<compile_context>
chip_gen: v6e
topology: v6e:2x2x1
jax: 0.10.0
libtpu: 0.0.40
codegen_flags: <defaults>
</compile_context>

<pallas_src>
import functools

import jax
import jax.numpy as jnp
from jax.experimental import pallas as pl
from jax.experimental.pallas import tpu as pltpu

EMBED_SIZE = 32
HIDDEN = 2048
NEG_SLOPE = 0.2
H_CHUNK = 512          # fc2/fc3 fused slab height (remainder handled generically)


def _round_up(n, m):
    return ((n + m - 1) // m) * m


def _leaky_relu(x, slope):
    return jnp.where(x > 0, x, slope * x)


def _choose_row_tile(M, tm):
    """Lane-dense row tile: multiple of 128, as large as requested, but kept
    small enough that the grid has >= 2 steps whenever M > 128 so the
    'parallel' axis can be split across v7x's two TensorCores."""
    tm_req = _round_up(max(tm, 128), 128)
    M128 = _round_up(max(M, 1), 128)
    if M128 <= 128:
        return 128
    half = _round_up((M128 + 1) // 2, 128)
    return max(128, min(tm_req, half))


def discriminator_kernel(x_ref, w1_ref, b1_ref, w2_ref, b2_ref,
                         w3p_ref, w3n_ref, b3_ref, o_ref):
    # x_ref  : (1, tm)   input rows, lane-dense
    # w1_ref : (E, 1)    fc1 weight (torch layout: out x in)
    # b1_ref : (E, 1)    fc1 bias (column)
    # w2_ref : (H, E)    fc2 weight, bf16 (torch layout: out x in)
    # b2_ref : (H, 1)    fc2 bias (column)
    # w3p_ref: (H, 1)    fc3 weight (column)           -> used where z > 0
    # w3n_ref: (H, 1)    NEG_SLOPE * fc3 weight        -> used where z <= 0
    # b3_ref : (1, 1)    fc3 bias
    # o_ref  : (1, tm)   output rows, lane-dense
    x = x_ref[...]                                                # (1, tm) f32

    # fc1: Linear(1, E) is an outer product -> VPU broadcast multiply
    # (a K=1 matmul would waste the MXU).
    h1 = _leaky_relu(w1_ref[...] * x + b1_ref[...], NEG_SLOPE)    # (E, tm) f32
    # bf16 only for the MXU operand; activations stay f32.
    h1_bf = h1.astype(jnp.bfloat16)

    tm = x.shape[1]
    H = w2_ref.shape[0]
    acc = jnp.zeros((1, tm), jnp.float32)

    # fc2 + LeakyReLU + fc3 fused per H-slab: never materializes the full
    # (H, tm) activation; the VPU epilogue of slab k overlaps the MXU matmul
    # of slab k+1.  Static Python loop (trip count 4 for H=2048, HC=512).
    for start in range(0, H, H_CHUNK):
        size = min(H_CHUNK, H - start)
        rows = pl.ds(start, size)
        z = jnp.dot(w2_ref[rows, :], h1_bf,
                    preferred_element_type=jnp.float32)           # (size, tm) MXU
        z = z + b2_ref[rows, :]
        # LeakyReLU folded into the fc3 weight:
        #   leaky(z) * w3 == z * where(z > 0, w3, slope * w3)
        w3_sel = jnp.where(z > 0, w3p_ref[rows, :], w3n_ref[rows, :])
        acc = acc + jnp.sum(z * w3_sel, axis=0, keepdims=True)    # (1, tm) f32

    o_ref[...] = (acc + b3_ref[...]).astype(o_ref.dtype)


@functools.partial(jax.jit, static_argnames=("tm",))
def discriminator_forward(x, kparams, tm=1024):
    """x: (B, T) float32, kparams from prepare_params().
    Returns what PyTorch returns: (B, T, 1) if B > 1, else (T, 1)."""
    w1, b1, w2_bf, b2, w3p, w3n, b3 = kparams
    B, T = x.shape
    M = B * T
    E = w1.shape[0]
    H = w2_bf.shape[0]

    tm_eff = _choose_row_tile(M, tm)
    n_tiles = -(-M // tm_eff)
    M_pad = n_tiles * tm_eff

    # Flatten rows onto the lane axis and zero-pad to a tile multiple.
    # (Padded rows produce junk values that are sliced off below.)
    x_row = jnp.pad(x.reshape(1, M).astype(jnp.float32),
                    ((0, 0), (0, M_pad - M)))

    flops = 2 * M_pad * H * E + 6 * M_pad * H + 4 * M_pad * E
    bytes_accessed = (4 * M_pad * 2            # x in + out
                      + 2 * H * E              # w2 (bf16)
                      + 4 * (4 * H + 2 * E + 1))  # biases / small weights

    out = pl.pallas_call(
        discriminator_kernel,
        out_shape=jax.ShapeDtypeStruct((1, M_pad), jnp.float32),
        grid_spec=pltpu.PrefetchScalarGridSpec(
            num_scalar_prefetch=0,
            grid=(n_tiles,),
            in_specs=[
                pl.BlockSpec((1, tm_eff), lambda i: (0, i)),   # x rows (lane-dense)
                pl.BlockSpec((E, 1), lambda i: (0, 0)),        # w1
                pl.BlockSpec((E, 1), lambda i: (0, 0)),        # b1
                pl.BlockSpec((H, E), lambda i: (0, 0)),        # w2 (bf16)
                pl.BlockSpec((H, 1), lambda i: (0, 0)),        # b2
                pl.BlockSpec((H, 1), lambda i: (0, 0)),        # w3  (pos branch)
                pl.BlockSpec((H, 1), lambda i: (0, 0)),        # slope*w3 (neg branch)
                pl.BlockSpec((1, 1), lambda i: (0, 0)),        # b3
            ],
            out_specs=pl.BlockSpec((1, tm_eff), lambda i: (0, i)),
        ),
        compiler_params=pltpu.CompilerParams(
            dimension_semantics=("parallel",),
            vmem_limit_bytes=32 * 1024 * 1024,
        ),
        cost_estimate=pl.CostEstimate(
            flops=flops, transcendentals=0, bytes_accessed=bytes_accessed),
    )(x_row, w1, b1, w2_bf, b2, w3p, w3n, b3)

    out = out[0, :M].reshape(B, T, 1)
    if B == 1:
        out = out[0]          # matches torch .squeeze(0)
    return out


def init_params(key, embed_size=EMBED_SIZE, hidden=HIDDEN):
    """Deterministic init mirroring nn.Linear shapes (torch (out, in) layout)."""
    k1, k2, k3, k4, k5, k6 = jax.random.split(key, 6)
    w1 = jax.random.normal(k1, (embed_size, 1), jnp.float32) * 0.5
    b1 = jax.random.normal(k2, (embed_size,), jnp.float32) * 0.1
    w2 = jax.random.normal(k3, (hidden, embed_size), jnp.float32) * 0.05
    b2 = jax.random.normal(k4, (hidden,), jnp.float32) * 0.1
    w3 = jax.random.normal(k5, (1, hidden), jnp.float32) * 0.02
    b3 = jax.random.normal(k6, (1,), jnp.float32) * 0.1
    return (w1, b1, w2, b2, w3, b3)


def prepare_params(params):
    """One-time conversion to kernel-ready layout.  Hoists the W2 bf16 cast
    and the slope*w3 precompute out of the per-call jitted path."""
    w1, b1, w2, b2, w3, b3 = params
    return (
        w1.astype(jnp.float32),                               # (E, 1)
        b1.reshape(-1, 1).astype(jnp.float32),                # (E, 1)
        w2.astype(jnp.bfloat16),                              # (H, E) MXU operand
        b2.reshape(-1, 1).astype(jnp.float32),                # (H, 1)
        w3.reshape(-1, 1).astype(jnp.float32),                # (H, 1) w3
        (NEG_SLOPE * w3).reshape(-1, 1).astype(jnp.float32),  # (H, 1) slope*w3
        b3.reshape(1, 1).astype(jnp.float32),                 # (1, 1)
    )


def reference_forward(x, params):
    """Plain-JAX f32 reference of the PyTorch forward (torch-layout params)."""
    w1, b1, w2, b2, w3, b3 = params
    xb = x[..., None]                                             # (B, T, 1)
    h1 = _leaky_relu(jnp.dot(xb, w1.T) + b1, NEG_SLOPE)           # (B, T, E)
    h2 = _leaky_relu(jnp.dot(h1, w2.T) + b2, NEG_SLOPE)           # (B, T, H)
    out = jnp.dot(h2, w3.T) + b3                                  # (B, T, 1)
    if x.shape[0] == 1:
        out = out[0]
    return out


if __name__ == "__main__":
    key = jax.random.PRNGKey(0)
    kp, kx1, kx2 = jax.random.split(key, 3)
    params = init_params(kp)
    kparams = prepare_params(params)

    # Small shape consistent with the module: x is (batch, seq).
    B, T = 2, 8
    x_small = jax.random.normal(kx1, (B, T), jnp.float32)
    out_small = jax.block_until_ready(discriminator_forward(x_small, kparams))
    ref_small = reference_forward(x_small, params)
    assert out_small.shape == ref_small.shape == (B, T, 1)
    assert jnp.allclose(out_small, ref_small, atol=2e-2, rtol=2e-2), (
        f"mismatch (small): max err {jnp.max(jnp.abs(out_small - ref_small))}")

    # Larger, ragged row count: exercises zero-padding, the >=2-tile clamp
    # (M=800 -> tm_eff=512, 2 grid steps) and the fused H-slab loop.
    B2, T2 = 4, 200
    x_big = jax.random.normal(kx2, (B2, T2), jnp.float32)
    out_big = jax.block_until_ready(discriminator_forward(x_big, kparams))
    ref_big = reference_forward(x_big, params)
    assert out_big.shape == ref_big.shape == (B2, T2, 1)
    assert jnp.allclose(out_big, ref_big, atol=2e-2, rtol=2e-2), (
        f"mismatch (big): max err {jnp.max(jnp.abs(out_big - ref_big))}")

    print("KERNEL_OK")
</pallas_src>

<mosaic_0001>
module attributes {stable_mosaic.version = 11 : i64} {
  func.func @discriminator_kernel(%arg0: i32, %arg1: memref<1x128xf32, #tpu.memory_space<vmem>>, %arg2: memref<32x1xf32, #tpu.memory_space<vmem>>, %arg3: memref<32x1xf32, #tpu.memory_space<vmem>>, %arg4: memref<2048x32xbf16, #tpu.memory_space<vmem>>, %arg5: memref<2048x1xf32, #tpu.memory_space<vmem>>, %arg6: memref<2048x1xf32, #tpu.memory_space<vmem>>, %arg7: memref<2048x1xf32, #tpu.memory_space<vmem>>, %arg8: memref<1x1xf32, #tpu.memory_space<vmem>>, %arg9: memref<1x128xf32, #tpu.memory_space<vmem>>) attributes {dimension_semantics = [#tpu.dimension_semantics<parallel>], iteration_bounds = array<i64: 1>, scalar_prefetch = 0 : i64, scratch_operands = 0 : i64, tpu.core_type = #tpu.core_type<tc>, window_params = [{transform_indices = @transform_0, window_bounds = array<i64: 1, 128>}, {pipeline_mode = #tpu.pipeline_mode<synchronous>, transform_indices = @transform_1, window_bounds = array<i64: 32, 1>}, {pipeline_mode = #tpu.pipeline_mode<synchronous>, transform_indices = @transform_2, window_bounds = array<i64: 32, 1>}, {pipeline_mode = #tpu.pipeline_mode<synchronous>, transform_indices = @transform_3, window_bounds = array<i64: 2048, 32>}, {pipeline_mode = #tpu.pipeline_mode<synchronous>, transform_indices = @transform_4, window_bounds = array<i64: 2048, 1>}, {pipeline_mode = #tpu.pipeline_mode<synchronous>, transform_indices = @transform_5, window_bounds = array<i64: 2048, 1>}, {pipeline_mode = #tpu.pipeline_mode<synchronous>, transform_indices = @transform_6, window_bounds = array<i64: 2048, 1>}, {pipeline_mode = #tpu.pipeline_mode<synchronous>, transform_indices = @transform_7, window_bounds = array<i64: 1, 1>}, {transform_indices = @transform_8, window_bounds = array<i64: 1, 128>}]} {
    %c0 = arith.constant 0 : index
    %c0_0 = arith.constant 0 : index
    %0 = vector.load %arg1[%c0, %c0_0] : memref<1x128xf32, #tpu.memory_space<vmem>>, vector<1x128xf32>
    %c0_1 = arith.constant 0 : index
    %c0_2 = arith.constant 0 : index
    %1 = vector.load %arg2[%c0_1, %c0_2] : memref<32x1xf32, #tpu.memory_space<vmem>>, vector<32x1xf32>
    %2 = vector.broadcast %1 : vector<32x1xf32> to vector<32x128xf32>
    %3 = vector.broadcast %0 : vector<1x128xf32> to vector<32x128xf32>
    %4 = arith.mulf %2, %3 : vector<32x128xf32>
    %c0_3 = arith.constant 0 : index
    %c0_4 = arith.constant 0 : index
    %5 = vector.load %arg3[%c0_3, %c0_4] : memref<32x1xf32, #tpu.memory_space<vmem>>, vector<32x1xf32>
    %6 = vector.broadcast %5 : vector<32x1xf32> to vector<32x128xf32>
    %7 = arith.addf %4, %6 : vector<32x128xf32>
    %cst = arith.constant 0.000000e+00 : f32
    %8 = vector.broadcast %cst : f32 to vector<32x128xf32>
    %9 = arith.cmpf ogt, %7, %8 : vector<32x128xf32>
    %cst_5 = arith.constant 2.000000e-01 : f32
    %10 = vector.broadcast %cst_5 : f32 to vector<32x128xf32>
    %11 = arith.mulf %10, %7 : vector<32x128xf32>
    %12 = arith.select %9, %7, %11 : vector<32x128xi1>, vector<32x128xf32>
    %13 = arith.truncf %12 : vector<32x128xf32> to vector<32x128xbf16>
    %cst_6 = arith.constant 0.000000e+00 : f32
    %14 = vector.broadcast %cst_6 : f32 to vector<1x128xf32>
    %c0_7 = arith.constant 0 : index
    %c0_8 = arith.constant 0 : index
    %15 = vector.load %arg4[%c0_7, %c0_8] : memref<2048x32xbf16, #tpu.memory_space<vmem>>, vector<512x32xbf16>
    %cst_9 = arith.constant dense<0.000000e+00> : vector<512x128xf32>
    %16 = tpu.matmul %15, %13, %cst_9 {dimension_numbers = #tpu.dot_dimension_numbers<[1], [0], [0], [1], [0, 0, 1, 1], [], []>} : vector<512x32xbf16>, vector<32x128xbf16>, vector<512x128xf32> -> vector<512x128xf32>
    %c0_10 = arith.constant 0 : index
    %c0_11 = arith.constant 0 : index
    %17 = vector.load %arg5[%c0_10, %c0_11] : memref<2048x1xf32, #tpu.memory_space<vmem>>, vector<512x1xf32>
    %18 = vector.broadcast %17 : vector<512x1xf32> to vector<512x128xf32>
    %19 = arith.addf %16, %18 : vector<512x128xf32>
    %cst_12 = arith.constant 0.000000e+00 : f32
    %20 = vector.broadcast %cst_12 : f32 to vector<512x128xf32>
    %21 = arith.cmpf ogt, %19, %20 : vector<512x128xf32>
    %c0_13 = arith.constant 0 : index
    %c0_14 = arith.constant 0 : index
    %22 = vector.load %arg6[%c0_13, %c0_14] : memref<2048x1xf32, #tpu.memory_space<vmem>>, vector<512x1xf32>
    %c0_15 = arith.constant 0 : index
    %c0_16 = arith.constant 0 : index
    %23 = vector.load %arg7[%c0_15, %c0_16] : memref<2048x1xf32, #tpu.memory_space<vmem>>, vector<512x1xf32>
    %24 = vector.shape_cast %22 : vector<512x1xf32> to vector<512x1xf32>
    %25 = vector.broadcast %24 : vector<512x1xf32> to vector<512x128xf32>
    %26 = vector.shape_cast %23 : vector<512x1xf32> to vector<512x1xf32>
    %27 = vector.broadcast %26 : vector<512x1xf32> to vector<512x128xf32>
    %28 = arith.select %21, %25, %27 : vector<512x128xi1>, vector<512x128xf32>
    %29 = arith.mulf %19, %28 : vector<512x128xf32>
    %cst_17 = arith.constant dense<0.000000e+00> : vector<128xf32>
    %30 = vector.multi_reduction <add>, %29, %cst_17 [0] : vector<512x128xf32> to vector<128xf32>
    %31 = vector.shape_cast %30 : vector<128xf32> to vector<1x128xf32>
    %32 = arith.addf %14, %31 : vector<1x128xf32>
    %c512 = arith.constant 512 : index
    %c0_18 = arith.constant 0 : index
    %33 = vector.load %arg4[%c512, %c0_18] : memref<2048x32xbf16, #tpu.memory_space<vmem>>, vector<512x32xbf16>
    %cst_19 = arith.constant dense<0.000000e+00> : vector<512x128xf32>
    %34 = tpu.matmul %33, %13, %cst_19 {dimension_numbers = #tpu.dot_dimension_numbers<[1], [0], [0], [1], [0, 0, 1, 1], [], []>} : vector<512x32xbf16>, vector<32x128xbf16>, vector<512x128xf32> -> vector<512x128xf32>
    %c512_20 = arith.constant 512 : index
    %c0_21 = arith.constant 0 : index
    %35 = vector.load %arg5[%c512_20, %c0_21] : memref<2048x1xf32, #tpu.memory_space<vmem>>, vector<512x1xf32>
    %36 = vector.broadcast %35 : vector<512x1xf32> to vector<512x128xf32>
    %37 = arith.addf %34, %36 : vector<512x128xf32>
    %cst_22 = arith.constant 0.000000e+00 : f32
    %38 = vector.broadcast %cst_22 : f32 to vector<512x128xf32>
    %39 = arith.cmpf ogt, %37, %38 : vector<512x128xf32>
    %c512_23 = arith.constant 512 : index
    %c0_24 = arith.constant 0 : index
    %40 = vector.load %arg6[%c512_23, %c0_24] : memref<2048x1xf32, #tpu.memory_space<vmem>>, vector<512x1xf32>
    %c512_25 = arith.constant 512 : index
    %c0_26 = arith.constant 0 : index
    %41 = vector.load %arg7[%c512_25, %c0_26] : memref<2048x1xf32, #tpu.memory_space<vmem>>, vector<512x1xf32>
    %42 = vector.shape_cast %40 : vector<512x1xf32> to vector<512x1xf32>
    %43 = vector.broadcast %42 : vector<512x1xf32> to vector<512x128xf32>
    %44 = vector.shape_cast %41 : vector<512x1xf32> to vector<512x1xf32>
    %45 = vector.broadcast %44 : vector<512x1xf32> to vector<512x128xf32>
    %46 = arith.select %39, %43, %45 : vector<512x128xi1>, vector<512x128xf32>
    %47 = arith.mulf %37, %46 : vector<512x128xf32>
    %cst_27 = arith.constant dense<0.000000e+00> : vector<128xf32>
    %48 = vector.multi_reduction <add>, %47, %cst_27 [0] : vector<512x128xf32> to vector<128xf32>
    %49 = vector.shape_cast %48 : vector<128xf32> to vector<1x128xf32>
    %50 = arith.addf %32, %49 : vector<1x128xf32>
    %c1024 = arith.constant 1024 : index
    %c0_28 = arith.constant 0 : index
    %51 = vector.load %arg4[%c1024, %c0_28] : memref<2048x32xbf16, #tpu.memory_space<vmem>>, vector<512x32xbf16>
    %cst_29 = arith.constant dense<0.000000e+00> : vector<512x128xf32>
    %52 = tpu.matmul %51, %13, %cst_29 {dimension_numbers = #tpu.dot_dimension_numbers<[1], [0], [0], [1], [0, 0, 1, 1], [], []>} : vector<512x32xbf16>, vector<32x128xbf16>, vector<512x128xf32> -> vector<512x128xf32>
    %c1024_30 = arith.constant 1024 : index
    %c0_31 = arith.constant 0 : index
    %53 = vector.load %arg5[%c1024_30, %c0_31] : memref<2048x1xf32, #tpu.memory_space<vmem>>, vector<512x1xf32>
    %54 = vector.broadcast %53 : vector<512x1xf32> to vector<512x128xf32>
    %55 = arith.addf %52, %54 : vector<512x128xf32>
    %cst_32 = arith.constant 0.000000e+00 : f32
    %56 = vector.broadcast %cst_32 : f32 to vector<512x128xf32>
    %57 = arith.cmpf ogt, %55, %56 : vector<512x128xf32>
    %c1024_33 = arith.constant 1024 : index
    %c0_34 = arith.constant 0 : index
    %58 = vector.load %arg6[%c1024_33, %c0_34] : memref<2048x1xf32, #tpu.memory_space<vmem>>, vector<512x1xf32>
    %c1024_35 = arith.constant 1024 : index
    %c0_36 = arith.constant 0 : index
    %59 = vector.load %arg7[%c1024_35, %c0_36] : memref<2048x1xf32, #tpu.memory_space<vmem>>, vector<512x1xf32>
    %60 = vector.shape_cast %58 : vector<512x1xf32> to vector<512x1xf32>
    %61 = vector.broadcast %60 : vector<512x1xf32> to vector<512x128xf32>
    %62 = vector.shape_cast %59 : vector<512x1xf32> to vector<512x1xf32>
    %63 = vector.broadcast %62 : vector<512x1xf32> to vector<512x128xf32>
    %64 = arith.select %57, %61, %63 : vector<512x128xi1>, vector<512x128xf32>
    %65 = arith.mulf %55, %64 : vector<512x128xf32>
    %cst_37 = arith.constant dense<0.000000e+00> : vector<128xf32>
    %66 = vector.multi_reduction <add>, %65, %cst_37 [0] : vector<512x128xf32> to vector<128xf32>
    %67 = vector.shape_cast %66 : vector<128xf32> to vector<1x128xf32>
    %68 = arith.addf %50, %67 : vector<1x128xf32>
    %c1536 = arith.constant 1536 : index
    %c0_38 = arith.constant 0 : index
    %69 = vector.load %arg4[%c1536, %c0_38] : memref<2048x32xbf16, #tpu.memory_space<vmem>>, vector<512x32xbf16>
    %cst_39 = arith.constant dense<0.000000e+00> : vector<512x128xf32>
    %70 = tpu.matmul %69, %13, %cst_39 {dimension_numbers = #tpu.dot_dimension_numbers<[1], [0], [0], [1], [0, 0, 1, 1], [], []>} : vector<512x32xbf16>, vector<32x128xbf16>, vector<512x128xf32> -> vector<512x128xf32>
    %c1536_40 = arith.constant 1536 : index
    %c0_41 = arith.constant 0 : index
    %71 = vector.load %arg5[%c1536_40, %c0_41] : memref<2048x1xf32, #tpu.memory_space<vmem>>, vector<512x1xf32>
    %72 = vector.broadcast %71 : vector<512x1xf32> to vector<512x128xf32>
    %73 = arith.addf %70, %72 : vector<512x128xf32>
    %cst_42 = arith.constant 0.000000e+00 : f32
    %74 = vector.broadcast %cst_42 : f32 to vector<512x128xf32>
    %75 = arith.cmpf ogt, %73, %74 : vector<512x128xf32>
    %c1536_43 = arith.constant 1536 : index
    %c0_44 = arith.constant 0 : index
    %76 = vector.load %arg6[%c1536_43, %c0_44] : memref<2048x1xf32, #tpu.memory_space<vmem>>, vector<512x1xf32>
    %c1536_45 = arith.constant 1536 : index
    %c0_46 = arith.constant 0 : index
    %77 = vector.load %arg7[%c1536_45, %c0_46] : memref<2048x1xf32, #tpu.memory_space<vmem>>, vector<512x1xf32>
    %78 = vector.shape_cast %76 : vector<512x1xf32> to vector<512x1xf32>
    %79 = vector.broadcast %78 : vector<512x1xf32> to vector<512x128xf32>
    %80 = vector.shape_cast %77 : vector<512x1xf32> to vector<512x1xf32>
    %81 = vector.broadcast %80 : vector<512x1xf32> to vector<512x128xf32>
    %82 = arith.select %75, %79, %81 : vector<512x128xi1>, vector<512x128xf32>
    %83 = arith.mulf %73, %82 : vector<512x128xf32>
    %cst_47 = arith.constant dense<0.000000e+00> : vector<128xf32>
    %84 = vector.multi_reduction <add>, %83, %cst_47 [0] : vector<512x128xf32> to vector<128xf32>
    %85 = vector.shape_cast %84 : vector<128xf32> to vector<1x128xf32>
    %86 = arith.addf %68, %85 : vector<1x128xf32>
    %c0_48 = arith.constant 0 : index
    %c0_49 = arith.constant 0 : index
    %87 = vector.load %arg8[%c0_48, %c0_49] : memref<1x1xf32, #tpu.memory_space<vmem>>, vector<1x1xf32>
    %88 = vector.broadcast %87 : vector<1x1xf32> to vector<1x128xf32>
    %89 = arith.addf %86, %88 : vector<1x128xf32>
    %c0_50 = arith.constant 0 : index
    %c0_51 = arith.constant 0 : index
    %90 = vector.load %arg9[%c0_50, %c0_51] : memref<1x128xf32, #tpu.memory_space<vmem>>, vector<1x128xf32>
    tpu.vector_store %arg9[%c0_50, %c0_51], %89 {strides = array<i32>} : memref<1x128xf32, #tpu.memory_space<vmem>>, vector<1x128xf32>,
    return
  }
  func.func @transform_0(%arg0: i32) -> (i32, i32) {
    %c0_i32 = arith.constant 0 : i32
    %c0_i32_0 = arith.constant 0 : i32
    return %c0_i32, %arg0 : i32, i32
  }
  func.func @transform_1(%arg0: i32) -> (i32, i32) {
    %c0_i32 = arith.constant 0 : i32
    %c0_i32_0 = arith.constant 0 : i32
    %c0_i32_1 = arith.constant 0 : i32
    return %c0_i32, %c0_i32_0 : i32, i32
  }
  func.func @transform_2(%arg0: i32) -> (i32, i32) {
    %c0_i32 = arith.constant 0 : i32
    %c0_i32_0 = arith.constant 0 : i32
    %c0_i32_1 = arith.constant 0 : i32
    return %c0_i32, %c0_i32_0 : i32, i32
  }
  func.func @transform_3(%arg0: i32) -> (i32, i32) {
    %c0_i32 = arith.constant 0 : i32
    %c0_i32_0 = arith.constant 0 : i32
    %c0_i32_1 = arith.constant 0 : i32
    return %c0_i32, %c0_i32_0 : i32, i32
  }
  func.func @transform_4(%arg0: i32) -> (i32, i32) {
    %c0_i32 = arith.constant 0 : i32
    %c0_i32_0 = arith.constant 0 : i32
    %c0_i32_1 = arith.constant 0 : i32
    return %c0_i32, %c0_i32_0 : i32, i32
  }
  func.func @transform_5(%arg0: i32) -> (i32, i32) {
    %c0_i32 = arith.constant 0 : i32
    %c0_i32_0 = arith.constant 0 : i32
    %c0_i32_1 = arith.constant 0 : i32
    return %c0_i32, %c0_i32_0 : i32, i32
  }
  func.func @transform_6(%arg0: i32) -> (i32, i32) {
    %c0_i32 = arith.constant 0 : i32
    %c0_i32_0 = arith.constant 0 : i32
    %c0_i32_1 = arith.constant 0 : i32
    return %c0_i32, %c0_i32_0 : i32, i32
  }
  func.func @transform_7(%arg0: i32) -> (i32, i32) {
    %c0_i32 = arith.constant 0 : i32
    %c0_i32_0 = arith.constant 0 : i32
    %c0_i32_1 = arith.constant 0 : i32
    return %c0_i32, %c0_i32_0 : i32, i32
  }
  func.func @transform_8(%arg0: i32) -> (i32, i32) {
    %c0_i32 = arith.constant 0 : i32
    %c0_i32_0 = arith.constant 0 : i32
    return %c0_i32, %arg0 : i32, i32
  }
}

</mosaic_0001>

<llo_original>
// kernel: squeeze.1
$region0: #{squeeze.1}
  %s0 = inlined_call_operand.vmem [shape: f32[16], index: 0, kind: input, shape index: {}]
  %s1 = inlined_call_operand.hbm [shape: f32[2,8,1], index: 1, kind: output, shape index: {}]
  $region1: #{squeeze.1} parent=0
    #allocation0 [shape = 'u8[1024]{0}', space=vmem, size = 0x400, scoped, tag = 'operand span for operand 1']
    #allocation1 [shape = 's32[1]{0}', space=sflag, size = 0x4, scoped, tag = 'scoped memory for squeeze.1']
    #allocation2 [shape = 'u8[4096]{0}', space=vmem, size = 0x1000, scoped, tag = 'scoped mem for output reshape']
    #allocation3 [shape = 'u8[4096]{0}', space=vmem, size = 0x1000, scoped, tag = 'scoped mem for input reshape']
    %2 = vsyncpa [#allocation1], 0
    %s4 = sshll.u32 1, 1
    %s5 = ssub.s32 %s4, 1
    %v6 = vld [vmem:[%s0] sm:%s5]
    %7 = vst [vmem:[#allocation3] sm:%s5] %v6
    %v8 = vld [vmem:[#allocation3] sm:$0x1]
    %vm9 = vcmask 64512
    %10 = vst.msk [vmem:[#allocation2] sm:$0x1] %vm9, %v8
    %v11 = vld [vmem:[#allocation3] sm:$0x1]
    %12 = vrot.lane.b32.xlu0 %v11, 120
    %v13 = vpop.permute.xlu0 %12
    %vm14 = vcmask 64512
    %s15 = scalar_lea.vmem [#allocation2], 1
    %16 = vst.msk [vmem:[%s15] sm:$0x1] %vm14, %v13
    %s18 = sshll.u32 1, 2
    %s19 = ssub.s32 %s18, 1
    %v21 = vld [vmem:[#allocation2] sm:%s19]
    %s22 = sshll.u32 1, 2
    %s23 = ssub.s32 %s22, 1
    %24 = vst [vmem:[#allocation0] sm:%s23] %v21
    %s26 = ssub.s32 32, 32
    %27 = vsyncadd [#allocation1], %s26
    %s29 = sshll.u32 [#allocation0], 4
    %s30 = int_to_ptr.vmem [resolvable:$true] %s29
    %32 = dma.vmem_to_hbm [thread:$0]  %s30, 32, %s1, [#allocation1]
    %33 = dma.done [#allocation1], 32
    %34 = vsyncpa [#allocation1], 1

// kernel: discriminator_forward.1
$region0: #{discriminator_forward.1}
  #allocation0 [shape = 'u32[]', space=smem, size = 0x4, offset = 0x4, fixed_abs, tag = 'smem constant byte address 0x4 - core index']
  #allocation1 [shape = 'u32[144,128]{1,0:T(1,128)}', space=vmem, size = 0x12000, scoped, tag = 'internal scratch']
  #allocation2 [shape = 'f32[1,1]{1,0:T(1,128)S(1)}', space=vmem, size = 0x200, scoped, tag = 'scoped memory for discriminator_forward.1']
  %s0 = inlined_call_operand.vmem [shape: f32[1,128], index: 0, kind: input, shape index: {}]
  %s1 = inlined_call_operand.vmem [shape: f32[32,1], index: 1, kind: input, shape index: {}]
  %s2 = inlined_call_operand.vmem [shape: f32[32,1], index: 2, kind: input, shape index: {}]
  %s3 = inlined_call_operand.vmem [shape: bf16[2048,32], index: 3, kind: input, shape index: {}]
  %s4 = inlined_call_operand.vmem [shape: f32[2048,1], index: 4, kind: input, shape index: {}]
  %s5 = inlined_call_operand.vmem [shape: f32[2048,1], index: 5, kind: input, shape index: {}]
  %s6 = inlined_call_operand.vmem [shape: f32[2048,1], index: 6, kind: input, shape index: {}]
  %s7 = inlined_call_operand.<no memory space> [shape: f32[1,1], index: 7, kind: input, shape index: {}]
  %s8 = inlined_call_operand.vmem [shape: f32[1,128], index: 8, kind: output, shape index: {}]
  %s9 = sld [smem:[#allocation0]]
  $region42: #{discriminator_forward.1} parent=0
    _
  %s11 = ssub.s32 1, %s9
  %s12 = scalar_select 0, %s11, %s9
  %v13 = vstv %s7
  %14 = vst [vmem:[#allocation2] sm:$0x1] %v13
  // Predicated region
  $region2: #{discriminator_forward.1} parent=0 // pred_check
    _
  $region3: #{discriminator_forward.1} parent=0 // pred_check_branch
    %16 = sbr.rel (0) target = $region5
  $region4: #{discriminator_forward.1} parent=0 // pred_region
    _
  $region5: #{discriminator_forward.1} parent=0 // pred_fallthru
    _
  // Predicated region
  $region6: #{discriminator_forward.1} parent=0 // pred_check
    _
  $region7: #{discriminator_forward.1} parent=0 // pred_check_branch
    %18 = sbr.rel (0) target = $region9
  $region8: #{discriminator_forward.1} parent=0 // pred_region
    _
  $region9: #{discriminator_forward.1} parent=0 // pred_fallthru
    _
  // Predicated region
  $region10: #{discriminator_forward.1} parent=0 // pred_check
    _
  $region11: #{discriminator_forward.1} parent=0 // pred_check_branch
    %20 = sbr.rel (0) target = $region13
  $region12: #{discriminator_forward.1} parent=0 // pred_region
    _
  $region13: #{discriminator_forward.1} parent=0 // pred_fallthru
    _
  // Predicated region
  $region14: #{discriminator_forward.1} parent=0 // pred_check
    _
  $region15: #{discriminator_forward.1} parent=0 // pred_check_branch
    %22 = sbr.rel (0) target = $region17
  $region16: #{discriminator_forward.1} parent=0 // pred_region
    _
  $region17: #{discriminator_forward.1} parent=0 // pred_fallthru
    _
  // Predicated region
  $region18: #{discriminator_forward.1} parent=0 // pred_check
    _
  $region19: #{discriminator_forward.1} parent=0 // pred_check_branch
    %24 = sbr.rel (0) target = $region21
  $region20: #{discriminator_forward.1} parent=0 // pred_region
    _
  $region21: #{discriminator_forward.1} parent=0 // pred_fallthru
    _
  // Predicated region
  $region22: #{discriminator_forward.1} parent=0 // pred_check
    _
  $region23: #{discriminator_forward.1} parent=0 // pred_check_branch
    %26 = sbr.rel (0) target = $region25
  $region24: #{discriminator_forward.1} parent=0 // pred_region
    _
  $region25: #{discriminator_forward.1} parent=0 // pred_fallthru
    _
  // Predicated region
  $region26: #{discriminator_forward.1} parent=0 // pred_check
    _
  $region27: #{discriminator_forward.1} parent=0 // pred_check_branch
    %28 = sbr.rel (0) target = $region29
  $region28: #{discriminator_forward.1} parent=0 // pred_region
    _
  $region29: #{discriminator_forward.1} parent=0 // pred_fallthru
    _
  // Predicated region
  $region30: #{discriminator_forward.1} parent=0 // pred_check
    _
  $region31: #{discriminator_forward.1} parent=0 // pred_check_branch
    %30 = sbr.rel (0) target = $region33
  $region32: #{discriminator_forward.1} parent=0 // pred_region
    _
  $region33: #{discriminator_forward.1} parent=0 // pred_fallthru
    _
  %v32 = vld [vmem:[%s0] sm:$0x1]
  %v33 = vld [vmem:[%s1] sm:$0xff]
  %v34 = vld [vmem:[%s1 + $0x8] sm:$0xff]
  %v35 = vld [vmem:[%s1 + $0x10] sm:$0xff]
  %v36 = vld [vmem:[%s1 + $0x18] sm:$0xff]
  %38 = vset.pattern.permute.xlu0 0
  %39 = vperm.xlu0 %38, %v33
  %v40 = vpop.permute.xlu0 %39
  %43 = vset.pattern.permute.xlu0 0
  %44 = vperm.xlu0 %43, %v34
  %v45 = vpop.permute.xlu0 %44
  %48 = vset.pattern.permute.xlu0 0
  %49 = vperm.xlu0 %48, %v35
  %v50 = vpop.permute.xlu0 %49
  %53 = vset.pattern.permute.xlu0 0
  %54 = vperm.xlu0 %53, %v36
  %v55 = vpop.permute.xlu0 %54
  %v58 = vlaneseq
  %v59 = vshrl.u32 %v58, 7
  %v60 = vsub.s32 0, %v59
  %v61 = vrot.slane %v32, %v60
  %v63 = vmul.f32 %v40, %v61
  %v64 = vmul.f32 %v45, %v61
  %v65 = vmul.f32 %v50, %v61
  %v66 = vmul.f32 %v55, %v61
  %v67 = vld [vmem:[%s2] sm:$0xff]
  %v68 = vld [vmem:[%s2 + $0x8] sm:$0xff]
  %v69 = vld [vmem:[%s2 + $0x10] sm:$0xff]
  %v70 = vld [vmem:[%s2 + $0x18] sm:$0xff]
  %72 = vset.pattern.permute.xlu0 0
  %73 = vperm.xlu0 %72, %v67
  %v74 = vpop.permute.xlu0 %73
  %77 = vset.pattern.permute.xlu0 0
  %78 = vperm.xlu0 %77, %v68
  %v79 = vpop.permute.xlu0 %78
  %82 = vset.pattern.permute.xlu0 0
  %83 = vperm.xlu0 %82, %v69
  %v84 = vpop.permute.xlu0 %83
  %87 = vset.pattern.permute.xlu0 0
  %88 = vperm.xlu0 %87, %v70
  %v89 = vpop.permute.xlu0 %88
  %v91 = vadd.f32 %v63, %v74
  %v92 = vadd.f32 %v64, %v79
  %v93 = vadd.f32 %v65, %v84
  %v94 = vadd.f32 %v66, %v89
  %vm95 = vcmp.gt.f32.partialorder %v91, 0.0
  %vm96 = vcmp.gt.f32.partialorder %v92, 0.0
  %vm97 = vcmp.gt.f32.partialorder %v93, 0.0
  %vm98 = vcmp.gt.f32.partialorder %v94, 0.0
  %v99 = vmul.f32 %v91, 0.2
  %v100 = vmul.f32 %v92, 0.2
  %v101 = vmul.f32 %v93, 0.2
  %v102 = vmul.f32 %v94, 0.2
  %v103 = vsel %vm95, %v91, %v99
  %v104 = vsel %vm96, %v92, %v100
  %v105 = vsel %vm97, %v93, %v101
  %v106 = vsel %vm98, %v94, %v102
  %v107 = vpack.c.bf16 %v104, %v103
  %v108 = vpack.c.bf16 %v106, %v105
  %v109 = vld [vmem:[%s3] sm:$0xf]
  %v110 = vld [vmem:[%s3 + $0x4] sm:$0xf]
  %v111 = vld [vmem:[%s3 + $0x8] sm:$0xf]
  %v112 = vld [vmem:[%s3 + $0xc] sm:$0xf]
  %v113 = vld [vmem:[%s3 + $0x10] sm:$0xf]
  %v114 = vld [vmem:[%s3 + $0x14] sm:$0xf]
  %v115 = vld [vmem:[%s3 + $0x18] sm:$0xf]
  %v116 = vld [vmem:[%s3 + $0x1c] sm:$0xf]
  %v117 = vld [vmem:[%s3 + $0x20] sm:$0xf]
  %v118 = vld [vmem:[%s3 + $0x24] sm:$0xf]
  %v119 = vld [vmem:[%s3 + $0x28] sm:$0xf]
  %v120 = vld [vmem:[%s3 + $0x2c] sm:$0xf]
  %v121 = vld [vmem:[%s3 + $0x30] sm:$0xf]
  %v122 = vld [vmem:[%s3 + $0x34] sm:$0xf]
  %v123 = vld [vmem:[%s3 + $0x38] sm:$0xf]
  %v124 = vld [vmem:[%s3 + $0x3c] sm:$0xf]
  %v125 = vld [vmem:[%s3 + $0x40] sm:$0xf]
  %v126 = vld [vmem:[%s3 + $0x44] sm:$0xf]
  %v127 = vld [vmem:[%s3 + $0x48] sm:$0xf]
  %v128 = vld [vmem:[%s3 + $0x4c] sm:$0xf]
  %v129 = vld [vmem:[%s3 + $0x50] sm:$0xf]
  %v130 = vld [vmem:[%s3 + $0x54] sm:$0xf]
  %v131 = vld [vmem:[%s3 + $0x58] sm:$0xf]
  %v132 = vld [vmem:[%s3 + $0x5c] sm:$0xf]
  %v133 = vld [vmem:[%s3 + $0x60] sm:$0xf]
  %v134 = vld [vmem:[%s3 + $0x64] sm:$0xf]
  %v135 = vld [vmem:[%s3 + $0x68] sm:$0xf]
  %v136 = vld [vmem:[%s3 + $0x6c] sm:$0xf]
  %v137 = vld [vmem:[%s3 + $0x70] sm:$0xf]
  %v138 = vld [vmem:[%s3 + $0x74] sm:$0xf]
  %v139 = vld [vmem:[%s3 + $0x78] sm:$0xf]
  %v140 = vld [vmem:[%s3 + $0x7c] sm:$0xf]
  %v141 = vld [vmem:[%s3 + $0x80] sm:$0xf]
  %v142 = vld [vmem:[%s3 + $0x84] sm:$0xf]
  %v143 = vld [vmem:[%s3 + $0x88] sm:$0xf]
  %v144 = vld [vmem:[%s3 + $0x8c] sm:$0xf]
  %v145 = vld [vmem:[%s3 + $0x90] sm:$0xf]
  %v146 = vld [vmem:[%s3 + $0x94] sm:$0xf]
  %v147 = vld [vmem:[%s3 + $0x98] sm:$0xf]
  %v148 = vld [vmem:[%s3 + $0x9c] sm:$0xf]
  %v149 = vld [vmem:[%s3 + $0xa0] sm:$0xf]
  %v150 = vld [vmem:[%s3 + $0xa4] sm:$0xf]
  %v151 = vld [vmem:[%s3 + $0xa8] sm:$0xf]
  %v152 = vld [vmem:[%s3 + $0xac] sm:$0xf]
  %v153 = vld [vmem:[%s3 + $0xb0] sm:$0xf]
  %v154 = vld [vmem:[%s3 + $0xb4] sm:$0xf]
  %v155 = vld [vmem:[%s3 + $0xb8] sm:$0xf]
  %v156 = vld [vmem:[%s3 + $0xbc] sm:$0xf]
  %v157 = vld [vmem:[%s3 + $0xc0] sm:$0xf]
  %v158 = vld [vmem:[%s3 + $0xc4] sm:$0xf]
  %v159 = vld [vmem:[%s3 + $0xc8] sm:$0xf]
  %v160 = vld [vmem:[%s3 + $0xcc] sm:$0xf]
  %v161 = vld [vmem:[%s3 + $0xd0] sm:$0xf]
  %v162 = vld [vmem:[%s3 + $0xd4] sm:$0xf]
  %v163 = vld [vmem:[%s3 + $0xd8] sm:$0xf]
  %v164 = vld [vmem:[%s3 + $0xdc] sm:$0xf]
  %v165 = vld [vmem:[%s3 + $0xe0] sm:$0xf]
  %v166 = vld [vmem:[%s3 + $0xe4] sm:$0xf]
  %v167 = vld [vmem:[%s3 + $0xe8] sm:$0xf]
  %v168 = vld [vmem:[%s3 + $0xec] sm:$0xf]
  %v169 = vld [vmem:[%s3 + $0xf0] sm:$0xf]
  %v170 = vld [vmem:[%s3 + $0xf4] sm:$0xf]
  %v171 = vld [vmem:[%s3 + $0xf8] sm:$0xf]
  %v172 = vld [vmem:[%s3 + $0xfc] sm:$0xf]
  %v173 = vld [vmem:[%s4] sm:$0xff]
  %v174 = vld [vmem:[%s4 + $0x8] sm:$0xff]
  %v175 = vld [vmem:[%s4 + $0x10] sm:$0xff]
  %v176 = vld [vmem:[%s4 + $0x18] sm:$0xff]
  %v177 = vld [vmem:[%s4 + $0x20] sm:$0xff]
  %v178 = vld [vmem:[%s4 + $0x28] sm:$0xff]
  %v179 = vld [vmem:[%s4 + $0x30] sm:$0xff]
  %v180 = vld [vmem:[%s4 + $0x38] sm:$0xff]
  %v181 = vld [vmem:[%s4 + $0x40] sm:$0xff]
  %v182 = vld [vmem:[%s4 + $0x48] sm:$0xff]
  %v183 = vld [vmem:[%s4 + $0x50] sm:$0xff]
  %v184 = vld [vmem:[%s4 + $0x58] sm:$0xff]
  %v185 = vld [vmem:[%s4 + $0x60] sm:$0xff]
  %v186 = vld [vmem:[%s4 + $0x68] sm:$0xff]
  %v187 = vld [vmem:[%s4 + $0x70] sm:$0xff]
  %v188 = vld [vmem:[%s4 + $0x78] sm:$0xff]
  %v189 = vld [vmem:[%s4 + $0x80] sm:$0xff]
  %v190 = vld [vmem:[%s4 + $0x88] sm:$0xff]
  %v191 = vld [vmem:[%s4 + $0x90] sm:$0xff]
  %v192 = vld [vmem:[%s4 + $0x98] sm:$0xff]
  %v193 = vld [vmem:[%s4 + $0xa0] sm:$0xff]
  %v194 = vld [vmem:[%s4 + $0xa8] sm:$0xff]
  %v195 = vld [vmem:[%s4 + $0xb0] sm:$0xff]
  %v196 = vld [vmem:[%s4 + $0xb8] sm:$0xff]
  %v197 = vld [vmem:[%s4 + $0xc0] sm:$0xff]
  %v198 = vld [vmem:[%s4 + $0xc8] sm:$0xff]
  %v199 = vld [vmem:[%s4 + $0xd0] sm:$0xff]
  %v200 = vld [vmem:[%s4 + $0xd8] sm:$0xff]
  %v201 = vld [vmem:[%s4 + $0xe0] sm:$0xff]
  %v202 = vld [vmem:[%s4 + $0xe8] sm:$0xff]
  %v203 = vld [vmem:[%s4 + $0xf0] sm:$0xff]
  %v204 = vld [vmem:[%s4 + $0xf8] sm:$0xff]
  %v205 = vld [vmem:[%s4 + $0x100] sm:$0xff]
  %v206 = vld [vmem:[%s4 + $0x108] sm:$0xff]
  %v207 = vld [vmem:[%s4 + $0x110] sm:$0xff]
  %v208 = vld [vmem:[%s4 + $0x118] sm:$0xff]
  %v209 = vld [vmem:[%s4 + $0x120] sm:$0xff]
  %v210 = vld [vmem:[%s4 + $0x128] sm:$0xff]
  %v211 = vld [vmem:[%s4 + $0x130] sm:$0xff]
  %v212 = vld [vmem:[%s4 + $0x138] sm:$0xff]
  %v213 = vld [vmem:[%s4 + $0x140] sm:$0xff]
  %v214 = vld [vmem:[%s4 + $0x148] sm:$0xff]
  %v215 = vld [vmem:[%s4 + $0x150] sm:$0xff]
  %v216 = vld [vmem:[%s4 + $0x158] sm:$0xff]
  %v217 = vld [vmem:[%s4 + $0x160] sm:$0xff]
  %v218 = vld [vmem:[%s4 + $0x168] sm:$0xff]
  %v219 = vld [vmem:[%s4 + $0x170] sm:$0xff]
  %v220 = vld [vmem:[%s4 + $0x178] sm:$0xff]
  %v221 = vld [vmem:[%s4 + $0x180] sm:$0xff]
  %v222 = vld [vmem:[%s4 + $0x188] sm:$0xff]
  %v223 = vld [vmem:[%s4 + $0x190] sm:$0xff]
  %v224 = vld [vmem:[%s4 + $0x198] sm:$0xff]
  %v225 = vld [vmem:[%s4 + $0x1a0] sm:$0xff]
  %v226 = vld [vmem:[%s4 + $0x1a8] sm:$0xff]
  %v227 = vld [vmem:[%s4 + $0x1b0] sm:$0xff]
  %v228 = vld [vmem:[%s4 + $0x1b8] sm:$0xff]
  %v229 = vld [vmem:[%s4 + $0x1c0] sm:$0xff]
  %v230 = vld [vmem:[%s4 + $0x1c8] sm:$0xff]
  %v231 = vld [vmem:[%s4 + $0x1d0] sm:$0xff]
  %v232 = vld [vmem:[%s4 + $0x1d8] sm:$0xff]
  %v233 = vld [vmem:[%s4 + $0x1e0] sm:$0xff]
  %v234 = vld [vmem:[%s4 + $0x1e8] sm:$0xff]
  %v235 = vld [vmem:[%s4 + $0x1f0] sm:$0xff]
  %v236 = vld [vmem:[%s4 + $0x1f8] sm:$0xff]
  %238 = vset.pattern.permute.xlu0 0
  %239 = vperm.xlu0 %238, %v173
  %v240 = vpop.permute.xlu0 %239
  %243 = vset.pattern.permute.xlu0 0
  %244 = vperm.xlu0 %243, %v174
  %v245 = vpop.permute.xlu0 %244
  %248 = vset.pattern.permute.xlu0 0
  %249 = vperm.xlu0 %248, %v175
  %v250 = vpop.permute.xlu0 %249
  %253 = vset.pattern.permute.xlu0 0
  %254 = vperm.xlu0 %253, %v176
  %v255 = vpop.permute.xlu0 %254
  %258 = vset.pattern.permute.xlu0 0
  %259 = vperm.xlu0 %258, %v177
  %v260 = vpop.permute.xlu0 %259
  %263 = vset.pattern.permute.xlu0 0
  %264 = vperm.xlu0 %263, %v178
  %v265 = vpop.permute.xlu0 %264
  %268 = vset.pattern.permute.xlu0 0
  %269 = vperm.xlu0 %268, %v179
  %v270 = vpop.permute.xlu0 %269
  %273 = vset.pattern.permute.xlu0 0
  %274 = vperm.xlu0 %273, %v180
  %v275 = vpop.permute.xlu0 %274
  %278 = vset.pattern.permute.xlu0 0
  %279 = vperm.xlu0 %278, %v181
  %v280 = vpop.permute.xlu0 %279
  %283 = vset.pattern.permute.xlu0 0
  %284 = vperm.xlu0 %283, %v182
  %v285 = vpop.permute.xlu0 %284
  %288 = vset.pattern.permute.xlu0 0
  %289 = vperm.xlu0 %288, %v183
  %v290 = vpop.permute.xlu0 %289
  %293 = vset.pattern.permute.xlu0 0
  %294 = vperm.xlu0 %293, %v184
  %v295 = vpop.permute.xlu0 %294
  %298 = vset.pattern.permute.xlu0 0
  %299 = vperm.xlu0 %298, %v185
  %v300 = vpop.permute.xlu0 %299
  %303 = vset.pattern.permute.xlu0 0
  %304 = vperm.xlu0 %303, %v186
  %v305 = vpop.permute.xlu0 %304
  %308 = vset.pattern.permute.xlu0 0
  %309 = vperm.xlu0 %308, %v187
  %v310 = vpop.permute.xlu0 %309
  %313 = vset.pattern.permute.xlu0 0
  %314 = vperm.xlu0 %313, %v188
  %v315 = vpop.permute.xlu0 %314
  %318 = vset.pattern.permute.xlu0 0
  %319 = vperm.xlu0 %318, %v189
  %v320 = vpop.permute.xlu0 %319
  %323 = vset.pattern.permute.xlu0 0
  %324 = vperm.xlu0 %323, %v190
  %v325 = vpop.permute.xlu0 %324
  %328 = vset.pattern.permute.xlu0 0
  %329 = vperm.xlu0 %328, %v191
  %v330 = vpop.permute.xlu0 %329
  %333 = vset.pattern.permute.xlu0 0
  %334 = vperm.xlu0 %333, %v192
  %v335 = vpop.permute.xlu0 %334
  %338 = vset.pattern.permute.xlu0 0
  %339 = vperm.xlu0 %338, %v193
  %v340 = vpop.permute.xlu0 %339
  %343 = vset.pattern.permute.xlu0 0
  %344 = vperm.xlu0 %343, %v194
  %v345 = vpop.permute.xlu0 %344
  %348 = vset.pattern.permute.xlu0 0
  %349 = vperm.xlu0 %348, %v195
  %v350 = vpop.permute.xlu0 %349
  %353 = vset.pattern.permute.xlu0 0
  %354 = vperm.xlu0 %353, %v196
  %v355 = vpop.permute.xlu0 %354
  %358 = vset.pattern.permute.xlu0 0
  %359 = vperm.xlu0 %358, %v197
  %v360 = vpop.permute.xlu0 %359
  %363 = vset.pattern.permute.xlu0 0
  %364 = vperm.xlu0 %363, %v198
  %v365 = vpop.permute.xlu0 %364
  %368 = vset.pattern.permute.xlu0 0
  %369 = vperm.xlu0 %368, %v199
  %v370 = vpop.permute.xlu0 %369
  %373 = vset.pattern.permute.xlu0 0
  %374 = vperm.xlu0 %373, %v200
  %v375 = vpop.permute.xlu0 %374
  %378 = vset.pattern.permute.xlu0 0
  %379 = vperm.xlu0 %378, %v201
  %v380 = vpop.permute.xlu0 %379
  %383 = vset.pattern.permute.xlu0 0
  %384 = vperm.xlu0 %383, %v202
  %v385 = vpop.permute.xlu0 %384
  %388 = vset.pattern.permute.xlu0 0
  %389 = vperm.xlu0 %388, %v203
  %v390 = vpop.permute.xlu0 %389
  %393 = vset.pattern.permute.xlu0 0
  %394 = vperm.xlu0 %393, %v204
  %v395 = vpop.permute.xlu0 %394
  %398 = vset.pattern.permute.xlu0 0
  %399 = vperm.xlu0 %398, %v205
  %v400 = vpop.permute.xlu0 %399
  %403 = vset.pattern.permute.xlu0 0
  %404 = vperm.xlu0 %403, %v206
  %v405 = vpop.permute.xlu0 %404
  %408 = vset.pattern.permute.xlu0 0
  %409 = vperm.xlu0 %408, %v207
  %v410 = vpop.permute.xlu0 %409
  %413 = vset.pattern.permute.xlu0 0
  %414 = vperm.xlu0 %413, %v208
  %v415 = vpop.permute.xlu0 %414
  %418 = vset.pattern.permute.xlu0 0
  %419 = vperm.xlu0 %418, %v209
  %v420 = vpop.permute.xlu0 %419
  %423 = vset.pattern.permute.xlu0 0
  %424 = vperm.xlu0 %423, %v210
  %v425 = vpop.permute.xlu0 %424
  %428 = vset.pattern.permute.xlu0 0
  %429 = vperm.xlu0 %428, %v211
  %v430 = vpop.permute.xlu0 %429
  %433 = vset.pattern.permute.xlu0 0
  %434 = vperm.xlu0 %433, %v212
  %v435 = vpop.permute.xlu0 %434
  %438 = vset.pattern.permute.xlu0 0
  %439 = vperm.xlu0 %438, %v213
  %v440 = vpop.permute.xlu0 %439
  %443 = vset.pattern.permute.xlu0 0
  %444 = vperm.xlu0 %443, %v214
  %v445 = vpop.permute.xlu0 %444
  %448 = vset.pattern.permute.xlu0 0
  %449 = vperm.xlu0 %448, %v215
  %v450 = vpop.permute.xlu0 %449
  %453 = vset.pattern.permute.xlu0 0
  %454 = vperm.xlu0 %453, %v216
  %v455 = vpop.permute.xlu0 %454
  %458 = vset.pattern.permute.xlu0 0
  %459 = vperm.xlu0 %458, %v217
  %v460 = vpop.permute.xlu0 %459
  %463 = vset.pattern.permute.xlu0 0
  %464 = vperm.xlu0 %463, %v218
  %v465 = vpop.permute.xlu0 %464
  %468 = vset.pattern.permute.xlu0 0
  %469 = vperm.xlu0 %468, %v219
  %v470 = vpop.permute.xlu0 %469
  %473 = vset.pattern.permute.xlu0 0
  %474 = vperm.xlu0 %473, %v220
  %v475 = vpop.permute.xlu0 %474
  %478 = vset.pattern.permute.xlu0 0
  %479 = vperm.xlu0 %478, %v221
  %v480 = vpop.permute.xlu0 %479
  %483 = vset.pattern.permute.xlu0 0
  %484 = vperm.xlu0 %483, %v222
  %v485 = vpop.permute.xlu0 %484
  %488 = vset.pattern.permute.xlu0 0
  %489 = vperm.xlu0 %488, %v223
  %v490 = vpop.permute.xlu0 %489
  %493 = vset.pattern.permute.xlu0 0
  %494 = vperm.xlu0 %493, %v224
  %v495 = vpop.permute.xlu0 %494
  %498 = vset.pattern.permute.xlu0 0
  %499 = vperm.xlu0 %498, %v225
  %v500 = vpop.permute.xlu0 %499
  %503 = vset.pattern.permute.xlu0 0
  %504 = vperm.xlu0 %503, %v226
  %v505 = vpop.permute.xlu0 %504
  %508 = vset.pattern.permute.xlu0 0
  %509 = vperm.xlu0 %508, %v227
  %v510 = vpop.permute.xlu0 %509
  %513 = vset.pattern.permute.xlu0 0
  %514 = vperm.xlu0 %513, %v228
  %v515 = vpop.permute.xlu0 %514
  %518 = vset.pattern.permute.xlu0 0
  %519 = vperm.xlu0 %518, %v229
  %v520 = vpop.permute.xlu0 %519
  %523 = vset.pattern.permute.xlu0 0
  %524 = vperm.xlu0 %523, %v230
  %v525 = vpop.permute.xlu0 %524
  %528 = vset.pattern.permute.xlu0 0
  %529 = vperm.xlu0 %528, %v231
  %v530 = vpop.permute.xlu0 %529
  %533 = vset.pattern.permute.xlu0 0
  %534 = vperm.xlu0 %533, %v232
  %v535 = vpop.permute.xlu0 %534
  %538 = vset.pattern.permute.xlu0 0
  %539 = vperm.xlu0 %538, %v233
  %v540 = vpop.permute.xlu0 %539
  %543 = vset.pattern.permute.xlu0 0
  %544 = vperm.xlu0 %543, %v234
  %v545 = vpop.permute.xlu0 %544
  %548 = vset.pattern.permute.xlu0 0
  %549 = vperm.xlu0 %548, %v235
  %v550 = vpop.permute.xlu0 %549
  %553 = vset.pattern.permute.xlu0 0
  %554 = vperm.xlu0 %553, %v236
  %v555 = vpop.permute.xlu0 %554
  %v621 = vunpack.c.l.b16 %v109
  %v622 = vunpack.c.l.b16 %v110
  %v623 = vunpack.c.l.b16 %v111
  %v624 = vunpack.c.l.b16 %v112
  %v625 = vunpack.c.l.b16 %v113
  %v626 = vunpack.c.l.b16 %v114
  %v627 = vunpack.c.l.b16 %v115
  %v628 = vunpack.c.l.b16 %v116
  %v629 = vunpack.c.l.b16 %v117
  %v630 = vunpack.c.l.b16 %v118
  %v631 = vunpack.c.l.b16 %v119
  %v632 = vunpack.c.l.b16 %v120
  %v633 = vunpack.c.l.b16 %v121
  %v634 = vunpack.c.l.b16 %v122
  %v635 = vunpack.c.l.b16 %v123
  %v636 = vunpack.c.l.b16 %v124
  %v637 = vunpack.c.l.b16 %v125
  %v638 = vunpack.c.l.b16 %v126
  %v639 = vunpack.c.l.b16 %v127
  %v640 = vunpack.c.l.b16 %v128
  %v641 = vunpack.c.l.b16 %v129
  %v642 = vunpack.c.l.b16 %v130
  %v643 = vunpack.c.l.b16 %v131
  %v644 = vunpack.c.l.b16 %v132
  %v645 = vunpack.c.l.b16 %v133
  %v646 = vunpack.c.l.b16 %v134
  %v647 = vunpack.c.l.b16 %v135
  %v648 = vunpack.c.l.b16 %v136
  %v649 = vunpack.c.l.b16 %v137
  %v650 = vunpack.c.l.b16 %v138
  %v651 = vunpack.c.l.b16 %v139
  %v652 = vunpack.c.l.b16 %v140
  %v653 = vunpack.c.l.b16 %v141
  %v654 = vunpack.c.l.b16 %v142
  %v655 = vunpack.c.l.b16 %v143
  %v656 = vunpack.c.l.b16 %v144
  %v657 = vunpack.c.l.b16 %v145
  %v658 = vunpack.c.l.b16 %v146
  %v659 = vunpack.c.l.b16 %v147
  %v660 = vunpack.c.l.b16 %v148
  %v661 = vunpack.c.l.b16 %v149
  %v662 = vunpack.c.l.b16 %v150
  %v663 = vunpack.c.l.b16 %v151
  %v664 = vunpack.c.l.b16 %v152
  %v665 = vunpack.c.l.b16 %v153
  %v666 = vunpack.c.l.b16 %v154
  %v667 = vunpack.c.l.b16 %v155
  %v668 = vunpack.c.l.b16 %v156
  %v669 = vunpack.c.l.b16 %v157
  %v670 = vunpack.c.l.b16 %v158
  %v671 = vunpack.c.l.b16 %v159
  %v672 = vunpack.c.l.b16 %v160
  %v673 = vunpack.c.l.b16 %v161
  %v674 = vunpack.c.l.b16 %v162
  %v675 = vunpack.c.l.b16 %v163
  %v676 = vunpack.c.l.b16 %v164
  %v677 = vunpack.c.l.b16 %v165
  %v678 = vunpack.c.l.b16 %v166
  %v679 = vunpack.c.l.b16 %v167
  %v680 = vunpack.c.l.b16 %v168
  %v681 = vunpack.c.l.b16 %v169
  %v682 = vunpack.c.l.b16 %v170
  %v683 = vunpack.c.l.b16 %v171
  %v684 = vunpack.c.l.b16 %v172
  %v685 = vpack.c.b16 %v622, %v621
  %v686 = vpack.c.b16 %v624, %v623
  %v687 = vpack.c.b16 %v626, %v625
  %v688 = vpack.c.b16 %v628, %v627
  %v689 = vpack.c.b16 %v630, %v629
  %v690 = vpack.c.b16 %v632, %v631
  %v691 = vpack.c.b16 %v634, %v633
  %v692 = vpack.c.b16 %v636, %v635
  %v693 = vpack.c.b16 %v638, %v637
  %v694 = vpack.c.b16 %v640, %v639
  %v695 = vpack.c.b16 %v642, %v641
  %v696 = vpack.c.b16 %v644, %v643
  %v697 = vpack.c.b16 %v646, %v645
  %v698 = vpack.c.b16 %v648, %v647
  %v699 = vpack.c.b16 %v650, %v649
  %v700 = vpack.c.b16 %v652, %v651
  %v701 = vpack.c.b16 %v654, %v653
  %v702 = vpack.c.b16 %v656, %v655
  %v703 = vpack.c.b16 %v658, %v657
  %v704 = vpack.c.b16 %v660, %v659
  %v705 = vpack.c.b16 %v662, %v661
  %v706 = vpack.c.b16 %v664, %v663
  %v707 = vpack.c.b16 %v666, %v665
  %v708 = vpack.c.b16 %v668, %v667
  %v709 = vpack.c.b16 %v670, %v669
  %v710 = vpack.c.b16 %v672, %v671
  %v711 = vpack.c.b16 %v674, %v673
  %v712 = vpack.c.b16 %v676, %v675
  %v713 = vpack.c.b16 %v678, %v677
  %v714 = vpack.c.b16 %v680, %v679
  %v715 = vpack.c.b16 %v682, %v681
  %v716 = vpack.c.b16 %v684, %v683
  %vm717 = vcmask 261120
  %v719 = vsel %vm717, %v685, 0
  %v722 = vsel %vm717, %v686, 0
  %v725 = vsel %vm717, %v687, 0
  %v728 = vsel %vm717, %v688, 0
  %v731 = vsel %vm717, %v689, 0
  %v734 = vsel %vm717, %v690, 0
  %v737 = vsel %vm717, %v691, 0
  %v740 = vsel %vm717, %v692, 0
  %v743 = vsel %vm717, %v693, 0
  %v746 = vsel %vm717, %v694, 0
  %v749 = vsel %vm717, %v695, 0
  %v752 = vsel %vm717, %v696, 0
  %v755 = vsel %vm717, %v697, 0
  %v758 = vsel %vm717, %v698, 0
  %v761 = vsel %vm717, %v699, 0
  %v764 = vsel %vm717, %v700, 0
  %v767 = vsel %vm717, %v701, 0
  %v770 = vsel %vm717, %v702, 0
  %v773 = vsel %vm717, %v703, 0
  %v776 = vsel %vm717, %v704, 0
  %v779 = vsel %vm717, %v705, 0
  %v782 = vsel %vm717, %v706, 0
  %v785 = vsel %vm717, %v707, 0
  %v788 = vsel %vm717, %v708, 0
  %v791 = vsel %vm717, %v709, 0
  %v794 = vsel %vm717, %v710, 0
  %v797 = vsel %vm717, %v711, 0
  %v800 = vsel %vm717, %v712, 0
  %v803 = vsel %vm717, %v713, 0
  %v806 = vsel %vm717, %v714, 0
  %v809 = vsel %vm717, %v715, 0
  %v812 = vsel %vm717, %v716, 0
  %814 = vmatprep.subr.bf16.mxu0 0
  %815 = vmatpush1.bf16.msra.mxu0 0
  %816 = vmatprep.subr.bf16.mxu0 0
  %817 = vmatpush1.bf16.msra.mxu0 0
  %818 = vmatprep.subr.bf16.mxu0 0
  %819 = vmatpush1.bf16.msra.mxu0 0
  %820 = vmatprep.subr.bf16.mxu0 0
  %821 = vmatpush1.bf16.msra.mxu0 0
  %822 = vmatprep.subr.bf16.mxu0 0
  %823 = vmatpush1.bf16.msra.mxu0 0
  %824 = vmatprep.subr.bf16.mxu0 0
  %825 = vmatpush1.bf16.msra.mxu0 0
  %826 = vmatprep.subr.bf16.mxu0 0
  %827 = vmatpush1.bf16.msra.mxu0 %v108
  %828 = vmatprep.subr.bf16.mxu0 0
  %829 = vmatpush1.bf16.msra.mxu0 %v107
  %830 = vmatprep.subr.bf16.mxu0 0
  %831 = vmatpush2.bf16.msra.mxu0 0
  %832 = vmatprep.subr.bf16.mxu0 0
  %833 = vmatpush2.bf16.msra.mxu0 0
  %834 = vmatprep.subr.bf16.mxu0 0
  %835 = vmatpush2.bf16.msra.mxu0 0
  %836 = vmatprep.subr.bf16.mxu0 0
  %837 = vmatpush2.bf16.msra.mxu0 0
  %838 = vmatprep.subr.bf16.mxu0 0
  %839 = vmatpush2.bf16.msra.mxu0 0
  %840 = vmatprep.subr.bf16.mxu0 0
  %841 = vmatpush2.bf16.msra.mxu0 0
  %842 = vmatprep.subr.bf16.mxu0 0
  %843 = vmatpush2.bf16.msra.mxu0 0
  %844 = vmatprep.subr.bf16.mxu0 0
  %845 = vmatpush2.bf16.msra.mxu0 0
  %846 = vmatprep.mubr.bf16.mxu0 0
  %847 = vmatmul.mubr.bf16.gmra.mxu0 %v719
  %v848 = vpop.f32.mrf.mxu0
  %v849 = vadd.f32 %v240, %v848
  %v850 = vpop.f32.mrf.mxu0
  %v851 = vpop.f32.mrf.mxu0
  %v852 = vadd.f32 %v245, %v851
  %v853 = vpop.f32.mrf.mxu0
  %854 = vmatprep.mubr.bf16.mxu0 0
  %855 = vmatmul.mubr.bf16.gmra.mxu0 %v722
  %v856 = vpop.f32.mrf.mxu0
  %v857 = vadd.f32 %v250, %v856
  %v858 = vpop.f32.mrf.mxu0
  %v859 = vpop.f32.mrf.mxu0
  %v860 = vadd.f32 %v255, %v859
  %v861 = vpop.f32.mrf.mxu0
  %862 = vmatprep.mubr.bf16.mxu0 0
  %863 = vmatmul.mubr.bf16.gmra.mxu0 %v725
  %v864 = vpop.f32.mrf.mxu0
  %v865 = vadd.f32 %v260, %v864
  %v866 = vpop.f32.mrf.mxu0
  %v867 = vpop.f32.mrf.mxu0
  %v868 = vadd.f32 %v265, %v867
  %v869 = vpop.f32.mrf.mxu0
  %870 = vmatprep.mubr.bf16.mxu0 0
  %871 = vmatmul.mubr.bf16.gmra.mxu0 %v728
  %v872 = vpop.f32.mrf.mxu0
  %v873 = vadd.f32 %v270, %v872
  %v874 = vpop.f32.mrf.mxu0
  %v875 = vpop.f32.mrf.mxu0
  %v876 = vadd.f32 %v275, %v875
  %v877 = vpop.f32.mrf.mxu0
  %878 = vmatprep.mubr.bf16.mxu0 0
  %879 = vmatmul.mubr.bf16.gmra.mxu0 %v731
  %v880 = vpop.f32.mrf.mxu0
  %v881 = vadd.f32 %v280, %v880
  %v882 = vpop.f32.mrf.mxu0
  %v883 = vpop.f32.mrf.mxu0
  %v884 = vadd.f32 %v285, %v883
  %v885 = vpop.f32.mrf.mxu0
  %886 = vmatprep.mubr.bf16.mxu0 0
  %887 = vmatmul.mubr.bf16.gmra.mxu0 %v734
  %v888 = vpop.f32.mrf.mxu0
  %v889 = vadd.f32 %v290, %v888
  %v890 = vpop.f32.mrf.mxu0
  %v891 = vpop.f32.mrf.mxu0
  %v892 = vadd.f32 %v295, %v891
  %v893 = vpop.f32.mrf.mxu0
  %894 = vmatprep.mubr.bf16.mxu0 0
  %895 = vmatmul.mubr.bf16.gmra.mxu0 %v737
  %v896 = vpop.f32.mrf.mxu0
  %v897 = vadd.f32 %v300, %v896
  %v898 = vpop.f32.mrf.mxu0
  %v899 = vpop.f32.mrf.mxu0
  %v900 = vadd.f32 %v305, %v899
  %v901 = vpop.f32.mrf.mxu0
  %902 = vmatprep.mubr.bf16.mxu0 0
  %903 = vmatmul.mubr.bf16.gmra.mxu0 %v740
  %v904 = vpop.f32.mrf.mxu0
  %v905 = vadd.f32 %v310, %v904
  %v906 = vpop.f32.mrf.mxu0
  %v907 = vpop.f32.mrf.mxu0
  %v908 = vadd.f32 %v315, %v907
  %v909 = vpop.f32.mrf.mxu0
  %910 = vmatprep.mubr.bf16.mxu0 0
  %911 = vmatmul.mubr.bf16.gmra.mxu0 %v743
  %v912 = vpop.f32.mrf.mxu0
  %v913 = vadd.f32 %v320, %v912
  %v914 = vpop.f32.mrf.mxu0
  %v915 = vpop.f32.mrf.mxu0
  %v916 = vadd.f32 %v325, %v915
  %v917 = vpop.f32.mrf.mxu0
  %918 = vmatprep.mubr.bf16.mxu0 0
  %919 = vmatmul.mubr.bf16.gmra.mxu0 %v746
  %v920 = vpop.f32.mrf.mxu0
  %v921 = vadd.f32 %v330, %v920
  %v922 = vpop.f32.mrf.mxu0
  %v923 = vpop.f32.mrf.mxu0
  %v924 = vadd.f32 %v335, %v923
  %v925 = vpop.f32.mrf.mxu0
  %926 = vmatprep.mubr.bf16.mxu0 0
  %927 = vmatmul.mubr.bf16.gmra.mxu0 %v749
  %v928 = vpop.f32.mrf.mxu0
  %v929 = vadd.f32 %v340, %v928
  %v930 = vpop.f32.mrf.mxu0
  %v931 = vpop.f32.mrf.mxu0
  %v932 = vadd.f32 %v345, %v931
  %v933 = vpop.f32.mrf.mxu0
  %934 = vmatprep.mubr.bf16.mxu0 0
  %935 = vmatmul.mubr.bf16.gmra.mxu0 %v752
  %v936 = vpop.f32.mrf.mxu0
  %v937 = vadd.f32 %v350, %v936
  %v938 = vpop.f32.mrf.mxu0
  %v939 = vpop.f32.mrf.mxu0
  %v940 = vadd.f32 %v355, %v939
  %v941 = vpop.f32.mrf.mxu0
  %942 = vmatprep.mubr.bf16.mxu0 0
  %943 = vmatmul.mubr.bf16.gmra.mxu0 %v755
  %v944 = vpop.f32.mrf.mxu0
  %v945 = vadd.f32 %v360, %v944
  %v946 = vpop.f32.mrf.mxu0
  %v947 = vpop.f32.mrf.mxu0
  %v948 = vadd.f32 %v365, %v947
  %v949 = vpop.f32.mrf.mxu0
  %950 = vmatprep.mubr.bf16.mxu0 0
  %951 = vmatmul.mubr.bf16.gmra.mxu0 %v758
  %v952 = vpop.f32.mrf.mxu0
  %v953 = vadd.f32 %v370, %v952
  %v954 = vpop.f32.mrf.mxu0
  %v955 = vpop.f32.mrf.mxu0
  %v956 = vadd.f32 %v375, %v955
  %v957 = vpop.f32.mrf.mxu0
  %958 = vmatprep.mubr.bf16.mxu0 0
  %959 = vmatmul.mubr.bf16.gmra.mxu0 %v761
  %v960 = vpop.f32.mrf.mxu0
  %v961 = vadd.f32 %v380, %v960
  %v962 = vpop.f32.mrf.mxu0
  %v963 = vpop.f32.mrf.mxu0
  %v964 = vadd.f32 %v385, %v963
  %v965 = vpop.f32.mrf.mxu0
  %966 = vmatprep.mubr.bf16.mxu0 0
  %967 = vmatmul.mubr.bf16.gmra.mxu0 %v764
  %v968 = vpop.f32.mrf.mxu0
  %v969 = vadd.f32 %v390, %v968
  %v970 = vpop.f32.mrf.mxu0
  %v971 = vpop.f32.mrf.mxu0
  %v972 = vadd.f32 %v395, %v971
  %v973 = vpop.f32.mrf.mxu0
  %974 = vmatprep.mubr.bf16.mxu0 0
  %975 = vmatmul.mubr.bf16.gmra.mxu0 %v767
  %v976 = vpop.f32.mrf.mxu0
  %v977 = vadd.f32 %v400, %v976
  %v978 = vpop.f32.mrf.mxu0
  %v979 = vpop.f32.mrf.mxu0
  %v980 = vadd.f32 %v405, %v979
  %v981 = vpop.f32.mrf.mxu0
  %982 = vmatprep.mubr.bf16.mxu0 0
  %983 = vmatmul.mubr.bf16.gmra.mxu0 %v770
  %v984 = vpop.f32.mrf.mxu0
  %v985 = vadd.f32 %v410, %v984
  %v986 = vpop.f32.mrf.mxu0
  %v987 = vpop.f32.mrf.mxu0
  %v988 = vadd.f32 %v415, %v987
  %v989 = vpop.f32.mrf.mxu0
  %990 = vmatprep.mubr.bf16.mxu0 0
  %991 = vmatmul.mubr.bf16.gmra.mxu0 %v773
  %v992 = vpop.f32.mrf.mxu0
  %v993 = vadd.f32 %v420, %v992
  %v994 = vpop.f32.mrf.mxu0
  %v995 = vpop.f32.mrf.mxu0
  %v996 = vadd.f32 %v425, %v995
  %v997 = vpop.f32.mrf.mxu0
  %998 = vmatprep.mubr.bf16.mxu0 0
  %999 = vmatmul.mubr.bf16.gmra.mxu0 %v776
  %v1000 = vpop.f32.mrf.mxu0
  %v1001 = vadd.f32 %v430, %v1000
  %v1002 = vpop.f32.mrf.mxu0
  %v1003 = vpop.f32.mrf.mxu0
  %v1004 = vadd.f32 %v435, %v1003
  %v1005 = vpop.f32.mrf.mxu0
  %1006 = vmatprep.mubr.bf16.mxu0 0
  %1007 = vmatmul.mubr.bf16.gmra.mxu0 %v779
  %v1008 = vpop.f32.mrf.mxu0
  %v1009 = vadd.f32 %v440, %v1008
  %v1010 = vpop.f32.mrf.mxu0
  %v1011 = vpop.f32.mrf.mxu0
  %v1012 = vadd.f32 %v445, %v1011
  %v1013 = vpop.f32.mrf.mxu0
  %1014 = vmatprep.mubr.bf16.mxu0 0
  %1015 = vmatmul.mubr.bf16.gmra.mxu0 %v782
  %v1016 = vpop.f32.mrf.mxu0
  %v1017 = vadd.f32 %v450, %v1016
  %v1018 = vpop.f32.mrf.mxu0
  %v1019 = vpop.f32.mrf.mxu0
  %v1020 = vadd.f32 %v455, %v1019
  %v1021 = vpop.f32.mrf.mxu0
  %1022 = vmatprep.mubr.bf16.mxu0 0
  %1023 = vmatmul.mubr.bf16.gmra.mxu0 %v785
  %v1024 = vpop.f32.mrf.mxu0
  %v1025 = vadd.f32 %v460, %v1024
  %v1026 = vpop.f32.mrf.mxu0
  %v1027 = vpop.f32.mrf.mxu0
  %v1028 = vadd.f32 %v465, %v1027
  %v1029 = vpop.f32.mrf.mxu0
  %1030 = vmatprep.mubr.bf16.mxu0 0
  %1031 = vmatmul.mubr.bf16.gmra.mxu0 %v788
  %v1032 = vpop.f32.mrf.mxu0
  %v1033 = vadd.f32 %v470, %v1032
  %v1034 = vpop.f32.mrf.mxu0
  %v1035 = vpop.f32.mrf.mxu0
  %v1036 = vadd.f32 %v475, %v1035
  %v1037 = vpop.f32.mrf.mxu0
  %1038 = vmatprep.mubr.bf16.mxu0 0
  %1039 = vmatmul.mubr.bf16.gmra.mxu0 %v791
  %v1040 = vpop.f32.mrf.mxu0
  %v1041 = vadd.f32 %v480, %v1040
  %v1042 = vpop.f32.mrf.mxu0
  %v1043 = vpop.f32.mrf.mxu0
  %v1044 = vadd.f32 %v485, %v1043
  %v1045 = vpop.f32.mrf.mxu0
  %1046 = vmatprep.mubr.bf16.mxu0 0
  %1047 = vmatmul.mubr.bf16.gmra.mxu0 %v794
  %v1048 = vpop.f32.mrf.mxu0
  %v1049 = vadd.f32 %v490, %v1048
  %v1050 = vpop.f32.mrf.mxu0
  %v1051 = vpop.f32.mrf.mxu0
  %v1052 = vadd.f32 %v495, %v1051
  %v1053 = vpop.f32.mrf.mxu0
  %1054 = vmatprep.mubr.bf16.mxu0 0
  %1055 = vmatmul.mubr.bf16.gmra.mxu0 %v797
  %v1056 = vpop.f32.mrf.mxu0
  %v1057 = vadd.f32 %v500, %v1056
  %v1058 = vpop.f32.mrf.mxu0
  %v1059 = vpop.f32.mrf.mxu0
  %v1060 = vadd.f32 %v505, %v1059
  %v1061 = vpop.f32.mrf.mxu0
  %1062 = vmatprep.mubr.bf16.mxu0 0
  %1063 = vmatmul.mubr.bf16.gmra.mxu0 %v800
  %v1064 = vpop.f32.mrf.mxu0
  %v1065 = vadd.f32 %v510, %v1064
  %v1066 = vpop.f32.mrf.mxu0
  %v1067 = vpop.f32.mrf.mxu0
  %v1068 = vadd.f32 %v515, %v1067
  %v1069 = vpop.f32.mrf.mxu0
  %1070 = vmatprep.mubr.bf16.mxu0 0
  %1071 = vmatmul.mubr.bf16.gmra.mxu0 %v803
  %v1072 = vpop.f32.mrf.mxu0
  %v1073 = vadd.f32 %v520, %v1072
  %v1074 = vpop.f32.mrf.mxu0
  %v1075 = vpop.f32.mrf.mxu0
  %v1076 = vadd.f32 %v525, %v1075
  %v1077 = vpop.f32.mrf.mxu0
  %1078 = vmatprep.mubr.bf16.mxu0 0
  %1079 = vmatmul.mubr.bf16.gmra.mxu0 %v806
  %v1080 = vpop.f32.mrf.mxu0
  %v1081 = vadd.f32 %v530, %v1080
  %v1082 = vpop.f32.mrf.mxu0
  %v1083 = vpop.f32.mrf.mxu0
  %v1084 = vadd.f32 %v535, %v1083
  %v1085 = vpop.f32.mrf.mxu0
  %1086 = vmatprep.mubr.bf16.mxu0 0
  %1087 = vmatmul.mubr.bf16.gmra.mxu0 %v809
  %v1088 = vpop.f32.mrf.mxu0
  %v1089 = vadd.f32 %v540, %v1088
  %v1090 = vpop.f32.mrf.mxu0
  %v1091 = vpop.f32.mrf.mxu0
  %v1092 = vadd.f32 %v545, %v1091
  %v1093 = vpop.f32.mrf.mxu0
  %1094 = vmatprep.mubr.bf16.mxu0 0
  %1095 = vmatmul.mubr.bf16.gmra.mxu0 %v812
  %v1096 = vpop.f32.mrf.mxu0
  %v1097 = vadd.f32 %v550, %v1096
  %v1098 = vpop.f32.mrf.mxu0
  %v1099 = vpop.f32.mrf.mxu0
  %v1100 = vadd.f32 %v555, %v1099
  %v1101 = vpop.f32.mrf.mxu0
  %1102 = vdwg.mxu0
  %vm1103 = vcmp.gt.f32.partialorder %v849, 0.0
  %vm1104 = vcmp.gt.f32.partialorder %v852, 0.0
  %vm1105 = vcmp.gt.f32.partialorder %v857, 0.0
  %vm1106 = vcmp.gt.f32.partialorder %v860, 0.0
  %vm1107 = vcmp.gt.f32.partialorder %v865, 0.0
  %vm1108 = vcmp.gt.f32.partialorder %v868, 0.0
  %vm1109 = vcmp.gt.f32.partialorder %v873, 0.0
  %vm1110 = vcmp.gt.f32.partialorder %v876, 0.0
  %vm1111 = vcmp.gt.f32.partialorder %v881, 0.0
  %vm1112 = vcmp.gt.f32.partialorder %v884, 0.0
  %vm1113 = vcmp.gt.f32.partialorder %v889, 0.0
  %vm1114 = vcmp.gt.f32.partialorder %v892, 0.0
  %vm1115 = vcmp.gt.f32.partialorder %v897, 0.0
  %vm1116 = vcmp.gt.f32.partialorder %v900, 0.0
  %vm1117 = vcmp.gt.f32.partialorder %v905, 0.0
  %vm1118 = vcmp.gt.f32.partialorder %v908, 0.0
  %vm1119 = vcmp.gt.f32.partialorder %v913, 0.0
  %vm1120 = vcmp.gt.f32.partialorder %v916, 0.0
  %vm1121 = vcmp.gt.f32.partialorder %v921, 0.0
  %vm1122 = vcmp.gt.f32.partialorder %v924, 0.0
  %vm1123 = vcmp.gt.f32.partialorder %v929, 0.0
  %vm1124 = vcmp.gt.f32.partialorder %v932, 0.0
  %vm1125 = vcmp.gt.f32.partialorder %v937, 0.0
  %vm1126 = vcmp.gt.f32.partialorder %v940, 0.0
  %vm1127 = vcmp.gt.f32.partialorder %v945, 0.0
  %vm1128 = vcmp.gt.f32.partialorder %v948, 0.0
  %vm1129 = vcmp.gt.f32.partialorder %v953, 0.0
  %vm1130 = vcmp.gt.f32.partialorder %v956, 0.0
  %vm1131 = vcmp.gt.f32.partialorder %v961, 0.0
  %vm1132 = vcmp.gt.f32.partialorder %v964, 0.0
  %vm1133 = vcmp.gt.f32.partialorder %v969, 0.0
  %vm1134 = vcmp.gt.f32.partialorder %v972, 0.0
  %vm1135 = vcmp.gt.f32.partialorder %v977, 0.0
  %vm1136 = vcmp.gt.f32.partialorder %v980, 0.0
  %vm1137 = vcmp.gt.f32.partialorder %v985, 0.0
  %vm1138 = vcmp.gt.f32.partialorder %v988, 0.0
  %vm1139 = vcmp.gt.f32.partialorder %v993, 0.0
  %vm1140 = vcmp.gt.f32.partialorder %v996, 0.0
  %vm1141 = vcmp.gt.f32.partialorder %v1001, 0.0
  %vm1142 = vcmp.gt.f32.partialorder %v1004, 0.0
  %vm1143 = vcmp.gt.f32.partialorder %v1009, 0.0
  %vm1144 = vcmp.gt.f32.partialorder %v1012, 0.0
  %vm1145 = vcmp.gt.f32.partialorder %v1017, 0.0
  %vm1146 = vcmp.gt.f32.partialorder %v1020, 0.0
  %vm1147 = vcmp.gt.f32.partialorder %v1025, 0.0
  %vm1148 = vcmp.gt.f32.partialorder %v1028, 0.0
  %vm1149 = vcmp.gt.f32.partialorder %v1033, 0.0
  %vm1150 = vcmp.gt.f32.partialorder %v1036, 0.0
  %vm1151 = vcmp.gt.f32.partialorder %v1041, 0.0
  %vm1152 = vcmp.gt.f32.partialorder %v1044, 0.0
  %vm1153 = vcmp.gt.f32.partialorder %v1049, 0.0
  %vm1154 = vcmp.gt.f32.partialorder %v1052, 0.0
  %vm1155 = vcmp.gt.f32.partialorder %v1057, 0.0
  %vm1156 = vcmp.gt.f32.partialorder %v1060, 0.0
  %vm1157 = vcmp.gt.f32.partialorder %v1065, 0.0
  %vm1158 = vcmp.gt.f32.partialorder %v1068, 0.0
  %vm1159 = vcmp.gt.f32.partialorder %v1073, 0.0
  %vm1160 = vcmp.gt.f32.partialorder %v1076, 0.0
  %vm1161 = vcmp.gt.f32.partialorder %v1081, 0.0
  %vm1162 = vcmp.gt.f32.partialorder %v1084, 0.0
  %vm1163 = vcmp.gt.f32.partialorder %v1089, 0.0
  %vm1164 = vcmp.gt.f32.partialorder %v1092, 0.0
  %vm1165 = vcmp.gt.f32.partialorder %v1097, 0.0
  %vm1166 = vcmp.gt.f32.partialorder %v1100, 0.0
  %v1167 = vld [vmem:[%s5] sm:$0xff]
  %v1168 = vld [vmem:[%s5 + $0x8] sm:$0xff]
  %v1169 = vld [vmem:[%s5 + $0x10] sm:$0xff]
  %v1170 = vld [vmem:[%s5 + $0x18] sm:$0xff]
  %v1171 = vld [vmem:[%s5 + $0x20] sm:$0xff]
  %v1172 = vld [vmem:[%s5 + $0x28] sm:$0xff]
  %v1173 = vld [vmem:[%s5 + $0x30] sm:$0xff]
  %v1174 = vld [vmem:[%s5 + $0x38] sm:$0xff]
  %v1175 = vld [vmem:[%s5 + $0x40] sm:$0xff]
  %v1176 = vld [vmem:[%s5 + $0x48] sm:$0xff]
  %v1177 = vld [vmem:[%s5 + $0x50] sm:$0xff]
  %v1178 = vld [vmem:[%s5 + $0x58] sm:$0xff]
  %v1179 = vld [vmem:[%s5 + $0x60] sm:$0xff]
  %v1180 = vld [vmem:[%s5 + $0x68] sm:$0xff]
  %v1181 = vld [vmem:[%s5 + $0x70] sm:$0xff]
  %v1182 = vld [vmem:[%s5 + $0x78] sm:$0xff]
  %v1183 = vld [vmem:[%s5 + $0x80] sm:$0xff]
  %v1184 = vld [vmem:[%s5 + $0x88] sm:$0xff]
  %v1185 = vld [vmem:[%s5 + $0x90] sm:$0xff]
  %v1186 = vld [vmem:[%s5 + $0x98] sm:$0xff]
  %v1187 = vld [vmem:[%s5 + $0xa0] sm:$0xff]
  %v1188 = vld [vmem:[%s5 + $0xa8] sm:$0xff]
  %v1189 = vld [vmem:[%s5 + $0xb0] sm:$0xff]
  %v1190 = vld [vmem:[%s5 + $0xb8] sm:$0xff]
  %v1191 = vld [vmem:[%s5 + $0xc0] sm:$0xff]
  %v1192 = vld [vmem:[%s5 + $0xc8] sm:$0xff]
  %v1193 = vld [vmem:[%s5 + $0xd0] sm:$0xff]
  %v1194 = vld [vmem:[%s5 + $0xd8] sm:$0xff]
  %v1195 = vld [vmem:[%s5 + $0xe0] sm:$0xff]
  %v1196 = vld [vmem:[%s5 + $0xe8] sm:$0xff]
  %v1197 = vld [vmem:[%s5 + $0xf0] sm:$0xff]
  %v1198 = vld [vmem:[%s5 + $0xf8] sm:$0xff]
  %v1199 = vld [vmem:[%s5 + $0x100] sm:$0xff]
  %v1200 = vld [vmem:[%s5 + $0x108] sm:$0xff]
  %v1201 = vld [vmem:[%s5 + $0x110] sm:$0xff]
  %v1202 = vld [vmem:[%s5 + $0x118] sm:$0xff]
  %v1203 = vld [vmem:[%s5 + $0x120] sm:$0xff]
  %v1204 = vld [vmem:[%s5 + $0x128] sm:$0xff]
  %v1205 = vld [vmem:[%s5 + $0x130] sm:$0xff]
  %v1206 = vld [vmem:[%s5 + $0x138] sm:$0xff]
  %v1207 = vld [vmem:[%s5 + $0x140] sm:$0xff]
  %v1208 = vld [vmem:[%s5 + $0x148] sm:$0xff]
  %v1209 = vld [vmem:[%s5 + $0x150] sm:$0xff]
  %v1210 = vld [vmem:[%s5 + $0x158] sm:$0xff]
  %v1211 = vld [vmem:[%s5 + $0x160] sm:$0xff]
  %v1212 = vld [vmem:[%s5 + $0x168] sm:$0xff]
  %v1213 = vld [vmem:[%s5 + $0x170] sm:$0xff]
  %v1214 = vld [vmem:[%s5 + $0x178] sm:$0xff]
  %v1215 = vld [vmem:[%s5 + $0x180] sm:$0xff]
  %v1216 = vld [vmem:[%s5 + $0x188] sm:$0xff]
  %v1217 = vld [vmem:[%s5 + $0x190] sm:$0xff]
  %v1218 = vld [vmem:[%s5 + $0x198] sm:$0xff]
  %v1219 = vld [vmem:[%s5 + $0x1a0] sm:$0xff]
  %v1220 = vld [vmem:[%s5 + $0x1a8] sm:$0xff]
  %v1221 = vld [vmem:[%s5 + $0x1b0] sm:$0xff]
  %v1222 = vld [vmem:[%s5 + $0x1b8] sm:$0xff]
  %v1223 = vld [vmem:[%s5 + $0x1c0] sm:$0xff]
  %v1224 = vld [vmem:[%s5 + $0x1c8] sm:$0xff]
  %v1225 = vld [vmem:[%s5 + $0x1d0] sm:$0xff]
  %v1226 = vld [vmem:[%s5 + $0x1d8] sm:$0xff]
  %v1227 = vld [vmem:[%s5 + $0x1e0] sm:$0xff]
  %v1228 = vld [vmem:[%s5 + $0x1e8] sm:$0xff]
  %v1229 = vld [vmem:[%s5 + $0x1f0] sm:$0xff]
  %v1230 = vld [vmem:[%s5 + $0x1f8] sm:$0xff]
  %v1231 = vld [vmem:[%s6] sm:$0xff]
  %v1232 = vld [vmem:[%s6 + $0x8] sm:$0xff]
  %v1233 = vld [vmem:[%s6 + $0x10] sm:$0xff]
  %v1234 = vld [vmem:[%s6 + $0x18] sm:$0xff]
  %v1235 = vld [vmem:[%s6 + $0x20] sm:$0xff]
  %v1236 = vld [vmem:[%s6 + $0x28] sm:$0xff]
  %v1237 = vld [vmem:[%s6 + $0x30] sm:$0xff]
  %v1238 = vld [vmem:[%s6 + $0x38] sm:$0xff]
  %v1239 = vld [vmem:[%s6 + $0x40] sm:$0xff]
  %v1240 = vld [vmem:[%s6 + $0x48] sm:$0xff]
  %v1241 = vld [vmem:[%s6 + $0x50] sm:$0xff]
  %v1242 = vld [vmem:[%s6 + $0x58] sm:$0xff]
  %v1243 = vld [vmem:[%s6 + $0x60] sm:$0xff]
  %v1244 = vld [vmem:[%s6 + $0x68] sm:$0xff]
  %v1245 = vld [vmem:[%s6 + $0x70] sm:$0xff]
  %v1246 = vld [vmem:[%s6 + $0x78] sm:$0xff]
  %v1247 = vld [vmem:[%s6 + $0x80] sm:$0xff]
  %v1248 = vld [vmem:[%s6 + $0x88] sm:$0xff]
  %v1249 = vld [vmem:[%s6 + $0x90] sm:$0xff]
  %v1250 = vld [vmem:[%s6 + $0x98] sm:$0xff]
  %v1251 = vld [vmem:[%s6 + $0xa0] sm:$0xff]
  %v1252 = vld [vmem:[%s6 + $0xa8] sm:$0xff]
  %v1253 = vld [vmem:[%s6 + $0xb0] sm:$0xff]
  %v1254 = vld [vmem:[%s6 + $0xb8] sm:$0xff]
  %v1255 = vld [vmem:[%s6 + $0xc0] sm:$0xff]
  %v1256 = vld [vmem:[%s6 + $0xc8] sm:$0xff]
  %v1257 = vld [vmem:[%s6 + $0xd0] sm:$0xff]
  %v1258 = vld [vmem:[%s6 + $0xd8] sm:$0xff]
  %v1259 = vld [vmem:[%s6 + $0xe0] sm:$0xff]
  %v1260 = vld [vmem:[%s6 + $0xe8] sm:$0xff]
  %v1261 = vld [vmem:[%s6 + $0xf0] sm:$0xff]
  %v1262 = vld [vmem:[%s6 + $0xf8] sm:$0xff]
  %v1263 = vld [vmem:[%s6 + $0x100] sm:$0xff]
  %v1264 = vld [vmem:[%s6 + $0x108] sm:$0xff]
  %v1265 = vld [vmem:[%s6 + $0x110] sm:$0xff]
  %v1266 = vld [vmem:[%s6 + $0x118] sm:$0xff]
  %v1267 = vld [vmem:[%s6 + $0x120] sm:$0xff]
  %v1268 = vld [vmem:[%s6 + $0x128] sm:$0xff]
  %v1269 = vld [vmem:[%s6 + $0x130] sm:$0xff]
  %v1270 = vld [vmem:[%s6 + $0x138] sm:$0xff]
  %v1271 = vld [vmem:[%s6 + $0x140] sm:$0xff]
  %v1272 = vld [vmem:[%s6 + $0x148] sm:$0xff]
  %v1273 = vld [vmem:[%s6 + $0x150] sm:$0xff]
  %v1274 = vld [vmem:[%s6 + $0x158] sm:$0xff]
  %v1275 = vld [vmem:[%s6 + $0x160] sm:$0xff]
  %v1276 = vld [vmem:[%s6 + $0x168] sm:$0xff]
  %v1277 = vld [vmem:[%s6 + $0x170] sm:$0xff]
  %v1278 = vld [vmem:[%s6 + $0x178] sm:$0xff]
  %v1279 = vld [vmem:[%s6 + $0x180] sm:$0xff]
  %v1280 = vld [vmem:[%s6 + $0x188] sm:$0xff]
  %v1281 = vld [vmem:[%s6 + $0x190] sm:$0xff]
  %v1282 = vld [vmem:[%s6 + $0x198] sm:$0xff]
  %v1283 = vld [vmem:[%s6 + $0x1a0] sm:$0xff]
  %v1284 = vld [vmem:[%s6 + $0x1a8] sm:$0xff]
  %v1285 = vld [vmem:[%s6 + $0x1b0] sm:$0xff]
  %v1286 = vld [vmem:[%s6 + $0x1b8] sm:$0xff]
  %v1287 = vld [vmem:[%s6 + $0x1c0] sm:$0xff]
  %v1288 = vld [vmem:[%s6 + $0x1c8] sm:$0xff]
  %v1289 = vld [vmem:[%s6 + $0x1d0] sm:$0xff]
  %v1290 = vld [vmem:[%s6 + $0x1d8] sm:$0xff]
  %v1291 = vld [vmem:[%s6 + $0x1e0] sm:$0xff]
  %v1292 = vld [vmem:[%s6 + $0x1e8] sm:$0xff]
  %v1293 = vld [vmem:[%s6 + $0x1f0] sm:$0xff]
  %v1294 = vld [vmem:[%s6 + $0x1f8] sm:$0xff]
  %1296 = vset.pattern.permute.xlu0 0
  %1297 = vperm.xlu0 %1296, %v1167
  %v1298 = vpop.permute.xlu0 %1297
  %1301 = vset.pattern.permute.xlu0 0
  %1302 = vperm.xlu0 %1301, %v1168
  %v1303 = vpop.permute.xlu0 %1302
  %1306 = vset.pattern.permute.xlu0 0
  %1307 = vperm.xlu0 %1306, %v1169
  %v1308 = vpop.permute.xlu0 %1307
  %1311 = vset.pattern.permute.xlu0 0
  %1312 = vperm.xlu0 %1311, %v1170
  %v1313 = vpop.permute.xlu0 %1312
  %1316 = vset.pattern.permute.xlu0 0
  %1317 = vperm.xlu0 %1316, %v1171
  %v1318 = vpop.permute.xlu0 %1317
  %1321 = vset.pattern.permute.xlu0 0
  %1322 = vperm.xlu0 %1321, %v1172
  %v1323 = vpop.permute.xlu0 %1322
  %1326 = vset.pattern.permute.xlu0 0
  %1327 = vperm.xlu0 %1326, %v1173
  %v1328 = vpop.permute.xlu0 %1327
  %1331 = vset.pattern.permute.xlu0 0
  %1332 = vperm.xlu0 %1331, %v1174
  %v1333 = vpop.permute.xlu0 %1332
  %1336 = vset.pattern.permute.xlu0 0
  %1337 = vperm.xlu0 %1336, %v1175
  %v1338 = vpop.permute.xlu0 %1337
  %1341 = vset.pattern.permute.xlu0 0
  %1342 = vperm.xlu0 %1341, %v1176
  %v1343 = vpop.permute.xlu0 %1342
  %1346 = vset.pattern.permute.xlu0 0
  %1347 = vperm.xlu0 %1346, %v1177
  %v1348 = vpop.permute.xlu0 %1347
  %1351 = vset.pattern.permute.xlu0 0
  %1352 = vperm.xlu0 %1351, %v1178
  %v1353 = vpop.permute.xlu0 %1352
  %1356 = vset.pattern.permute.xlu0 0
  %1357 = vperm.xlu0 %1356, %v1179
  %v1358 = vpop.permute.xlu0 %1357
  %1361 = vset.pattern.permute.xlu0 0
  %1362 = vperm.xlu0 %1361, %v1180
  %v1363 = vpop.permute.xlu0 %1362
  %1366 = vset.pattern.permute.xlu0 0
  %1367 = vperm.xlu0 %1366, %v1181
  %v1368 = vpop.permute.xlu0 %1367
  %1371 = vset.pattern.permute.xlu0 0
  %1372 = vperm.xlu0 %1371, %v1182
  %v1373 = vpop.permute.xlu0 %1372
  %1376 = vset.pattern.permute.xlu0 0
  %1377 = vperm.xlu0 %1376, %v1183
  %v1378 = vpop.permute.xlu0 %1377
  %1381 = vset.pattern.permute.xlu0 0
  %1382 = vperm.xlu0 %1381, %v1184
  %v1383 = vpop.permute.xlu0 %1382
  %1386 = vset.pattern.permute.xlu0 0
  %1387 = vperm.xlu0 %1386, %v1185
  %v1388 = vpop.permute.xlu0 %1387
  %1391 = vset.pattern.permute.xlu0 0
  %1392 = vperm.xlu0 %1391, %v1186
  %v1393 = vpop.permute.xlu0 %1392
  %1396 = vset.pattern.permute.xlu0 0
  %1397 = vperm.xlu0 %1396, %v1187
  %v1398 = vpop.permute.xlu0 %1397
  %1401 = vset.pattern.permute.xlu0 0
  %1402 = vperm.xlu0 %1401, %v1188
  %v1403 = vpop.permute.xlu0 %1402
  %1406 = vset.pattern.permute.xlu0 0
  %1407 = vperm.xlu0 %1406, %v1189
  %v1408 = vpop.permute.xlu0 %1407
  %1411 = vset.pattern.permute.xlu0 0
  %1412 = vperm.xlu0 %1411, %v1190
  %v1413 = vpop.permute.xlu0 %1412
  %1416 = vset.pattern.permute.xlu0 0
  %1417 = vperm.xlu0 %1416, %v1191
  %v1418 = vpop.permute.xlu0 %1417
  %1421 = vset.pattern.permute.xlu0 0
  %1422 = vperm.xlu0 %1421, %v1192
  %v1423 = vpop.permute.xlu0 %1422
  %1426 = vset.pattern.permute.xlu0 0
  %1427 = vperm.xlu0 %1426, %v1193
  %v1428 = vpop.permute.xlu0 %1427
  %1431 = vset.pattern.permute.xlu0 0
  %1432 = vperm.xlu0 %1431, %v1194
  %v1433 = vpop.permute.xlu0 %1432
  %1436 = vset.pattern.permute.xlu0 0
  %1437 = vperm.xlu0 %1436, %v1195
  %v1438 = vpop.permute.xlu0 %1437
  %1441 = vset.pattern.permute.xlu0 0
  %1442 = vperm.xlu0 %1441, %v1196
  %v1443 = vpop.permute.xlu0 %1442
  %1446 = vset.pattern.permute.xlu0 0
  %1447 = vperm.xlu0 %1446, %v1197
  %v1448 = vpop.permute.xlu0 %1447
  %1451 = vset.pattern.permute.xlu0 0
  %1452 = vperm.xlu0 %1451, %v1198
  %v1453 = vpop.permute.xlu0 %1452
  %1456 = vset.pattern.permute.xlu0 0
  %1457 = vperm.xlu0 %1456, %v1199
  %v1458 = vpop.permute.xlu0 %1457
  %1461 = vset.pattern.permute.xlu0 0
  %1462 = vperm.xlu0 %1461, %v1200
  %v1463 = vpop.permute.xlu0 %1462
  %1466 = vset.pattern.permute.xlu0 0
  %1467 = vperm.xlu0 %1466, %v1201
  %v1468 = vpop.permute.xlu0 %1467
  %1471 = vset.pattern.permute.xlu0 0
  %1472 = vperm.xlu0 %1471, %v1202
  %v1473 = vpop.permute.xlu0 %1472
  %1476 = vset.pattern.permute.xlu0 0
  %1477 = vperm.xlu0 %1476, %v1203
  %v1478 = vpop.permute.xlu0 %1477
  %1481 = vset.pattern.permute.xlu0 0
  %1482 = vperm.xlu0 %1481, %v1204
  %v1483 = vpop.permute.xlu0 %1482
  %1486 = vset.pattern.permute.xlu0 0
  %1487 = vperm.xlu0 %1486, %v1205
  %v1488 = vpop.permute.xlu0 %1487
  %1491 = vset.pattern.permute.xlu0 0
  %1492 = vperm.xlu0 %1491, %v1206
  %v1493 = vpop.permute.xlu0 %1492
  %1496 = vset.pattern.permute.xlu0 0
  %1497 = vperm.xlu0 %1496, %v1207
  %v1498 = vpop.permute.xlu0 %1497
  %1501 = vset.pattern.permute.xlu0 0
  %1502 = vperm.xlu0 %1501, %v1208
  %v1503 = vpop.permute.xlu0 %1502
  %1506 = vset.pattern.permute.xlu0 0
  %1507 = vperm.xlu0 %1506, %v1209
  %v1508 = vpop.permute.xlu0 %1507
  %1511 = vset.pattern.permute.xlu0 0
  %1512 = vperm.xlu0 %1511, %v1210
  %v1513 = vpop.permute.xlu0 %1512
  %1516 = vset.pattern.permute.xlu0 0
  %1517 = vperm.xlu0 %1516, %v1211
  %v1518 = vpop.permute.xlu0 %1517
  %1521 = vset.pattern.permute.xlu0 0
  %1522 = vperm.xlu0 %1521, %v1212
  %v1523 = vpop.permute.xlu0 %1522
  %1526 = vset.pattern.permute.xlu0 0
  %1527 = vperm.xlu0 %1526, %v1213
  %v1528 = vpop.permute.xlu0 %1527
  %1531 = vset.pattern.permute.xlu0 0
  %1532 = vperm.xlu0 %1531, %v1214
  %v1533 = vpop.permute.xlu0 %1532
  %1536 = vset.pattern.permute.xlu0 0
  %1537 = vperm.xlu0 %1536, %v1215
  %v1538 = vpop.permute.xlu0 %1537
  %1541 = vset.pattern.permute.xlu0 0
  %1542 = vperm.xlu0 %1541, %v1216
  %v1543 = vpop.permute.xlu0 %1542
  %1546 = vset.pattern.permute.xlu0 0
  %1547 = vperm.xlu0 %1546, %v1217
  %v1548 = vpop.permute.xlu0 %1547
  %1551 = vset.pattern.permute.xlu0 0
  %1552 = vperm.xlu0 %1551, %v1218
  %v1553 = vpop.permute.xlu0 %1552
  %1556 = vset.pattern.permute.xlu0 0
  %1557 = vperm.xlu0 %1556, %v1219
  %v1558 = vpop.permute.xlu0 %1557
  %1561 = vset.pattern.permute.xlu0 0
  %1562 = vperm.xlu0 %1561, %v1220
  %v1563 = vpop.permute.xlu0 %1562
  %1566 = vset.pattern.permute.xlu0 0
  %1567 = vperm.xlu0 %1566, %v1221
  %v1568 = vpop.permute.xlu0 %1567
  %1571 = vset.pattern.permute.xlu0 0
  %1572 = vperm.xlu0 %1571, %v1222
  %v1573 = vpop.permute.xlu0 %1572
  %1576 = vset.pattern.permute.xlu0 0
  %1577 = vperm.xlu0 %1576, %v1223
  %v1578 = vpop.permute.xlu0 %1577
  %1581 = vset.pattern.permute.xlu0 0
  %1582 = vperm.xlu0 %1581, %v1224
  %v1583 = vpop.permute.xlu0 %1582
  %1586 = vset.pattern.permute.xlu0 0
  %1587 = vperm.xlu0 %1586, %v1225
  %v1588 = vpop.permute.xlu0 %1587
  %1591 = vset.pattern.permute.xlu0 0
  %1592 = vperm.xlu0 %1591, %v1226
  %v1593 = vpop.permute.xlu0 %1592
  %1596 = vset.pattern.permute.xlu0 0
  %1597 = vperm.xlu0 %1596, %v1227
  %v1598 = vpop.permute.xlu0 %1597
  %1601 = vset.pattern.permute.xlu0 0
  %1602 = vperm.xlu0 %1601, %v1228
  %v1603 = vpop.permute.xlu0 %1602
  %1606 = vset.pattern.permute.xlu0 0
  %1607 = vperm.xlu0 %1606, %v1229
  %v1608 = vpop.permute.xlu0 %1607
  %1611 = vset.pattern.permute.xlu0 0
  %1612 = vperm.xlu0 %1611, %v1230
  %v1613 = vpop.permute.xlu0 %1612
  %1616 = vset.pattern.permute.xlu0 0
  %1617 = vperm.xlu0 %1616, %v1231
  %v1618 = vpop.permute.xlu0 %1617
  %1621 = vset.pattern.permute.xlu0 0
  %1622 = vperm.xlu0 %1621, %v1232
  %v1623 = vpop.permute.xlu0 %1622
  %1626 = vset.pattern.permute.xlu0 0
  %1627 = vperm.xlu0 %1626, %v1233
  %v1628 = vpop.permute.xlu0 %1627
  %1631 = vset.pattern.permute.xlu0 0
  %1632 = vperm.xlu0 %1631, %v1234
  %v1633 = vpop.permute.xlu0 %1632
  %1636 = vset.pattern.permute.xlu0 0
  %1637 = vperm.xlu0 %1636, %v1235
  %v1638 = vpop.permute.xlu0 %1637
  %1641 = vset.pattern.permute.xlu0 0
  %1642 = vperm.xlu0 %1641, %v1236
  %v1643 = vpop.permute.xlu0 %1642
  %1646 = vset.pattern.permute.xlu0 0
  %1647 = vperm.xlu0 %1646, %v1237
  %v1648 = vpop.permute.xlu0 %1647
  %1651 = vset.pattern.permute.xlu0 0
  %1652 = vperm.xlu0 %1651, %v1238
  %v1653 = vpop.permute.xlu0 %1652
  %1656 = vset.pattern.permute.xlu0 0
  %1657 = vperm.xlu0 %1656, %v1239
  %v1658 = vpop.permute.xlu0 %1657
  %1661 = vset.pattern.permute.xlu0 0
  %1662 = vperm.xlu0 %1661, %v1240
  %v1663 = vpop.permute.xlu0 %1662
  %1666 = vset.pattern.permute.xlu0 0
  %1667 = vperm.xlu0 %1666, %v1241
  %v1668 = vpop.permute.xlu0 %1667
  %1671 = vset.pattern.permute.xlu0 0
  %1672 = vperm.xlu0 %1671, %v1242
  %v1673 = vpop.permute.xlu0 %1672
  %1676 = vset.pattern.permute.xlu0 0
  %1677 = vperm.xlu0 %1676, %v1243
  %v1678 = vpop.permute.xlu0 %1677
  %1681 = vset.pattern.permute.xlu0 0
  %1682 = vperm.xlu0 %1681, %v1244
  %v1683 = vpop.permute.xlu0 %1682
  %1686 = vset.pattern.permute.xlu0 0
  %1687 = vperm.xlu0 %1686, %v1245
  %v1688 = vpop.permute.xlu0 %1687
  %1691 = vset.pattern.permute.xlu0 0
  %1692 = vperm.xlu0 %1691, %v1246
  %v1693 = vpop.permute.xlu0 %1692
  %1696 = vset.pattern.permute.xlu0 0
  %1697 = vperm.xlu0 %1696, %v1247
  %v1698 = vpop.permute.xlu0 %1697
  %1701 = vset.pattern.permute.xlu0 0
  %1702 = vperm.xlu0 %1701, %v1248
  %v1703 = vpop.permute.xlu0 %1702
  %1706 = vset.pattern.permute.xlu0 0
  %1707 = vperm.xlu0 %1706, %v1249
  %v1708 = vpop.permute.xlu0 %1707
  %1711 = vset.pattern.permute.xlu0 0
  %1712 = vperm.xlu0 %1711, %v1250
  %v1713 = vpop.permute.xlu0 %1712
  %1716 = vset.pattern.permute.xlu0 0
  %1717 = vperm.xlu0 %1716, %v1251
  %v1718 = vpop.permute.xlu0 %1717
  %1721 = vset.pattern.permute.xlu0 0
  %1722 = vperm.xlu0 %1721, %v1252
  %v1723 = vpop.permute.xlu0 %1722
  %1726 = vset.pattern.permute.xlu0 0
  %1727 = vperm.xlu0 %1726, %v1253
  %v1728 = vpop.permute.xlu0 %1727
  %1731 = vset.pattern.permute.xlu0 0
  %1732 = vperm.xlu0 %1731, %v1254
  %v1733 = vpop.permute.xlu0 %1732
  %1736 = vset.pattern.permute.xlu0 0
  %1737 = vperm.xlu0 %1736, %v1255
  %v1738 = vpop.permute.xlu0 %1737
  %1741 = vset.pattern.permute.xlu0 0
  %1742 = vperm.xlu0 %1741, %v1256
  %v1743 = vpop.permute.xlu0 %1742
  %1746 = vset.pattern.permute.xlu0 0
  %1747 = vperm.xlu0 %1746, %v1257
  %v1748 = vpop.permute.xlu0 %1747
  %1751 = vset.pattern.permute.xlu0 0
  %1752 = vperm.xlu0 %1751, %v1258
  %v1753 = vpop.permute.xlu0 %1752
  %1756 = vset.pattern.permute.xlu0 0
  %1757 = vperm.xlu0 %1756, %v1259
  %v1758 = vpop.permute.xlu0 %1757
  %1761 = vset.pattern.permute.xlu0 0
  %1762 = vperm.xlu0 %1761, %v1260
  %v1763 = vpop.permute.xlu0 %1762
  %1766 = vset.pattern.permute.xlu0 0
  %1767 = vperm.xlu0 %1766, %v1261
  %v1768 = vpop.permute.xlu0 %1767
  %1771 = vset.pattern.permute.xlu0 0
  %1772 = vperm.xlu0 %1771, %v1262
  %v1773 = vpop.permute.xlu0 %1772
  %1776 = vset.pattern.permute.xlu0 0
  %1777 = vperm.xlu0 %1776, %v1263
  %v1778 = vpop.permute.xlu0 %1777
  %1781 = vset.pattern.permute.xlu0 0
  %1782 = vperm.xlu0 %1781, %v1264
  %v1783 = vpop.permute.xlu0 %1782
  %1786 = vset.pattern.permute.xlu0 0
  %1787 = vperm.xlu0 %1786, %v1265
  %v1788 = vpop.permute.xlu0 %1787
  %1791 = vset.pattern.permute.xlu0 0
  %1792 = vperm.xlu0 %1791, %v1266
  %v1793 = vpop.permute.xlu0 %1792
  %1796 = vset.pattern.permute.xlu0 0
  %1797 = vperm.xlu0 %1796, %v1267
  %v1798 = vpop.permute.xlu0 %1797
  %1801 = vset.pattern.permute.xlu0 0
  %1802 = vperm.xlu0 %1801, %v1268
  %v1803 = vpop.permute.xlu0 %1802
  %1806 = vset.pattern.permute.xlu0 0
  %1807 = vperm.xlu0 %1806, %v1269
  %v1808 = vpop.permute.xlu0 %1807
  %1811 = vset.pattern.permute.xlu0 0
  %1812 = vperm.xlu0 %1811, %v1270
  %v1813 = vpop.permute.xlu0 %1812
  %1816 = vset.pattern.permute.xlu0 0
  %1817 = vperm.xlu0 %1816, %v1271
  %v1818 = vpop.permute.xlu0 %1817
  %1821 = vset.pattern.permute.xlu0 0
  %1822 = vperm.xlu0 %1821, %v1272
  %v1823 = vpop.permute.xlu0 %1822
  %1826 = vset.pattern.permute.xlu0 0
  %1827 = vperm.xlu0 %1826, %v1273
  %v1828 = vpop.permute.xlu0 %1827
  %1831 = vset.pattern.permute.xlu0 0
  %1832 = vperm.xlu0 %1831, %v1274
  %v1833 = vpop.permute.xlu0 %1832
  %1836 = vset.pattern.permute.xlu0 0
  %1837 = vperm.xlu0 %1836, %v1275
  %v1838 = vpop.permute.xlu0 %1837
  %1841 = vset.pattern.permute.xlu0 0
  %1842 = vperm.xlu0 %1841, %v1276
  %v1843 = vpop.permute.xlu0 %1842
  %1846 = vset.pattern.permute.xlu0 0
  %1847 = vperm.xlu0 %1846, %v1277
  %v1848 = vpop.permute.xlu0 %1847
  %1851 = vset.pattern.permute.xlu0 0
  %1852 = vperm.xlu0 %1851, %v1278
  %v1853 = vpop.permute.xlu0 %1852
  %1856 = vset.pattern.permute.xlu0 0
  %1857 = vperm.xlu0 %1856, %v1279
  %v1858 = vpop.permute.xlu0 %1857
  %1861 = vset.pattern.permute.xlu0 0
  %1862 = vperm.xlu0 %1861, %v1280
  %v1863 = vpop.permute.xlu0 %1862
  %1866 = vset.pattern.permute.xlu0 0
  %1867 = vperm.xlu0 %1866, %v1281
  %v1868 = vpop.permute.xlu0 %1867
  %1871 = vset.pattern.permute.xlu0 0
  %1872 = vperm.xlu0 %1871, %v1282
  %v1873 = vpop.permute.xlu0 %1872
  %1876 = vset.pattern.permute.xlu0 0
  %1877 = vperm.xlu0 %1876, %v1283
  %v1878 = vpop.permute.xlu0 %1877
  %1881 = vset.pattern.permute.xlu0 0
  %1882 = vperm.xlu0 %1881, %v1284
  %v1883 = vpop.permute.xlu0 %1882
  %1886 = vset.pattern.permute.xlu0 0
  %1887 = vperm.xlu0 %1886, %v1285
  %v1888 = vpop.permute.xlu0 %1887
  %1891 = vset.pattern.permute.xlu0 0
  %1892 = vperm.xlu0 %1891, %v1286
  %v1893 = vpop.permute.xlu0 %1892
  %1896 = vset.pattern.permute.xlu0 0
  %1897 = vperm.xlu0 %1896, %v1287
  %v1898 = vpop.permute.xlu0 %1897
  %1901 = vset.pattern.permute.xlu0 0
  %1902 = vperm.xlu0 %1901, %v1288
  %v1903 = vpop.permute.xlu0 %1902
  %1906 = vset.pattern.permute.xlu0 0
  %1907 = vperm.xlu0 %1906, %v1289
  %v1908 = vpop.permute.xlu0 %1907
  %1911 = vset.pattern.permute.xlu0 0
  %1912 = vperm.xlu0 %1911, %v1290
  %v1913 = vpop.permute.xlu0 %1912
  %1916 = vset.pattern.permute.xlu0 0
  %1917 = vperm.xlu0 %1916, %v1291
  %v1918 = vpop.permute.xlu0 %1917
  %1921 = vset.pattern.permute.xlu0 0
  %1922 = vperm.xlu0 %1921, %v1292
  %v1923 = vpop.permute.xlu0 %1922
  %1926 = vset.pattern.permute.xlu0 0
  %1927 = vperm.xlu0 %1926, %v1293
  %v1928 = vpop.permute.xlu0 %1927
  %1931 = vset.pattern.permute.xlu0 0
  %1932 = vperm.xlu0 %1931, %v1294
  %v1933 = vpop.permute.xlu0 %1932
  %v1935 = vsel %vm1103, %v1298, %v1618
  %v1936 = vsel %vm1104, %v1303, %v1623
  %v1937 = vsel %vm1105, %v1308, %v1628
  %v1938 = vsel %vm1106, %v1313, %v1633
  %v1939 = vsel %vm1107, %v1318, %v1638
  %v1940 = vsel %vm1108, %v1323, %v1643
  %v1941 = vsel %vm1109, %v1328, %v1648
  %v1942 = vsel %vm1110, %v1333, %v1653
  %v1943 = vsel %vm1111, %v1338, %v1658
  %v1944 = vsel %vm1112, %v1343, %v1663
  %v1945 = vsel %vm1113, %v1348, %v1668
  %v1946 = vsel %vm1114, %v1353, %v1673
  %v1947 = vsel %vm1115, %v1358, %v1678
  %v1948 = vsel %vm1116, %v1363, %v1683
  %v1949 = vsel %vm1117, %v1368, %v1688
  %v1950 = vsel %vm1118, %v1373, %v1693
  %v1951 = vsel %vm1119, %v1378, %v1698
  %v1952 = vsel %vm1120, %v1383, %v1703
  %v1953 = vsel %vm1121, %v1388, %v1708
  %v1954 = vsel %vm1122, %v1393, %v1713
  %v1955 = vsel %vm1123, %v1398, %v1718
  %v1956 = vsel %vm1124, %v1403, %v1723
  %v1957 = vsel %vm1125, %v1408, %v1728
  %v1958 = vsel %vm1126, %v1413, %v1733
  %v1959 = vsel %vm1127, %v1418, %v1738
  %v1960 = vsel %vm1128, %v1423, %v1743
  %v1961 = vsel %vm1129, %v1428, %v1748
  %v1962 = vsel %vm1130, %v1433, %v1753
  %v1963 = vsel %vm1131, %v1438, %v1758
  %v1964 = vsel %vm1132, %v1443, %v1763
  %v1965 = vsel %vm1133, %v1448, %v1768
  %v1966 = vsel %vm1134, %v1453, %v1773
  %v1967 = vsel %vm1135, %v1458, %v1778
  %v1968 = vsel %vm1136, %v1463, %v1783
  %v1969 = vsel %vm1137, %v1468, %v1788
  %v1970 = vsel %vm1138, %v1473, %v1793
  %v1971 = vsel %vm1139, %v1478, %v1798
  %v1972 = vsel %vm1140, %v1483, %v1803
  %v1973 = vsel %vm1141, %v1488, %v1808
  %v1974 = vsel %vm1142, %v1493, %v1813
  %v1975 = vsel %vm1143, %v1498, %v1818
  %v1976 = vsel %vm1144, %v1503, %v1823
  %v1977 = vsel %vm1145, %v1508, %v1828
  %v1978 = vsel %vm1146, %v1513, %v1833
  %v1979 = vsel %vm1147, %v1518, %v1838
  %v1980 = vsel %vm1148, %v1523, %v1843
  %v1981 = vsel %vm1149, %v1528, %v1848
  %v1982 = vsel %vm1150, %v1533, %v1853
  %v1983 = vsel %vm1151, %v1538, %v1858
  %v1984 = vsel %vm1152, %v1543, %v1863
  %v1985 = vsel %vm1153, %v1548, %v1868
  %v1986 = vsel %vm1154, %v1553, %v1873
  %v1987 = vsel %vm1155, %v1558, %v1878
  %v1988 = vsel %vm1156, %v1563, %v1883
  %v1989 = vsel %vm1157, %v1568, %v1888
  %v1990 = vsel %vm1158, %v1573, %v1893
  %v1991 = vsel %vm1159, %v1578, %v1898
  %v1992 = vsel %vm1160, %v1583, %v1903
  %v1993 = vsel %vm1161, %v1588, %v1908
  %v1994 = vsel %vm1162, %v1593, %v1913
  %v1995 = vsel %vm1163, %v1598, %v1918
  %v1996 = vsel %vm1164, %v1603, %v1923
  %v1997 = vsel %vm1165, %v1608, %v1928
  %v1998 = vsel %vm1166, %v1613, %v1933
  %v1999 = vmul.f32 %v849, %v1935
  %v2000 = vmul.f32 %v852, %v1936
  %v2001 = vmul.f32 %v857, %v1937
  %v2002 = vmul.f32 %v860, %v1938
  %v2003 = vmul.f32 %v865, %v1939
  %v2004 = vmul.f32 %v868, %v1940
  %v2005 = vmul.f32 %v873, %v1941
  %v2006 = vmul.f32 %v876, %v1942
  %v2007 = vmul.f32 %v881, %v1943
  %v2008 = vmul.f32 %v884, %v1944
  %v2009 = vmul.f32 %v889, %v1945
  %v2010 = vmul.f32 %v892, %v1946
  %v2011 = vmul.f32 %v897, %v1947
  %v2012 = vmul.f32 %v900, %v1948
  %v2013 = vmul.f32 %v905, %v1949
  %v2014 = vmul.f32 %v908, %v1950
  %v2015 = vmul.f32 %v913, %v1951
  %v2016 = vmul.f32 %v916, %v1952
  %v2017 = vmul.f32 %v921, %v1953
  %v2018 = vmul.f32 %v924, %v1954
  %v2019 = vmul.f32 %v929, %v1955
  %v2020 = vmul.f32 %v932, %v1956
  %v2021 = vmul.f32 %v937, %v1957
  %v2022 = vmul.f32 %v940, %v1958
  %v2023 = vmul.f32 %v945, %v1959
  %v2024 = vmul.f32 %v948, %v1960
  %v2025 = vmul.f32 %v953, %v1961
  %v2026 = vmul.f32 %v956, %v1962
  %v2027 = vmul.f32 %v961, %v1963
  %v2028 = vmul.f32 %v964, %v1964
  %v2029 = vmul.f32 %v969, %v1965
  %v2030 = vmul.f32 %v972, %v1966
  %v2031 = vmul.f32 %v977, %v1967
  %v2032 = vmul.f32 %v980, %v1968
  %v2033 = vmul.f32 %v985, %v1969
  %v2034 = vmul.f32 %v988, %v1970
  %v2035 = vmul.f32 %v993, %v1971
  %v2036 = vmul.f32 %v996, %v1972
  %v2037 = vmul.f32 %v1001, %v1973
  %v2038 = vmul.f32 %v1004, %v1974
  %v2039 = vmul.f32 %v1009, %v1975
  %v2040 = vmul.f32 %v1012, %v1976
  %v2041 = vmul.f32 %v1017, %v1977
  %v2042 = vmul.f32 %v1020, %v1978
  %v2043 = vmul.f32 %v1025, %v1979
  %v2044 = vmul.f32 %v1028, %v1980
  %v2045 = vmul.f32 %v1033, %v1981
  %v2046 = vmul.f32 %v1036, %v1982
  %v2047 = vmul.f32 %v1041, %v1983
  %v2048 = vmul.f32 %v1044, %v1984
  %v2049 = vmul.f32 %v1049, %v1985
  %v2050 = vmul.f32 %v1052, %v1986
  %v2051 = vmul.f32 %v1057, %v1987
  %v2052 = vmul.f32 %v1060, %v1988
  %v2053 = vmul.f32 %v1065, %v1989
  %v2054 = vmul.f32 %v1068, %v1990
  %v2055 = vmul.f32 %v1073, %v1991
  %v2056 = vmul.f32 %v1076, %v1992
  %v2057 = vmul.f32 %v1081, %v1993
  %v2058 = vmul.f32 %v1084, %v1994
  %v2059 = vmul.f32 %v1089, %v1995
  %v2060 = vmul.f32 %v1092, %v1996
  %v2061 = vmul.f32 %v1097, %v1997
  %v2062 = vmul.f32 %v1100, %v1998
  %v2063 = vadd.f32 %v1999, %v2000
  %v2064 = vadd.f32 %v2063, %v2001
  %v2065 = vadd.f32 %v2064, %v2002
  %v2066 = vadd.f32 %v2065, %v2003
  %v2067 = vadd.f32 %v2066, %v2004
  %v2068 = vadd.f32 %v2067, %v2005
  %v2069 = vadd.f32 %v2068, %v2006
  %v2070 = vadd.f32 %v2069, %v2007
  %v2071 = vadd.f32 %v2070, %v2008
  %v2072 = vadd.f32 %v2071, %v2009
  %v2073 = vadd.f32 %v2072, %v2010
  %v2074 = vadd.f32 %v2073, %v2011
  %v2075 = vadd.f32 %v2074, %v2012
  %v2076 = vadd.f32 %v2075, %v2013
  %v2077 = vadd.f32 %v2076, %v2014
  %v2078 = vadd.f32 %v2077, %v2015
  %v2079 = vadd.f32 %v2078, %v2016
  %v2080 = vadd.f32 %v2079, %v2017
  %v2081 = vadd.f32 %v2080, %v2018
  %v2082 = vadd.f32 %v2081, %v2019
  %v2083 = vadd.f32 %v2082, %v2020
  %v2084 = vadd.f32 %v2083, %v2021
  %v2085 = vadd.f32 %v2084, %v2022
  %v2086 = vadd.f32 %v2085, %v2023
  %v2087 = vadd.f32 %v2086, %v2024
  %v2088 = vadd.f32 %v2087, %v2025
  %v2089 = vadd.f32 %v2088, %v2026
  %v2090 = vadd.f32 %v2089, %v2027
  %v2091 = vadd.f32 %v2090, %v2028
  %v2092 = vadd.f32 %v2091, %v2029
  %v2093 = vadd.f32 %v2092, %v2030
  %v2094 = vadd.f32 %v2093, %v2031
  %v2095 = vadd.f32 %v2094, %v2032
  %v2096 = vadd.f32 %v2095, %v2033
  %v2097 = vadd.f32 %v2096, %v2034
  %v2098 = vadd.f32 %v2097, %v2035
  %v2099 = vadd.f32 %v2098, %v2036
  %v2100 = vadd.f32 %v2099, %v2037
  %v2101 = vadd.f32 %v2100, %v2038
  %v2102 = vadd.f32 %v2101, %v2039
  %v2103 = vadd.f32 %v2102, %v2040
  %v2104 = vadd.f32 %v2103, %v2041
  %v2105 = vadd.f32 %v2104, %v2042
  %v2106 = vadd.f32 %v2105, %v2043
  %v2107 = vadd.f32 %v2106, %v2044
  %v2108 = vadd.f32 %v2107, %v2045
  %v2109 = vadd.f32 %v2108, %v2046
  %v2110 = vadd.f32 %v2109, %v2047
  %v2111 = vadd.f32 %v2110, %v2048
  %v2112 = vadd.f32 %v2111, %v2049
  %v2113 = vadd.f32 %v2112, %v2050
  %v2114 = vadd.f32 %v2113, %v2051
  %v2115 = vadd.f32 %v2114, %v2052
  %v2116 = vadd.f32 %v2115, %v2053
  %v2117 = vadd.f32 %v2116, %v2054
  %v2118 = vadd.f32 %v2117, %v2055
  %v2119 = vadd.f32 %v2118, %v2056
  %v2120 = vadd.f32 %v2119, %v2057
  %v2121 = vadd.f32 %v2120, %v2058
  %v2122 = vadd.f32 %v2121, %v2059
  %v2123 = vadd.f32 %v2122, %v2060
  %v2124 = vadd.f32 %v2123, %v2061
  %v2125 = vadd.f32 %v2124, %v2062
  %v2126 = vrot.slane %v2125, 4
  %v2127 = vadd.f32 %v2125, %v2126
  %v2128 = vrot.slane %v2127, 2
  %v2129 = vadd.f32 %v2127, %v2128
  %v2130 = vrot.slane %v2129, 1
  %v2131 = vadd.f32 %v2129, %v2130
  %v2132 = vadd.f32 %v2131, 0.0
  %v2133 = vld [vmem:[%s3 + $0x100] sm:$0xf]
  %v2134 = vld [vmem:[%s3 + $0x104] sm:$0xf]
  %v2135 = vld [vmem:[%s3 + $0x108] sm:$0xf]
  %v2136 = vld [vmem:[%s3 + $0x10c] sm:$0xf]
  %v2137 = vld [vmem:[%s3 + $0x110] sm:$0xf]
  %v2138 = vld [vmem:[%s3 + $0x114] sm:$0xf]
  %v2139 = vld [vmem:[%s3 + $0x118] sm:$0xf]
  %v2140 = vld [vmem:[%s3 + $0x11c] sm:$0xf]
  %v2141 = vld [vmem:[%s3 + $0x120] sm:$0xf]
  %v2142 = vld [vmem:[%s3 + $0x124] sm:$0xf]
  %v2143 = vld [vmem:[%s3 + $0x128] sm:$0xf]
  %v2144 = vld [vmem:[%s3 + $0x12c] sm:$0xf]
  %v2145 = vld [vmem:[%s3 + $0x130] sm:$0xf]
  %v2146 = vld [vmem:[%s3 + $0x134] sm:$0xf]
  %v2147 = vld [vmem:[%s3 + $0x138] sm:$0xf]
  %v2148 = vld [vmem:[%s3 + $0x13c] sm:$0xf]
  %v2149 = vld [vmem:[%s3 + $0x140] sm:$0xf]
  %v2150 = vld [vmem:[%s3 + $0x144] sm:$0xf]
  %v2151 = vld [vmem:[%s3 + $0x148] sm:$0xf]
  %v2152 = vld [vmem:[%s3 + $0x14c] sm:$0xf]
  %v2153 = vld [vmem:[%s3 + $0x150] sm:$0xf]
  %v2154 = vld [vmem:[%s3 + $0x154] sm:$0xf]
  %v2155 = vld [vmem:[%s3 + $0x158] sm:$0xf]
  %v2156 = vld [vmem:[%s3 + $0x15c] sm:$0xf]
  %v2157 = vld [vmem:[%s3 + $0x160] sm:$0xf]
  %v2158 = vld [vmem:[%s3 + $0x164] sm:$0xf]
  %v2159 = vld [vmem:[%s3 + $0x168] sm:$0xf]
  %v2160 = vld [vmem:[%s3 + $0x16c] sm:$0xf]
  %v2161 = vld [vmem:[%s3 + $0x170] sm:$0xf]
  %v2162 = vld [vmem:[%s3 + $0x174] sm:$0xf]
  %v2163 = vld [vmem:[%s3 + $0x178] sm:$0xf]
  %v2164 = vld [vmem:[%s3 + $0x17c] sm:$0xf]
  %v2165 = vld [vmem:[%s3 + $0x180] sm:$0xf]
  %v2166 = vld [vmem:[%s3 + $0x184] sm:$0xf]
  %v2167 = vld [vmem:[%s3 + $0x188] sm:$0xf]
  %v2168 = vld [vmem:[%s3 + $0x18c] sm:$0xf]
  %v2169 = vld [vmem:[%s3 + $0x190] sm:$0xf]
  %v2170 = vld [vmem:[%s3 + $0x194] sm:$0xf]
  %v2171 = vld [vmem:[%s3 + $0x198] sm:$0xf]
  %v2172 = vld [vmem:[%s3 + $0x19c] sm:$0xf]
  %v2173 = vld [vmem:[%s3 + $0x1a0] sm:$0xf]
  %v2174 = vld [vmem:[%s3 + $0x1a4] sm:$0xf]
  %v2175 = vld [vmem:[%s3 + $0x1a8] sm:$0xf]
  %v2176 = vld [vmem:[%s3 + $0x1ac] sm:$0xf]
  %v2177 = vld [vmem:[%s3 + $0x1b0] sm:$0xf]
  %v2178 = vld [vmem:[%s3 + $0x1b4] sm:$0xf]
  %v2179 = vld [vmem:[%s3 + $0x1b8] sm:$0xf]
  %v2180 = vld [vmem:[%s3 + $0x1bc] sm:$0xf]
  %v2181 = vld [vmem:[%s3 + $0x1c0] sm:$0xf]
  %v2182 = vld [vmem:[%s3 + $0x1c4] sm:$0xf]
  %v2183 = vld [vmem:[%s3 + $0x1c8] sm:$0xf]
  %v2184 = vld [vmem:[%s3 + $0x1cc] sm:$0xf]
  %v2185 = vld [vmem:[%s3 + $0x1d0] sm:$0xf]
  %v2186 = vld [vmem:[%s3 + $0x1d4] sm:$0xf]
  %v2187 = vld [vmem:[%s3 + $0x1d8] sm:$0xf]
  %v2188 = vld [vmem:[%s3 + $0x1dc] sm:$0xf]
  %v2189 = vld [vmem:[%s3 + $0x1e0] sm:$0xf]
  %v2190 = vld [vmem:[%s3 + $0x1e4] sm:$0xf]
  %v2191 = vld [vmem:[%s3 + $0x1e8] sm:$0xf]
  %v2192 = vld [vmem:[%s3 + $0x1ec] sm:$0xf]
  %v2193 = vld [vmem:[%s3 + $0x1f0] sm:$0xf]
  %v2194 = vld [vmem:[%s3 + $0x1f4] sm:$0xf]
  %v2195 = vld [vmem:[%s3 + $0x1f8] sm:$0xf]
  %v2196 = vld [vmem:[%s3 + $0x1fc] sm:$0xf]
  %v2197 = vld [vmem:[%s4 + $0x200] sm:$0xff]
  %v2198 = vld [vmem:[%s4 + $0x208] sm:$0xff]
  %v2199 = vld [vmem:[%s4 + $0x210] sm:$0xff]
  %v2200 = vld [vmem:[%s4 + $0x218] sm:$0xff]
  %v2201 = vld [vmem:[%s4 + $0x220] sm:$0xff]
  %v2202 = vld [vmem:[%s4 + $0x228] sm:$0xff]
  %v2203 = vld [vmem:[%s4 + $0x230] sm:$0xff]
  %v2204 = vld [vmem:[%s4 + $0x238] sm:$0xff]
  %v2205 = vld [vmem:[%s4 + $0x240] sm:$0xff]
  %v2206 = vld [vmem:[%s4 + $0x248] sm:$0xff]
  %v2207 = vld [vmem:[%s4 + $0x250] sm:$0xff]
  %v2208 = vld [vmem:[%s4 + $0x258] sm:$0xff]
  %v2209 = vld [vmem:[%s4 + $0x260] sm:$0xff]
  %v2210 = vld [vmem:[%s4 + $0x268] sm:$0xff]
  %v2211 = vld [vmem:[%s4 + $0x270] sm:$0xff]
  %v2212 = vld [vmem:[%s4 + $0x278] sm:$0xff]
  %v2213 = vld [vmem:[%s4 + $0x280] sm:$0xff]
  %v2214 = vld [vmem:[%s4 + $0x288] sm:$0xff]
  %v2215 = vld [vmem:[%s4 + $0x290] sm:$0xff]
  %v2216 = vld [vmem:[%s4 + $0x298] sm:$0xff]
  %v2217 = vld [vmem:[%s4 + $0x2a0] sm:$0xff]
  %v2218 = vld [vmem:[%s4 + $0x2a8] sm:$0xff]
  %v2219 = vld [vmem:[%s4 + $0x2b0] sm:$0xff]
  %v2220 = vld [vmem:[%s4 + $0x2b8] sm:$0xff]
  %v2221 = vld [vmem:[%s4 + $0x2c0] sm:$0xff]
  %v2222 = vld [vmem:[%s4 + $0x2c8] sm:$0xff]
  %v2223 = vld [vmem:[%s4 + $0x2d0] sm:$0xff]
  %v2224 = vld [vmem:[%s4 + $0x2d8] sm:$0xff]
  %v2225 = vld [vmem:[%s4 + $0x2e0] sm:$0xff]
  %v2226 = vld [vmem:[%s4 + $0x2e8] sm:$0xff]
  %v2227 = vld [vmem:[%s4 + $0x2f0] sm:$0xff]
  %v2228 = vld [vmem:[%s4 + $0x2f8] sm:$0xff]
  %v2229 = vld [vmem:[%s4 + $0x300] sm:$0xff]
  %v2230 = vld [vmem:[%s4 + $0x308] sm:$0xff]
  %v2231 = vld [vmem:[%s4 + $0x310] sm:$0xff]
  %v2232 = vld [vmem:[%s4 + $0x318] sm:$0xff]
  %v2233 = vld [vmem:[%s4 + $0x320] sm:$0xff]
  %v2234 = vld [vmem:[%s4 + $0x328] sm:$0xff]
  %v2235 = vld [vmem:[%s4 + $0x330] sm:$0xff]
  %v2236 = vld [vmem:[%s4 + $0x338] sm:$0xff]
  %v2237 = vld [vmem:[%s4 + $0x340] sm:$0xff]
  %v2238 = vld [vmem:[%s4 + $0x348] sm:$0xff]
  %v2239 = vld [vmem:[%s4 + $0x350] sm:$0xff]
  %v2240 = vld [vmem:[%s4 + $0x358] sm:$0xff]
  %v2241 = vld [vmem:[%s4 + $0x360] sm:$0xff]
  %v2242 = vld [vmem:[%s4 + $0x368] sm:$0xff]
  %v2243 = vld [vmem:[%s4 + $0x370] sm:$0xff]
  %v2244 = vld [vmem:[%s4 + $0x378] sm:$0xff]
  %v2245 = vld [vmem:[%s4 + $0x380] sm:$0xff]
  %v2246 = vld [vmem:[%s4 + $0x388] sm:$0xff]
  %v2247 = vld [vmem:[%s4 + $0x390] sm:$0xff]
  %v2248 = vld [vmem:[%s4 + $0x398] sm:$0xff]
  %v2249 = vld [vmem:[%s4 + $0x3a0] sm:$0xff]
  %v2250 = vld [vmem:[%s4 + $0x3a8] sm:$0xff]
  %v2251 = vld [vmem:[%s4 + $0x3b0] sm:$0xff]
  %v2252 = vld [vmem:[%s4 + $0x3b8] sm:$0xff]
  %v2253 = vld [vmem:[%s4 + $0x3c0] sm:$0xff]
  %v2254 = vld [vmem:[%s4 + $0x3c8] sm:$0xff]
  %v2255 = vld [vmem:[%s4 + $0x3d0] sm:$0xff]
  %v2256 = vld [vmem:[%s4 + $0x3d8] sm:$0xff]
  %v2257 = vld [vmem:[%s4 + $0x3e0] sm:$0xff]
  %v2258 = vld [vmem:[%s4 + $0x3e8] sm:$0xff]
  %v2259 = vld [vmem:[%s4 + $0x3f0] sm:$0xff]
  %v2260 = vld [vmem:[%s4 + $0x3f8] sm:$0xff]
  %2262 = vset.pattern.permute.xlu0 0
  %2263 = vperm.xlu0 %2262, %v2197
  %v2264 = vpop.permute.xlu0 %2263
  %2267 = vset.pattern.permute.xlu0 0
  %2268 = vperm.xlu0 %2267, %v2198
  %v2269 = vpop.permute.xlu0 %2268
  %2272 = vset.pattern.permute.xlu0 0
  %2273 = vperm.xlu0 %2272, %v2199
  %v2274 = vpop.permute.xlu0 %2273
  %2277 = vset.pattern.permute.xlu0 0
  %2278 = vperm.xlu0 %2277, %v2200
  %v2279 = vpop.permute.xlu0 %2278
  %2282 = vset.pattern.permute.xlu0 0
  %2283 = vperm.xlu0 %2282, %v2201
  %v2284 = vpop.permute.xlu0 %2283
  %2287 = vset.pattern.permute.xlu0 0
  %2288 = vperm.xlu0 %2287, %v2202
  %v2289 = vpop.permute.xlu0 %2288
  %2292 = vset.pattern.permute.xlu0 0
  %2293 = vperm.xlu0 %2292, %v2203
  %v2294 = vpop.permute.xlu0 %2293
  %2297 = vset.pattern.permute.xlu0 0
  %2298 = vperm.xlu0 %2297, %v2204
  %v2299 = vpop.permute.xlu0 %2298
  %2302 = vset.pattern.permute.xlu0 0
  %2303 = vperm.xlu0 %2302, %v2205
  %v2304 = vpop.permute.xlu0 %2303
  %2307 = vset.pattern.permute.xlu0 0
  %2308 = vperm.xlu0 %2307, %v2206
  %v2309 = vpop.permute.xlu0 %2308
  %2312 = vset.pattern.permute.xlu0 0
  %2313 = vperm.xlu0 %2312, %v2207
  %v2314 = vpop.permute.xlu0 %2313
  %2317 = vset.pattern.permute.xlu0 0
  %2318 = vperm.xlu0 %2317, %v2208
  %v2319 = vpop.permute.xlu0 %2318
  %2322 = vset.pattern.permute.xlu0 0
  %2323 = vperm.xlu0 %2322, %v2209
  %v2324 = vpop.permute.xlu0 %2323
  %2327 = vset.pattern.permute.xlu0 0
  %2328 = vperm.xlu0 %2327, %v2210
  %v2329 = vpop.permute.xlu0 %2328
  %2332 = vset.pattern.permute.xlu0 0
  %2333 = vperm.xlu0 %2332, %v2211
  %v2334 = vpop.permute.xlu0 %2333
  %2337 = vset.pattern.permute.xlu0 0
  %2338 = vperm.xlu0 %2337, %v2212
  %v2339 = vpop.permute.xlu0 %2338
  %2342 = vset.pattern.permute.xlu0 0
  %2343 = vperm.xlu0 %2342, %v2213
  %v2344 = vpop.permute.xlu0 %2343
  %2347 = vset.pattern.permute.xlu0 0
  %2348 = vperm.xlu0 %2347, %v2214
  %v2349 = vpop.permute.xlu0 %2348
  %2352 = vset.pattern.permute.xlu0 0
  %2353 = vperm.xlu0 %2352, %v2215
  %v2354 = vpop.permute.xlu0 %2353
  %2357 = vset.pattern.permute.xlu0 0
  %2358 = vperm.xlu0 %2357, %v2216
  %v2359 = vpop.permute.xlu0 %2358
  %2362 = vset.pattern.permute.xlu0 0
  %2363 = vperm.xlu0 %2362, %v2217
  %v2364 = vpop.permute.xlu0 %2363
  %2367 = vset.pattern.permute.xlu0 0
  %2368 = vperm.xlu0 %2367, %v2218
  %v2369 = vpop.permute.xlu0 %2368
  %2372 = vset.pattern.permute.xlu0 0
  %2373 = vperm.xlu0 %2372, %v2219
  %v2374 = vpop.permute.xlu0 %2373
  %2377 = vset.pattern.permute.xlu0 0
  %2378 = vperm.xlu0 %2377, %v2220
  %v2379 = vpop.permute.xlu0 %2378
  %2382 = vset.pattern.permute.xlu0 0
  %2383 = vperm.xlu0 %2382, %v2221
  %v2384 = vpop.permute.xlu0 %2383
  %2387 = vset.pattern.permute.xlu0 0
  %2388 = vperm.xlu0 %2387, %v2222
  %v2389 = vpop.permute.xlu0 %2388
  %2392 = vset.pattern.permute.xlu0 0
  %2393 = vperm.xlu0 %2392, %v2223
  %v2394 = vpop.permute.xlu0 %2393
  %2397 = vset.pattern.permute.xlu0 0
  %2398 = vperm.xlu0 %2397, %v2224
  %v2399 = vpop.permute.xlu0 %2398
  %2402 = vset.pattern.permute.xlu0 0
  %2403 = vperm.xlu0 %2402, %v2225
  %v2404 = vpop.permute.xlu0 %2403
  %2407 = vset.pattern.permute.xlu0 0
  %2408 = vperm.xlu0 %2407, %v2226
  %v2409 = vpop.permute.xlu0 %2408
  %2412 = vset.pattern.permute.xlu0 0
  %2413 = vperm.xlu0 %2412, %v2227
  %v2414 = vpop.permute.xlu0 %2413
  %2417 = vset.pattern.permute.xlu0 0
  %2418 = vperm.xlu0 %2417, %v2228
  %v2419 = vpop.permute.xlu0 %2418
  %2422 = vset.pattern.permute.xlu0 0
  %2423 = vperm.xlu0 %2422, %v2229
  %v2424 = vpop.permute.xlu0 %2423
  %2427 = vset.pattern.permute.xlu0 0
  %2428 = vperm.xlu0 %2427, %v2230
  %v2429 = vpop.permute.xlu0 %2428
  %2432 = vset.pattern.permute.xlu0 0
  %2433 = vperm.xlu0 %2432, %v2231
  %v2434 = vpop.permute.xlu0 %2433
  %2437 = vset.pattern.permute.xlu0 0
  %2438 = vperm.xlu0 %2437, %v2232
  %v2439 = vpop.permute.xlu0 %2438
  %2442 = vset.pattern.permute.xlu0 0
  %2443 = vperm.xlu0 %2442, %v2233
  %v2444 = vpop.permute.xlu0 %2443
  %2447 = vset.pattern.permute.xlu0 0
  %2448 = vperm.xlu0 %2447, %v2234
  %v2449 = vpop.permute.xlu0 %2448
  %2452 = vset.pattern.permute.xlu0 0
  %2453 = vperm.xlu0 %2452, %v2235
  %v2454 = vpop.permute.xlu0 %2453
  %2457 = vset.pattern.permute.xlu0 0
  %2458 = vperm.xlu0 %2457, %v2236
  %v2459 = vpop.permute.xlu0 %2458
  %2462 = vset.pattern.permute.xlu0 0
  %2463 = vperm.xlu0 %2462, %v2237
  %v2464 = vpop.permute.xlu0 %2463
  %2467 = vset.pattern.permute.xlu0 0
  %2468 = vperm.xlu0 %2467, %v2238
  %v2469 = vpop.permute.xlu0 %2468
  %2472 = vset.pattern.permute.xlu0 0
  %2473 = vperm.xlu0 %2472, %v2239
  %v2474 = vpop.permute.xlu0 %2473
  %2477 = vset.pattern.permute.xlu0 0
  %2478 = vperm.xlu0 %2477, %v2240
  %v2479 = vpop.permute.xlu0 %2478
  %2482 = vset.pattern.permute.xlu0 0
  %2483 = vperm.xlu0 %2482, %v2241
  %v2484 = vpop.permute.xlu0 %2483
  %2487 = vset.pattern.permute.xlu0 0
  %2488 = vperm.xlu0 %2487, %v2242
  %v2489 = vpop.permute.xlu0 %2488
  %2492 = vset.pattern.permute.xlu0 0
  %2493 = vperm.xlu0 %2492, %v2243
  %v2494 = vpop.permute.xlu0 %2493
  %2497 = vset.pattern.permute.xlu0 0
  %2498 = vperm.xlu0 %2497, %v2244
  %v2499 = vpop.permute.xlu0 %2498
  %2502 = vset.pattern.permute.xlu0 0
  %2503 = vperm.xlu0 %2502, %v2245
  %v2504 = vpop.permute.xlu0 %2503
  %2507 = vset.pattern.permute.xlu0 0
  %2508 = vperm.xlu0 %2507, %v2246
  %v2509 = vpop.permute.xlu0 %2508
  %2512 = vset.pattern.permute.xlu0 0
  %2513 = vperm.xlu0 %2512, %v2247
  %v2514 = vpop.permute.xlu0 %2513
  %2517 = vset.pattern.permute.xlu0 0
  %2518 = vperm.xlu0 %2517, %v2248
  %v2519 = vpop.permute.xlu0 %2518
  %2522 = vset.pattern.permute.xlu0 0
  %2523 = vperm.xlu0 %2522, %v2249
  %v2524 = vpop.permute.xlu0 %2523
  %2527 = vset.pattern.permute.xlu0 0
  %2528 = vperm.xlu0 %2527, %v2250
  %v2529 = vpop.permute.xlu0 %2528
  %2532 = vset.pattern.permute.xlu0 0
  %2533 = vperm.xlu0 %2532, %v2251
  %v2534 = vpop.permute.xlu0 %2533
  %2537 = vset.pattern.permute.xlu0 0
  %2538 = vperm.xlu0 %2537, %v2252
  %v2539 = vpop.permute.xlu0 %2538
  %2542 = vset.pattern.permute.xlu0 0
  %2543 = vperm.xlu0 %2542, %v2253
  %v2544 = vpop.permute.xlu0 %2543
  %2547 = vset.pattern.permute.xlu0 0
  %2548 = vperm.xlu0 %2547, %v2254
  %v2549 = vpop.permute.xlu0 %2548
  %2552 = vset.pattern.permute.xlu0 0
  %2553 = vperm.xlu0 %2552, %v2255
  %v2554 = vpop.permute.xlu0 %2553
  %2557 = vset.pattern.permute.xlu0 0
  %2558 = vperm.xlu0 %2557, %v2256
  %v2559 = vpop.permute.xlu0 %2558
  %2562 = vset.pattern.permute.xlu0 0
  %2563 = vperm.xlu0 %2562, %v2257
  %v2564 = vpop.permute.xlu0 %2563
  %2567 = vset.pattern.permute.xlu0 0
  %2568 = vperm.xlu0 %2567, %v2258
  %v2569 = vpop.permute.xlu0 %2568
  %2572 = vset.pattern.permute.xlu0 0
  %2573 = vperm.xlu0 %2572, %v2259
  %v2574 = vpop.permute.xlu0 %2573
  %2577 = vset.pattern.permute.xlu0 0
  %2578 = vperm.xlu0 %2577, %v2260
  %v2579 = vpop.permute.xlu0 %2578
  %v2645 = vunpack.c.l.b16 %v2133
  %v2646 = vunpack.c.l.b16 %v2134
  %v2647 = vunpack.c.l.b16 %v2135
  %v2648 = vunpack.c.l.b16 %v2136
  %v2649 = vunpack.c.l.b16 %v2137
  %v2650 = vunpack.c.l.b16 %v2138
  %v2651 = vunpack.c.l.b16 %v2139
  %v2652 = vunpack.c.l.b16 %v2140
  %v2653 = vunpack.c.l.b16 %v2141
  %v2654 = vunpack.c.l.b16 %v2142
  %v2655 = vunpack.c.l.b16 %v2143
  %v2656 = vunpack.c.l.b16 %v2144
  %v2657 = vunpack.c.l.b16 %v2145
  %v2658 = vunpack.c.l.b16 %v2146
  %v2659 = vunpack.c.l.b16 %v2147
  %v2660 = vunpack.c.l.b16 %v2148
  %v2661 = vunpack.c.l.b16 %v2149
  %v2662 = vunpack.c.l.b16 %v2150
  %v2663 = vunpack.c.l.b16 %v2151
  %v2664 = vunpack.c.l.b16 %v2152
  %v2665 = vunpack.c.l.b16 %v2153
  %v2666 = vunpack.c.l.b16 %v2154
  %v2667 = vunpack.c.l.b16 %v2155
  %v2668 = vunpack.c.l.b16 %v2156
  %v2669 = vunpack.c.l.b16 %v2157
  %v2670 = vunpack.c.l.b16 %v2158
  %v2671 = vunpack.c.l.b16 %v2159
  %v2672 = vunpack.c.l.b16 %v2160
  %v2673 = vunpack.c.l.b16 %v2161
  %v2674 = vunpack.c.l.b16 %v2162
  %v2675 = vunpack.c.l.b16 %v2163
  %v2676 = vunpack.c.l.b16 %v2164
  %v2677 = vunpack.c.l.b16 %v2165
  %v2678 = vunpack.c.l.b16 %v2166
  %v2679 = vunpack.c.l.b16 %v2167
  %v2680 = vunpack.c.l.b16 %v2168
  %v2681 = vunpack.c.l.b16 %v2169
  %v2682 = vunpack.c.l.b16 %v2170
  %v2683 = vunpack.c.l.b16 %v2171
  %v2684 = vunpack.c.l.b16 %v2172
  %v2685 = vunpack.c.l.b16 %v2173
  %v2686 = vunpack.c.l.b16 %v2174
  %v2687 = vunpack.c.l.b16 %v2175
  %v2688 = vunpack.c.l.b16 %v2176
  %v2689 = vunpack.c.l.b16 %v2177
  %v2690 = vunpack.c.l.b16 %v2178
  %v2691 = vunpack.c.l.b16 %v2179
  %v2692 = vunpack.c.l.b16 %v2180
  %v2693 = vunpack.c.l.b16 %v2181
  %v2694 = vunpack.c.l.b16 %v2182
  %v2695 = vunpack.c.l.b16 %v2183
  %v2696 = vunpack.c.l.b16 %v2184
  %v2697 = vunpack.c.l.b16 %v2185
  %v2698 = vunpack.c.l.b16 %v2186
  %v2699 = vunpack.c.l.b16 %v2187
  %v2700 = vunpack.c.l.b16 %v2188
  %v2701 = vunpack.c.l.b16 %v2189
  %v2702 = vunpack.c.l.b16 %v2190
  %v2703 = vunpack.c.l.b16 %v2191
  %v2704 = vunpack.c.l.b16 %v2192
  %v2705 = vunpack.c.l.b16 %v2193
  %v2706 = vunpack.c.l.b16 %v2194
  %v2707 = vunpack.c.l.b16 %v2195
  %v2708 = vunpack.c.l.b16 %v2196
  %v2709 = vpack.c.b16 %v2646, %v2645
  %v2710 = vpack.c.b16 %v2648, %v2647
  %v2711 = vpack.c.b16 %v2650, %v2649
  %v2712 = vpack.c.b16 %v2652, %v2651
  %v2713 = vpack.c.b16 %v2654, %v2653
  %v2714 = vpack.c.b16 %v2656, %v2655
  %v2715 = vpack.c.b16 %v2658, %v2657
  %v2716 = vpack.c.b16 %v2660, %v2659
  %v2717 = vpack.c.b16 %v2662, %v2661
  %v2718 = vpack.c.b16 %v2664, %v2663
  %v2719 = vpack.c.b16 %v2666, %v2665
  %v2720 = vpack.c.b16 %v2668, %v2667
  %v2721 = vpack.c.b16 %v2670, %v2669
  %v2722 = vpack.c.b16 %v2672, %v2671
  %v2723 = vpack.c.b16 %v2674, %v2673
  %v2724 = vpack.c.b16 %v2676, %v2675
  %v2725 = vpack.c.b16 %v2678, %v2677
  %v2726 = vpack.c.b16 %v2680, %v2679
  %v2727 = vpack.c.b16 %v2682, %v2681
  %v2728 = vpack.c.b16 %v2684, %v2683
  %v2729 = vpack.c.b16 %v2686, %v2685
  %v2730 = vpack.c.b16 %v2688, %v2687
  %v2731 = vpack.c.b16 %v2690, %v2689
  %v2732 = vpack.c.b16 %v2692, %v2691
  %v2733 = vpack.c.b16 %v2694, %v2693
  %v2734 = vpack.c.b16 %v2696, %v2695
  %v2735 = vpack.c.b16 %v2698, %v2697
  %v2736 = vpack.c.b16 %v2700, %v2699
  %v2737 = vpack.c.b16 %v2702, %v2701
  %v2738 = vpack.c.b16 %v2704, %v2703
  %v2739 = vpack.c.b16 %v2706, %v2705
  %v2740 = vpack.c.b16 %v2708, %v2707
  %v2742 = vsel %vm717, %v2709, 0
  %v2745 = vsel %vm717, %v2710, 0
  %v2748 = vsel %vm717, %v2711, 0
  %v2751 = vsel %vm717, %v2712, 0
  %v2754 = vsel %vm717, %v2713, 0
  %v2757 = vsel %vm717, %v2714, 0
  %v2760 = vsel %vm717, %v2715, 0
  %v2763 = vsel %vm717, %v2716, 0
  %v2766 = vsel %vm717, %v2717, 0
  %v2769 = vsel %vm717, %v2718, 0
  %v2772 = vsel %vm717, %v2719, 0
  %v2775 = vsel %vm717, %v2720, 0
  %v2778 = vsel %vm717, %v2721, 0
  %v2781 = vsel %vm717, %v2722, 0
  %v2784 = vsel %vm717, %v2723, 0
  %v2787 = vsel %vm717, %v2724, 0
  %v2790 = vsel %vm717, %v2725, 0
  %v2793 = vsel %vm717, %v2726, 0
  %v2796 = vsel %vm717, %v2727, 0
  %v2799 = vsel %vm717, %v2728, 0
  %v2802 = vsel %vm717, %v2729, 0
  %v2805 = vsel %vm717, %v2730, 0
  %v2808 = vsel %vm717, %v2731, 0
  %v2811 = vsel %vm717, %v2732, 0
  %v2814 = vsel %vm717, %v2733, 0
  %v2817 = vsel %vm717, %v2734, 0
  %v2820 = vsel %vm717, %v2735, 0
  %v2823 = vsel %vm717, %v2736, 0
  %v2826 = vsel %vm717, %v2737, 0
  %v2829 = vsel %vm717, %v2738, 0
  %v2832 = vsel %vm717, %v2739, 0
  %v2835 = vsel %vm717, %v2740, 0
  %2837 = vmatprep.subr.bf16.mxu0 0
  %2838 = vmatpush1.bf16.msra.mxu0 0
  %2839 = vmatprep.subr.bf16.mxu0 0
  %2840 = vmatpush1.bf16.msra.mxu0 0
  %2841 = vmatprep.subr.bf16.mxu0 0
  %2842 = vmatpush1.bf16.msra.mxu0 0
  %2843 = vmatprep.subr.bf16.mxu0 0
  %2844 = vmatpush1.bf16.msra.mxu0 0
  %2845 = vmatprep.subr.bf16.mxu0 0
  %2846 = vmatpush1.bf16.msra.mxu0 0
  %2847 = vmatprep.subr.bf16.mxu0 0
  %2848 = vmatpush1.bf16.msra.mxu0 0
  %2849 = vmatprep.subr.bf16.mxu0 0
  %2850 = vmatpush1.bf16.msra.mxu0 %v108
  %2851 = vmatprep.subr.bf16.mxu0 0
  %2852 = vmatpush1.bf16.msra.mxu0 %v107
  %2853 = vmatprep.subr.bf16.mxu0 0
  %2854 = vmatpush2.bf16.msra.mxu0 0
  %2855 = vmatprep.subr.bf16.mxu0 0
  %2856 = vmatpush2.bf16.msra.mxu0 0
  %2857 = vmatprep.subr.bf16.mxu0 0
  %2858 = vmatpush2.bf16.msra.mxu0 0
  %2859 = vmatprep.subr.bf16.mxu0 0
  %2860 = vmatpush2.bf16.msra.mxu0 0
  %2861 = vmatprep.subr.bf16.mxu0 0
  %2862 = vmatpush2.bf16.msra.mxu0 0
  %2863 = vmatprep.subr.bf16.mxu0 0
  %2864 = vmatpush2.bf16.msra.mxu0 0
  %2865 = vmatprep.subr.bf16.mxu0 0
  %2866 = vmatpush2.bf16.msra.mxu0 0
  %2867 = vmatprep.subr.bf16.mxu0 0
  %2868 = vmatpush2.bf16.msra.mxu0 0
  %2869 = vmatprep.mubr.bf16.mxu0 0
  %2870 = vmatmul.mubr.bf16.gmra.mxu0 %v2742
  %v2871 = vpop.f32.mrf.mxu0
  %v2872 = vadd.f32 %v2264, %v2871
  %v2873 = vpop.f32.mrf.mxu0
  %v2874 = vpop.f32.mrf.mxu0
  %v2875 = vadd.f32 %v2269, %v2874
  %v2876 = vpop.f32.mrf.mxu0
  %2877 = vmatprep.mubr.bf16.mxu0 0
  %2878 = vmatmul.mubr.bf16.gmra.mxu0 %v2745
  %v2879 = vpop.f32.mrf.mxu0
  %v2880 = vadd.f32 %v2274, %v2879
  %v2881 = vpop.f32.mrf.mxu0
  %v2882 = vpop.f32.mrf.mxu0
  %v2883 = vadd.f32 %v2279, %v2882
  %v2884 = vpop.f32.mrf.mxu0
  %2885 = vmatprep.mubr.bf16.mxu0 0
  %2886 = vmatmul.mubr.bf16.gmra.mxu0 %v2748
  %v2887 = vpop.f32.mrf.mxu0
  %v2888 = vadd.f32 %v2284, %v2887
  %v2889 = vpop.f32.mrf.mxu0
  %v2890 = vpop.f32.mrf.mxu0
  %v2891 = vadd.f32 %v2289, %v2890
  %v2892 = vpop.f32.mrf.mxu0
  %2893 = vmatprep.mubr.bf16.mxu0 0
  %2894 = vmatmul.mubr.bf16.gmra.mxu0 %v2751
  %v2895 = vpop.f32.mrf.mxu0
  %v2896 = vadd.f32 %v2294, %v2895
  %v2897 = vpop.f32.mrf.mxu0
  %v2898 = vpop.f32.mrf.mxu0
  %v2899 = vadd.f32 %v2299, %v2898
  %v2900 = vpop.f32.mrf.mxu0
  %2901 = vmatprep.mubr.bf16.mxu0 0
  %2902 = vmatmul.mubr.bf16.gmra.mxu0 %v2754
  %v2903 = vpop.f32.mrf.mxu0
  %v2904 = vadd.f32 %v2304, %v2903
  %v2905 = vpop.f32.mrf.mxu0
  %v2906 = vpop.f32.mrf.mxu0
  %v2907 = vadd.f32 %v2309, %v2906
  %v2908 = vpop.f32.mrf.mxu0
  %2909 = vmatprep.mubr.bf16.mxu0 0
  %2910 = vmatmul.mubr.bf16.gmra.mxu0 %v2757
  %v2911 = vpop.f32.mrf.mxu0
  %v2912 = vadd.f32 %v2314, %v2911
  %v2913 = vpop.f32.mrf.mxu0
  %v2914 = vpop.f32.mrf.mxu0
  %v2915 = vadd.f32 %v2319, %v2914
  %v2916 = vpop.f32.mrf.mxu0
  %2917 = vmatprep.mubr.bf16.mxu0 0
  %2918 = vmatmul.mubr.bf16.gmra.mxu0 %v2760
  %v2919 = vpop.f32.mrf.mxu0
  %v2920 = vadd.f32 %v2324, %v2919
  %v2921 = vpop.f32.mrf.mxu0
  %v2922 = vpop.f32.mrf.mxu0
  %v2923 = vadd.f32 %v2329, %v2922
  %v2924 = vpop.f32.mrf.mxu0
  %2925 = vmatprep.mubr.bf16.mxu0 0
  %2926 = vmatmul.mubr.bf16.gmra.mxu0 %v2763
  %v2927 = vpop.f32.mrf.mxu0
  %v2928 = vadd.f32 %v2334, %v2927
  %v2929 = vpop.f32.mrf.mxu0
  %v2930 = vpop.f32.mrf.mxu0
  %v2931 = vadd.f32 %v2339, %v2930
  %v2932 = vpop.f32.mrf.mxu0
  %2933 = vmatprep.mubr.bf16.mxu0 0
  %2934 = vmatmul.mubr.bf16.gmra.mxu0 %v2766
  %v2935 = vpop.f32.mrf.mxu0
  %v2936 = vadd.f32 %v2344, %v2935
  %v2937 = vpop.f32.mrf.mxu0
  %v2938 = vpop.f32.mrf.mxu0
  %v2939 = vadd.f32 %v2349, %v2938
  %v2940 = vpop.f32.mrf.mxu0
  %2941 = vmatprep.mubr.bf16.mxu0 0
  %2942 = vmatmul.mubr.bf16.gmra.mxu0 %v2769
  %v2943 = vpop.f32.mrf.mxu0
  %v2944 = vadd.f32 %v2354, %v2943
  %v2945 = vpop.f32.mrf.mxu0
  %v2946 = vpop.f32.mrf.mxu0
  %v2947 = vadd.f32 %v2359, %v2946
  %v2948 = vpop.f32.mrf.mxu0
  %2949 = vmatprep.mubr.bf16.mxu0 0
  %2950 = vmatmul.mubr.bf16.gmra.mxu0 %v2772
  %v2951 = vpop.f32.mrf.mxu0
  %v2952 = vadd.f32 %v2364, %v2951
  %v2953 = vpop.f32.mrf.mxu0
  %v2954 = vpop.f32.mrf.mxu0
  %v2955 = vadd.f32 %v2369, %v2954
  %v2956 = vpop.f32.mrf.mxu0
  %2957 = vmatprep.mubr.bf16.mxu0 0
  %2958 = vmatmul.mubr.bf16.gmra.mxu0 %v2775
  %v2959 = vpop.f32.mrf.mxu0
  %v2960 = vadd.f32 %v2374, %v2959
  %v2961 = vpop.f32.mrf.mxu0
  %v2962 = vpop.f32.mrf.mxu0
  %v2963 = vadd.f32 %v2379, %v2962
  %v2964 = vpop.f32.mrf.mxu0
  %2965 = vmatprep.mubr.bf16.mxu0 0
  %2966 = vmatmul.mubr.bf16.gmra.mxu0 %v2778
  %v2967 = vpop.f32.mrf.mxu0
  %v2968 = vadd.f32 %v2384, %v2967
  %v2969 = vpop.f32.mrf.mxu0
  %v2970 = vpop.f32.mrf.mxu0
  %v2971 = vadd.f32 %v2389, %v2970
  %v2972 = vpop.f32.mrf.mxu0
  %2973 = vmatprep.mubr.bf16.mxu0 0
  %2974 = vmatmul.mubr.bf16.gmra.mxu0 %v2781
  %v2975 = vpop.f32.mrf.mxu0
  %v2976 = vadd.f32 %v2394, %v2975
  %v2977 = vpop.f32.mrf.mxu0
  %v2978 = vpop.f32.mrf.mxu0
  %v2979 = vadd.f32 %v2399, %v2978
  %v2980 = vpop.f32.mrf.mxu0
  %2981 = vmatprep.mubr.bf16.mxu0 0
  %2982 = vmatmul.mubr.bf16.gmra.mxu0 %v2784
  %v2983 = vpop.f32.mrf.mxu0
  %v2984 = vadd.f32 %v2404, %v2983
  %v2985 = vpop.f32.mrf.mxu0
  %v2986 = vpop.f32.mrf.mxu0
  %v2987 = vadd.f32 %v2409, %v2986
  %v2988 = vpop.f32.mrf.mxu0
  %2989 = vmatprep.mubr.bf16.mxu0 0
  %2990 = vmatmul.mubr.bf16.gmra.mxu0 %v2787
  %v2991 = vpop.f32.mrf.mxu0
  %v2992 = vadd.f32 %v2414, %v2991
  %v2993 = vpop.f32.mrf.mxu0
  %v2994 = vpop.f32.mrf.mxu0
  %v2995 = vadd.f32 %v2419, %v2994
  %v2996 = vpop.f32.mrf.mxu0
  %2997 = vmatprep.mubr.bf16.mxu0 0
  %2998 = vmatmul.mubr.bf16.gmra.mxu0 %v2790
  %v2999 = vpop.f32.mrf.mxu0
  %v3000 = vadd.f32 %v2424, %v2999
  %v3001 = vpop.f32.mrf.mxu0
  %v3002 = vpop.f32.mrf.mxu0
  %v3003 = vadd.f32 %v2429, %v3002
  %v3004 = vpop.f32.mrf.mxu0
  %3005 = vmatprep.mubr.bf16.mxu0 0
  %3006 = vmatmul.mubr.bf16.gmra.mxu0 %v2793
  %v3007 = vpop.f32.mrf.mxu0
  %v3008 = vadd.f32 %v2434, %v3007
  %v3009 = vpop.f32.mrf.mxu0
  %v3010 = vpop.f32.mrf.mxu0
  %v3011 = vadd.f32 %v2439, %v3010
  %v3012 = vpop.f32.mrf.mxu0
  %3013 = vmatprep.mubr.bf16.mxu0 0
  %3014 = vmatmul.mubr.bf16.gmra.mxu0 %v2796
  %v3015 = vpop.f32.mrf.mxu0
  %v3016 = vadd.f32 %v2444, %v3015
  %v3017 = vpop.f32.mrf.mxu0
  %v3018 = vpop.f32.mrf.mxu0
  %v3019 = vadd.f32 %v2449, %v3018
  %v3020 = vpop.f32.mrf.mxu0
  %3021 = vmatprep.mubr.bf16.mxu0 0
  %3022 = vmatmul.mubr.bf16.gmra.mxu0 %v2799
  %v3023 = vpop.f32.mrf.mxu0
  %v3024 = vadd.f32 %v2454, %v3023
  %v3025 = vpop.f32.mrf.mxu0
  %v3026 = vpop.f32.mrf.mxu0
  %v3027 = vadd.f32 %v2459, %v3026
  %v3028 = vpop.f32.mrf.mxu0
  %3029 = vmatprep.mubr.bf16.mxu0 0
  %3030 = vmatmul.mubr.bf16.gmra.mxu0 %v2802
  %v3031 = vpop.f32.mrf.mxu0
  %v3032 = vadd.f32 %v2464, %v3031
  %v3033 = vpop.f32.mrf.mxu0
  %v3034 = vpop.f32.mrf.mxu0
  %v3035 = vadd.f32 %v2469, %v3034
  %v3036 = vpop.f32.mrf.mxu0
  %3037 = vmatprep.mubr.bf16.mxu0 0
  %3038 = vmatmul.mubr.bf16.gmra.mxu0 %v2805
  %v3039 = vpop.f32.mrf.mxu0
  %v3040 = vadd.f32 %v2474, %v3039
  %v3041 = vpop.f32.mrf.mxu0
  %v3042 = vpop.f32.mrf.mxu0
  %v3043 = vadd.f32 %v2479, %v3042
  %v3044 = vpop.f32.mrf.mxu0
  %3045 = vmatprep.mubr.bf16.mxu0 0
  %3046 = vmatmul.mubr.bf16.gmra.mxu0 %v2808
  %v3047 = vpop.f32.mrf.mxu0
  %v3048 = vadd.f32 %v2484, %v3047
  %v3049 = vpop.f32.mrf.mxu0
  %v3050 = vpop.f32.mrf.mxu0
  %v3051 = vadd.f32 %v2489, %v3050
  %v3052 = vpop.f32.mrf.mxu0
  %3053 = vmatprep.mubr.bf16.mxu0 0
  %3054 = vmatmul.mubr.bf16.gmra.mxu0 %v2811
  %v3055 = vpop.f32.mrf.mxu0
  %v3056 = vadd.f32 %v2494, %v3055
  %v3057 = vpop.f32.mrf.mxu0
  %v3058 = vpop.f32.mrf.mxu0
  %v3059 = vadd.f32 %v2499, %v3058
  %v3060 = vpop.f32.mrf.mxu0
  %3061 = vmatprep.mubr.bf16.mxu0 0
  %3062 = vmatmul.mubr.bf16.gmra.mxu0 %v2814
  %v3063 = vpop.f32.mrf.mxu0
  %v3064 = vadd.f32 %v2504, %v3063
  %v3065 = vpop.f32.mrf.mxu0
  %v3066 = vpop.f32.mrf.mxu0
  %v3067 = vadd.f32 %v2509, %v3066
  %v3068 = vpop.f32.mrf.mxu0
  %3069 = vmatprep.mubr.bf16.mxu0 0
  %3070 = vmatmul.mubr.bf16.gmra.mxu0 %v2817
  %v3071 = vpop.f32.mrf.mxu0
  %v3072 = vadd.f32 %v2514, %v3071
  %v3073 = vpop.f32.mrf.mxu0
  %v3074 = vpop.f32.mrf.mxu0
  %v3075 = vadd.f32 %v2519, %v3074
  %v3076 = vpop.f32.mrf.mxu0
  %3077 = vmatprep.mubr.bf16.mxu0 0
  %3078 = vmatmul.mubr.bf16.gmra.mxu0 %v2820
  %v3079 = vpop.f32.mrf.mxu0
  %v3080 = vadd.f32 %v2524, %v3079
  %v3081 = vpop.f32.mrf.mxu0
  %v3082 = vpop.f32.mrf.mxu0
  %v3083 = vadd.f32 %v2529, %v3082
  %v3084 = vpop.f32.mrf.mxu0
  %3085 = vmatprep.mubr.bf16.mxu0 0
  %3086 = vmatmul.mubr.bf16.gmra.mxu0 %v2823
  %v3087 = vpop.f32.mrf.mxu0
  %v3088 = vadd.f32 %v2534, %v3087
  %v3089 = vpop.f32.mrf.mxu0
  %v3090 = vpop.f32.mrf.mxu0
  %v3091 = vadd.f32 %v2539, %v3090
  %v3092 = vpop.f32.mrf.mxu0
  %3093 = vmatprep.mubr.bf16.mxu0 0
  %3094 = vmatmul.mubr.bf16.gmra.mxu0 %v2826
  %v3095 = vpop.f32.mrf.mxu0
  %v3096 = vadd.f32 %v2544, %v3095
  %v3097 = vpop.f32.mrf.mxu0
  %v3098 = vpop.f32.mrf.mxu0
  %v3099 = vadd.f32 %v2549, %v3098
  %v3100 = vpop.f32.mrf.mxu0
  %3101 = vmatprep.mubr.bf16.mxu0 0
  %3102 = vmatmul.mubr.bf16.gmra.mxu0 %v2829
  %v3103 = vpop.f32.mrf.mxu0
  %v3104 = vadd.f32 %v2554, %v3103
  %v3105 = vpop.f32.mrf.mxu0
  %v3106 = vpop.f32.mrf.mxu0
  %v3107 = vadd.f32 %v2559, %v3106
  %v3108 = vpop.f32.mrf.mxu0
  %3109 = vmatprep.mubr.bf16.mxu0 0
  %3110 = vmatmul.mubr.bf16.gmra.mxu0 %v2832
  %v3111 = vpop.f32.mrf.mxu0
  %v3112 = vadd.f32 %v2564, %v3111
  %v3113 = vpop.f32.mrf.mxu0
  %v3114 = vpop.f32.mrf.mxu0
  %v3115 = vadd.f32 %v2569, %v3114
  %v3116 = vpop.f32.mrf.mxu0
  %3117 = vmatprep.mubr.bf16.mxu0 0
  %3118 = vmatmul.mubr.bf16.gmra.mxu0 %v2835
  %v3119 = vpop.f32.mrf.mxu0
  %v3120 = vadd.f32 %v2574, %v3119
  %v3121 = vpop.f32.mrf.mxu0
  %v3122 = vpop.f32.mrf.mxu0
  %v3123 = vadd.f32 %v2579, %v3122
  %v3124 = vpop.f32.mrf.mxu0
  %3125 = vdwg.mxu0
  %vm3126 = vcmp.gt.f32.partialorder %v2872, 0.0
  %vm3127 = vcmp.gt.f32.partialorder %v2875, 0.0
  %vm3128 = vcmp.gt.f32.partialorder %v2880, 0.0
  %vm3129 = vcmp.gt.f32.partialorder %v2883, 0.0
  %vm3130 = vcmp.gt.f32.partialorder %v2888, 0.0
  %vm3131 = vcmp.gt.f32.partialorder %v2891, 0.0
  %vm3132 = vcmp.gt.f32.partialorder %v2896, 0.0
  %vm3133 = vcmp.gt.f32.partialorder %v2899, 0.0
  %vm3134 = vcmp.gt.f32.partialorder %v2904, 0.0
  %vm3135 = vcmp.gt.f32.partialorder %v2907, 0.0
  %vm3136 = vcmp.gt.f32.partialorder %v2912, 0.0
  %vm3137 = vcmp.gt.f32.partialorder %v2915, 0.0
  %vm3138 = vcmp.gt.f32.partialorder %v2920, 0.0
  %vm3139 = vcmp.gt.f32.partialorder %v2923, 0.0
  %vm3140 = vcmp.gt.f32.partialorder %v2928, 0.0
  %vm3141 = vcmp.gt.f32.partialorder %v2931, 0.0
  %vm3142 = vcmp.gt.f32.partialorder %v2936, 0.0
  %vm3143 = vcmp.gt.f32.partialorder %v2939, 0.0
  %vm3144 = vcmp.gt.f32.partialorder %v2944, 0.0
  %vm3145 = vcmp.gt.f32.partialorder %v2947, 0.0
  %vm3146 = vcmp.gt.f32.partialorder %v2952, 0.0
  %vm3147 = vcmp.gt.f32.partialorder %v2955, 0.0
  %vm3148 = vcmp.gt.f32.partialorder %v2960, 0.0
  %vm3149 = vcmp.gt.f32.partialorder %v2963, 0.0
  %vm3150 = vcmp.gt.f32.partialorder %v2968, 0.0
  %vm3151 = vcmp.gt.f32.partialorder %v2971, 0.0
  %vm3152 = vcmp.gt.f32.partialorder %v2976, 0.0
  %vm3153 = vcmp.gt.f32.partialorder %v2979, 0.0
  %vm3154 = vcmp.gt.f32.partialorder %v2984, 0.0
  %vm3155 = vcmp.gt.f32.partialorder %v2987, 0.0
  %vm3156 = vcmp.gt.f32.partialorder %v2992, 0.0
  %vm3157 = vcmp.gt.f32.partialorder %v2995, 0.0
  %vm3158 = vcmp.gt.f32.partialorder %v3000, 0.0
  %vm3159 = vcmp.gt.f32.partialorder %v3003, 0.0
  %vm3160 = vcmp.gt.f32.partialorder %v3008, 0.0
  %vm3161 = vcmp.gt.f32.partialorder %v3011, 0.0
  %vm3162 = vcmp.gt.f32.partialorder %v3016, 0.0
  %vm3163 = vcmp.gt.f32.partialorder %v3019, 0.0
  %vm3164 = vcmp.gt.f32.partialorder %v3024, 0.0
  %vm3165 = vcmp.gt.f32.partialorder %v3027, 0.0
  %vm3166 = vcmp.gt.f32.partialorder %v3032, 0.0
  %vm3167 = vcmp.gt.f32.partialorder %v3035, 0.0
  %vm3168 = vcmp.gt.f32.partialorder %v3040, 0.0
  %vm3169 = vcmp.gt.f32.partialorder %v3043, 0.0
  %vm3170 = vcmp.gt.f32.partialorder %v3048, 0.0
  %vm3171 = vcmp.gt.f32.partialorder %v3051, 0.0
  %vm3172 = vcmp.gt.f32.partialorder %v3056, 0.0
  %vm3173 = vcmp.gt.f32.partialorder %v3059, 0.0
  %vm3174 = vcmp.gt.f32.partialorder %v3064, 0.0
  %vm3175 = vcmp.gt.f32.partialorder %v3067, 0.0
  %vm3176 = vcmp.gt.f32.partialorder %v3072, 0.0
  %vm3177 = vcmp.gt.f32.partialorder %v3075, 0.0
  %vm3178 = vcmp.gt.f32.partialorder %v3080, 0.0
  %vm3179 = vcmp.gt.f32.partialorder %v3083, 0.0
  %vm3180 = vcmp.gt.f32.partialorder %v3088, 0.0
  %vm3181 = vcmp.gt.f32.partialorder %v3091, 0.0
  %vm3182 = vcmp.gt.f32.partialorder %v3096, 0.0
  %vm3183 = vcmp.gt.f32.partialorder %v3099, 0.0
  %vm3184 = vcmp.gt.f32.partialorder %v3104, 0.0
  %vm3185 = vcmp.gt.f32.partialorder %v3107, 0.0
  %vm3186 = vcmp.gt.f32.partialorder %v3112, 0.0
  %vm3187 = vcmp.gt.f32.partialorder %v3115, 0.0
  %vm3188 = vcmp.gt.f32.partialorder %v3120, 0.0
  %vm3189 = vcmp.gt.f32.partialorder %v3123, 0.0
  %v3190 = vld [vmem:[%s5 + $0x200] sm:$0xff]
  %v3191 = vld [vmem:[%s5 + $0x208] sm:$0xff]
  %v3192 = vld [vmem:[%s5 + $0x210] sm:$0xff]
  %v3193 = vld [vmem:[%s5 + $0x218] sm:$0xff]
  %v3194 = vld [vmem:[%s5 + $0x220] sm:$0xff]
  %v3195 = vld [vmem:[%s5 + $0x228] sm:$0xff]
  %v3196 = vld [vmem:[%s5 + $0x230] sm:$0xff]
  %v3197 = vld [vmem:[%s5 + $0x238] sm:$0xff]
  %v3198 = vld [vmem:[%s5 + $0x240] sm:$0xff]
  %v3199 = vld [vmem:[%s5 + $0x248] sm:$0xff]
  %v3200 = vld [vmem:[%s5 + $0x250] sm:$0xff]
  %v3201 = vld [vmem:[%s5 + $0x258] sm:$0xff]
  %v3202 = vld [vmem:[%s5 + $0x260] sm:$0xff]
  %v3203 = vld [vmem:[%s5 + $0x268] sm:$0xff]
  %v3204 = vld [vmem:[%s5 + $0x270] sm:$0xff]
  %v3205 = vld [vmem:[%s5 + $0x278] sm:$0xff]
  %v3206 = vld [vmem:[%s5 + $0x280] sm:$0xff]
  %v3207 = vld [vmem:[%s5 + $0x288] sm:$0xff]
  %v3208 = vld [vmem:[%s5 + $0x290] sm:$0xff]
  %v3209 = vld [vmem:[%s5 + $0x298] sm:$0xff]
  %v3210 = vld [vmem:[%s5 + $0x2a0] sm:$0xff]
  %v3211 = vld [vmem:[%s5 + $0x2a8] sm:$0xff]
  %v3212 = vld [vmem:[%s5 + $0x2b0] sm:$0xff]
  %v3213 = vld [vmem:[%s5 + $0x2b8] sm:$0xff]
  %v3214 = vld [vmem:[%s5 + $0x2c0] sm:$0xff]
  %v3215 = vld [vmem:[%s5 + $0x2c8] sm:$0xff]
  %v3216 = vld [vmem:[%s5 + $0x2d0] sm:$0xff]
  %v3217 = vld [vmem:[%s5 + $0x2d8] sm:$0xff]
  %v3218 = vld [vmem:[%s5 + $0x2e0] sm:$0xff]
  %v3219 = vld [vmem:[%s5 + $0x2e8] sm:$0xff]
  %v3220 = vld [vmem:[%s5 + $0x2f0] sm:$0xff]
  %v3221 = vld [vmem:[%s5 + $0x2f8] sm:$0xff]
  %v3222 = vld [vmem:[%s5 + $0x300] sm:$0xff]
  %v3223 = vld [vmem:[%s5 + $0x308] sm:$0xff]
  %v3224 = vld [vmem:[%s5 + $0x310] sm:$0xff]
  %v3225 = vld [vmem:[%s5 + $0x318] sm:$0xff]
  %v3226 = vld [vmem:[%s5 + $0x320] sm:$0xff]
  %v3227 = vld [vmem:[%s5 + $0x328] sm:$0xff]
  %v3228 = vld [vmem:[%s5 + $0x330] sm:$0xff]
  %v3229 = vld [vmem:[%s5 + $0x338] sm:$0xff]
  %v3230 = vld [vmem:[%s5 + $0x340] sm:$0xff]
  %v3231 = vld [vmem:[%s5 + $0x348] sm:$0xff]
  %v3232 = vld [vmem:[%s5 + $0x350] sm:$0xff]
  %v3233 = vld [vmem:[%s5 + $0x358] sm:$0xff]
  %v3234 = vld [vmem:[%s5 + $0x360] sm:$0xff]
  %v3235 = vld [vmem:[%s5 + $0x368] sm:$0xff]
  %v3236 = vld [vmem:[%s5 + $0x370] sm:$0xff]
  %v3237 = vld [vmem:[%s5 + $0x378] sm:$0xff]
  %v3238 = vld [vmem:[%s5 + $0x380] sm:$0xff]
  %v3239 = vld [vmem:[%s5 + $0x388] sm:$0xff]
  %v3240 = vld [vmem:[%s5 + $0x390] sm:$0xff]
  %v3241 = vld [vmem:[%s5 + $0x398] sm:$0xff]
  %v3242 = vld [vmem:[%s5 + $0x3a0] sm:$0xff]
  %v3243 = vld [vmem:[%s5 + $0x3a8] sm:$0xff]
  %v3244 = vld [vmem:[%s5 + $0x3b0] sm:$0xff]
  %v3245 = vld [vmem:[%s5 + $0x3b8] sm:$0xff]
  %v3246 = vld [vmem:[%s5 + $0x3c0] sm:$0xff]
  %v3247 = vld [vmem:[%s5 + $0x3c8] sm:$0xff]
  %v3248 = vld [vmem:[%s5 + $0x3d0] sm:$0xff]
  %v3249 = vld [vmem:[%s5 + $0x3d8] sm:$0xff]
  %v3250 = vld [vmem:[%s5 + $0x3e0] sm:$0xff]
  %v3251 = vld [vmem:[%s5 + $0x3e8] sm:$0xff]
  %v3252 = vld [vmem:[%s5 + $0x3f0] sm:$0xff]
  %v3253 = vld [vmem:[%s5 + $0x3f8] sm:$0xff]
  %v3254 = vld [vmem:[%s6 + $0x200] sm:$0xff]
  %v3255 = vld [vmem:[%s6 + $0x208] sm:$0xff]
  %v3256 = vld [vmem:[%s6 + $0x210] sm:$0xff]
  %v3257 = vld [vmem:[%s6 + $0x218] sm:$0xff]
  %v3258 = vld [vmem:[%s6 + $0x220] sm:$0xff]
  %v3259 = vld [vmem:[%s6 + $0x228] sm:$0xff]
  %v3260 = vld [vmem:[%s6 + $0x230] sm:$0xff]
  %v3261 = vld [vmem:[%s6 + $0x238] sm:$0xff]
  %v3262 = vld [vmem:[%s6 + $0x240] sm:$0xff]
  %v3263 = vld [vmem:[%s6 + $0x248] sm:$0xff]
  %v3264 = vld [vmem:[%s6 + $0x250] sm:$0xff]
  %v3265 = vld [vmem:[%s6 + $0x258] sm:$0xff]
  %v3266 = vld [vmem:[%s6 + $0x260] sm:$0xff]
  %v3267 = vld [vmem:[%s6 + $0x268] sm:$0xff]
  %v3268 = vld [vmem:[%s6 + $0x270] sm:$0xff]
  %v3269 = vld [vmem:[%s6 + $0x278] sm:$0xff]
  %v3270 = vld [vmem:[%s6 + $0x280] sm:$0xff]
  %v3271 = vld [vmem:[%s6 + $0x288] sm:$0xff]
  %v3272 = vld [vmem:[%s6 + $0x290] sm:$0xff]
  %v3273 = vld [vmem:[%s6 + $0x298] sm:$0xff]
  %v3274 = vld [vmem:[%s6 + $0x2a0] sm:$0xff]
  %v3275 = vld [vmem:[%s6 + $0x2a8] sm:$0xff]
  %v3276 = vld [vmem:[%s6 + $0x2b0] sm:$0xff]
  %v3277 = vld [vmem:[%s6 + $0x2b8] sm:$0xff]
  %v3278 = vld [vmem:[%s6 + $0x2c0] sm:$0xff]
  %v3279 = vld [vmem:[%s6 + $0x2c8] sm:$0xff]
  %v3280 = vld [vmem:[%s6 + $0x2d0] sm:$0xff]
  %v3281 = vld [vmem:[%s6 + $0x2d8] sm:$0xff]
  %v3282 = vld [vmem:[%s6 + $0x2e0] sm:$0xff]
  %v3283 = vld [vmem:[%s6 + $0x2e8] sm:$0xff]
  %v3284 = vld [vmem:[%s6 + $0x2f0] sm:$0xff]
  %v3285 = vld [vmem:[%s6 + $0x2f8] sm:$0xff]
  %v3286 = vld [vmem:[%s6 + $0x300] sm:$0xff]
  %v3287 = vld [vmem:[%s6 + $0x308] sm:$0xff]
  %v3288 = vld [vmem:[%s6 + $0x310] sm:$0xff]
  %v3289 = vld [vmem:[%s6 + $0x318] sm:$0xff]
  %v3290 = vld [vmem:[%s6 + $0x320] sm:$0xff]
  %v3291 = vld [vmem:[%s6 + $0x328] sm:$0xff]
  %v3292 = vld [vmem:[%s6 + $0x330] sm:$0xff]
  %v3293 = vld [vmem:[%s6 + $0x338] sm:$0xff]
  %v3294 = vld [vmem:[%s6 + $0x340] sm:$0xff]
  %v3295 = vld [vmem:[%s6 + $0x348] sm:$0xff]
  %v3296 = vld [vmem:[%s6 + $0x350] sm:$0xff]
  %v3297 = vld [vmem:[%s6 + $0x358] sm:$0xff]
  %v3298 = vld [vmem:[%s6 + $0x360] sm:$0xff]
  %v3299 = vld [vmem:[%s6 + $0x368] sm:$0xff]
  %v3300 = vld [vmem:[%s6 + $0x370] sm:$0xff]
  %v3301 = vld [vmem:[%s6 + $0x378] sm:$0xff]
  %v3302 = vld [vmem:[%s6 + $0x380] sm:$0xff]
  %v3303 = vld [vmem:[%s6 + $0x388] sm:$0xff]
  %v3304 = vld [vmem:[%s6 + $0x390] sm:$0xff]
  %v3305 = vld [vmem:[%s6 + $0x398] sm:$0xff]
  %v3306 = vld [vmem:[%s6 + $0x3a0] sm:$0xff]
  %v3307 = vld [vmem:[%s6 + $0x3a8] sm:$0xff]
  %v3308 = vld [vmem:[%s6 + $0x3b0] sm:$0xff]
  %v3309 = vld [vmem:[%s6 + $0x3b8] sm:$0xff]
  %v3310 = vld [vmem:[%s6 + $0x3c0] sm:$0xff]
  %v3311 = vld [vmem:[%s6 + $0x3c8] sm:$0xff]
  %v3312 = vld [vmem:[%s6 + $0x3d0] sm:$0xff]
  %v3313 = vld [vmem:[%s6 + $0x3d8] sm:$0xff]
  %v3314 = vld [vmem:[%s6 + $0x3e0] sm:$0xff]
  %v3315 = vld [vmem:[%s6 + $0x3e8] sm:$0xff]
  %v3316 = vld [vmem:[%s6 + $0x3f0] sm:$0xff]
  %v3317 = vld [vmem:[%s6 + $0x3f8] sm:$0xff]
  %3319 = vset.pattern.permute.xlu0 0
  %3320 = vperm.xlu0 %3319, %v3190
  %v3321 = vpop.permute.xlu0 %3320
  %3324 = vset.pattern.permute.xlu0 0
  %3325 = vperm.xlu0 %3324, %v3191
  %v3326 = vpop.permute.xlu0 %3325
  %3329 = vset.pattern.permute.xlu0 0
  %3330 = vperm.xlu0 %3329, %v3192
  %v3331 = vpop.permute.xlu0 %3330
  %3334 = vset.pattern.permute.xlu0 0
  %3335 = vperm.xlu0 %3334, %v3193
  %v3336 = vpop.permute.xlu0 %3335
  %3339 = vset.pattern.permute.xlu0 0
  %3340 = vperm.xlu0 %3339, %v3194
  %v3341 = vpop.permute.xlu0 %3340
  %3344 = vset.pattern.permute.xlu0 0
  %3345 = vperm.xlu0 %3344, %v3195
  %v3346 = vpop.permute.xlu0 %3345
  %3349 = vset.pattern.permute.xlu0 0
  %3350 = vperm.xlu0 %3349, %v3196
  %v3351 = vpop.permute.xlu0 %3350
  %3354 = vset.pattern.permute.xlu0 0
  %3355 = vperm.xlu0 %3354, %v3197
  %v3356 = vpop.permute.xlu0 %3355
  %3359 = vset.pattern.permute.xlu0 0
  %3360 = vperm.xlu0 %3359, %v3198
  %v3361 = vpop.permute.xlu0 %3360
  %3364 = vset.pattern.permute.xlu0 0
  %3365 = vperm.xlu0 %3364, %v3199
  %v3366 = vpop.permute.xlu0 %3365
  %3369 = vset.pattern.permute.xlu0 0
  %3370 = vperm.xlu0 %3369, %v3200
  %v3371 = vpop.permute.xlu0 %3370
  %3374 = vset.pattern.permute.xlu0 0
  %3375 = vperm.xlu0 %3374, %v3201
  %v3376 = vpop.permute.xlu0 %3375
  %3379 = vset.pattern.permute.xlu0 0
  %3380 = vperm.xlu0 %3379, %v3202
  %v3381 = vpop.permute.xlu0 %3380
  %3384 = vset.pattern.permute.xlu0 0
  %3385 = vperm.xlu0 %3384, %v3203
  %v3386 = vpop.permute.xlu0 %3385
  %3389 = vset.pattern.permute.xlu0 0
  %3390 = vperm.xlu0 %3389, %v3204
  %v3391 = vpop.permute.xlu0 %3390
  %3394 = vset.pattern.permute.xlu0 0
  %3395 = vperm.xlu0 %3394, %v3205
  %v3396 = vpop.permute.xlu0 %3395
  %3399 = vset.pattern.permute.xlu0 0
  %3400 = vperm.xlu0 %3399, %v3206
  %v3401 = vpop.permute.xlu0 %3400
  %3404 = vset.pattern.permute.xlu0 0
  %3405 = vperm.xlu0 %3404, %v3207
  %v3406 = vpop.permute.xlu0 %3405
  %3409 = vset.pattern.permute.xlu0 0
  %3410 = vperm.xlu0 %3409, %v3208
  %v3411 = vpop.permute.xlu0 %3410
  %3414 = vset.pattern.permute.xlu0 0
  %3415 = vperm.xlu0 %3414, %v3209
  %v3416 = vpop.permute.xlu0 %3415
  %3419 = vset.pattern.permute.xlu0 0
  %3420 = vperm.xlu0 %3419, %v3210
  %v3421 = vpop.permute.xlu0 %3420
  %3424 = vset.pattern.permute.xlu0 0
  %3425 = vperm.xlu0 %3424, %v3211
  %v3426 = vpop.permute.xlu0 %3425
  %3429 = vset.pattern.permute.xlu0 0
  %3430 = vperm.xlu0 %3429, %v3212
  %v3431 = vpop.permute.xlu0 %3430
  %3434 = vset.pattern.permute.xlu0 0
  %3435 = vperm.xlu0 %3434, %v3213
  %v3436 = vpop.permute.xlu0 %3435
  %3439 = vset.pattern.permute.xlu0 0
  %3440 = vperm.xlu0 %3439, %v3214
  %v3441 = vpop.permute.xlu0 %3440
  %3444 = vset.pattern.permute.xlu0 0
  %3445 = vperm.xlu0 %3444, %v3215
  %v3446 = vpop.permute.xlu0 %3445
  %3449 = vset.pattern.permute.xlu0 0
  %3450 = vperm.xlu0 %3449, %v3216
  %v3451 = vpop.permute.xlu0 %3450
  %3454 = vset.pattern.permute.xlu0 0
  %3455 = vperm.xlu0 %3454, %v3217
  %v3456 = vpop.permute.xlu0 %3455
  %3459 = vset.pattern.permute.xlu0 0
  %3460 = vperm.xlu0 %3459, %v3218
  %v3461 = vpop.permute.xlu0 %3460
  %3464 = vset.pattern.permute.xlu0 0
  %3465 = vperm.xlu0 %3464, %v3219
  %v3466 = vpop.permute.xlu0 %3465
  %3469 = vset.pattern.permute.xlu0 0
  %3470 = vperm.xlu0 %3469, %v3220
  %v3471 = vpop.permute.xlu0 %3470
  %3474 = vset.pattern.permute.xlu0 0
  %3475 = vperm.xlu0 %3474, %v3221
  %v3476 = vpop.permute.xlu0 %3475
  %3479 = vset.pattern.permute.xlu0 0
  %3480 = vperm.xlu0 %3479, %v3222
  %v3481 = vpop.permute.xlu0 %3480
  %3484 = vset.pattern.permute.xlu0 0
  %3485 = vperm.xlu0 %3484, %v3223
  %v3486 = vpop.permute.xlu0 %3485
  %3489 = vset.pattern.permute.xlu0 0
  %3490 = vperm.xlu0 %3489, %v3224
  %v3491 = vpop.permute.xlu0 %3490
  %3494 = vset.pattern.permute.xlu0 0
  %3495 = vperm.xlu0 %3494, %v3225
  %v3496 = vpop.permute.xlu0 %3495
  %3499 = vset.pattern.permute.xlu0 0
  %3500 = vperm.xlu0 %3499, %v3226
  %v3501 = vpop.permute.xlu0 %3500
  %3504 = vset.pattern.permute.xlu0 0
  %3505 = vperm.xlu0 %3504, %v3227
  %v3506 = vpop.permute.xlu0 %3505
  %3509 = vset.pattern.permute.xlu0 0
  %3510 = vperm.xlu0 %3509, %v3228
  %v3511 = vpop.permute.xlu0 %3510
  %3514 = vset.pattern.permute.xlu0 0
  %3515 = vperm.xlu0 %3514, %v3229
  %v3516 = vpop.permute.xlu0 %3515
  %3519 = vset.pattern.permute.xlu0 0
  %3520 = vperm.xlu0 %3519, %v3230
  %v3521 = vpop.permute.xlu0 %3520
  %3524 = vset.pattern.permute.xlu0 0
  %3525 = vperm.xlu0 %3524, %v3231
  %v3526 = vpop.permute.xlu0 %3525
  %3529 = vset.pattern.permute.xlu0 0
  %3530 = vperm.xlu0 %3529, %v3232
  %v3531 = vpop.permute.xlu0 %3530
  %3534 = vset.pattern.permute.xlu0 0
  %3535 = vperm.xlu0 %3534, %v3233
  %v3536 = vpop.permute.xlu0 %3535
  %3539 = vset.pattern.permute.xlu0 0
  %3540 = vperm.xlu0 %3539, %v3234
  %v3541 = vpop.permute.xlu0 %3540
  %3544 = vset.pattern.permute.xlu0 0
  %3545 = vperm.xlu0 %3544, %v3235
  %v3546 = vpop.permute.xlu0 %3545
  %3549 = vset.pattern.permute.xlu0 0
  %3550 = vperm.xlu0 %3549, %v3236
  %v3551 = vpop.permute.xlu0 %3550
  %3554 = vset.pattern.permute.xlu0 0
  %3555 = vperm.xlu0 %3554, %v3237
  %v3556 = vpop.permute.xlu0 %3555
  %3559 = vset.pattern.permute.xlu0 0
  %3560 = vperm.xlu0 %3559, %v3238
  %v3561 = vpop.permute.xlu0 %3560
  %3564 = vset.pattern.permute.xlu0 0
  %3565 = vperm.xlu0 %3564, %v3239
  %v3566 = vpop.permute.xlu0 %3565
  %3569 = vset.pattern.permute.xlu0 0
  %3570 = vperm.xlu0 %3569, %v3240
  %v3571 = vpop.permute.xlu0 %3570
  %3574 = vset.pattern.permute.xlu0 0
  %3575 = vperm.xlu0 %3574, %v3241
  %v3576 = vpop.permute.xlu0 %3575
  %3579 = vset.pattern.permute.xlu0 0
  %3580 = vperm.xlu0 %3579, %v3242
  %v3581 = vpop.permute.xlu0 %3580
  %3584 = vset.pattern.permute.xlu0 0
  %3585 = vperm.xlu0 %3584, %v3243
  %v3586 = vpop.permute.xlu0 %3585
  %3589 = vset.pattern.permute.xlu0 0
  %3590 = vperm.xlu0 %3589, %v3244
  %v3591 = vpop.permute.xlu0 %3590
  %3594 = vset.pattern.permute.xlu0 0
  %3595 = vperm.xlu0 %3594, %v3245
  %v3596 = vpop.permute.xlu0 %3595
  %3599 = vset.pattern.permute.xlu0 0
  %3600 = vperm.xlu0 %3599, %v3246
  %v3601 = vpop.permute.xlu0 %3600
  %3604 = vset.pattern.permute.xlu0 0
  %3605 = vperm.xlu0 %3604, %v3247
  %v3606 = vpop.permute.xlu0 %3605
  %3609 = vset.pattern.permute.xlu0 0
  %3610 = vperm.xlu0 %3609, %v3248
  %v3611 = vpop.permute.xlu0 %3610
  %3614 = vset.pattern.permute.xlu0 0
  %3615 = vperm.xlu0 %3614, %v3249
  %v3616 = vpop.permute.xlu0 %3615
  %3619 = vset.pattern.permute.xlu0 0
  %3620 = vperm.xlu0 %3619, %v3250
  %v3621 = vpop.permute.xlu0 %3620
  %3624 = vset.pattern.permute.xlu0 0
  %3625 = vperm.xlu0 %3624, %v3251
  %v3626 = vpop.permute.xlu0 %3625
  %3629 = vset.pattern.permute.xlu0 0
  %3630 = vperm.xlu0 %3629, %v3252
  %v3631 = vpop.permute.xlu0 %3630
  %3634 = vset.pattern.permute.xlu0 0
  %3635 = vperm.xlu0 %3634, %v3253
  %v3636 = vpop.permute.xlu0 %3635
  %3639 = vset.pattern.permute.xlu0 0
  %3640 = vperm.xlu0 %3639, %v3254
  %v3641 = vpop.permute.xlu0 %3640
  %3644 = vset.pattern.permute.xlu0 0
  %3645 = vperm.xlu0 %3644, %v3255
  %v3646 = vpop.permute.xlu0 %3645
  %3649 = vset.pattern.permute.xlu0 0
  %3650 = vperm.xlu0 %3649, %v3256
  %v3651 = vpop.permute.xlu0 %3650
  %3654 = vset.pattern.permute.xlu0 0
  %3655 = vperm.xlu0 %3654, %v3257
  %v3656 = vpop.permute.xlu0 %3655
  %3659 = vset.pattern.permute.xlu0 0
  %3660 = vperm.xlu0 %3659, %v3258
  %v3661 = vpop.permute.xlu0 %3660
  %3664 = vset.pattern.permute.xlu0 0
  %3665 = vperm.xlu0 %3664, %v3259
  %v3666 = vpop.permute.xlu0 %3665
  %3669 = vset.pattern.permute.xlu0 0
  %3670 = vperm.xlu0 %3669, %v3260
  %v3671 = vpop.permute.xlu0 %3670
  %3674 = vset.pattern.permute.xlu0 0
  %3675 = vperm.xlu0 %3674, %v3261
  %v3676 = vpop.permute.xlu0 %3675
  %3679 = vset.pattern.permute.xlu0 0
  %3680 = vperm.xlu0 %3679, %v3262
  %v3681 = vpop.permute.xlu0 %3680
  %3684 = vset.pattern.permute.xlu0 0
  %3685 = vperm.xlu0 %3684, %v3263
  %v3686 = vpop.permute.xlu0 %3685
  %3689 = vset.pattern.permute.xlu0 0
  %3690 = vperm.xlu0 %3689, %v3264
  %v3691 = vpop.permute.xlu0 %3690
  %3694 = vset.pattern.permute.xlu0 0
  %3695 = vperm.xlu0 %3694, %v3265
  %v3696 = vpop.permute.xlu0 %3695
  %3699 = vset.pattern.permute.xlu0 0
  %3700 = vperm.xlu0 %3699, %v3266
  %v3701 = vpop.permute.xlu0 %3700
  %3704 = vset.pattern.permute.xlu0 0
  %3705 = vperm.xlu0 %3704, %v3267
  %v3706 = vpop.permute.xlu0 %3705
  %3709 = vset.pattern.permute.xlu0 0
  %3710 = vperm.xlu0 %3709, %v3268
  %v3711 = vpop.permute.xlu0 %3710
  %3714 = vset.pattern.permute.xlu0 0
  %3715 = vperm.xlu0 %3714, %v3269
  %v3716 = vpop.permute.xlu0 %3715
  %3719 = vset.pattern.permute.xlu0 0
  %3720 = vperm.xlu0 %3719, %v3270
  %v3721 = vpop.permute.xlu0 %3720
  %3724 = vset.pattern.permute.xlu0 0
  %3725 = vperm.xlu0 %3724, %v3271
  %v3726 = vpop.permute.xlu0 %3725
  %3729 = vset.pattern.permute.xlu0 0
  %3730 = vperm.xlu0 %3729, %v3272
  %v3731 = vpop.permute.xlu0 %3730
  %3734 = vset.pattern.permute.xlu0 0
  %3735 = vperm.xlu0 %3734, %v3273
  %v3736 = vpop.permute.xlu0 %3735
  %3739 = vset.pattern.permute.xlu0 0
  %3740 = vperm.xlu0 %3739, %v3274
  %v3741 = vpop.permute.xlu0 %3740
  %3744 = vset.pattern.permute.xlu0 0
  %3745 = vperm.xlu0 %3744, %v3275
  %v3746 = vpop.permute.xlu0 %3745
  %3749 = vset.pattern.permute.xlu0 0
  %3750 = vperm.xlu0 %3749, %v3276
  %v3751 = vpop.permute.xlu0 %3750
  %3754 = vset.pattern.permute.xlu0 0
  %3755 = vperm.xlu0 %3754, %v3277
  %v3756 = vpop.permute.xlu0 %3755
  %3759 = vset.pattern.permute.xlu0 0
  %3760 = vperm.xlu0 %3759, %v3278
  %v3761 = vpop.permute.xlu0 %3760
  %3764 = vset.pattern.permute.xlu0 0
  %3765 = vperm.xlu0 %3764, %v3279
  %v3766 = vpop.permute.xlu0 %3765
  %3769 = vset.pattern.permute.xlu0 0
  %3770 = vperm.xlu0 %3769, %v3280
  %v3771 = vpop.permute.xlu0 %3770
  %3774 = vset.pattern.permute.xlu0 0
  %3775 = vperm.xlu0 %3774, %v3281
  %v3776 = vpop.permute.xlu0 %3775
  %3779 = vset.pattern.permute.xlu0 0
  %3780 = vperm.xlu0 %3779, %v3282
  %v3781 = vpop.permute.xlu0 %3780
  %3784 = vset.pattern.permute.xlu0 0
  %3785 = vperm.xlu0 %3784, %v3283
  %v3786 = vpop.permute.xlu0 %3785
  %3789 = vset.pattern.permute.xlu0 0
  %3790 = vperm.xlu0 %3789, %v3284
  %v3791 = vpop.permute.xlu0 %3790
  %3794 = vset.pattern.permute.xlu0 0
  %3795 = vperm.xlu0 %3794, %v3285
  %v3796 = vpop.permute.xlu0 %3795
  %3799 = vset.pattern.permute.xlu0 0
  %3800 = vperm.xlu0 %3799, %v3286
  %v3801 = vpop.permute.xlu0 %3800
  %3804 = vset.pattern.permute.xlu0 0
  %3805 = vperm.xlu0 %3804, %v3287
  %v3806 = vpop.permute.xlu0 %3805
  %3809 = vset.pattern.permute.xlu0 0
  %3810 = vperm.xlu0 %3809, %v3288
  %v3811 = vpop.permute.xlu0 %3810
  %3814 = vset.pattern.permute.xlu0 0
  %3815 = vperm.xlu0 %3814, %v3289
  %v3816 = vpop.permute.xlu0 %3815
  %3819 = vset.pattern.permute.xlu0 0
  %3820 = vperm.xlu0 %3819, %v3290
  %v3821 = vpop.permute.xlu0 %3820
  %3824 = vset.pattern.permute.xlu0 0
  %3825 = vperm.xlu0 %3824, %v3291
  %v3826 = vpop.permute.xlu0 %3825
  %3829 = vset.pattern.permute.xlu0 0
  %3830 = vperm.xlu0 %3829, %v3292
  %v3831 = vpop.permute.xlu0 %3830
  %3834 = vset.pattern.permute.xlu0 0
  %3835 = vperm.xlu0 %3834, %v3293
  %v3836 = vpop.permute.xlu0 %3835
  %3839 = vset.pattern.permute.xlu0 0
  %3840 = vperm.xlu0 %3839, %v3294
  %v3841 = vpop.permute.xlu0 %3840
  %3844 = vset.pattern.permute.xlu0 0
  %3845 = vperm.xlu0 %3844, %v3295
  %v3846 = vpop.permute.xlu0 %3845
  %3849 = vset.pattern.permute.xlu0 0
  %3850 = vperm.xlu0 %3849, %v3296
  %v3851 = vpop.permute.xlu0 %3850
  %3854 = vset.pattern.permute.xlu0 0
  %3855 = vperm.xlu0 %3854, %v3297
  %v3856 = vpop.permute.xlu0 %3855
  %3859 = vset.pattern.permute.xlu0 0
  %3860 = vperm.xlu0 %3859, %v3298
  %v3861 = vpop.permute.xlu0 %3860
  %3864 = vset.pattern.permute.xlu0 0
  %3865 = vperm.xlu0 %3864, %v3299
  %v3866 = vpop.permute.xlu0 %3865
  %3869 = vset.pattern.permute.xlu0 0
  %3870 = vperm.xlu0 %3869, %v3300
  %v3871 = vpop.permute.xlu0 %3870
  %3874 = vset.pattern.permute.xlu0 0
  %3875 = vperm.xlu0 %3874, %v3301
  %v3876 = vpop.permute.xlu0 %3875
  %3879 = vset.pattern.permute.xlu0 0
  %3880 = vperm.xlu0 %3879, %v3302
  %v3881 = vpop.permute.xlu0 %3880
  %3884 = vset.pattern.permute.xlu0 0
  %3885 = vperm.xlu0 %3884, %v3303
  %v3886 = vpop.permute.xlu0 %3885
  %3889 = vset.pattern.permute.xlu0 0
  %3890 = vperm.xlu0 %3889, %v3304
  %v3891 = vpop.permute.xlu0 %3890
  %3894 = vset.pattern.permute.xlu0 0
  %3895 = vperm.xlu0 %3894, %v3305
  %v3896 = vpop.permute.xlu0 %3895
  %3899 = vset.pattern.permute.xlu0 0
  %3900 = vperm.xlu0 %3899, %v3306
  %v3901 = vpop.permute.xlu0 %3900
  %3904 = vset.pattern.permute.xlu0 0
  %3905 = vperm.xlu0 %3904, %v3307
  %v3906 = vpop.permute.xlu0 %3905
  %3909 = vset.pattern.permute.xlu0 0
  %3910 = vperm.xlu0 %3909, %v3308
  %v3911 = vpop.permute.xlu0 %3910
  %3914 = vset.pattern.permute.xlu0 0
  %3915 = vperm.xlu0 %3914, %v3309
  %v3916 = vpop.permute.xlu0 %3915
  %3919 = vset.pattern.permute.xlu0 0
  %3920 = vperm.xlu0 %3919, %v3310
  %v3921 = vpop.permute.xlu0 %3920
  %3924 = vset.pattern.permute.xlu0 0
  %3925 = vperm.xlu0 %3924, %v3311
  %v3926 = vpop.permute.xlu0 %3925
  %3929 = vset.pattern.permute.xlu0 0
  %3930 = vperm.xlu0 %3929, %v3312
  %v3931 = vpop.permute.xlu0 %3930
  %3934 = vset.pattern.permute.xlu0 0
  %3935 = vperm.xlu0 %3934, %v3313
  %v3936 = vpop.permute.xlu0 %3935
  %3939 = vset.pattern.permute.xlu0 0
  %3940 = vperm.xlu0 %3939, %v3314
  %v3941 = vpop.permute.xlu0 %3940
  %3944 = vset.pattern.permute.xlu0 0
  %3945 = vperm.xlu0 %3944, %v3315
  %v3946 = vpop.permute.xlu0 %3945
  %3949 = vset.pattern.permute.xlu0 0
  %3950 = vperm.xlu0 %3949, %v3316
  %v3951 = vpop.permute.xlu0 %3950
  %3954 = vset.pattern.permute.xlu0 0
  %3955 = vperm.xlu0 %3954, %v3317
  %v3956 = vpop.permute.xlu0 %3955
  %v3958 = vsel %vm3126, %v3321, %v3641
  %v3959 = vsel %vm3127, %v3326, %v3646
  %v3960 = vsel %vm3128, %v3331, %v3651
  %v3961 = vsel %vm3129, %v3336, %v3656
  %v3962 = vsel %vm3130, %v3341, %v3661
  %v3963 = vsel %vm3131, %v3346, %v3666
  %v3964 = vsel %vm3132, %v3351, %v3671
  %v3965 = vsel %vm3133, %v3356, %v3676
  %v3966 = vsel %vm3134, %v3361, %v3681
  %v3967 = vsel %vm3135, %v3366, %v3686
  %v3968 = vsel %vm3136, %v3371, %v3691
  %v3969 = vsel %vm3137, %v3376, %v3696
  %v3970 = vsel %vm3138, %v3381, %v3701
  %v3971 = vsel %vm3139, %v3386, %v3706
  %v3972 = vsel %vm3140, %v3391, %v3711
  %v3973 = vsel %vm3141, %v3396, %v3716
  %v3974 = vsel %vm3142, %v3401, %v3721
  %v3975 = vsel %vm3143, %v3406, %v3726
  %v3976 = vsel %vm3144, %v3411, %v3731
  %v3977 = vsel %vm3145, %v3416, %v3736
  %v3978 = vsel %vm3146, %v3421, %v3741
  %v3979 = vsel %vm3147, %v3426, %v3746
  %v3980 = vsel %vm3148, %v3431, %v3751
  %v3981 = vsel %vm3149, %v3436, %v3756
  %v3982 = vsel %vm3150, %v3441, %v3761
  %v3983 = vsel %vm3151, %v3446, %v3766
  %v3984 = vsel %vm3152, %v3451, %v3771
  %v3985 = vsel %vm3153, %v3456, %v3776
  %v3986 = vsel %vm3154, %v3461, %v3781
  %v3987 = vsel %vm3155, %v3466, %v3786
  %v3988 = vsel %vm3156, %v3471, %v3791
  %v3989 = vsel %vm3157, %v3476, %v3796
  %v3990 = vsel %vm3158, %v3481, %v3801
  %v3991 = vsel %vm3159, %v3486, %v3806
  %v3992 = vsel %vm3160, %v3491, %v3811
  %v3993 = vsel %vm3161, %v3496, %v3816
  %v3994 = vsel %vm3162, %v3501, %v3821
  %v3995 = vsel %vm3163, %v3506, %v3826
  %v3996 = vsel %vm3164, %v3511, %v3831
  %v3997 = vsel %vm3165, %v3516, %v3836
  %v3998 = vsel %vm3166, %v3521, %v3841
  %v3999 = vsel %vm3167, %v3526, %v3846
  %v4000 = vsel %vm3168, %v3531, %v3851
  %v4001 = vsel %vm3169, %v3536, %v3856
  %v4002 = vsel %vm3170, %v3541, %v3861
  %v4003 = vsel %vm3171, %v3546, %v3866
  %v4004 = vsel %vm3172, %v3551, %v3871
  %v4005 = vsel %vm3173, %v3556, %v3876
  %v4006 = vsel %vm3174, %v3561, %v3881
  %v4007 = vsel %vm3175, %v3566, %v3886
  %v4008 = vsel %vm3176, %v3571, %v3891
  %v4009 = vsel %vm3177, %v3576, %v3896
  %v4010 = vsel %vm3178, %v3581, %v3901
  %v4011 = vsel %vm3179, %v3586, %v3906
  %v4012 = vsel %vm3180, %v3591, %v3911
  %v4013 = vsel %vm3181, %v3596, %v3916
  %v4014 = vsel %vm3182, %v3601, %v3921
  %v4015 = vsel %vm3183, %v3606, %v3926
  %v4016 = vsel %vm3184, %v3611, %v3931
  %v4017 = vsel %vm3185, %v3616, %v3936
  %v4018 = vsel %vm3186, %v3621, %v3941
  %v4019 = vsel %vm3187, %v3626, %v3946
  %v4020 = vsel %vm3188, %v3631, %v3951
  %v4021 = vsel %vm3189, %v3636, %v3956
  %v4022 = vmul.f32 %v2872, %v3958
  %v4023 = vmul.f32 %v2875, %v3959
  %v4024 = vmul.f32 %v2880, %v3960
  %v4025 = vmul.f32 %v2883, %v3961
  %v4026 = vmul.f32 %v2888, %v3962
  %v4027 = vmul.f32 %v2891, %v3963
  %v4028 = vmul.f32 %v2896, %v3964
  %v4029 = vmul.f32 %v2899, %v3965
  %v4030 = vmul.f32 %v2904, %v3966
  %v4031 = vmul.f32 %v2907, %v3967
  %v4032 = vmul.f32 %v2912, %v3968
  %v4033 = vmul.f32 %v2915, %v3969
  %v4034 = vmul.f32 %v2920, %v3970
  %v4035 = vmul.f32 %v2923, %v3971
  %v4036 = vmul.f32 %v2928, %v3972
  %v4037 = vmul.f32 %v2931, %v3973
  %v4038 = vmul.f32 %v2936, %v3974
  %v4039 = vmul.f32 %v2939, %v3975
  %v4040 = vmul.f32 %v2944, %v3976
  %v4041 = vmul.f32 %v2947, %v3977
  %v4042 = vmul.f32 %v2952, %v3978
  %v4043 = vmul.f32 %v2955, %v3979
  %v4044 = vmul.f32 %v2960, %v3980
  %v4045 = vmul.f32 %v2963, %v3981
  %v4046 = vmul.f32 %v2968, %v3982
  %v4047 = vmul.f32 %v2971, %v3983
  %v4048 = vmul.f32 %v2976, %v3984
  %v4049 = vmul.f32 %v2979, %v3985
  %v4050 = vmul.f32 %v2984, %v3986
  %v4051 = vmul.f32 %v2987, %v3987
  %v4052 = vmul.f32 %v2992, %v3988
  %v4053 = vmul.f32 %v2995, %v3989
  %v4054 = vmul.f32 %v3000, %v3990
  %v4055 = vmul.f32 %v3003, %v3991
  %v4056 = vmul.f32 %v3008, %v3992
  %v4057 = vmul.f32 %v3011, %v3993
  %v4058 = vmul.f32 %v3016, %v3994
  %v4059 = vmul.f32 %v3019, %v3995
  %v4060 = vmul.f32 %v3024, %v3996
  %v4061 = vmul.f32 %v3027, %v3997
  %v4062 = vmul.f32 %v3032, %v3998
  %v4063 = vmul.f32 %v3035, %v3999
  %v4064 = vmul.f32 %v3040, %v4000
  %v4065 = vmul.f32 %v3043, %v4001
  %v4066 = vmul.f32 %v3048, %v4002
  %v4067 = vmul.f32 %v3051, %v4003
  %v4068 = vmul.f32 %v3056, %v4004
  %v4069 = vmul.f32 %v3059, %v4005
  %v4070 = vmul.f32 %v3064, %v4006
  %v4071 = vmul.f32 %v3067, %v4007
  %v4072 = vmul.f32 %v3072, %v4008
  %v4073 = vmul.f32 %v3075, %v4009
  %v4074 = vmul.f32 %v3080, %v4010
  %v4075 = vmul.f32 %v3083, %v4011
  %v4076 = vmul.f32 %v3088, %v4012
  %v4077 = vmul.f32 %v3091, %v4013
  %v4078 = vmul.f32 %v3096, %v4014
  %v4079 = vmul.f32 %v3099, %v4015
  %v4080 = vmul.f32 %v3104, %v4016
  %v4081 = vmul.f32 %v3107, %v4017
  %v4082 = vmul.f32 %v3112, %v4018
  %v4083 = vmul.f32 %v3115, %v4019
  %v4084 = vmul.f32 %v3120, %v4020
  %v4085 = vmul.f32 %v3123, %v4021
  %v4086 = vadd.f32 %v4022, %v4023
  %v4087 = vadd.f32 %v4086, %v4024
  %v4088 = vadd.f32 %v4087, %v4025
  %v4089 = vadd.f32 %v4088, %v4026
  %v4090 = vadd.f32 %v4089, %v4027
  %v4091 = vadd.f32 %v4090, %v4028
  %v4092 = vadd.f32 %v4091, %v4029
  %v4093 = vadd.f32 %v4092, %v4030
  %v4094 = vadd.f32 %v4093, %v4031
  %v4095 = vadd.f32 %v4094, %v4032
  %v4096 = vadd.f32 %v4095, %v4033
  %v4097 = vadd.f32 %v4096, %v4034
  %v4098 = vadd.f32 %v4097, %v4035
  %v4099 = vadd.f32 %v4098, %v4036
  %v4100 = vadd.f32 %v4099, %v4037
  %v4101 = vadd.f32 %v4100, %v4038
  %v4102 = vadd.f32 %v4101, %v4039
  %v4103 = vadd.f32 %v4102, %v4040
  %v4104 = vadd.f32 %v4103, %v4041
  %v4105 = vadd.f32 %v4104, %v4042
  %v4106 = vadd.f32 %v4105, %v4043
  %v4107 = vadd.f32 %v4106, %v4044
  %v4108 = vadd.f32 %v4107, %v4045
  %v4109 = vadd.f32 %v4108, %v4046
  %v4110 = vadd.f32 %v4109, %v4047
  %v4111 = vadd.f32 %v4110, %v4048
  %v4112 = vadd.f32 %v4111, %v4049
  %v4113 = vadd.f32 %v4112, %v4050
  %v4114 = vadd.f32 %v4113, %v4051
  %v4115 = vadd.f32 %v4114, %v4052
  %v4116 = vadd.f32 %v4115, %v4053
  %v4117 = vadd.f32 %v4116, %v4054
  %v4118 = vadd.f32 %v4117, %v4055
  %v4119 = vadd.f32 %v4118, %v4056
  %v4120 = vadd.f32 %v4119, %v4057
  %v4121 = vadd.f32 %v4120, %v4058
  %v4122 = vadd.f32 %v4121, %v4059
  %v4123 = vadd.f32 %v4122, %v4060
  %v4124 = vadd.f32 %v4123, %v4061
  %v4125 = vadd.f32 %v4124, %v4062
  %v4126 = vadd.f32 %v4125, %v4063
  %v4127 = vadd.f32 %v4126, %v4064
  %v4128 = vadd.f32 %v4127, %v4065
  %v4129 = vadd.f32 %v4128, %v4066
  %v4130 = vadd.f32 %v4129, %v4067
  %v4131 = vadd.f32 %v4130, %v4068
  %v4132 = vadd.f32 %v4131, %v4069
  %v4133 = vadd.f32 %v4132, %v4070
  %v4134 = vadd.f32 %v4133, %v4071
  %v4135 = vadd.f32 %v4134, %v4072
  %v4136 = vadd.f32 %v4135, %v4073
  %v4137 = vadd.f32 %v4136, %v4074
  %v4138 = vadd.f32 %v4137, %v4075
  %v4139 = vadd.f32 %v4138, %v4076
  %v4140 = vadd.f32 %v4139, %v4077
  %v4141 = vadd.f32 %v4140, %v4078
  %v4142 = vadd.f32 %v4141, %v4079
  %v4143 = vadd.f32 %v4142, %v4080
  %v4144 = vadd.f32 %v4143, %v4081
  %v4145 = vadd.f32 %v4144, %v4082
  %v4146 = vadd.f32 %v4145, %v4083
  %v4147 = vadd.f32 %v4146, %v4084
  %v4148 = vadd.f32 %v4147, %v4085
  %v4149 = vrot.slane %v4148, 4
  %v4150 = vadd.f32 %v4148, %v4149
  %v4151 = vrot.slane %v4150, 2
  %v4152 = vadd.f32 %v4150, %v4151
  %v4153 = vrot.slane %v4152, 1
  %v4154 = vadd.f32 %v4152, %v4153
  %v4155 = vadd.f32 %v2132, %v4154
  %v4156 = vld [vmem:[%s3 + $0x200] sm:$0xf]
  %v4157 = vld [vmem:[%s3 + $0x204] sm:$0xf]
  %v4158 = vld [vmem:[%s3 + $0x208] sm:$0xf]
  %v4159 = vld [vmem:[%s3 + $0x20c] sm:$0xf]
  %v4160 = vld [vmem:[%s3 + $0x210] sm:$0xf]
  %v4161 = vld [vmem:[%s3 + $0x214] sm:$0xf]
  %v4162 = vld [vmem:[%s3 + $0x218] sm:$0xf]
  %v4163 = vld [vmem:[%s3 + $0x21c] sm:$0xf]
  %v4164 = vld [vmem:[%s3 + $0x220] sm:$0xf]
  %v4165 = vld [vmem:[%s3 + $0x224] sm:$0xf]
  %v4166 = vld [vmem:[%s3 + $0x228] sm:$0xf]
  %v4167 = vld [vmem:[%s3 + $0x22c] sm:$0xf]
  %v4168 = vld [vmem:[%s3 + $0x230] sm:$0xf]
  %v4169 = vld [vmem:[%s3 + $0x234] sm:$0xf]
  %v4170 = vld [vmem:[%s3 + $0x238] sm:$0xf]
  %v4171 = vld [vmem:[%s3 + $0x23c] sm:$0xf]
  %v4172 = vld [vmem:[%s3 + $0x240] sm:$0xf]
  %v4173 = vld [vmem:[%s3 + $0x244] sm:$0xf]
  %v4174 = vld [vmem:[%s3 + $0x248] sm:$0xf]
  %v4175 = vld [vmem:[%s3 + $0x24c] sm:$0xf]
  %v4176 = vld [vmem:[%s3 + $0x250] sm:$0xf]
  %v4177 = vld [vmem:[%s3 + $0x254] sm:$0xf]
  %v4178 = vld [vmem:[%s3 + $0x258] sm:$0xf]
  %v4179 = vld [vmem:[%s3 + $0x25c] sm:$0xf]
  %v4180 = vld [vmem:[%s3 + $0x260] sm:$0xf]
  %v4181 = vld [vmem:[%s3 + $0x264] sm:$0xf]
  %v4182 = vld [vmem:[%s3 + $0x268] sm:$0xf]
  %v4183 = vld [vmem:[%s3 + $0x26c] sm:$0xf]
  %v4184 = vld [vmem:[%s3 + $0x270] sm:$0xf]
  %v4185 = vld [vmem:[%s3 + $0x274] sm:$0xf]
  %v4186 = vld [vmem:[%s3 + $0x278] sm:$0xf]
  %v4187 = vld [vmem:[%s3 + $0x27c] sm:$0xf]
  %v4188 = vld [vmem:[%s3 + $0x280] sm:$0xf]
  %v4189 = vld [vmem:[%s3 + $0x284] sm:$0xf]
  %v4190 = vld [vmem:[%s3 + $0x288] sm:$0xf]
  %v4191 = vld [vmem:[%s3 + $0x28c] sm:$0xf]
  %v4192 = vld [vmem:[%s3 + $0x290] sm:$0xf]
  %v4193 = vld [vmem:[%s3 + $0x294] sm:$0xf]
  %v4194 = vld [vmem:[%s3 + $0x298] sm:$0xf]
  %v4195 = vld [vmem:[%s3 + $0x29c] sm:$0xf]
  %v4196 = vld [vmem:[%s3 + $0x2a0] sm:$0xf]
  %v4197 = vld [vmem:[%s3 + $0x2a4] sm:$0xf]
  %v4198 = vld [vmem:[%s3 + $0x2a8] sm:$0xf]
  %v4199 = vld [vmem:[%s3 + $0x2ac] sm:$0xf]
  %v4200 = vld [vmem:[%s3 + $0x2b0] sm:$0xf]
  %v4201 = vld [vmem:[%s3 + $0x2b4] sm:$0xf]
  %v4202 = vld [vmem:[%s3 + $0x2b8] sm:$0xf]
  %v4203 = vld [vmem:[%s3 + $0x2bc] sm:$0xf]
  %v4204 = vld [vmem:[%s3 + $0x2c0] sm:$0xf]
  %v4205 = vld [vmem:[%s3 + $0x2c4] sm:$0xf]
  %v4206 = vld [vmem:[%s3 + $0x2c8] sm:$0xf]
  %v4207 = vld [vmem:[%s3 + $0x2cc] sm:$0xf]
  %v4208 = vld [vmem:[%s3 + $0x2d0] sm:$0xf]
  %v4209 = vld [vmem:[%s3 + $0x2d4] sm:$0xf]
  %v4210 = vld [vmem:[%s3 + $0x2d8] sm:$0xf]
  %v4211 = vld [vmem:[%s3 + $0x2dc] sm:$0xf]
  %v4212 = vld [vmem:[%s3 + $0x2e0] sm:$0xf]
  %v4213 = vld [vmem:[%s3 + $0x2e4] sm:$0xf]
  %v4214 = vld [vmem:[%s3 + $0x2e8] sm:$0xf]
  %v4215 = vld [vmem:[%s3 + $0x2ec] sm:$0xf]
  %v4216 = vld [vmem:[%s3 + $0x2f0] sm:$0xf]
  %v4217 = vld [vmem:[%s3 + $0x2f4] sm:$0xf]
  %v4218 = vld [vmem:[%s3 + $0x2f8] sm:$0xf]
  %v4219 = vld [vmem:[%s3 + $0x2fc] sm:$0xf]
  %v4220 = vld [vmem:[%s4 + $0x400] sm:$0xff]
  %v4221 = vld [vmem:[%s4 + $0x408] sm:$0xff]
  %v4222 = vld [vmem:[%s4 + $0x410] sm:$0xff]
  %v4223 = vld [vmem:[%s4 + $0x418] sm:$0xff]
  %v4224 = vld [vmem:[%s4 + $0x420] sm:$0xff]
  %v4225 = vld [vmem:[%s4 + $0x428] sm:$0xff]
  %v4226 = vld [vmem:[%s4 + $0x430] sm:$0xff]
  %v4227 = vld [vmem:[%s4 + $0x438] sm:$0xff]
  %v4228 = vld [vmem:[%s4 + $0x440] sm:$0xff]
  %v4229 = vld [vmem:[%s4 + $0x448] sm:$0xff]
  %v4230 = vld [vmem:[%s4 + $0x450] sm:$0xff]
  %v4231 = vld [vmem:[%s4 + $0x458] sm:$0xff]
  %v4232 = vld [vmem:[%s4 + $0x460] sm:$0xff]
  %v4233 = vld [vmem:[%s4 + $0x468] sm:$0xff]
  %v4234 = vld [vmem:[%s4 + $0x470] sm:$0xff]
  %v4235 = vld [vmem:[%s4 + $0x478] sm:$0xff]
  %v4236 = vld [vmem:[%s4 + $0x480] sm:$0xff]
  %v4237 = vld [vmem:[%s4 + $0x488] sm:$0xff]
  %v4238 = vld [vmem:[%s4 + $0x490] sm:$0xff]
  %v4239 = vld [vmem:[%s4 + $0x498] sm:$0xff]
  %v4240 = vld [vmem:[%s4 + $0x4a0] sm:$0xff]
  %v4241 = vld [vmem:[%s4 + $0x4a8] sm:$0xff]
  %v4242 = vld [vmem:[%s4 + $0x4b0] sm:$0xff]
  %v4243 = vld [vmem:[%s4 + $0x4b8] sm:$0xff]
  %v4244 = vld [vmem:[%s4 + $0x4c0] sm:$0xff]
  %v4245 = vld [vmem:[%s4 + $0x4c8] sm:$0xff]
  %v4246 = vld [vmem:[%s4 + $0x4d0] sm:$0xff]
  %v4247 = vld [vmem:[%s4 + $0x4d8] sm:$0xff]
  %v4248 = vld [vmem:[%s4 + $0x4e0] sm:$0xff]
  %v4249 = vld [vmem:[%s4 + $0x4e8] sm:$0xff]
  %v4250 = vld [vmem:[%s4 + $0x4f0] sm:$0xff]
  %v4251 = vld [vmem:[%s4 + $0x4f8] sm:$0xff]
  %v4252 = vld [vmem:[%s4 + $0x500] sm:$0xff]
  %v4253 = vld [vmem:[%s4 + $0x508] sm:$0xff]
  %v4254 = vld [vmem:[%s4 + $0x510] sm:$0xff]
  %v4255 = vld [vmem:[%s4 + $0x518] sm:$0xff]
  %v4256 = vld [vmem:[%s4 + $0x520] sm:$0xff]
  %v4257 = vld [vmem:[%s4 + $0x528] sm:$0xff]
  %v4258 = vld [vmem:[%s4 + $0x530] sm:$0xff]
  %v4259 = vld [vmem:[%s4 + $0x538] sm:$0xff]
  %v4260 = vld [vmem:[%s4 + $0x540] sm:$0xff]
  %v4261 = vld [vmem:[%s4 + $0x548] sm:$0xff]
  %v4262 = vld [vmem:[%s4 + $0x550] sm:$0xff]
  %v4263 = vld [vmem:[%s4 + $0x558] sm:$0xff]
  %v4264 = vld [vmem:[%s4 + $0x560] sm:$0xff]
  %v4265 = vld [vmem:[%s4 + $0x568] sm:$0xff]
  %v4266 = vld [vmem:[%s4 + $0x570] sm:$0xff]
  %v4267 = vld [vmem:[%s4 + $0x578] sm:$0xff]
  %v4268 = vld [vmem:[%s4 + $0x580] sm:$0xff]
  %v4269 = vld [vmem:[%s4 + $0x588] sm:$0xff]
  %v4270 = vld [vmem:[%s4 + $0x590] sm:$0xff]
  %v4271 = vld [vmem:[%s4 + $0x598] sm:$0xff]
  %v4272 = vld [vmem:[%s4 + $0x5a0] sm:$0xff]
  %v4273 = vld [vmem:[%s4 + $0x5a8] sm:$0xff]
  %v4274 = vld [vmem:[%s4 + $0x5b0] sm:$0xff]
  %v4275 = vld [vmem:[%s4 + $0x5b8] sm:$0xff]
  %v4276 = vld [vmem:[%s4 + $0x5c0] sm:$0xff]
  %v4277 = vld [vmem:[%s4 + $0x5c8] sm:$0xff]
  %v4278 = vld [vmem:[%s4 + $0x5d0] sm:$0xff]
  %v4279 = vld [vmem:[%s4 + $0x5d8] sm:$0xff]
  %v4280 = vld [vmem:[%s4 + $0x5e0] sm:$0xff]
  %v4281 = vld [vmem:[%s4 + $0x5e8] sm:$0xff]
  %v4282 = vld [vmem:[%s4 + $0x5f0] sm:$0xff]
  %v4283 = vld [vmem:[%s4 + $0x5f8] sm:$0xff]
  %4285 = vset.pattern.permute.xlu0 0
  %4286 = vperm.xlu0 %4285, %v4220
  %v4287 = vpop.permute.xlu0 %4286
  %4290 = vset.pattern.permute.xlu0 0
  %4291 = vperm.xlu0 %4290, %v4221
  %v4292 = vpop.permute.xlu0 %4291
  %4295 = vset.pattern.permute.xlu0 0
  %4296 = vperm.xlu0 %4295, %v4222
  %v4297 = vpop.permute.xlu0 %4296
  %4300 = vset.pattern.permute.xlu0 0
  %4301 = vperm.xlu0 %4300, %v4223
  %v4302 = vpop.permute.xlu0 %4301
  %4305 = vset.pattern.permute.xlu0 0
  %4306 = vperm.xlu0 %4305, %v4224
  %v4307 = vpop.permute.xlu0 %4306
  %4310 = vset.pattern.permute.xlu0 0
  %4311 = vperm.xlu0 %4310, %v4225
  %v4312 = vpop.permute.xlu0 %4311
  %4315 = vset.pattern.permute.xlu0 0
  %4316 = vperm.xlu0 %4315, %v4226
  %v4317 = vpop.permute.xlu0 %4316
  %4320 = vset.pattern.permute.xlu0 0
  %4321 = vperm.xlu0 %4320, %v4227
  %v4322 = vpop.permute.xlu0 %4321
  %4325 = vset.pattern.permute.xlu0 0
  %4326 = vperm.xlu0 %4325, %v4228
  %v4327 = vpop.permute.xlu0 %4326
  %4330 = vset.pattern.permute.xlu0 0
  %4331 = vperm.xlu0 %4330, %v4229
  %v4332 = vpop.permute.xlu0 %4331
  %4335 = vset.pattern.permute.xlu0 0
  %4336 = vperm.xlu0 %4335, %v4230
  %v4337 = vpop.permute.xlu0 %4336
  %4340 = vset.pattern.permute.xlu0 0
  %4341 = vperm.xlu0 %4340, %v4231
  %v4342 = vpop.permute.xlu0 %4341
  %4345 = vset.pattern.permute.xlu0 0
  %4346 = vperm.xlu0 %4345, %v4232
  %v4347 = vpop.permute.xlu0 %4346
  %4350 = vset.pattern.permute.xlu0 0
  %4351 = vperm.xlu0 %4350, %v4233
  %v4352 = vpop.permute.xlu0 %4351
  %4355 = vset.pattern.permute.xlu0 0
  %4356 = vperm.xlu0 %4355, %v4234
  %v4357 = vpop.permute.xlu0 %4356
  %4360 = vset.pattern.permute.xlu0 0
  %4361 = vperm.xlu0 %4360, %v4235
  %v4362 = vpop.permute.xlu0 %4361
  %4365 = vset.pattern.permute.xlu0 0
  %4366 = vperm.xlu0 %4365, %v4236
  %v4367 = vpop.permute.xlu0 %4366
  %4370 = vset.pattern.permute.xlu0 0
  %4371 = vperm.xlu0 %4370, %v4237
  %v4372 = vpop.permute.xlu0 %4371
  %4375 = vset.pattern.permute.xlu0 0
  %4376 = vperm.xlu0 %4375, %v4238
  %v4377 = vpop.permute.xlu0 %4376
  %4380 = vset.pattern.permute.xlu0 0
  %4381 = vperm.xlu0 %4380, %v4239
  %v4382 = vpop.permute.xlu0 %4381
  %4385 = vset.pattern.permute.xlu0 0
  %4386 = vperm.xlu0 %4385, %v4240
  %v4387 = vpop.permute.xlu0 %4386
  %4390 = vset.pattern.permute.xlu0 0
  %4391 = vperm.xlu0 %4390, %v4241
  %v4392 = vpop.permute.xlu0 %4391
  %4395 = vset.pattern.permute.xlu0 0
  %4396 = vperm.xlu0 %4395, %v4242
  %v4397 = vpop.permute.xlu0 %4396
  %4400 = vset.pattern.permute.xlu0 0
  %4401 = vperm.xlu0 %4400, %v4243
  %v4402 = vpop.permute.xlu0 %4401
  %4405 = vset.pattern.permute.xlu0 0
  %4406 = vperm.xlu0 %4405, %v4244
  %v4407 = vpop.permute.xlu0 %4406
  %4410 = vset.pattern.permute.xlu0 0
  %4411 = vperm.xlu0 %4410, %v4245
  %v4412 = vpop.permute.xlu0 %4411
  %4415 = vset.pattern.permute.xlu0 0
  %4416 = vperm.xlu0 %4415, %v4246
  %v4417 = vpop.permute.xlu0 %4416
  %4420 = vset.pattern.permute.xlu0 0
  %4421 = vperm.xlu0 %4420, %v4247
  %v4422 = vpop.permute.xlu0 %4421
  %4425 = vset.pattern.permute.xlu0 0
  %4426 = vperm.xlu0 %4425, %v4248
  %v4427 = vpop.permute.xlu0 %4426
  %4430 = vset.pattern.permute.xlu0 0
  %4431 = vperm.xlu0 %4430, %v4249
  %v4432 = vpop.permute.xlu0 %4431
  %4435 = vset.pattern.permute.xlu0 0
  %4436 = vperm.xlu0 %4435, %v4250
  %v4437 = vpop.permute.xlu0 %4436
  %4440 = vset.pattern.permute.xlu0 0
  %4441 = vperm.xlu0 %4440, %v4251
  %v4442 = vpop.permute.xlu0 %4441
  %4445 = vset.pattern.permute.xlu0 0
  %4446 = vperm.xlu0 %4445, %v4252
  %v4447 = vpop.permute.xlu0 %4446
  %4450 = vset.pattern.permute.xlu0 0
  %4451 = vperm.xlu0 %4450, %v4253
  %v4452 = vpop.permute.xlu0 %4451
  %4455 = vset.pattern.permute.xlu0 0
  %4456 = vperm.xlu0 %4455, %v4254
  %v4457 = vpop.permute.xlu0 %4456
  %4460 = vset.pattern.permute.xlu0 0
  %4461 = vperm.xlu0 %4460, %v4255
  %v4462 = vpop.permute.xlu0 %4461
  %4465 = vset.pattern.permute.xlu0 0
  %4466 = vperm.xlu0 %4465, %v4256
  %v4467 = vpop.permute.xlu0 %4466
  %4470 = vset.pattern.permute.xlu0 0
  %4471 = vperm.xlu0 %4470, %v4257
  %v4472 = vpop.permute.xlu0 %4471
  %4475 = vset.pattern.permute.xlu0 0
  %4476 = vperm.xlu0 %4475, %v4258
  %v4477 = vpop.permute.xlu0 %4476
  %4480 = vset.pattern.permute.xlu0 0
  %4481 = vperm.xlu0 %4480, %v4259
  %v4482 = vpop.permute.xlu0 %4481
  %4485 = vset.pattern.permute.xlu0 0
  %4486 = vperm.xlu0 %4485, %v4260
  %v4487 = vpop.permute.xlu0 %4486
  %4490 = vset.pattern.permute.xlu0 0
  %4491 = vperm.xlu0 %4490, %v4261
  %v4492 = vpop.permute.xlu0 %4491
  %4495 = vset.pattern.permute.xlu0 0
  %4496 = vperm.xlu0 %4495, %v4262
  %v4497 = vpop.permute.xlu0 %4496
  %4500 = vset.pattern.permute.xlu0 0
  %4501 = vperm.xlu0 %4500, %v4263
  %v4502 = vpop.permute.xlu0 %4501
  %4505 = vset.pattern.permute.xlu0 0
  %4506 = vperm.xlu0 %4505, %v4264
  %v4507 = vpop.permute.xlu0 %4506
  %4510 = vset.pattern.permute.xlu0 0
  %4511 = vperm.xlu0 %4510, %v4265
  %v4512 = vpop.permute.xlu0 %4511
  %4515 = vset.pattern.permute.xlu0 0
  %4516 = vperm.xlu0 %4515, %v4266
  %v4517 = vpop.permute.xlu0 %4516
  %4520 = vset.pattern.permute.xlu0 0
  %4521 = vperm.xlu0 %4520, %v4267
  %v4522 = vpop.permute.xlu0 %4521
  %4525 = vset.pattern.permute.xlu0 0
  %4526 = vperm.xlu0 %4525, %v4268
  %v4527 = vpop.permute.xlu0 %4526
  %4530 = vset.pattern.permute.xlu0 0
  %4531 = vperm.xlu0 %4530, %v4269
  %v4532 = vpop.permute.xlu0 %4531
  %4535 = vset.pattern.permute.xlu0 0
  %4536 = vperm.xlu0 %4535, %v4270
  %v4537 = vpop.permute.xlu0 %4536
  %4540 = vset.pattern.permute.xlu0 0
  %4541 = vperm.xlu0 %4540, %v4271
  %v4542 = vpop.permute.xlu0 %4541
  %4545 = vset.pattern.permute.xlu0 0
  %4546 = vperm.xlu0 %4545, %v4272
  %v4547 = vpop.permute.xlu0 %4546
  %4550 = vset.pattern.permute.xlu0 0
  %4551 = vperm.xlu0 %4550, %v4273
  %v4552 = vpop.permute.xlu0 %4551
  %4555 = vset.pattern.permute.xlu0 0
  %4556 = vperm.xlu0 %4555, %v4274
  %v4557 = vpop.permute.xlu0 %4556
  %4560 = vset.pattern.permute.xlu0 0
  %4561 = vperm.xlu0 %4560, %v4275
  %v4562 = vpop.permute.xlu0 %4561
  %4565 = vset.pattern.permute.xlu0 0
  %4566 = vperm.xlu0 %4565, %v4276
  %v4567 = vpop.permute.xlu0 %4566
  %4570 = vset.pattern.permute.xlu0 0
  %4571 = vperm.xlu0 %4570, %v4277
  %v4572 = vpop.permute.xlu0 %4571
  %4575 = vset.pattern.permute.xlu0 0
  %4576 = vperm.xlu0 %4575, %v4278
  %v4577 = vpop.permute.xlu0 %4576
  %4580 = vset.pattern.permute.xlu0 0
  %4581 = vperm.xlu0 %4580, %v4279
  %v4582 = vpop.permute.xlu0 %4581
  %4585 = vset.pattern.permute.xlu0 0
  %4586 = vperm.xlu0 %4585, %v4280
  %v4587 = vpop.permute.xlu0 %4586
  %4590 = vset.pattern.permute.xlu0 0
  %4591 = vperm.xlu0 %4590, %v4281
  %v4592 = vpop.permute.xlu0 %4591
  %4595 = vset.pattern.permute.xlu0 0
  %4596 = vperm.xlu0 %4595, %v4282
  %v4597 = vpop.permute.xlu0 %4596
  %4600 = vset.pattern.permute.xlu0 0
  %4601 = vperm.xlu0 %4600, %v4283
  %v4602 = vpop.permute.xlu0 %4601
  %v4668 = vunpack.c.l.b16 %v4156
  %v4669 = vunpack.c.l.b16 %v4157
  %v4670 = vunpack.c.l.b16 %v4158
  %v4671 = vunpack.c.l.b16 %v4159
  %v4672 = vunpack.c.l.b16 %v4160
  %v4673 = vunpack.c.l.b16 %v4161
  %v4674 = vunpack.c.l.b16 %v4162
  %v4675 = vunpack.c.l.b16 %v4163
  %v4676 = vunpack.c.l.b16 %v4164
  %v4677 = vunpack.c.l.b16 %v4165
  %v4678 = vunpack.c.l.b16 %v4166
  %v4679 = vunpack.c.l.b16 %v4167
  %v4680 = vunpack.c.l.b16 %v4168
  %v4681 = vunpack.c.l.b16 %v4169
  %v4682 = vunpack.c.l.b16 %v4170
  %v4683 = vunpack.c.l.b16 %v4171
  %v4684 = vunpack.c.l.b16 %v4172
  %v4685 = vunpack.c.l.b16 %v4173
  %v4686 = vunpack.c.l.b16 %v4174
  %v4687 = vunpack.c.l.b16 %v4175
  %v4688 = vunpack.c.l.b16 %v4176
  %v4689 = vunpack.c.l.b16 %v4177
  %v4690 = vunpack.c.l.b16 %v4178
  %v4691 = vunpack.c.l.b16 %v4179
  %v4692 = vunpack.c.l.b16 %v4180
  %v4693 = vunpack.c.l.b16 %v4181
  %v4694 = vunpack.c.l.b16 %v4182
  %v4695 = vunpack.c.l.b16 %v4183
  %v4696 = vunpack.c.l.b16 %v4184
  %v4697 = vunpack.c.l.b16 %v4185
  %v4698 = vunpack.c.l.b16 %v4186
  %v4699 = vunpack.c.l.b16 %v4187
  %v4700 = vunpack.c.l.b16 %v4188
  %v4701 = vunpack.c.l.b16 %v4189
  %v4702 = vunpack.c.l.b16 %v4190
  %v4703 = vunpack.c.l.b16 %v4191
  %v4704 = vunpack.c.l.b16 %v4192
  %v4705 = vunpack.c.l.b16 %v4193
  %v4706 = vunpack.c.l.b16 %v4194
  %v4707 = vunpack.c.l.b16 %v4195
  %v4708 = vunpack.c.l.b16 %v4196
  %v4709 = vunpack.c.l.b16 %v4197
  %v4710 = vunpack.c.l.b16 %v4198
  %v4711 = vunpack.c.l.b16 %v4199
  %v4712 = vunpack.c.l.b16 %v4200
  %v4713 = vunpack.c.l.b16 %v4201
  %v4714 = vunpack.c.l.b16 %v4202
  %v4715 = vunpack.c.l.b16 %v4203
  %v4716 = vunpack.c.l.b16 %v4204
  %v4717 = vunpack.c.l.b16 %v4205
  %v4718 = vunpack.c.l.b16 %v4206
  %v4719 = vunpack.c.l.b16 %v4207
  %v4720 = vunpack.c.l.b16 %v4208
  %v4721 = vunpack.c.l.b16 %v4209
  %v4722 = vunpack.c.l.b16 %v4210
  %v4723 = vunpack.c.l.b16 %v4211
  %v4724 = vunpack.c.l.b16 %v4212
  %v4725 = vunpack.c.l.b16 %v4213
  %v4726 = vunpack.c.l.b16 %v4214
  %v4727 = vunpack.c.l.b16 %v4215
  %v4728 = vunpack.c.l.b16 %v4216
  %v4729 = vunpack.c.l.b16 %v4217
  %v4730 = vunpack.c.l.b16 %v4218
  %v4731 = vunpack.c.l.b16 %v4219
  %v4732 = vpack.c.b16 %v4669, %v4668
  %v4733 = vpack.c.b16 %v4671, %v4670
  %v4734 = vpack.c.b16 %v4673, %v4672
  %v4735 = vpack.c.b16 %v4675, %v4674
  %v4736 = vpack.c.b16 %v4677, %v4676
  %v4737 = vpack.c.b16 %v4679, %v4678
  %v4738 = vpack.c.b16 %v4681, %v4680
  %v4739 = vpack.c.b16 %v4683, %v4682
  %v4740 = vpack.c.b16 %v4685, %v4684
  %v4741 = vpack.c.b16 %v4687, %v4686
  %v4742 = vpack.c.b16 %v4689, %v4688
  %v4743 = vpack.c.b16 %v4691, %v4690
  %v4744 = vpack.c.b16 %v4693, %v4692
  %v4745 = vpack.c.b16 %v4695, %v4694
  %v4746 = vpack.c.b16 %v4697, %v4696
  %v4747 = vpack.c.b16 %v4699, %v4698
  %v4748 = vpack.c.b16 %v4701, %v4700
  %v4749 = vpack.c.b16 %v4703, %v4702
  %v4750 = vpack.c.b16 %v4705, %v4704
  %v4751 = vpack.c.b16 %v4707, %v4706
  %v4752 = vpack.c.b16 %v4709, %v4708
  %v4753 = vpack.c.b16 %v4711, %v4710
  %v4754 = vpack.c.b16 %v4713, %v4712
  %v4755 = vpack.c.b16 %v4715, %v4714
  %v4756 = vpack.c.b16 %v4717, %v4716
  %v4757 = vpack.c.b16 %v4719, %v4718
  %v4758 = vpack.c.b16 %v4721, %v4720
  %v4759 = vpack.c.b16 %v4723, %v4722
  %v4760 = vpack.c.b16 %v4725, %v4724
  %v4761 = vpack.c.b16 %v4727, %v4726
  %v4762 = vpack.c.b16 %v4729, %v4728
  %v4763 = vpack.c.b16 %v4731, %v4730
  %v4765 = vsel %vm717, %v4732, 0
  %v4768 = vsel %vm717, %v4733, 0
  %v4771 = vsel %vm717, %v4734, 0
  %v4774 = vsel %vm717, %v4735, 0
  %v4777 = vsel %vm717, %v4736, 0
  %v4780 = vsel %vm717, %v4737, 0
  %v4783 = vsel %vm717, %v4738, 0
  %v4786 = vsel %vm717, %v4739, 0
  %v4789 = vsel %vm717, %v4740, 0
  %v4792 = vsel %vm717, %v4741, 0
  %v4795 = vsel %vm717, %v4742, 0
  %v4798 = vsel %vm717, %v4743, 0
  %v4801 = vsel %vm717, %v4744, 0
  %v4804 = vsel %vm717, %v4745, 0
  %v4807 = vsel %vm717, %v4746, 0
  %v4810 = vsel %vm717, %v4747, 0
  %v4813 = vsel %vm717, %v4748, 0
  %v4816 = vsel %vm717, %v4749, 0
  %v4819 = vsel %vm717, %v4750, 0
  %v4822 = vsel %vm717, %v4751, 0
  %v4825 = vsel %vm717, %v4752, 0
  %v4828 = vsel %vm717, %v4753, 0
  %v4831 = vsel %vm717, %v4754, 0
  %v4834 = vsel %vm717, %v4755, 0
  %v4837 = vsel %vm717, %v4756, 0
  %v4840 = vsel %vm717, %v4757, 0
  %v4843 = vsel %vm717, %v4758, 0
  %v4846 = vsel %vm717, %v4759, 0
  %v4849 = vsel %vm717, %v4760, 0
  %v4852 = vsel %vm717, %v4761, 0
  %v4855 = vsel %vm717, %v4762, 0
  %v4858 = vsel %vm717, %v4763, 0
  %4860 = vmatprep.subr.bf16.mxu0 0
  %4861 = vmatpush1.bf16.msra.mxu0 0
  %4862 = vmatprep.subr.bf16.mxu0 0
  %4863 = vmatpush1.bf16.msra.mxu0 0
  %4864 = vmatprep.subr.bf16.mxu0 0
  %4865 = vmatpush1.bf16.msra.mxu0 0
  %4866 = vmatprep.subr.bf16.mxu0 0
  %4867 = vmatpush1.bf16.msra.mxu0 0
  %4868 = vmatprep.subr.bf16.mxu0 0
  %4869 = vmatpush1.bf16.msra.mxu0 0
  %4870 = vmatprep.subr.bf16.mxu0 0
  %4871 = vmatpush1.bf16.msra.mxu0 0
  %4872 = vmatprep.subr.bf16.mxu0 0
  %4873 = vmatpush1.bf16.msra.mxu0 %v108
  %4874 = vmatprep.subr.bf16.mxu0 0
  %4875 = vmatpush1.bf16.msra.mxu0 %v107
  %4876 = vmatprep.subr.bf16.mxu0 0
  %4877 = vmatpush2.bf16.msra.mxu0 0
  %4878 = vmatprep.subr.bf16.mxu0 0
  %4879 = vmatpush2.bf16.msra.mxu0 0
  %4880 = vmatprep.subr.bf16.mxu0 0
  %4881 = vmatpush2.bf16.msra.mxu0 0
  %4882 = vmatprep.subr.bf16.mxu0 0
  %4883 = vmatpush2.bf16.msra.mxu0 0
  %4884 = vmatprep.subr.bf16.mxu0 0
  %4885 = vmatpush2.bf16.msra.mxu0 0
  %4886 = vmatprep.subr.bf16.mxu0 0
  %4887 = vmatpush2.bf16.msra.mxu0 0
  %4888 = vmatprep.subr.bf16.mxu0 0
  %4889 = vmatpush2.bf16.msra.mxu0 0
  %4890 = vmatprep.subr.bf16.mxu0 0
  %4891 = vmatpush2.bf16.msra.mxu0 0
  %4892 = vmatprep.mubr.bf16.mxu0 0
  %4893 = vmatmul.mubr.bf16.gmra.mxu0 %v4765
  %v4894 = vpop.f32.mrf.mxu0
  %v4895 = vadd.f32 %v4287, %v4894
  %v4896 = vpop.f32.mrf.mxu0
  %v4897 = vpop.f32.mrf.mxu0
  %v4898 = vadd.f32 %v4292, %v4897
  %v4899 = vpop.f32.mrf.mxu0
  %4900 = vmatprep.mubr.bf16.mxu0 0
  %4901 = vmatmul.mubr.bf16.gmra.mxu0 %v4768
  %v4902 = vpop.f32.mrf.mxu0
  %v4903 = vadd.f32 %v4297, %v4902
  %v4904 = vpop.f32.mrf.mxu0
  %v4905 = vpop.f32.mrf.mxu0
  %v4906 = vadd.f32 %v4302, %v4905
  %v4907 = vpop.f32.mrf.mxu0
  %4908 = vmatprep.mubr.bf16.mxu0 0
  %4909 = vmatmul.mubr.bf16.gmra.mxu0 %v4771
  %v4910 = vpop.f32.mrf.mxu0
  %v4911 = vadd.f32 %v4307, %v4910
  %v4912 = vpop.f32.mrf.mxu0
  %v4913 = vpop.f32.mrf.mxu0
  %v4914 = vadd.f32 %v4312, %v4913
  %v4915 = vpop.f32.mrf.mxu0
  %4916 = vmatprep.mubr.bf16.mxu0 0
  %4917 = vmatmul.mubr.bf16.gmra.mxu0 %v4774
  %v4918 = vpop.f32.mrf.mxu0
  %v4919 = vadd.f32 %v4317, %v4918
  %v4920 = vpop.f32.mrf.mxu0
  %v4921 = vpop.f32.mrf.mxu0
  %v4922 = vadd.f32 %v4322, %v4921
  %v4923 = vpop.f32.mrf.mxu0
  %4924 = vmatprep.mubr.bf16.mxu0 0
  %4925 = vmatmul.mubr.bf16.gmra.mxu0 %v4777
  %v4926 = vpop.f32.mrf.mxu0
  %v4927 = vadd.f32 %v4327, %v4926
  %v4928 = vpop.f32.mrf.mxu0
  %v4929 = vpop.f32.mrf.mxu0
  %v4930 = vadd.f32 %v4332, %v4929
  %v4931 = vpop.f32.mrf.mxu0
  %4932 = vmatprep.mubr.bf16.mxu0 0
  %4933 = vmatmul.mubr.bf16.gmra.mxu0 %v4780
  %v4934 = vpop.f32.mrf.mxu0
  %v4935 = vadd.f32 %v4337, %v4934
  %v4936 = vpop.f32.mrf.mxu0
  %v4937 = vpop.f32.mrf.mxu0
  %v4938 = vadd.f32 %v4342, %v4937
  %v4939 = vpop.f32.mrf.mxu0
  %4940 = vmatprep.mubr.bf16.mxu0 0
  %4941 = vmatmul.mubr.bf16.gmra.mxu0 %v4783
  %v4942 = vpop.f32.mrf.mxu0
  %v4943 = vadd.f32 %v4347, %v4942
  %v4944 = vpop.f32.mrf.mxu0
  %v4945 = vpop.f32.mrf.mxu0
  %v4946 = vadd.f32 %v4352, %v4945
  %v4947 = vpop.f32.mrf.mxu0
  %4948 = vmatprep.mubr.bf16.mxu0 0
  %4949 = vmatmul.mubr.bf16.gmra.mxu0 %v4786
  %v4950 = vpop.f32.mrf.mxu0
  %v4951 = vadd.f32 %v4357, %v4950
  %v4952 = vpop.f32.mrf.mxu0
  %v4953 = vpop.f32.mrf.mxu0
  %v4954 = vadd.f32 %v4362, %v4953
  %v4955 = vpop.f32.mrf.mxu0
  %4956 = vmatprep.mubr.bf16.mxu0 0
  %4957 = vmatmul.mubr.bf16.gmra.mxu0 %v4789
  %v4958 = vpop.f32.mrf.mxu0
  %v4959 = vadd.f32 %v4367, %v4958
  %v4960 = vpop.f32.mrf.mxu0
  %v4961 = vpop.f32.mrf.mxu0
  %v4962 = vadd.f32 %v4372, %v4961
  %v4963 = vpop.f32.mrf.mxu0
  %4964 = vmatprep.mubr.bf16.mxu0 0
  %4965 = vmatmul.mubr.bf16.gmra.mxu0 %v4792
  %v4966 = vpop.f32.mrf.mxu0
  %v4967 = vadd.f32 %v4377, %v4966
  %v4968 = vpop.f32.mrf.mxu0
  %v4969 = vpop.f32.mrf.mxu0
  %v4970 = vadd.f32 %v4382, %v4969
  %v4971 = vpop.f32.mrf.mxu0
  %4972 = vmatprep.mubr.bf16.mxu0 0
  %4973 = vmatmul.mubr.bf16.gmra.mxu0 %v4795
  %v4974 = vpop.f32.mrf.mxu0
  %v4975 = vadd.f32 %v4387, %v4974
  %v4976 = vpop.f32.mrf.mxu0
  %v4977 = vpop.f32.mrf.mxu0
  %v4978 = vadd.f32 %v4392, %v4977
  %v4979 = vpop.f32.mrf.mxu0
  %4980 = vmatprep.mubr.bf16.mxu0 0
  %4981 = vmatmul.mubr.bf16.gmra.mxu0 %v4798
  %v4982 = vpop.f32.mrf.mxu0
  %v4983 = vadd.f32 %v4397, %v4982
  %v4984 = vpop.f32.mrf.mxu0
  %v4985 = vpop.f32.mrf.mxu0
  %v4986 = vadd.f32 %v4402, %v4985
  %v4987 = vpop.f32.mrf.mxu0
  %4988 = vmatprep.mubr.bf16.mxu0 0
  %4989 = vmatmul.mubr.bf16.gmra.mxu0 %v4801
  %v4990 = vpop.f32.mrf.mxu0
  %v4991 = vadd.f32 %v4407, %v4990
  %v4992 = vpop.f32.mrf.mxu0
  %v4993 = vpop.f32.mrf.mxu0
  %v4994 = vadd.f32 %v4412, %v4993
  %v4995 = vpop.f32.mrf.mxu0
  %4996 = vmatprep.mubr.bf16.mxu0 0
  %4997 = vmatmul.mubr.bf16.gmra.mxu0 %v4804
  %v4998 = vpop.f32.mrf.mxu0
  %v4999 = vadd.f32 %v4417, %v4998
  %v5000 = vpop.f32.mrf.mxu0
  %v5001 = vpop.f32.mrf.mxu0
  %v5002 = vadd.f32 %v4422, %v5001
  %v5003 = vpop.f32.mrf.mxu0
  %5004 = vmatprep.mubr.bf16.mxu0 0
  %5005 = vmatmul.mubr.bf16.gmra.mxu0 %v4807
  %v5006 = vpop.f32.mrf.mxu0
  %v5007 = vadd.f32 %v4427, %v5006
  %v5008 = vpop.f32.mrf.mxu0
  %v5009 = vpop.f32.mrf.mxu0
  %v5010 = vadd.f32 %v4432, %v5009
  %v5011 = vpop.f32.mrf.mxu0
  %5012 = vmatprep.mubr.bf16.mxu0 0
  %5013 = vmatmul.mubr.bf16.gmra.mxu0 %v4810
  %v5014 = vpop.f32.mrf.mxu0
  %v5015 = vadd.f32 %v4437, %v5014
  %v5016 = vpop.f32.mrf.mxu0
  %v5017 = vpop.f32.mrf.mxu0
  %v5018 = vadd.f32 %v4442, %v5017
  %v5019 = vpop.f32.mrf.mxu0
  %5020 = vmatprep.mubr.bf16.mxu0 0
  %5021 = vmatmul.mubr.bf16.gmra.mxu0 %v4813
  %v5022 = vpop.f32.mrf.mxu0
  %v5023 = vadd.f32 %v4447, %v5022
  %v5024 = vpop.f32.mrf.mxu0
  %v5025 = vpop.f32.mrf.mxu0
  %v5026 = vadd.f32 %v4452, %v5025
  %v5027 = vpop.f32.mrf.mxu0
  %5028 = vmatprep.mubr.bf16.mxu0 0
  %5029 = vmatmul.mubr.bf16.gmra.mxu0 %v4816
  %v5030 = vpop.f32.mrf.mxu0
  %v5031 = vadd.f32 %v4457, %v5030
  %v5032 = vpop.f32.mrf.mxu0
  %v5033 = vpop.f32.mrf.mxu0
  %v5034 = vadd.f32 %v4462, %v5033
  %v5035 = vpop.f32.mrf.mxu0
  %5036 = vmatprep.mubr.bf16.mxu0 0
  %5037 = vmatmul.mubr.bf16.gmra.mxu0 %v4819
  %v5038 = vpop.f32.mrf.mxu0
  %v5039 = vadd.f32 %v4467, %v5038
  %v5040 = vpop.f32.mrf.mxu0
  %v5041 = vpop.f32.mrf.mxu0
  %v5042 = vadd.f32 %v4472, %v5041
  %v5043 = vpop.f32.mrf.mxu0
  %5044 = vmatprep.mubr.bf16.mxu0 0
  %5045 = vmatmul.mubr.bf16.gmra.mxu0 %v4822
  %v5046 = vpop.f32.mrf.mxu0
  %v5047 = vadd.f32 %v4477, %v5046
  %v5048 = vpop.f32.mrf.mxu0
  %v5049 = vpop.f32.mrf.mxu0
  %v5050 = vadd.f32 %v4482, %v5049
  %v5051 = vpop.f32.mrf.mxu0
  %5052 = vmatprep.mubr.bf16.mxu0 0
  %5053 = vmatmul.mubr.bf16.gmra.mxu0 %v4825
  %v5054 = vpop.f32.mrf.mxu0
  %v5055 = vadd.f32 %v4487, %v5054
  %v5056 = vpop.f32.mrf.mxu0
  %v5057 = vpop.f32.mrf.mxu0
  %v5058 = vadd.f32 %v4492, %v5057
  %v5059 = vpop.f32.mrf.mxu0
  %5060 = vmatprep.mubr.bf16.mxu0 0
  %5061 = vmatmul.mubr.bf16.gmra.mxu0 %v4828
  %v5062 = vpop.f32.mrf.mxu0
  %v5063 = vadd.f32 %v4497, %v5062
  %v5064 = vpop.f32.mrf.mxu0
  %v5065 = vpop.f32.mrf.mxu0
  %v5066 = vadd.f32 %v4502, %v5065
  %v5067 = vpop.f32.mrf.mxu0
  %5068 = vmatprep.mubr.bf16.mxu0 0
  %5069 = vmatmul.mubr.bf16.gmra.mxu0 %v4831
  %v5070 = vpop.f32.mrf.mxu0
  %v5071 = vadd.f32 %v4507, %v5070
  %v5072 = vpop.f32.mrf.mxu0
  %v5073 = vpop.f32.mrf.mxu0
  %v5074 = vadd.f32 %v4512, %v5073
  %v5075 = vpop.f32.mrf.mxu0
  %5076 = vmatprep.mubr.bf16.mxu0 0
  %5077 = vmatmul.mubr.bf16.gmra.mxu0 %v4834
  %v5078 = vpop.f32.mrf.mxu0
  %v5079 = vadd.f32 %v4517, %v5078
  %v5080 = vpop.f32.mrf.mxu0
  %v5081 = vpop.f32.mrf.mxu0
  %v5082 = vadd.f32 %v4522, %v5081
  %v5083 = vpop.f32.mrf.mxu0
  %5084 = vmatprep.mubr.bf16.mxu0 0
  %5085 = vmatmul.mubr.bf16.gmra.mxu0 %v4837
  %v5086 = vpop.f32.mrf.mxu0
  %v5087 = vadd.f32 %v4527, %v5086
  %v5088 = vpop.f32.mrf.mxu0
  %v5089 = vpop.f32.mrf.mxu0
  %v5090 = vadd.f32 %v4532, %v5089
  %v5091 = vpop.f32.mrf.mxu0
  %5092 = vmatprep.mubr.bf16.mxu0 0
  %5093 = vmatmul.mubr.bf16.gmra.mxu0 %v4840
  %v5094 = vpop.f32.mrf.mxu0
  %v5095 = vadd.f32 %v4537, %v5094
  %v5096 = vpop.f32.mrf.mxu0
  %v5097 = vpop.f32.mrf.mxu0
  %v5098 = vadd.f32 %v4542, %v5097
  %v5099 = vpop.f32.mrf.mxu0
  %5100 = vmatprep.mubr.bf16.mxu0 0
  %5101 = vmatmul.mubr.bf16.gmra.mxu0 %v4843
  %v5102 = vpop.f32.mrf.mxu0
  %v5103 = vadd.f32 %v4547, %v5102
  %v5104 = vpop.f32.mrf.mxu0
  %v5105 = vpop.f32.mrf.mxu0
  %v5106 = vadd.f32 %v4552, %v5105
  %v5107 = vpop.f32.mrf.mxu0
  %5108 = vmatprep.mubr.bf16.mxu0 0
  %5109 = vmatmul.mubr.bf16.gmra.mxu0 %v4846
  %v5110 = vpop.f32.mrf.mxu0
  %v5111 = vadd.f32 %v4557, %v5110
  %v5112 = vpop.f32.mrf.mxu0
  %v5113 = vpop.f32.mrf.mxu0
  %v5114 = vadd.f32 %v4562, %v5113
  %v5115 = vpop.f32.mrf.mxu0
  %5116 = vmatprep.mubr.bf16.mxu0 0
  %5117 = vmatmul.mubr.bf16.gmra.mxu0 %v4849
  %v5118 = vpop.f32.mrf.mxu0
  %v5119 = vadd.f32 %v4567, %v5118
  %v5120 = vpop.f32.mrf.mxu0
  %v5121 = vpop.f32.mrf.mxu0
  %v5122 = vadd.f32 %v4572, %v5121
  %v5123 = vpop.f32.mrf.mxu0
  %5124 = vmatprep.mubr.bf16.mxu0 0
  %5125 = vmatmul.mubr.bf16.gmra.mxu0 %v4852
  %v5126 = vpop.f32.mrf.mxu0
  %v5127 = vadd.f32 %v4577, %v5126
  %v5128 = vpop.f32.mrf.mxu0
  %v5129 = vpop.f32.mrf.mxu0
  %v5130 = vadd.f32 %v4582, %v5129
  %v5131 = vpop.f32.mrf.mxu0
  %5132 = vmatprep.mubr.bf16.mxu0 0
  %5133 = vmatmul.mubr.bf16.gmra.mxu0 %v4855
  %v5134 = vpop.f32.mrf.mxu0
  %v5135 = vadd.f32 %v4587, %v5134
  %v5136 = vpop.f32.mrf.mxu0
  %v5137 = vpop.f32.mrf.mxu0
  %v5138 = vadd.f32 %v4592, %v5137
  %v5139 = vpop.f32.mrf.mxu0
  %5140 = vmatprep.mubr.bf16.mxu0 0
  %5141 = vmatmul.mubr.bf16.gmra.mxu0 %v4858
  %v5142 = vpop.f32.mrf.mxu0
  %v5143 = vadd.f32 %v4597, %v5142
  %v5144 = vpop.f32.mrf.mxu0
  %v5145 = vpop.f32.mrf.mxu0
  %v5146 = vadd.f32 %v4602, %v5145
  %v5147 = vpop.f32.mrf.mxu0
  %5148 = vdwg.mxu0
  %vm5149 = vcmp.gt.f32.partialorder %v4895, 0.0
  %vm5150 = vcmp.gt.f32.partialorder %v4898, 0.0
  %vm5151 = vcmp.gt.f32.partialorder %v4903, 0.0
  %vm5152 = vcmp.gt.f32.partialorder %v4906, 0.0
  %vm5153 = vcmp.gt.f32.partialorder %v4911, 0.0
  %vm5154 = vcmp.gt.f32.partialorder %v4914, 0.0
  %vm5155 = vcmp.gt.f32.partialorder %v4919, 0.0
  %vm5156 = vcmp.gt.f32.partialorder %v4922, 0.0
  %vm5157 = vcmp.gt.f32.partialorder %v4927, 0.0
  %vm5158 = vcmp.gt.f32.partialorder %v4930, 0.0
  %vm5159 = vcmp.gt.f32.partialorder %v4935, 0.0
  %vm5160 = vcmp.gt.f32.partialorder %v4938, 0.0
  %vm5161 = vcmp.gt.f32.partialorder %v4943, 0.0
  %vm5162 = vcmp.gt.f32.partialorder %v4946, 0.0
  %vm5163 = vcmp.gt.f32.partialorder %v4951, 0.0
  %vm5164 = vcmp.gt.f32.partialorder %v4954, 0.0
  %vm5165 = vcmp.gt.f32.partialorder %v4959, 0.0
  %vm5166 = vcmp.gt.f32.partialorder %v4962, 0.0
  %vm5167 = vcmp.gt.f32.partialorder %v4967, 0.0
  %vm5168 = vcmp.gt.f32.partialorder %v4970, 0.0
  %vm5169 = vcmp.gt.f32.partialorder %v4975, 0.0
  %vm5170 = vcmp.gt.f32.partialorder %v4978, 0.0
  %vm5171 = vcmp.gt.f32.partialorder %v4983, 0.0
  %vm5172 = vcmp.gt.f32.partialorder %v4986, 0.0
  %vm5173 = vcmp.gt.f32.partialorder %v4991, 0.0
  %vm5174 = vcmp.gt.f32.partialorder %v4994, 0.0
  %vm5175 = vcmp.gt.f32.partialorder %v4999, 0.0
  %vm5176 = vcmp.gt.f32.partialorder %v5002, 0.0
  %vm5177 = vcmp.gt.f32.partialorder %v5007, 0.0
  %vm5178 = vcmp.gt.f32.partialorder %v5010, 0.0
  %vm5179 = vcmp.gt.f32.partialorder %v5015, 0.0
  %vm5180 = vcmp.gt.f32.partialorder %v5018, 0.0
  %vm5181 = vcmp.gt.f32.partialorder %v5023, 0.0
  %vm5182 = vcmp.gt.f32.partialorder %v5026, 0.0
  %vm5183 = vcmp.gt.f32.partialorder %v5031, 0.0
  %vm5184 = vcmp.gt.f32.partialorder %v5034, 0.0
  %vm5185 = vcmp.gt.f32.partialorder %v5039, 0.0
  %vm5186 = vcmp.gt.f32.partialorder %v5042, 0.0
  %vm5187 = vcmp.gt.f32.partialorder %v5047, 0.0
  %vm5188 = vcmp.gt.f32.partialorder %v5050, 0.0
  %vm5189 = vcmp.gt.f32.partialorder %v5055, 0.0
  %vm5190 = vcmp.gt.f32.partialorder %v5058, 0.0
  %vm5191 = vcmp.gt.f32.partialorder %v5063, 0.0
  %vm5192 = vcmp.gt.f32.partialorder %v5066, 0.0
  %vm5193 = vcmp.gt.f32.partialorder %v5071, 0.0
  %vm5194 = vcmp.gt.f32.partialorder %v5074, 0.0
  %vm5195 = vcmp.gt.f32.partialorder %v5079, 0.0
  %vm5196 = vcmp.gt.f32.partialorder %v5082, 0.0
  %vm5197 = vcmp.gt.f32.partialorder %v5087, 0.0
  %vm5198 = vcmp.gt.f32.partialorder %v5090, 0.0
  %vm5199 = vcmp.gt.f32.partialorder %v5095, 0.0
  %vm5200 = vcmp.gt.f32.partialorder %v5098, 0.0
  %vm5201 = vcmp.gt.f32.partialorder %v5103, 0.0
  %vm5202 = vcmp.gt.f32.partialorder %v5106, 0.0
  %vm5203 = vcmp.gt.f32.partialorder %v5111, 0.0
  %vm5204 = vcmp.gt.f32.partialorder %v5114, 0.0
  %vm5205 = vcmp.gt.f32.partialorder %v5119, 0.0
  %vm5206 = vcmp.gt.f32.partialorder %v5122, 0.0
  %vm5207 = vcmp.gt.f32.partialorder %v5127, 0.0
  %vm5208 = vcmp.gt.f32.partialorder %v5130, 0.0
  %vm5209 = vcmp.gt.f32.partialorder %v5135, 0.0
  %vm5210 = vcmp.gt.f32.partialorder %v5138, 0.0
  %vm5211 = vcmp.gt.f32.partialorder %v5143, 0.0
  %vm5212 = vcmp.gt.f32.partialorder %v5146, 0.0
  %v5213 = vld [vmem:[%s5 + $0x400] sm:$0xff]
  %v5214 = vld [vmem:[%s5 + $0x408] sm:$0xff]
  %v5215 = vld [vmem:[%s5 + $0x410] sm:$0xff]
  %v5216 = vld [vmem:[%s5 + $0x418] sm:$0xff]
  %v5217 = vld [vmem:[%s5 + $0x420] sm:$0xff]
  %v5218 = vld [vmem:[%s5 + $0x428] sm:$0xff]
  %v5219 = vld [vmem:[%s5 + $0x430] sm:$0xff]
  %v5220 = vld [vmem:[%s5 + $0x438] sm:$0xff]
  %v5221 = vld [vmem:[%s5 + $0x440] sm:$0xff]
  %v5222 = vld [vmem:[%s5 + $0x448] sm:$0xff]
  %v5223 = vld [vmem:[%s5 + $0x450] sm:$0xff]
  %v5224 = vld [vmem:[%s5 + $0x458] sm:$0xff]
  %v5225 = vld [vmem:[%s5 + $0x460] sm:$0xff]
  %v5226 = vld [vmem:[%s5 + $0x468] sm:$0xff]
  %v5227 = vld [vmem:[%s5 + $0x470] sm:$0xff]
  %v5228 = vld [vmem:[%s5 + $0x478] sm:$0xff]
  %v5229 = vld [vmem:[%s5 + $0x480] sm:$0xff]
  %v5230 = vld [vmem:[%s5 + $0x488] sm:$0xff]
  %v5231 = vld [vmem:[%s5 + $0x490] sm:$0xff]
  %v5232 = vld [vmem:[%s5 + $0x498] sm:$0xff]
  %v5233 = vld [vmem:[%s5 + $0x4a0] sm:$0xff]
  %v5234 = vld [vmem:[%s5 + $0x4a8] sm:$0xff]
  %v5235 = vld [vmem:[%s5 + $0x4b0] sm:$0xff]
  %v5236 = vld [vmem:[%s5 + $0x4b8] sm:$0xff]
  %v5237 = vld [vmem:[%s5 + $0x4c0] sm:$0xff]
  %v5238 = vld [vmem:[%s5 + $0x4c8] sm:$0xff]
  %v5239 = vld [vmem:[%s5 + $0x4d0] sm:$0xff]
  %v5240 = vld [vmem:[%s5 + $0x4d8] sm:$0xff]
  %v5241 = vld [vmem:[%s5 + $0x4e0] sm:$0xff]
  %v5242 = vld [vmem:[%s5 + $0x4e8] sm:$0xff]
  %v5243 = vld [vmem:[%s5 + $0x4f0] sm:$0xff]
  %v5244 = vld [vmem:[%s5 + $0x4f8] sm:$0xff]
  %v5245 = vld [vmem:[%s5 + $0x500] sm:$0xff]
  %v5246 = vld [vmem:[%s5 + $0x508] sm:$0xff]
  %v5247 = vld [vmem:[%s5 + $0x510] sm:$0xff]
  %v5248 = vld [vmem:[%s5 + $0x518] sm:$0xff]
  %v5249 = vld [vmem:[%s5 + $0x520] sm:$0xff]
  %v5250 = vld [vmem:[%s5 + $0x528] sm:$0xff]
  %v5251 = vld [vmem:[%s5 + $0x530] sm:$0xff]
  %v5252 = vld [vmem:[%s5 + $0x538] sm:$0xff]
  %v5253 = vld [vmem:[%s5 + $0x540] sm:$0xff]
  %v5254 = vld [vmem:[%s5 + $0x548] sm:$0xff]
  %v5255 = vld [vmem:[%s5 + $0x550] sm:$0xff]
  %v5256 = vld [vmem:[%s5 + $0x558] sm:$0xff]
  %v5257 = vld [vmem:[%s5 + $0x560] sm:$0xff]
  %v5258 = vld [vmem:[%s5 + $0x568] sm:$0xff]
  %v5259 = vld [vmem:[%s5 + $0x570] sm:$0xff]
  %v5260 = vld [vmem:[%s5 + $0x578] sm:$0xff]
  %v5261 = vld [vmem:[%s5 + $0x580] sm:$0xff]
  %v5262 = vld [vmem:[%s5 + $0x588] sm:$0xff]
  %v5263 = vld [vmem:[%s5 + $0x590] sm:$0xff]
  %v5264 = vld [vmem:[%s5 + $0x598] sm:$0xff]
  %v5265 = vld [vmem:[%s5 + $0x5a0] sm:$0xff]
  %v5266 = vld [vmem:[%s5 + $0x5a8] sm:$0xff]
  %v5267 = vld [vmem:[%s5 + $0x5b0] sm:$0xff]
  %v5268 = vld [vmem:[%s5 + $0x5b8] sm:$0xff]
  %v5269 = vld [vmem:[%s5 + $0x5c0] sm:$0xff]
  %v5270 = vld [vmem:[%s5 + $0x5c8] sm:$0xff]
  %v5271 = vld [vmem:[%s5 + $0x5d0] sm:$0xff]
  %v5272 = vld [vmem:[%s5 + $0x5d8] sm:$0xff]
  %v5273 = vld [vmem:[%s5 + $0x5e0] sm:$0xff]
  %v5274 = vld [vmem:[%s5 + $0x5e8] sm:$0xff]
  %v5275 = vld [vmem:[%s5 + $0x5f0] sm:$0xff]
  %v5276 = vld [vmem:[%s5 + $0x5f8] sm:$0xff]
  %v5277 = vld [vmem:[%s6 + $0x400] sm:$0xff]
  %v5278 = vld [vmem:[%s6 + $0x408] sm:$0xff]
  %v5279 = vld [vmem:[%s6 + $0x410] sm:$0xff]
  %v5280 = vld [vmem:[%s6 + $0x418] sm:$0xff]
  %v5281 = vld [vmem:[%s6 + $0x420] sm:$0xff]
  %v5282 = vld [vmem:[%s6 + $0x428] sm:$0xff]
  %v5283 = vld [vmem:[%s6 + $0x430] sm:$0xff]
  %v5284 = vld [vmem:[%s6 + $0x438] sm:$0xff]
  %v5285 = vld [vmem:[%s6 + $0x440] sm:$0xff]
  %v5286 = vld [vmem:[%s6 + $0x448] sm:$0xff]
  %v5287 = vld [vmem:[%s6 + $0x450] sm:$0xff]
  %v5288 = vld [vmem:[%s6 + $0x458] sm:$0xff]
  %v5289 = vld [vmem:[%s6 + $0x460] sm:$0xff]
  %v5290 = vld [vmem:[%s6 + $0x468] sm:$0xff]
  %v5291 = vld [vmem:[%s6 + $0x470] sm:$0xff]
  %v5292 = vld [vmem:[%s6 + $0x478] sm:$0xff]
  %v5293 = vld [vmem:[%s6 + $0x480] sm:$0xff]
  %v5294 = vld [vmem:[%s6 + $0x488] sm:$0xff]
  %v5295 = vld [vmem:[%s6 + $0x490] sm:$0xff]
  %v5296 = vld [vmem:[%s6 + $0x498] sm:$0xff]
  %v5297 = vld [vmem:[%s6 + $0x4a0] sm:$0xff]
  %v5298 = vld [vmem:[%s6 + $0x4a8] sm:$0xff]
  %v5299 = vld [vmem:[%s6 + $0x4b0] sm:$0xff]
  %v5300 = vld [vmem:[%s6 + $0x4b8] sm:$0xff]
  %v5301 = vld [vmem:[%s6 + $0x4c0] sm:$0xff]
  %v5302 = vld [vmem:[%s6 + $0x4c8] sm:$0xff]
  %v5303 = vld [vmem:[%s6 + $0x4d0] sm:$0xff]
  %v5304 = vld [vmem:[%s6 + $0x4d8] sm:$0xff]
  %v5305 = vld [vmem:[%s6 + $0x4e0] sm:$0xff]
  %v5306 = vld [vmem:[%s6 + $0x4e8] sm:$0xff]
  %v5307 = vld [vmem:[%s6 + $0x4f0] sm:$0xff]
  %v5308 = vld [vmem:[%s6 + $0x4f8] sm:$0xff]
  %v5309 = vld [vmem:[%s6 + $0x500] sm:$0xff]
  %v5310 = vld [vmem:[%s6 + $0x508] sm:$0xff]
  %v5311 = vld [vmem:[%s6 + $0x510] sm:$0xff]
  %v5312 = vld [vmem:[%s6 + $0x518] sm:$0xff]
  %v5313 = vld [vmem:[%s6 + $0x520] sm:$0xff]
  %v5314 = vld [vmem:[%s6 + $0x528] sm:$0xff]
  %v5315 = vld [vmem:[%s6 + $0x530] sm:$0xff]
  %v5316 = vld [vmem:[%s6 + $0x538] sm:$0xff]
  %v5317 = vld [vmem:[%s6 + $0x540] sm:$0xff]
  %v5318 = vld [vmem:[%s6 + $0x548] sm:$0xff]
  %v5319 = vld [vmem:[%s6 + $0x550] sm:$0xff]
  %v5320 = vld [vmem:[%s6 + $0x558] sm:$0xff]
  %v5321 = vld [vmem:[%s6 + $0x560] sm:$0xff]
  %v5322 = vld [vmem:[%s6 + $0x568] sm:$0xff]
  %v5323 = vld [vmem:[%s6 + $0x570] sm:$0xff]
  %v5324 = vld [vmem:[%s6 + $0x578] sm:$0xff]
  %v5325 = vld [vmem:[%s6 + $0x580] sm:$0xff]
  %v5326 = vld [vmem:[%s6 + $0x588] sm:$0xff]
  %v5327 = vld [vmem:[%s6 + $0x590] sm:$0xff]
  %v5328 = vld [vmem:[%s6 + $0x598] sm:$0xff]
  %v5329 = vld [vmem:[%s6 + $0x5a0] sm:$0xff]
  %v5330 = vld [vmem:[%s6 + $0x5a8] sm:$0xff]
  %v5331 = vld [vmem:[%s6 + $0x5b0] sm:$0xff]
  %v5332 = vld [vmem:[%s6 + $0x5b8] sm:$0xff]
  %v5333 = vld [vmem:[%s6 + $0x5c0] sm:$0xff]
  %v5334 = vld [vmem:[%s6 + $0x5c8] sm:$0xff]
  %v5335 = vld [vmem:[%s6 + $0x5d0] sm:$0xff]
  %v5336 = vld [vmem:[%s6 + $0x5d8] sm:$0xff]
  %v5337 = vld [vmem:[%s6 + $0x5e0] sm:$0xff]
  %v5338 = vld [vmem:[%s6 + $0x5e8] sm:$0xff]
  %v5339 = vld [vmem:[%s6 + $0x5f0] sm:$0xff]
  %v5340 = vld [vmem:[%s6 + $0x5f8] sm:$0xff]
  %5342 = vset.pattern.permute.xlu0 0
  %5343 = vperm.xlu0 %5342, %v5213
  %v5344 = vpop.permute.xlu0 %5343
  %5347 = vset.pattern.permute.xlu0 0
  %5348 = vperm.xlu0 %5347, %v5214
  %v5349 = vpop.permute.xlu0 %5348
  %5352 = vset.pattern.permute.xlu0 0
  %5353 = vperm.xlu0 %5352, %v5215
  %v5354 = vpop.permute.xlu0 %5353
  %5357 = vset.pattern.permute.xlu0 0
  %5358 = vperm.xlu0 %5357, %v5216
  %v5359 = vpop.permute.xlu0 %5358
  %5362 = vset.pattern.permute.xlu0 0
  %5363 = vperm.xlu0 %5362, %v5217
  %v5364 = vpop.permute.xlu0 %5363
  %5367 = vset.pattern.permute.xlu0 0
  %5368 = vperm.xlu0 %5367, %v5218
  %v5369 = vpop.permute.xlu0 %5368
  %5372 = vset.pattern.permute.xlu0 0
  %5373 = vperm.xlu0 %5372, %v5219
  %v5374 = vpop.permute.xlu0 %5373
  %5377 = vset.pattern.permute.xlu0 0
  %5378 = vperm.xlu0 %5377, %v5220
  %v5379 = vpop.permute.xlu0 %5378
  %5382 = vset.pattern.permute.xlu0 0
  %5383 = vperm.xlu0 %5382, %v5221
  %v5384 = vpop.permute.xlu0 %5383
  %5387 = vset.pattern.permute.xlu0 0
  %5388 = vperm.xlu0 %5387, %v5222
  %v5389 = vpop.permute.xlu0 %5388
  %5392 = vset.pattern.permute.xlu0 0
  %5393 = vperm.xlu0 %5392, %v5223
  %v5394 = vpop.permute.xlu0 %5393
  %5397 = vset.pattern.permute.xlu0 0
  %5398 = vperm.xlu0 %5397, %v5224
  %v5399 = vpop.permute.xlu0 %5398
  %5402 = vset.pattern.permute.xlu0 0
  %5403 = vperm.xlu0 %5402, %v5225
  %v5404 = vpop.permute.xlu0 %5403
  %5407 = vset.pattern.permute.xlu0 0
  %5408 = vperm.xlu0 %5407, %v5226
  %v5409 = vpop.permute.xlu0 %5408
  %5412 = vset.pattern.permute.xlu0 0
  %5413 = vperm.xlu0 %5412, %v5227
  %v5414 = vpop.permute.xlu0 %5413
  %5417 = vset.pattern.permute.xlu0 0
  %5418 = vperm.xlu0 %5417, %v5228
  %v5419 = vpop.permute.xlu0 %5418
  %5422 = vset.pattern.permute.xlu0 0
  %5423 = vperm.xlu0 %5422, %v5229
  %v5424 = vpop.permute.xlu0 %5423
  %5427 = vset.pattern.permute.xlu0 0
  %5428 = vperm.xlu0 %5427, %v5230
  %v5429 = vpop.permute.xlu0 %5428
  %5432 = vset.pattern.permute.xlu0 0
  %5433 = vperm.xlu0 %5432, %v5231
  %v5434 = vpop.permute.xlu0 %5433
  %5437 = vset.pattern.permute.xlu0 0
  %5438 = vperm.xlu0 %5437, %v5232
  %v5439 = vpop.permute.xlu0 %5438
  %5442 = vset.pattern.permute.xlu0 0
  %5443 = vperm.xlu0 %5442, %v5233
  %v5444 = vpop.permute.xlu0 %5443
  %5447 = vset.pattern.permute.xlu0 0
  %5448 = vperm.xlu0 %5447, %v5234
  %v5449 = vpop.permute.xlu0 %5448
  %5452 = vset.pattern.permute.xlu0 0
  %5453 = vperm.xlu0 %5452, %v5235
  %v5454 = vpop.permute.xlu0 %5453
  %5457 = vset.pattern.permute.xlu0 0
  %5458 = vperm.xlu0 %5457, %v5236
  %v5459 = vpop.permute.xlu0 %5458
  %5462 = vset.pattern.permute.xlu0 0
  %5463 = vperm.xlu0 %5462, %v5237
  %v5464 = vpop.permute.xlu0 %5463
  %5467 = vset.pattern.permute.xlu0 0
  %5468 = vperm.xlu0 %5467, %v5238
  %v5469 = vpop.permute.xlu0 %5468
  %5472 = vset.pattern.permute.xlu0 0
  %5473 = vperm.xlu0 %5472, %v5239
  %v5474 = vpop.permute.xlu0 %5473
  %5477 = vset.pattern.permute.xlu0 0
  %5478 = vperm.xlu0 %5477, %v5240
  %v5479 = vpop.permute.xlu0 %5478
  %5482 = vset.pattern.permute.xlu0 0
  %5483 = vperm.xlu0 %5482, %v5241
  %v5484 = vpop.permute.xlu0 %5483
  %5487 = vset.pattern.permute.xlu0 0
  %5488 = vperm.xlu0 %5487, %v5242
  %v5489 = vpop.permute.xlu0 %5488
  %5492 = vset.pattern.permute.xlu0 0
  %5493 = vperm.xlu0 %5492, %v5243
  %v5494 = vpop.permute.xlu0 %5493
  %5497 = vset.pattern.permute.xlu0 0
  %5498 = vperm.xlu0 %5497, %v5244
  %v5499 = vpop.permute.xlu0 %5498
  %5502 = vset.pattern.permute.xlu0 0
  %5503 = vperm.xlu0 %5502, %v5245
  %v5504 = vpop.permute.xlu0 %5503
  %5507 = vset.pattern.permute.xlu0 0
  %5508 = vperm.xlu0 %5507, %v5246
  %v5509 = vpop.permute.xlu0 %5508
  %5512 = vset.pattern.permute.xlu0 0
  %5513 = vperm.xlu0 %5512, %v5247
  %v5514 = vpop.permute.xlu0 %5513
  %5517 = vset.pattern.permute.xlu0 0
  %5518 = vperm.xlu0 %5517, %v5248
  %v5519 = vpop.permute.xlu0 %5518
  %5522 = vset.pattern.permute.xlu0 0
  %5523 = vperm.xlu0 %5522, %v5249
  %v5524 = vpop.permute.xlu0 %5523
  %5527 = vset.pattern.permute.xlu0 0
  %5528 = vperm.xlu0 %5527, %v5250
  %v5529 = vpop.permute.xlu0 %5528
  %5532 = vset.pattern.permute.xlu0 0
  %5533 = vperm.xlu0 %5532, %v5251
  %v5534 = vpop.permute.xlu0 %5533
  %5537 = vset.pattern.permute.xlu0 0
  %5538 = vperm.xlu0 %5537, %v5252
  %v5539 = vpop.permute.xlu0 %5538
  %5542 = vset.pattern.permute.xlu0 0
  %5543 = vperm.xlu0 %5542, %v5253
  %v5544 = vpop.permute.xlu0 %5543
  %5547 = vset.pattern.permute.xlu0 0
  %5548 = vperm.xlu0 %5547, %v5254
  %v5549 = vpop.permute.xlu0 %5548
  %5552 = vset.pattern.permute.xlu0 0
  %5553 = vperm.xlu0 %5552, %v5255
  %v5554 = vpop.permute.xlu0 %5553
  %5557 = vset.pattern.permute.xlu0 0
  %5558 = vperm.xlu0 %5557, %v5256
  %v5559 = vpop.permute.xlu0 %5558
  %5562 = vset.pattern.permute.xlu0 0
  %5563 = vperm.xlu0 %5562, %v5257
  %v5564 = vpop.permute.xlu0 %5563
  %5567 = vset.pattern.permute.xlu0 0
  %5568 = vperm.xlu0 %5567, %v5258
  %v5569 = vpop.permute.xlu0 %5568
  %5572 = vset.pattern.permute.xlu0 0
  %5573 = vperm.xlu0 %5572, %v5259
  %v5574 = vpop.permute.xlu0 %5573
  %5577 = vset.pattern.permute.xlu0 0
  %5578 = vperm.xlu0 %5577, %v5260
  %v5579 = vpop.permute.xlu0 %5578
  %5582 = vset.pattern.permute.xlu0 0
  %5583 = vperm.xlu0 %5582, %v5261
  %v5584 = vpop.permute.xlu0 %5583
  %5587 = vset.pattern.permute.xlu0 0
  %5588 = vperm.xlu0 %5587, %v5262
  %v5589 = vpop.permute.xlu0 %5588
  %5592 = vset.pattern.permute.xlu0 0
  %5593 = vperm.xlu0 %5592, %v5263
  %v5594 = vpop.permute.xlu0 %5593
  %5597 = vset.pattern.permute.xlu0 0
  %5598 = vperm.xlu0 %5597, %v5264
  %v5599 = vpop.permute.xlu0 %5598
  %5602 = vset.pattern.permute.xlu0 0
  %5603 = vperm.xlu0 %5602, %v5265
  %v5604 = vpop.permute.xlu0 %5603
  %5607 = vset.pattern.permute.xlu0 0
  %5608 = vperm.xlu0 %5607, %v5266
  %v5609 = vpop.permute.xlu0 %5608
  %5612 = vset.pattern.permute.xlu0 0
  %5613 = vperm.xlu0 %5612, %v5267
  %v5614 = vpop.permute.xlu0 %5613
  %5617 = vset.pattern.permute.xlu0 0
  %5618 = vperm.xlu0 %5617, %v5268
  %v5619 = vpop.permute.xlu0 %5618
  %5622 = vset.pattern.permute.xlu0 0
  %5623 = vperm.xlu0 %5622, %v5269
  %v5624 = vpop.permute.xlu0 %5623
  %5627 = vset.pattern.permute.xlu0 0
  %5628 = vperm.xlu0 %5627, %v5270
  %v5629 = vpop.permute.xlu0 %5628
  %5632 = vset.pattern.permute.xlu0 0
  %5633 = vperm.xlu0 %5632, %v5271
  %v5634 = vpop.permute.xlu0 %5633
  %5637 = vset.pattern.permute.xlu0 0
  %5638 = vperm.xlu0 %5637, %v5272
  %v5639 = vpop.permute.xlu0 %5638
  %5642 = vset.pattern.permute.xlu0 0
  %5643 = vperm.xlu0 %5642, %v5273
  %v5644 = vpop.permute.xlu0 %5643
  %5647 = vset.pattern.permute.xlu0 0
  %5648 = vperm.xlu0 %5647, %v5274
  %v5649 = vpop.permute.xlu0 %5648
  %5652 = vset.pattern.permute.xlu0 0
  %5653 = vperm.xlu0 %5652, %v5275
  %v5654 = vpop.permute.xlu0 %5653
  %5657 = vset.pattern.permute.xlu0 0
  %5658 = vperm.xlu0 %5657, %v5276
  %v5659 = vpop.permute.xlu0 %5658
  %5662 = vset.pattern.permute.xlu0 0
  %5663 = vperm.xlu0 %5662, %v5277
  %v5664 = vpop.permute.xlu0 %5663
  %5667 = vset.pattern.permute.xlu0 0
  %5668 = vperm.xlu0 %5667, %v5278
  %v5669 = vpop.permute.xlu0 %5668
  %5672 = vset.pattern.permute.xlu0 0
  %5673 = vperm.xlu0 %5672, %v5279
  %v5674 = vpop.permute.xlu0 %5673
  %5677 = vset.pattern.permute.xlu0 0
  %5678 = vperm.xlu0 %5677, %v5280
  %v5679 = vpop.permute.xlu0 %5678
  %5682 = vset.pattern.permute.xlu0 0
  %5683 = vperm.xlu0 %5682, %v5281
  %v5684 = vpop.permute.xlu0 %5683
  %5687 = vset.pattern.permute.xlu0 0
  %5688 = vperm.xlu0 %5687, %v5282
  %v5689 = vpop.permute.xlu0 %5688
  %5692 = vset.pattern.permute.xlu0 0
  %5693 = vperm.xlu0 %5692, %v5283
  %v5694 = vpop.permute.xlu0 %5693
  %5697 = vset.pattern.permute.xlu0 0
  %5698 = vperm.xlu0 %5697, %v5284
  %v5699 = vpop.permute.xlu0 %5698
  %5702 = vset.pattern.permute.xlu0 0
  %5703 = vperm.xlu0 %5702, %v5285
  %v5704 = vpop.permute.xlu0 %5703
  %5707 = vset.pattern.permute.xlu0 0
  %5708 = vperm.xlu0 %5707, %v5286
  %v5709 = vpop.permute.xlu0 %5708
  %5712 = vset.pattern.permute.xlu0 0
  %5713 = vperm.xlu0 %5712, %v5287
  %v5714 = vpop.permute.xlu0 %5713
  %5717 = vset.pattern.permute.xlu0 0
  %5718 = vperm.xlu0 %5717, %v5288
  %v5719 = vpop.permute.xlu0 %5718
  %5722 = vset.pattern.permute.xlu0 0
  %5723 = vperm.xlu0 %5722, %v5289
  %v5724 = vpop.permute.xlu0 %5723
  %5727 = vset.pattern.permute.xlu0 0
  %5728 = vperm.xlu0 %5727, %v5290
  %v5729 = vpop.permute.xlu0 %5728
  %5732 = vset.pattern.permute.xlu0 0
  %5733 = vperm.xlu0 %5732, %v5291
  %v5734 = vpop.permute.xlu0 %5733
  %5737 = vset.pattern.permute.xlu0 0
  %5738 = vperm.xlu0 %5737, %v5292
  %v5739 = vpop.permute.xlu0 %5738
  %5742 = vset.pattern.permute.xlu0 0
  %5743 = vperm.xlu0 %5742, %v5293
  %v5744 = vpop.permute.xlu0 %5743
  %5747 = vset.pattern.permute.xlu0 0
  %5748 = vperm.xlu0 %5747, %v5294
  %v5749 = vpop.permute.xlu0 %5748
  %5752 = vset.pattern.permute.xlu0 0
  %5753 = vperm.xlu0 %5752, %v5295
  %v5754 = vpop.permute.xlu0 %5753
  %5757 = vset.pattern.permute.xlu0 0
  %5758 = vperm.xlu0 %5757, %v5296
  %v5759 = vpop.permute.xlu0 %5758
  %5762 = vset.pattern.permute.xlu0 0
  %5763 = vperm.xlu0 %5762, %v5297
  %v5764 = vpop.permute.xlu0 %5763
  %5767 = vset.pattern.permute.xlu0 0
  %5768 = vperm.xlu0 %5767, %v5298
  %v5769 = vpop.permute.xlu0 %5768
  %5772 = vset.pattern.permute.xlu0 0
  %5773 = vperm.xlu0 %5772, %v5299
  %v5774 = vpop.permute.xlu0 %5773
  %5777 = vset.pattern.permute.xlu0 0
  %5778 = vperm.xlu0 %5777, %v5300
  %v5779 = vpop.permute.xlu0 %5778
  %5782 = vset.pattern.permute.xlu0 0
  %5783 = vperm.xlu0 %5782, %v5301
  %v5784 = vpop.permute.xlu0 %5783
  %5787 = vset.pattern.permute.xlu0 0
  %5788 = vperm.xlu0 %5787, %v5302
  %v5789 = vpop.permute.xlu0 %5788
  %5792 = vset.pattern.permute.xlu0 0
  %5793 = vperm.xlu0 %5792, %v5303
  %v5794 = vpop.permute.xlu0 %5793
  %5797 = vset.pattern.permute.xlu0 0
  %5798 = vperm.xlu0 %5797, %v5304
  %v5799 = vpop.permute.xlu0 %5798
  %5802 = vset.pattern.permute.xlu0 0
  %5803 = vperm.xlu0 %5802, %v5305
  %v5804 = vpop.permute.xlu0 %5803
  %5807 = vset.pattern.permute.xlu0 0
  %5808 = vperm.xlu0 %5807, %v5306
  %v5809 = vpop.permute.xlu0 %5808
  %5812 = vset.pattern.permute.xlu0 0
  %5813 = vperm.xlu0 %5812, %v5307
  %v5814 = vpop.permute.xlu0 %5813
  %5817 = vset.pattern.permute.xlu0 0
  %5818 = vperm.xlu0 %5817, %v5308
  %v5819 = vpop.permute.xlu0 %5818
  %5822 = vset.pattern.permute.xlu0 0
  %5823 = vperm.xlu0 %5822, %v5309
  %v5824 = vpop.permute.xlu0 %5823
  %5827 = vset.pattern.permute.xlu0 0
  %5828 = vperm.xlu0 %5827, %v5310
  %v5829 = vpop.permute.xlu0 %5828
  %5832 = vset.pattern.permute.xlu0 0
  %5833 = vperm.xlu0 %5832, %v5311
  %v5834 = vpop.permute.xlu0 %5833
  %5837 = vset.pattern.permute.xlu0 0
  %5838 = vperm.xlu0 %5837, %v5312
  %v5839 = vpop.permute.xlu0 %5838
  %5842 = vset.pattern.permute.xlu0 0
  %5843 = vperm.xlu0 %5842, %v5313
  %v5844 = vpop.permute.xlu0 %5843
  %5847 = vset.pattern.permute.xlu0 0
  %5848 = vperm.xlu0 %5847, %v5314
  %v5849 = vpop.permute.xlu0 %5848
  %5852 = vset.pattern.permute.xlu0 0
  %5853 = vperm.xlu0 %5852, %v5315
  %v5854 = vpop.permute.xlu0 %5853
  %5857 = vset.pattern.permute.xlu0 0
  %5858 = vperm.xlu0 %5857, %v5316
  %v5859 = vpop.permute.xlu0 %5858
  %5862 = vset.pattern.permute.xlu0 0
  %5863 = vperm.xlu0 %5862, %v5317
  %v5864 = vpop.permute.xlu0 %5863
  %5867 = vset.pattern.permute.xlu0 0
  %5868 = vperm.xlu0 %5867, %v5318
  %v5869 = vpop.permute.xlu0 %5868
  %5872 = vset.pattern.permute.xlu0 0
  %5873 = vperm.xlu0 %5872, %v5319
  %v5874 = vpop.permute.xlu0 %5873
  %5877 = vset.pattern.permute.xlu0 0
  %5878 = vperm.xlu0 %5877, %v5320
  %v5879 = vpop.permute.xlu0 %5878
  %5882 = vset.pattern.permute.xlu0 0
  %5883 = vperm.xlu0 %5882, %v5321
  %v5884 = vpop.permute.xlu0 %5883
  %5887 = vset.pattern.permute.xlu0 0
  %5888 = vperm.xlu0 %5887, %v5322
  %v5889 = vpop.permute.xlu0 %5888
  %5892 = vset.pattern.permute.xlu0 0
  %5893 = vperm.xlu0 %5892, %v5323
  %v5894 = vpop.permute.xlu0 %5893
  %5897 = vset.pattern.permute.xlu0 0
  %5898 = vperm.xlu0 %5897, %v5324
  %v5899 = vpop.permute.xlu0 %5898
  %5902 = vset.pattern.permute.xlu0 0
  %5903 = vperm.xlu0 %5902, %v5325
  %v5904 = vpop.permute.xlu0 %5903
  %5907 = vset.pattern.permute.xlu0 0
  %5908 = vperm.xlu0 %5907, %v5326
  %v5909 = vpop.permute.xlu0 %5908
  %5912 = vset.pattern.permute.xlu0 0
  %5913 = vperm.xlu0 %5912, %v5327
  %v5914 = vpop.permute.xlu0 %5913
  %5917 = vset.pattern.permute.xlu0 0
  %5918 = vperm.xlu0 %5917, %v5328
  %v5919 = vpop.permute.xlu0 %5918
  %5922 = vset.pattern.permute.xlu0 0
  %5923 = vperm.xlu0 %5922, %v5329
  %v5924 = vpop.permute.xlu0 %5923
  %5927 = vset.pattern.permute.xlu0 0
  %5928 = vperm.xlu0 %5927, %v5330
  %v5929 = vpop.permute.xlu0 %5928
  %5932 = vset.pattern.permute.xlu0 0
  %5933 = vperm.xlu0 %5932, %v5331
  %v5934 = vpop.permute.xlu0 %5933
  %5937 = vset.pattern.permute.xlu0 0
  %5938 = vperm.xlu0 %5937, %v5332
  %v5939 = vpop.permute.xlu0 %5938
  %5942 = vset.pattern.permute.xlu0 0
  %5943 = vperm.xlu0 %5942, %v5333
  %v5944 = vpop.permute.xlu0 %5943
  %5947 = vset.pattern.permute.xlu0 0
  %5948 = vperm.xlu0 %5947, %v5334
  %v5949 = vpop.permute.xlu0 %5948
  %5952 = vset.pattern.permute.xlu0 0
  %5953 = vperm.xlu0 %5952, %v5335
  %v5954 = vpop.permute.xlu0 %5953
  %5957 = vset.pattern.permute.xlu0 0
  %5958 = vperm.xlu0 %5957, %v5336
  %v5959 = vpop.permute.xlu0 %5958
  %5962 = vset.pattern.permute.xlu0 0
  %5963 = vperm.xlu0 %5962, %v5337
  %v5964 = vpop.permute.xlu0 %5963
  %5967 = vset.pattern.permute.xlu0 0
  %5968 = vperm.xlu0 %5967, %v5338
  %v5969 = vpop.permute.xlu0 %5968
  %5972 = vset.pattern.permute.xlu0 0
  %5973 = vperm.xlu0 %5972, %v5339
  %v5974 = vpop.permute.xlu0 %5973
  %5977 = vset.pattern.permute.xlu0 0
  %5978 = vperm.xlu0 %5977, %v5340
  %v5979 = vpop.permute.xlu0 %5978
  %v5981 = vsel %vm5149, %v5344, %v5664
  %v5982 = vsel %vm5150, %v5349, %v5669
  %v5983 = vsel %vm5151, %v5354, %v5674
  %v5984 = vsel %vm5152, %v5359, %v5679
  %v5985 = vsel %vm5153, %v5364, %v5684
  %v5986 = vsel %vm5154, %v5369, %v5689
  %v5987 = vsel %vm5155, %v5374, %v5694
  %v5988 = vsel %vm5156, %v5379, %v5699
  %v5989 = vsel %vm5157, %v5384, %v5704
  %v5990 = vsel %vm5158, %v5389, %v5709
  %v5991 = vsel %vm5159, %v5394, %v5714
  %v5992 = vsel %vm5160, %v5399, %v5719
  %v5993 = vsel %vm5161, %v5404, %v5724
  %v5994 = vsel %vm5162, %v5409, %v5729
  %v5995 = vsel %vm5163, %v5414, %v5734
  %v5996 = vsel %vm5164, %v5419, %v5739
  %v5997 = vsel %vm5165, %v5424, %v5744
  %v5998 = vsel %vm5166, %v5429, %v5749
  %v5999 = vsel %vm5167, %v5434, %v5754
  %v6000 = vsel %vm5168, %v5439, %v5759
  %v6001 = vsel %vm5169, %v5444, %v5764
  %v6002 = vsel %vm5170, %v5449, %v5769
  %v6003 = vsel %vm5171, %v5454, %v5774
  %v6004 = vsel %vm5172, %v5459, %v5779
  %v6005 = vsel %vm5173, %v5464, %v5784
  %v6006 = vsel %vm5174, %v5469, %v5789
  %v6007 = vsel %vm5175, %v5474, %v5794
  %v6008 = vsel %vm5176, %v5479, %v5799
  %v6009 = vsel %vm5177, %v5484, %v5804
  %v6010 = vsel %vm5178, %v5489, %v5809
  %v6011 = vsel %vm5179, %v5494, %v5814
  %v6012 = vsel %vm5180, %v5499, %v5819
  %v6013 = vsel %vm5181, %v5504, %v5824
  %v6014 = vsel %vm5182, %v5509, %v5829
  %v6015 = vsel %vm5183, %v5514, %v5834
  %v6016 = vsel %vm5184, %v5519, %v5839
  %v6017 = vsel %vm5185, %v5524, %v5844
  %v6018 = vsel %vm5186, %v5529, %v5849
  %v6019 = vsel %vm5187, %v5534, %v5854
  %v6020 = vsel %vm5188, %v5539, %v5859
  %v6021 = vsel %vm5189, %v5544, %v5864
  %v6022 = vsel %vm5190, %v5549, %v5869
  %v6023 = vsel %vm5191, %v5554, %v5874
  %v6024 = vsel %vm5192, %v5559, %v5879
  %v6025 = vsel %vm5193, %v5564, %v5884
  %v6026 = vsel %vm5194, %v5569, %v5889
  %v6027 = vsel %vm5195, %v5574, %v5894
  %v6028 = vsel %vm5196, %v5579, %v5899
  %v6029 = vsel %vm5197, %v5584, %v5904
  %v6030 = vsel %vm5198, %v5589, %v5909
  %v6031 = vsel %vm5199, %v5594, %v5914
  %v6032 = vsel %vm5200, %v5599, %v5919
  %v6033 = vsel %vm5201, %v5604, %v5924
  %v6034 = vsel %vm5202, %v5609, %v5929
  %v6035 = vsel %vm5203, %v5614, %v5934
  %v6036 = vsel %vm5204, %v5619, %v5939
  %v6037 = vsel %vm5205, %v5624, %v5944
  %v6038 = vsel %vm5206, %v5629, %v5949
  %v6039 = vsel %vm5207, %v5634, %v5954
  %v6040 = vsel %vm5208, %v5639, %v5959
  %v6041 = vsel %vm5209, %v5644, %v5964
  %v6042 = vsel %vm5210, %v5649, %v5969
  %v6043 = vsel %vm5211, %v5654, %v5974
  %v6044 = vsel %vm5212, %v5659, %v5979
  %v6045 = vmul.f32 %v4895, %v5981
  %v6046 = vmul.f32 %v4898, %v5982
  %v6047 = vmul.f32 %v4903, %v5983
  %v6048 = vmul.f32 %v4906, %v5984
  %v6049 = vmul.f32 %v4911, %v5985
  %v6050 = vmul.f32 %v4914, %v5986
  %v6051 = vmul.f32 %v4919, %v5987
  %v6052 = vmul.f32 %v4922, %v5988
  %v6053 = vmul.f32 %v4927, %v5989
  %v6054 = vmul.f32 %v4930, %v5990
  %v6055 = vmul.f32 %v4935, %v5991
  %v6056 = vmul.f32 %v4938, %v5992
  %v6057 = vmul.f32 %v4943, %v5993
  %v6058 = vmul.f32 %v4946, %v5994
  %v6059 = vmul.f32 %v4951, %v5995
  %v6060 = vmul.f32 %v4954, %v5996
  %v6061 = vmul.f32 %v4959, %v5997
  %v6062 = vmul.f32 %v4962, %v5998
  %v6063 = vmul.f32 %v4967, %v5999
  %v6064 = vmul.f32 %v4970, %v6000
  %v6065 = vmul.f32 %v4975, %v6001
  %v6066 = vmul.f32 %v4978, %v6002
  %v6067 = vmul.f32 %v4983, %v6003
  %v6068 = vmul.f32 %v4986, %v6004
  %v6069 = vmul.f32 %v4991, %v6005
  %v6070 = vmul.f32 %v4994, %v6006
  %v6071 = vmul.f32 %v4999, %v6007
  %v6072 = vmul.f32 %v5002, %v6008
  %v6073 = vmul.f32 %v5007, %v6009
  %v6074 = vmul.f32 %v5010, %v6010
  %v6075 = vmul.f32 %v5015, %v6011
  %v6076 = vmul.f32 %v5018, %v6012
  %v6077 = vmul.f32 %v5023, %v6013
  %v6078 = vmul.f32 %v5026, %v6014
  %v6079 = vmul.f32 %v5031, %v6015
  %v6080 = vmul.f32 %v5034, %v6016
  %v6081 = vmul.f32 %v5039, %v6017
  %v6082 = vmul.f32 %v5042, %v6018
  %v6083 = vmul.f32 %v5047, %v6019
  %v6084 = vmul.f32 %v5050, %v6020
  %v6085 = vmul.f32 %v5055, %v6021
  %v6086 = vmul.f32 %v5058, %v6022
  %v6087 = vmul.f32 %v5063, %v6023
  %v6088 = vmul.f32 %v5066, %v6024
  %v6089 = vmul.f32 %v5071, %v6025
  %v6090 = vmul.f32 %v5074, %v6026
  %v6091 = vmul.f32 %v5079, %v6027
  %v6092 = vmul.f32 %v5082, %v6028
  %v6093 = vmul.f32 %v5087, %v6029
  %v6094 = vmul.f32 %v5090, %v6030
  %v6095 = vmul.f32 %v5095, %v6031
  %v6096 = vmul.f32 %v5098, %v6032
  %v6097 = vmul.f32 %v5103, %v6033
  %v6098 = vmul.f32 %v5106, %v6034
  %v6099 = vmul.f32 %v5111, %v6035
  %v6100 = vmul.f32 %v5114, %v6036
  %v6101 = vmul.f32 %v5119, %v6037
  %v6102 = vmul.f32 %v5122, %v6038
  %v6103 = vmul.f32 %v5127, %v6039
  %v6104 = vmul.f32 %v5130, %v6040
  %v6105 = vmul.f32 %v5135, %v6041
  %v6106 = vmul.f32 %v5138, %v6042
  %v6107 = vmul.f32 %v5143, %v6043
  %v6108 = vmul.f32 %v5146, %v6044
  %v6109 = vadd.f32 %v6045, %v6046
  %v6110 = vadd.f32 %v6109, %v6047
  %v6111 = vadd.f32 %v6110, %v6048
  %v6112 = vadd.f32 %v6111, %v6049
  %v6113 = vadd.f32 %v6112, %v6050
  %v6114 = vadd.f32 %v6113, %v6051
  %v6115 = vadd.f32 %v6114, %v6052
  %v6116 = vadd.f32 %v6115, %v6053
  %v6117 = vadd.f32 %v6116, %v6054
  %v6118 = vadd.f32 %v6117, %v6055
  %v6119 = vadd.f32 %v6118, %v6056
  %v6120 = vadd.f32 %v6119, %v6057
  %v6121 = vadd.f32 %v6120, %v6058
  %v6122 = vadd.f32 %v6121, %v6059
  %v6123 = vadd.f32 %v6122, %v6060
  %v6124 = vadd.f32 %v6123, %v6061
  %v6125 = vadd.f32 %v6124, %v6062
  %v6126 = vadd.f32 %v6125, %v6063
  %v6127 = vadd.f32 %v6126, %v6064
  %v6128 = vadd.f32 %v6127, %v6065
  %v6129 = vadd.f32 %v6128, %v6066
  %v6130 = vadd.f32 %v6129, %v6067
  %v6131 = vadd.f32 %v6130, %v6068
  %v6132 = vadd.f32 %v6131, %v6069
  %v6133 = vadd.f32 %v6132, %v6070
  %v6134 = vadd.f32 %v6133, %v6071
  %v6135 = vadd.f32 %v6134, %v6072
  %v6136 = vadd.f32 %v6135, %v6073
  %v6137 = vadd.f32 %v6136, %v6074
  %v6138 = vadd.f32 %v6137, %v6075
  %v6139 = vadd.f32 %v6138, %v6076
  %v6140 = vadd.f32 %v6139, %v6077
  %v6141 = vadd.f32 %v6140, %v6078
  %v6142 = vadd.f32 %v6141, %v6079
  %v6143 = vadd.f32 %v6142, %v6080
  %v6144 = vadd.f32 %v6143, %v6081
  %v6145 = vadd.f32 %v6144, %v6082
  %v6146 = vadd.f32 %v6145, %v6083
  %v6147 = vadd.f32 %v6146, %v6084
  %v6148 = vadd.f32 %v6147, %v6085
  %v6149 = vadd.f32 %v6148, %v6086
  %v6150 = vadd.f32 %v6149, %v6087
  %v6151 = vadd.f32 %v6150, %v6088
  %v6152 = vadd.f32 %v6151, %v6089
  %v6153 = vadd.f32 %v6152, %v6090
  %v6154 = vadd.f32 %v6153, %v6091
  %v6155 = vadd.f32 %v6154, %v6092
  %v6156 = vadd.f32 %v6155, %v6093
  %v6157 = vadd.f32 %v6156, %v6094
  %v6158 = vadd.f32 %v6157, %v6095
  %v6159 = vadd.f32 %v6158, %v6096
  %v6160 = vadd.f32 %v6159, %v6097
  %v6161 = vadd.f32 %v6160, %v6098
  %v6162 = vadd.f32 %v6161, %v6099
  %v6163 = vadd.f32 %v6162, %v6100
  %v6164 = vadd.f32 %v6163, %v6101
  %v6165 = vadd.f32 %v6164, %v6102
  %v6166 = vadd.f32 %v6165, %v6103
  %v6167 = vadd.f32 %v6166, %v6104
  %v6168 = vadd.f32 %v6167, %v6105
  %v6169 = vadd.f32 %v6168, %v6106
  %v6170 = vadd.f32 %v6169, %v6107
  %v6171 = vadd.f32 %v6170, %v6108
  %v6172 = vrot.slane %v6171, 4
  %v6173 = vadd.f32 %v6171, %v6172
  %v6174 = vrot.slane %v6173, 2
  %v6175 = vadd.f32 %v6173, %v6174
  %v6176 = vrot.slane %v6175, 1
  %v6177 = vadd.f32 %v6175, %v6176
  %v6178 = vadd.f32 %v4155, %v6177
  %v6179 = vld [vmem:[%s3 + $0x300] sm:$0xf]
  %v6180 = vld [vmem:[%s3 + $0x304] sm:$0xf]
  %v6181 = vld [vmem:[%s3 + $0x308] sm:$0xf]
  %v6182 = vld [vmem:[%s3 + $0x30c] sm:$0xf]
  %v6183 = vld [vmem:[%s3 + $0x310] sm:$0xf]
  %v6184 = vld [vmem:[%s3 + $0x314] sm:$0xf]
  %v6185 = vld [vmem:[%s3 + $0x318] sm:$0xf]
  %v6186 = vld [vmem:[%s3 + $0x31c] sm:$0xf]
  %v6187 = vld [vmem:[%s3 + $0x320] sm:$0xf]
  %v6188 = vld [vmem:[%s3 + $0x324] sm:$0xf]
  %v6189 = vld [vmem:[%s3 + $0x328] sm:$0xf]
  %v6190 = vld [vmem:[%s3 + $0x32c] sm:$0xf]
  %v6191 = vld [vmem:[%s3 + $0x330] sm:$0xf]
  %v6192 = vld [vmem:[%s3 + $0x334] sm:$0xf]
  %v6193 = vld [vmem:[%s3 + $0x338] sm:$0xf]
  %v6194 = vld [vmem:[%s3 + $0x33c] sm:$0xf]
  %v6195 = vld [vmem:[%s3 + $0x340] sm:$0xf]
  %v6196 = vld [vmem:[%s3 + $0x344] sm:$0xf]
  %v6197 = vld [vmem:[%s3 + $0x348] sm:$0xf]
  %v6198 = vld [vmem:[%s3 + $0x34c] sm:$0xf]
  %v6199 = vld [vmem:[%s3 + $0x350] sm:$0xf]
  %v6200 = vld [vmem:[%s3 + $0x354] sm:$0xf]
  %v6201 = vld [vmem:[%s3 + $0x358] sm:$0xf]
  %v6202 = vld [vmem:[%s3 + $0x35c] sm:$0xf]
  %v6203 = vld [vmem:[%s3 + $0x360] sm:$0xf]
  %v6204 = vld [vmem:[%s3 + $0x364] sm:$0xf]
  %v6205 = vld [vmem:[%s3 + $0x368] sm:$0xf]
  %v6206 = vld [vmem:[%s3 + $0x36c] sm:$0xf]
  %v6207 = vld [vmem:[%s3 + $0x370] sm:$0xf]
  %v6208 = vld [vmem:[%s3 + $0x374] sm:$0xf]
  %v6209 = vld [vmem:[%s3 + $0x378] sm:$0xf]
  %v6210 = vld [vmem:[%s3 + $0x37c] sm:$0xf]
  %v6211 = vld [vmem:[%s3 + $0x380] sm:$0xf]
  %v6212 = vld [vmem:[%s3 + $0x384] sm:$0xf]
  %v6213 = vld [vmem:[%s3 + $0x388] sm:$0xf]
  %v6214 = vld [vmem:[%s3 + $0x38c] sm:$0xf]
  %v6215 = vld [vmem:[%s3 + $0x390] sm:$0xf]
  %v6216 = vld [vmem:[%s3 + $0x394] sm:$0xf]
  %v6217 = vld [vmem:[%s3 + $0x398] sm:$0xf]
  %v6218 = vld [vmem:[%s3 + $0x39c] sm:$0xf]
  %v6219 = vld [vmem:[%s3 + $0x3a0] sm:$0xf]
  %v6220 = vld [vmem:[%s3 + $0x3a4] sm:$0xf]
  %v6221 = vld [vmem:[%s3 + $0x3a8] sm:$0xf]
  %v6222 = vld [vmem:[%s3 + $0x3ac] sm:$0xf]
  %v6223 = vld [vmem:[%s3 + $0x3b0] sm:$0xf]
  %v6224 = vld [vmem:[%s3 + $0x3b4] sm:$0xf]
  %v6225 = vld [vmem:[%s3 + $0x3b8] sm:$0xf]
  %v6226 = vld [vmem:[%s3 + $0x3bc] sm:$0xf]
  %v6227 = vld [vmem:[%s3 + $0x3c0] sm:$0xf]
  %v6228 = vld [vmem:[%s3 + $0x3c4] sm:$0xf]
  %v6229 = vld [vmem:[%s3 + $0x3c8] sm:$0xf]
  %v6230 = vld [vmem:[%s3 + $0x3cc] sm:$0xf]
  %v6231 = vld [vmem:[%s3 + $0x3d0] sm:$0xf]
  %v6232 = vld [vmem:[%s3 + $0x3d4] sm:$0xf]
  %v6233 = vld [vmem:[%s3 + $0x3d8] sm:$0xf]
  %v6234 = vld [vmem:[%s3 + $0x3dc] sm:$0xf]
  %v6235 = vld [vmem:[%s3 + $0x3e0] sm:$0xf]
  %v6236 = vld [vmem:[%s3 + $0x3e4] sm:$0xf]
  %v6237 = vld [vmem:[%s3 + $0x3e8] sm:$0xf]
  %v6238 = vld [vmem:[%s3 + $0x3ec] sm:$0xf]
  %v6239 = vld [vmem:[%s3 + $0x3f0] sm:$0xf]
  %v6240 = vld [vmem:[%s3 + $0x3f4] sm:$0xf]
  %v6241 = vld [vmem:[%s3 + $0x3f8] sm:$0xf]
  %v6242 = vld [vmem:[%s3 + $0x3fc] sm:$0xf]
  %v6243 = vld [vmem:[%s4 + $0x600] sm:$0xff]
  %v6244 = vld [vmem:[%s4 + $0x608] sm:$0xff]
  %v6245 = vld [vmem:[%s4 + $0x610] sm:$0xff]
  %v6246 = vld [vmem:[%s4 + $0x618] sm:$0xff]
  %v6247 = vld [vmem:[%s4 + $0x620] sm:$0xff]
  %v6248 = vld [vmem:[%s4 + $0x628] sm:$0xff]
  %v6249 = vld [vmem:[%s4 + $0x630] sm:$0xff]
  %v6250 = vld [vmem:[%s4 + $0x638] sm:$0xff]
  %v6251 = vld [vmem:[%s4 + $0x640] sm:$0xff]
  %v6252 = vld [vmem:[%s4 + $0x648] sm:$0xff]
  %v6253 = vld [vmem:[%s4 + $0x650] sm:$0xff]
  %v6254 = vld [vmem:[%s4 + $0x658] sm:$0xff]
  %v6255 = vld [vmem:[%s4 + $0x660] sm:$0xff]
  %v6256 = vld [vmem:[%s4 + $0x668] sm:$0xff]
  %v6257 = vld [vmem:[%s4 + $0x670] sm:$0xff]
  %v6258 = vld [vmem:[%s4 + $0x678] sm:$0xff]
  %v6259 = vld [vmem:[%s4 + $0x680] sm:$0xff]
  %v6260 = vld [vmem:[%s4 + $0x688] sm:$0xff]
  %v6261 = vld [vmem:[%s4 + $0x690] sm:$0xff]
  %v6262 = vld [vmem:[%s4 + $0x698] sm:$0xff]
  %v6263 = vld [vmem:[%s4 + $0x6a0] sm:$0xff]
  %v6264 = vld [vmem:[%s4 + $0x6a8] sm:$0xff]
  %v6265 = vld [vmem:[%s4 + $0x6b0] sm:$0xff]
  %v6266 = vld [vmem:[%s4 + $0x6b8] sm:$0xff]
  %v6267 = vld [vmem:[%s4 + $0x6c0] sm:$0xff]
  %v6268 = vld [vmem:[%s4 + $0x6c8] sm:$0xff]
  %v6269 = vld [vmem:[%s4 + $0x6d0] sm:$0xff]
  %v6270 = vld [vmem:[%s4 + $0x6d8] sm:$0xff]
  %v6271 = vld [vmem:[%s4 + $0x6e0] sm:$0xff]
  %v6272 = vld [vmem:[%s4 + $0x6e8] sm:$0xff]
  %v6273 = vld [vmem:[%s4 + $0x6f0] sm:$0xff]
  %v6274 = vld [vmem:[%s4 + $0x6f8] sm:$0xff]
  %v6275 = vld [vmem:[%s4 + $0x700] sm:$0xff]
  %v6276 = vld [vmem:[%s4 + $0x708] sm:$0xff]
  %v6277 = vld [vmem:[%s4 + $0x710] sm:$0xff]
  %v6278 = vld [vmem:[%s4 + $0x718] sm:$0xff]
  %v6279 = vld [vmem:[%s4 + $0x720] sm:$0xff]
  %v6280 = vld [vmem:[%s4 + $0x728] sm:$0xff]
  %v6281 = vld [vmem:[%s4 + $0x730] sm:$0xff]
  %v6282 = vld [vmem:[%s4 + $0x738] sm:$0xff]
  %v6283 = vld [vmem:[%s4 + $0x740] sm:$0xff]
  %v6284 = vld [vmem:[%s4 + $0x748] sm:$0xff]
  %v6285 = vld [vmem:[%s4 + $0x750] sm:$0xff]
  %v6286 = vld [vmem:[%s4 + $0x758] sm:$0xff]
  %v6287 = vld [vmem:[%s4 + $0x760] sm:$0xff]
  %v6288 = vld [vmem:[%s4 + $0x768] sm:$0xff]
  %v6289 = vld [vmem:[%s4 + $0x770] sm:$0xff]
  %v6290 = vld [vmem:[%s4 + $0x778] sm:$0xff]
  %v6291 = vld [vmem:[%s4 + $0x780] sm:$0xff]
  %v6292 = vld [vmem:[%s4 + $0x788] sm:$0xff]
  %v6293 = vld [vmem:[%s4 + $0x790] sm:$0xff]
  %v6294 = vld [vmem:[%s4 + $0x798] sm:$0xff]
  %v6295 = vld [vmem:[%s4 + $0x7a0] sm:$0xff]
  %v6296 = vld [vmem:[%s4 + $0x7a8] sm:$0xff]
  %v6297 = vld [vmem:[%s4 + $0x7b0] sm:$0xff]
  %v6298 = vld [vmem:[%s4 + $0x7b8] sm:$0xff]
  %v6299 = vld [vmem:[%s4 + $0x7c0] sm:$0xff]
  %v6300 = vld [vmem:[%s4 + $0x7c8] sm:$0xff]
  %v6301 = vld [vmem:[%s4 + $0x7d0] sm:$0xff]
  %v6302 = vld [vmem:[%s4 + $0x7d8] sm:$0xff]
  %v6303 = vld [vmem:[%s4 + $0x7e0] sm:$0xff]
  %v6304 = vld [vmem:[%s4 + $0x7e8] sm:$0xff]
  %v6305 = vld [vmem:[%s4 + $0x7f0] sm:$0xff]
  %v6306 = vld [vmem:[%s4 + $0x7f8] sm:$0xff]
  %6308 = vset.pattern.permute.xlu0 0
  %6309 = vperm.xlu0 %6308, %v6243
  %v6310 = vpop.permute.xlu0 %6309
  %6313 = vset.pattern.permute.xlu0 0
  %6314 = vperm.xlu0 %6313, %v6244
  %v6315 = vpop.permute.xlu0 %6314
  %6318 = vset.pattern.permute.xlu0 0
  %6319 = vperm.xlu0 %6318, %v6245
  %v6320 = vpop.permute.xlu0 %6319
  %6323 = vset.pattern.permute.xlu0 0
  %6324 = vperm.xlu0 %6323, %v6246
  %v6325 = vpop.permute.xlu0 %6324
  %6328 = vset.pattern.permute.xlu0 0
  %6329 = vperm.xlu0 %6328, %v6247
  %v6330 = vpop.permute.xlu0 %6329
  %6333 = vset.pattern.permute.xlu0 0
  %6334 = vperm.xlu0 %6333, %v6248
  %v6335 = vpop.permute.xlu0 %6334
  %6338 = vset.pattern.permute.xlu0 0
  %6339 = vperm.xlu0 %6338, %v6249
  %v6340 = vpop.permute.xlu0 %6339
  %6343 = vset.pattern.permute.xlu0 0
  %6344 = vperm.xlu0 %6343, %v6250
  %v6345 = vpop.permute.xlu0 %6344
  %6348 = vset.pattern.permute.xlu0 0
  %6349 = vperm.xlu0 %6348, %v6251
  %v6350 = vpop.permute.xlu0 %6349
  %6353 = vset.pattern.permute.xlu0 0
  %6354 = vperm.xlu0 %6353, %v6252
  %v6355 = vpop.permute.xlu0 %6354
  %6358 = vset.pattern.permute.xlu0 0
  %6359 = vperm.xlu0 %6358, %v6253
  %v6360 = vpop.permute.xlu0 %6359
  %6363 = vset.pattern.permute.xlu0 0
  %6364 = vperm.xlu0 %6363, %v6254
  %v6365 = vpop.permute.xlu0 %6364
  %6368 = vset.pattern.permute.xlu0 0
  %6369 = vperm.xlu0 %6368, %v6255
  %v6370 = vpop.permute.xlu0 %6369
  %6373 = vset.pattern.permute.xlu0 0
  %6374 = vperm.xlu0 %6373, %v6256
  %v6375 = vpop.permute.xlu0 %6374
  %6378 = vset.pattern.permute.xlu0 0
  %6379 = vperm.xlu0 %6378, %v6257
  %v6380 = vpop.permute.xlu0 %6379
  %6383 = vset.pattern.permute.xlu0 0
  %6384 = vperm.xlu0 %6383, %v6258
  %v6385 = vpop.permute.xlu0 %6384
  %6388 = vset.pattern.permute.xlu0 0
  %6389 = vperm.xlu0 %6388, %v6259
  %v6390 = vpop.permute.xlu0 %6389
  %6393 = vset.pattern.permute.xlu0 0
  %6394 = vperm.xlu0 %6393, %v6260
  %v6395 = vpop.permute.xlu0 %6394
  %6398 = vset.pattern.permute.xlu0 0
  %6399 = vperm.xlu0 %6398, %v6261
  %v6400 = vpop.permute.xlu0 %6399
  %6403 = vset.pattern.permute.xlu0 0
  %6404 = vperm.xlu0 %6403, %v6262
  %v6405 = vpop.permute.xlu0 %6404
  %6408 = vset.pattern.permute.xlu0 0
  %6409 = vperm.xlu0 %6408, %v6263
  %v6410 = vpop.permute.xlu0 %6409
  %6413 = vset.pattern.permute.xlu0 0
  %6414 = vperm.xlu0 %6413, %v6264
  %v6415 = vpop.permute.xlu0 %6414
  %6418 = vset.pattern.permute.xlu0 0
  %6419 = vperm.xlu0 %6418, %v6265
  %v6420 = vpop.permute.xlu0 %6419
  %6423 = vset.pattern.permute.xlu0 0
  %6424 = vperm.xlu0 %6423, %v6266
  %v6425 = vpop.permute.xlu0 %6424
  %6428 = vset.pattern.permute.xlu0 0
  %6429 = vperm.xlu0 %6428, %v6267
  %v6430 = vpop.permute.xlu0 %6429
  %6433 = vset.pattern.permute.xlu0 0
  %6434 = vperm.xlu0 %6433, %v6268
  %v6435 = vpop.permute.xlu0 %6434
  %6438 = vset.pattern.permute.xlu0 0
  %6439 = vperm.xlu0 %6438, %v6269
  %v6440 = vpop.permute.xlu0 %6439
  %6443 = vset.pattern.permute.xlu0 0
  %6444 = vperm.xlu0 %6443, %v6270
  %v6445 = vpop.permute.xlu0 %6444
  %6448 = vset.pattern.permute.xlu0 0
  %6449 = vperm.xlu0 %6448, %v6271
  %v6450 = vpop.permute.xlu0 %6449
  %6453 = vset.pattern.permute.xlu0 0
  %6454 = vperm.xlu0 %6453, %v6272
  %v6455 = vpop.permute.xlu0 %6454
  %6458 = vset.pattern.permute.xlu0 0
  %6459 = vperm.xlu0 %6458, %v6273
  %v6460 = vpop.permute.xlu0 %6459
  %6463 = vset.pattern.permute.xlu0 0
  %6464 = vperm.xlu0 %6463, %v6274
  %v6465 = vpop.permute.xlu0 %6464
  %6468 = vset.pattern.permute.xlu0 0
  %6469 = vperm.xlu0 %6468, %v6275
  %v6470 = vpop.permute.xlu0 %6469
  %6473 = vset.pattern.permute.xlu0 0
  %6474 = vperm.xlu0 %6473, %v6276
  %v6475 = vpop.permute.xlu0 %6474
  %6478 = vset.pattern.permute.xlu0 0
  %6479 = vperm.xlu0 %6478, %v6277
  %v6480 = vpop.permute.xlu0 %6479
  %6483 = vset.pattern.permute.xlu0 0
  %6484 = vperm.xlu0 %6483, %v6278
  %v6485 = vpop.permute.xlu0 %6484
  %6488 = vset.pattern.permute.xlu0 0
  %6489 = vperm.xlu0 %6488, %v6279
  %v6490 = vpop.permute.xlu0 %6489
  %6493 = vset.pattern.permute.xlu0 0
  %6494 = vperm.xlu0 %6493, %v6280
  %v6495 = vpop.permute.xlu0 %6494
  %6498 = vset.pattern.permute.xlu0 0
  %6499 = vperm.xlu0 %6498, %v6281
  %v6500 = vpop.permute.xlu0 %6499
  %6503 = vset.pattern.permute.xlu0 0
  %6504 = vperm.xlu0 %6503, %v6282
  %v6505 = vpop.permute.xlu0 %6504
  %6508 = vset.pattern.permute.xlu0 0
  %6509 = vperm.xlu0 %6508, %v6283
  %v6510 = vpop.permute.xlu0 %6509
  %6513 = vset.pattern.permute.xlu0 0
  %6514 = vperm.xlu0 %6513, %v6284
  %v6515 = vpop.permute.xlu0 %6514
  %6518 = vset.pattern.permute.xlu0 0
  %6519 = vperm.xlu0 %6518, %v6285
  %v6520 = vpop.permute.xlu0 %6519
  %6523 = vset.pattern.permute.xlu0 0
  %6524 = vperm.xlu0 %6523, %v6286
  %v6525 = vpop.permute.xlu0 %6524
  %6528 = vset.pattern.permute.xlu0 0
  %6529 = vperm.xlu0 %6528, %v6287
  %v6530 = vpop.permute.xlu0 %6529
  %6533 = vset.pattern.permute.xlu0 0
  %6534 = vperm.xlu0 %6533, %v6288
  %v6535 = vpop.permute.xlu0 %6534
  %6538 = vset.pattern.permute.xlu0 0
  %6539 = vperm.xlu0 %6538, %v6289
  %v6540 = vpop.permute.xlu0 %6539
  %6543 = vset.pattern.permute.xlu0 0
  %6544 = vperm.xlu0 %6543, %v6290
  %v6545 = vpop.permute.xlu0 %6544
  %6548 = vset.pattern.permute.xlu0 0
  %6549 = vperm.xlu0 %6548, %v6291
  %v6550 = vpop.permute.xlu0 %6549
  %6553 = vset.pattern.permute.xlu0 0
  %6554 = vperm.xlu0 %6553, %v6292
  %v6555 = vpop.permute.xlu0 %6554
  %6558 = vset.pattern.permute.xlu0 0
  %6559 = vperm.xlu0 %6558, %v6293
  %v6560 = vpop.permute.xlu0 %6559
  %6563 = vset.pattern.permute.xlu0 0
  %6564 = vperm.xlu0 %6563, %v6294
  %v6565 = vpop.permute.xlu0 %6564
  %6568 = vset.pattern.permute.xlu0 0
  %6569 = vperm.xlu0 %6568, %v6295
  %v6570 = vpop.permute.xlu0 %6569
  %6573 = vset.pattern.permute.xlu0 0
  %6574 = vperm.xlu0 %6573, %v6296
  %v6575 = vpop.permute.xlu0 %6574
  %6578 = vset.pattern.permute.xlu0 0
  %6579 = vperm.xlu0 %6578, %v6297
  %v6580 = vpop.permute.xlu0 %6579
  %6583 = vset.pattern.permute.xlu0 0
  %6584 = vperm.xlu0 %6583, %v6298
  %v6585 = vpop.permute.xlu0 %6584
  %6588 = vset.pattern.permute.xlu0 0
  %6589 = vperm.xlu0 %6588, %v6299
  %v6590 = vpop.permute.xlu0 %6589
  %6593 = vset.pattern.permute.xlu0 0
  %6594 = vperm.xlu0 %6593, %v6300
  %v6595 = vpop.permute.xlu0 %6594
  %6598 = vset.pattern.permute.xlu0 0
  %6599 = vperm.xlu0 %6598, %v6301
  %v6600 = vpop.permute.xlu0 %6599
  %6603 = vset.pattern.permute.xlu0 0
  %6604 = vperm.xlu0 %6603, %v6302
  %v6605 = vpop.permute.xlu0 %6604
  %6608 = vset.pattern.permute.xlu0 0
  %6609 = vperm.xlu0 %6608, %v6303
  %v6610 = vpop.permute.xlu0 %6609
  %6613 = vset.pattern.permute.xlu0 0
  %6614 = vperm.xlu0 %6613, %v6304
  %v6615 = vpop.permute.xlu0 %6614
  %6618 = vset.pattern.permute.xlu0 0
  %6619 = vperm.xlu0 %6618, %v6305
  %v6620 = vpop.permute.xlu0 %6619
  %6623 = vset.pattern.permute.xlu0 0
  %6624 = vperm.xlu0 %6623, %v6306
  %v6625 = vpop.permute.xlu0 %6624
  %v6691 = vunpack.c.l.b16 %v6179
  %v6692 = vunpack.c.l.b16 %v6180
  %v6693 = vunpack.c.l.b16 %v6181
  %v6694 = vunpack.c.l.b16 %v6182
  %v6695 = vunpack.c.l.b16 %v6183
  %v6696 = vunpack.c.l.b16 %v6184
  %v6697 = vunpack.c.l.b16 %v6185
  %v6698 = vunpack.c.l.b16 %v6186
  %v6699 = vunpack.c.l.b16 %v6187
  %v6700 = vunpack.c.l.b16 %v6188
  %v6701 = vunpack.c.l.b16 %v6189
  %v6702 = vunpack.c.l.b16 %v6190
  %v6703 = vunpack.c.l.b16 %v6191
  %v6704 = vunpack.c.l.b16 %v6192
  %v6705 = vunpack.c.l.b16 %v6193
  %v6706 = vunpack.c.l.b16 %v6194
  %v6707 = vunpack.c.l.b16 %v6195
  %v6708 = vunpack.c.l.b16 %v6196
  %v6709 = vunpack.c.l.b16 %v6197
  %v6710 = vunpack.c.l.b16 %v6198
  %v6711 = vunpack.c.l.b16 %v6199
  %v6712 = vunpack.c.l.b16 %v6200
  %v6713 = vunpack.c.l.b16 %v6201
  %v6714 = vunpack.c.l.b16 %v6202
  %v6715 = vunpack.c.l.b16 %v6203
  %v6716 = vunpack.c.l.b16 %v6204
  %v6717 = vunpack.c.l.b16 %v6205
  %v6718 = vunpack.c.l.b16 %v6206
  %v6719 = vunpack.c.l.b16 %v6207
  %v6720 = vunpack.c.l.b16 %v6208
  %v6721 = vunpack.c.l.b16 %v6209
  %v6722 = vunpack.c.l.b16 %v6210
  %v6723 = vunpack.c.l.b16 %v6211
  %v6724 = vunpack.c.l.b16 %v6212
  %v6725 = vunpack.c.l.b16 %v6213
  %v6726 = vunpack.c.l.b16 %v6214
  %v6727 = vunpack.c.l.b16 %v6215
  %v6728 = vunpack.c.l.b16 %v6216
  %v6729 = vunpack.c.l.b16 %v6217
  %v6730 = vunpack.c.l.b16 %v6218
  %v6731 = vunpack.c.l.b16 %v6219
  %v6732 = vunpack.c.l.b16 %v6220
  %v6733 = vunpack.c.l.b16 %v6221
  %v6734 = vunpack.c.l.b16 %v6222
  %v6735 = vunpack.c.l.b16 %v6223
  %v6736 = vunpack.c.l.b16 %v6224
  %v6737 = vunpack.c.l.b16 %v6225
  %v6738 = vunpack.c.l.b16 %v6226
  %v6739 = vunpack.c.l.b16 %v6227
  %v6740 = vunpack.c.l.b16 %v6228
  %v6741 = vunpack.c.l.b16 %v6229
  %v6742 = vunpack.c.l.b16 %v6230
  %v6743 = vunpack.c.l.b16 %v6231
  %v6744 = vunpack.c.l.b16 %v6232
  %v6745 = vunpack.c.l.b16 %v6233
  %v6746 = vunpack.c.l.b16 %v6234
  %v6747 = vunpack.c.l.b16 %v6235
  %v6748 = vunpack.c.l.b16 %v6236
  %v6749 = vunpack.c.l.b16 %v6237
  %v6750 = vunpack.c.l.b16 %v6238
  %v6751 = vunpack.c.l.b16 %v6239
  %v6752 = vunpack.c.l.b16 %v6240
  %v6753 = vunpack.c.l.b16 %v6241
  %v6754 = vunpack.c.l.b16 %v6242
  %v6755 = vpack.c.b16 %v6692, %v6691
  %v6756 = vpack.c.b16 %v6694, %v6693
  %v6757 = vpack.c.b16 %v6696, %v6695
  %v6758 = vpack.c.b16 %v6698, %v6697
  %v6759 = vpack.c.b16 %v6700, %v6699
  %v6760 = vpack.c.b16 %v6702, %v6701
  %v6761 = vpack.c.b16 %v6704, %v6703
  %v6762 = vpack.c.b16 %v6706, %v6705
  %v6763 = vpack.c.b16 %v6708, %v6707
  %v6764 = vpack.c.b16 %v6710, %v6709
  %v6765 = vpack.c.b16 %v6712, %v6711
  %v6766 = vpack.c.b16 %v6714, %v6713
  %v6767 = vpack.c.b16 %v6716, %v6715
  %v6768 = vpack.c.b16 %v6718, %v6717
  %v6769 = vpack.c.b16 %v6720, %v6719
  %v6770 = vpack.c.b16 %v6722, %v6721
  %v6771 = vpack.c.b16 %v6724, %v6723
  %v6772 = vpack.c.b16 %v6726, %v6725
  %v6773 = vpack.c.b16 %v6728, %v6727
  %v6774 = vpack.c.b16 %v6730, %v6729
  %v6775 = vpack.c.b16 %v6732, %v6731
  %v6776 = vpack.c.b16 %v6734, %v6733
  %v6777 = vpack.c.b16 %v6736, %v6735
  %v6778 = vpack.c.b16 %v6738, %v6737
  %v6779 = vpack.c.b16 %v6740, %v6739
  %v6780 = vpack.c.b16 %v6742, %v6741
  %v6781 = vpack.c.b16 %v6744, %v6743
  %v6782 = vpack.c.b16 %v6746, %v6745
  %v6783 = vpack.c.b16 %v6748, %v6747
  %v6784 = vpack.c.b16 %v6750, %v6749
  %v6785 = vpack.c.b16 %v6752, %v6751
  %v6786 = vpack.c.b16 %v6754, %v6753
  %v6788 = vsel %vm717, %v6755, 0
  %v6791 = vsel %vm717, %v6756, 0
  %v6794 = vsel %vm717, %v6757, 0
  %v6797 = vsel %vm717, %v6758, 0
  %v6800 = vsel %vm717, %v6759, 0
  %v6803 = vsel %vm717, %v6760, 0
  %v6806 = vsel %vm717, %v6761, 0
  %v6809 = vsel %vm717, %v6762, 0
  %v6812 = vsel %vm717, %v6763, 0
  %v6815 = vsel %vm717, %v6764, 0
  %v6818 = vsel %vm717, %v6765, 0
  %v6821 = vsel %vm717, %v6766, 0
  %v6824 = vsel %vm717, %v6767, 0
  %v6827 = vsel %vm717, %v6768, 0
  %v6830 = vsel %vm717, %v6769, 0
  %v6833 = vsel %vm717, %v6770, 0
  %v6836 = vsel %vm717, %v6771, 0
  %v6839 = vsel %vm717, %v6772, 0
  %v6842 = vsel %vm717, %v6773, 0
  %v6845 = vsel %vm717, %v6774, 0
  %v6848 = vsel %vm717, %v6775, 0
  %v6851 = vsel %vm717, %v6776, 0
  %v6854 = vsel %vm717, %v6777, 0
  %v6857 = vsel %vm717, %v6778, 0
  %v6860 = vsel %vm717, %v6779, 0
  %v6863 = vsel %vm717, %v6780, 0
  %v6866 = vsel %vm717, %v6781, 0
  %v6869 = vsel %vm717, %v6782, 0
  %v6872 = vsel %vm717, %v6783, 0
  %v6875 = vsel %vm717, %v6784, 0
  %v6878 = vsel %vm717, %v6785, 0
  %v6881 = vsel %vm717, %v6786, 0
  %6883 = vmatprep.subr.bf16.mxu0 0
  %6884 = vmatpush1.bf16.msra.mxu0 0
  %6885 = vmatprep.subr.bf16.mxu0 0
  %6886 = vmatpush1.bf16.msra.mxu0 0
  %6887 = vmatprep.subr.bf16.mxu0 0
  %6888 = vmatpush1.bf16.msra.mxu0 0
  %6889 = vmatprep.subr.bf16.mxu0 0
  %6890 = vmatpush1.bf16.msra.mxu0 0
  %6891 = vmatprep.subr.bf16.mxu0 0
  %6892 = vmatpush1.bf16.msra.mxu0 0
  %6893 = vmatprep.subr.bf16.mxu0 0
  %6894 = vmatpush1.bf16.msra.mxu0 0
  %6895 = vmatprep.subr.bf16.mxu0 0
  %6896 = vmatpush1.bf16.msra.mxu0 %v108
  %6897 = vmatprep.subr.bf16.mxu0 0
  %6898 = vmatpush1.bf16.msra.mxu0 %v107
  %6899 = vmatprep.subr.bf16.mxu0 0
  %6900 = vmatpush2.bf16.msra.mxu0 0
  %6901 = vmatprep.subr.bf16.mxu0 0
  %6902 = vmatpush2.bf16.msra.mxu0 0
  %6903 = vmatprep.subr.bf16.mxu0 0
  %6904 = vmatpush2.bf16.msra.mxu0 0
  %6905 = vmatprep.subr.bf16.mxu0 0
  %6906 = vmatpush2.bf16.msra.mxu0 0
  %6907 = vmatprep.subr.bf16.mxu0 0
  %6908 = vmatpush2.bf16.msra.mxu0 0
  %6909 = vmatprep.subr.bf16.mxu0 0
  %6910 = vmatpush2.bf16.msra.mxu0 0
  %6911 = vmatprep.subr.bf16.mxu0 0
  %6912 = vmatpush2.bf16.msra.mxu0 0
  %6913 = vmatprep.subr.bf16.mxu0 0
  %6914 = vmatpush2.bf16.msra.mxu0 0
  %6915 = vmatprep.mubr.bf16.mxu0 0
  %6916 = vmatmul.mubr.bf16.gmra.mxu0 %v6788
  %v6917 = vpop.f32.mrf.mxu0
  %v6918 = vadd.f32 %v6310, %v6917
  %v6919 = vpop.f32.mrf.mxu0
  %v6920 = vpop.f32.mrf.mxu0
  %v6921 = vadd.f32 %v6315, %v6920
  %v6922 = vpop.f32.mrf.mxu0
  %6923 = vmatprep.mubr.bf16.mxu0 0
  %6924 = vmatmul.mubr.bf16.gmra.mxu0 %v6791
  %v6925 = vpop.f32.mrf.mxu0
  %v6926 = vadd.f32 %v6320, %v6925
  %v6927 = vpop.f32.mrf.mxu0
  %v6928 = vpop.f32.mrf.mxu0
  %v6929 = vadd.f32 %v6325, %v6928
  %v6930 = vpop.f32.mrf.mxu0
  %6931 = vmatprep.mubr.bf16.mxu0 0
  %6932 = vmatmul.mubr.bf16.gmra.mxu0 %v6794
  %v6933 = vpop.f32.mrf.mxu0
  %v6934 = vadd.f32 %v6330, %v6933
  %v6935 = vpop.f32.mrf.mxu0
  %v6936 = vpop.f32.mrf.mxu0
  %v6937 = vadd.f32 %v6335, %v6936
  %v6938 = vpop.f32.mrf.mxu0
  %6939 = vmatprep.mubr.bf16.mxu0 0
  %6940 = vmatmul.mubr.bf16.gmra.mxu0 %v6797
  %v6941 = vpop.f32.mrf.mxu0
  %v6942 = vadd.f32 %v6340, %v6941
  %v6943 = vpop.f32.mrf.mxu0
  %v6944 = vpop.f32.mrf.mxu0
  %v6945 = vadd.f32 %v6345, %v6944
  %v6946 = vpop.f32.mrf.mxu0
  %6947 = vmatprep.mubr.bf16.mxu0 0
  %6948 = vmatmul.mubr.bf16.gmra.mxu0 %v6800
  %v6949 = vpop.f32.mrf.mxu0
  %v6950 = vadd.f32 %v6350, %v6949
  %v6951 = vpop.f32.mrf.mxu0
  %v6952 = vpop.f32.mrf.mxu0
  %v6953 = vadd.f32 %v6355, %v6952
  %v6954 = vpop.f32.mrf.mxu0
  %6955 = vmatprep.mubr.bf16.mxu0 0
  %6956 = vmatmul.mubr.bf16.gmra.mxu0 %v6803
  %v6957 = vpop.f32.mrf.mxu0
  %v6958 = vadd.f32 %v6360, %v6957
  %v6959 = vpop.f32.mrf.mxu0
  %v6960 = vpop.f32.mrf.mxu0
  %v6961 = vadd.f32 %v6365, %v6960
  %v6962 = vpop.f32.mrf.mxu0
  %6963 = vmatprep.mubr.bf16.mxu0 0
  %6964 = vmatmul.mubr.bf16.gmra.mxu0 %v6806
  %v6965 = vpop.f32.mrf.mxu0
  %v6966 = vadd.f32 %v6370, %v6965
  %v6967 = vpop.f32.mrf.mxu0
  %v6968 = vpop.f32.mrf.mxu0
  %v6969 = vadd.f32 %v6375, %v6968
  %v6970 = vpop.f32.mrf.mxu0
  %6971 = vmatprep.mubr.bf16.mxu0 0
  %6972 = vmatmul.mubr.bf16.gmra.mxu0 %v6809
  %v6973 = vpop.f32.mrf.mxu0
  %v6974 = vadd.f32 %v6380, %v6973
  %v6975 = vpop.f32.mrf.mxu0
  %v6976 = vpop.f32.mrf.mxu0
  %v6977 = vadd.f32 %v6385, %v6976
  %v6978 = vpop.f32.mrf.mxu0
  %6979 = vmatprep.mubr.bf16.mxu0 0
  %6980 = vmatmul.mubr.bf16.gmra.mxu0 %v6812
  %v6981 = vpop.f32.mrf.mxu0
  %v6982 = vadd.f32 %v6390, %v6981
  %v6983 = vpop.f32.mrf.mxu0
  %v6984 = vpop.f32.mrf.mxu0
  %v6985 = vadd.f32 %v6395, %v6984
  %v6986 = vpop.f32.mrf.mxu0
  %6987 = vmatprep.mubr.bf16.mxu0 0
  %6988 = vmatmul.mubr.bf16.gmra.mxu0 %v6815
  %v6989 = vpop.f32.mrf.mxu0
  %v6990 = vadd.f32 %v6400, %v6989
  %v6991 = vpop.f32.mrf.mxu0
  %v6992 = vpop.f32.mrf.mxu0
  %v6993 = vadd.f32 %v6405, %v6992
  %v6994 = vpop.f32.mrf.mxu0
  %6995 = vmatprep.mubr.bf16.mxu0 0
  %6996 = vmatmul.mubr.bf16.gmra.mxu0 %v6818
  %v6997 = vpop.f32.mrf.mxu0
  %v6998 = vadd.f32 %v6410, %v6997
  %v6999 = vpop.f32.mrf.mxu0
  %v7000 = vpop.f32.mrf.mxu0
  %v7001 = vadd.f32 %v6415, %v7000
  %v7002 = vpop.f32.mrf.mxu0
  %7003 = vmatprep.mubr.bf16.mxu0 0
  %7004 = vmatmul.mubr.bf16.gmra.mxu0 %v6821
  %v7005 = vpop.f32.mrf.mxu0
  %v7006 = vadd.f32 %v6420, %v7005
  %v7007 = vpop.f32.mrf.mxu0
  %v7008 = vpop.f32.mrf.mxu0
  %v7009 = vadd.f32 %v6425, %v7008
  %v7010 = vpop.f32.mrf.mxu0
  %7011 = vmatprep.mubr.bf16.mxu0 0
  %7012 = vmatmul.mubr.bf16.gmra.mxu0 %v6824
  %v7013 = vpop.f32.mrf.mxu0
  %v7014 = vadd.f32 %v6430, %v7013
  %v7015 = vpop.f32.mrf.mxu0
  %v7016 = vpop.f32.mrf.mxu0
  %v7017 = vadd.f32 %v6435, %v7016
  %v7018 = vpop.f32.mrf.mxu0
  %7019 = vmatprep.mubr.bf16.mxu0 0
  %7020 = vmatmul.mubr.bf16.gmra.mxu0 %v6827
  %v7021 = vpop.f32.mrf.mxu0
  %v7022 = vadd.f32 %v6440, %v7021
  %v7023 = vpop.f32.mrf.mxu0
  %v7024 = vpop.f32.mrf.mxu0
  %v7025 = vadd.f32 %v6445, %v7024
  %v7026 = vpop.f32.mrf.mxu0
  %7027 = vmatprep.mubr.bf16.mxu0 0
  %7028 = vmatmul.mubr.bf16.gmra.mxu0 %v6830
  %v7029 = vpop.f32.mrf.mxu0
  %v7030 = vadd.f32 %v6450, %v7029
  %v7031 = vpop.f32.mrf.mxu0
  %v7032 = vpop.f32.mrf.mxu0
  %v7033 = vadd.f32 %v6455, %v7032
  %v7034 = vpop.f32.mrf.mxu0
  %7035 = vmatprep.mubr.bf16.mxu0 0
  %7036 = vmatmul.mubr.bf16.gmra.mxu0 %v6833
  %v7037 = vpop.f32.mrf.mxu0
  %v7038 = vadd.f32 %v6460, %v7037
  %v7039 = vpop.f32.mrf.mxu0
  %v7040 = vpop.f32.mrf.mxu0
  %v7041 = vadd.f32 %v6465, %v7040
  %v7042 = vpop.f32.mrf.mxu0
  %7043 = vmatprep.mubr.bf16.mxu0 0
  %7044 = vmatmul.mubr.bf16.gmra.mxu0 %v6836
  %v7045 = vpop.f32.mrf.mxu0
  %v7046 = vadd.f32 %v6470, %v7045
  %v7047 = vpop.f32.mrf.mxu0
  %v7048 = vpop.f32.mrf.mxu0
  %v7049 = vadd.f32 %v6475, %v7048
  %v7050 = vpop.f32.mrf.mxu0
  %7051 = vmatprep.mubr.bf16.mxu0 0
  %7052 = vmatmul.mubr.bf16.gmra.mxu0 %v6839
  %v7053 = vpop.f32.mrf.mxu0
  %v7054 = vadd.f32 %v6480, %v7053
  %v7055 = vpop.f32.mrf.mxu0
  %v7056 = vpop.f32.mrf.mxu0
  %v7057 = vadd.f32 %v6485, %v7056
  %v7058 = vpop.f32.mrf.mxu0
  %7059 = vmatprep.mubr.bf16.mxu0 0
  %7060 = vmatmul.mubr.bf16.gmra.mxu0 %v6842
  %v7061 = vpop.f32.mrf.mxu0
  %v7062 = vadd.f32 %v6490, %v7061
  %v7063 = vpop.f32.mrf.mxu0
  %v7064 = vpop.f32.mrf.mxu0
  %v7065 = vadd.f32 %v6495, %v7064
  %v7066 = vpop.f32.mrf.mxu0
  %7067 = vmatprep.mubr.bf16.mxu0 0
  %7068 = vmatmul.mubr.bf16.gmra.mxu0 %v6845
  %v7069 = vpop.f32.mrf.mxu0
  %v7070 = vadd.f32 %v6500, %v7069
  %v7071 = vpop.f32.mrf.mxu0
  %v7072 = vpop.f32.mrf.mxu0
  %v7073 = vadd.f32 %v6505, %v7072
  %v7074 = vpop.f32.mrf.mxu0
  %7075 = vmatprep.mubr.bf16.mxu0 0
  %7076 = vmatmul.mubr.bf16.gmra.mxu0 %v6848
  %v7077 = vpop.f32.mrf.mxu0
  %v7078 = vadd.f32 %v6510, %v7077
  %v7079 = vpop.f32.mrf.mxu0
  %v7080 = vpop.f32.mrf.mxu0
  %v7081 = vadd.f32 %v6515, %v7080
  %v7082 = vpop.f32.mrf.mxu0
  %7083 = vmatprep.mubr.bf16.mxu0 0
  %7084 = vmatmul.mubr.bf16.gmra.mxu0 %v6851
  %v7085 = vpop.f32.mrf.mxu0
  %v7086 = vadd.f32 %v6520, %v7085
  %v7087 = vpop.f32.mrf.mxu0
  %v7088 = vpop.f32.mrf.mxu0
  %v7089 = vadd.f32 %v6525, %v7088
  %v7090 = vpop.f32.mrf.mxu0
  %7091 = vmatprep.mubr.bf16.mxu0 0
  %7092 = vmatmul.mubr.bf16.gmra.mxu0 %v6854
  %v7093 = vpop.f32.mrf.mxu0
  %v7094 = vadd.f32 %v6530, %v7093
  %v7095 = vpop.f32.mrf.mxu0
  %v7096 = vpop.f32.mrf.mxu0
  %v7097 = vadd.f32 %v6535, %v7096
  %v7098 = vpop.f32.mrf.mxu0
  %7099 = vmatprep.mubr.bf16.mxu0 0
  %7100 = vmatmul.mubr.bf16.gmra.mxu0 %v6857
  %v7101 = vpop.f32.mrf.mxu0
  %v7102 = vadd.f32 %v6540, %v7101
  %v7103 = vpop.f32.mrf.mxu0
  %v7104 = vpop.f32.mrf.mxu0
  %v7105 = vadd.f32 %v6545, %v7104
  %v7106 = vpop.f32.mrf.mxu0
  %7107 = vmatprep.mubr.bf16.mxu0 0
  %7108 = vmatmul.mubr.bf16.gmra.mxu0 %v6860
  %v7109 = vpop.f32.mrf.mxu0
  %v7110 = vadd.f32 %v6550, %v7109
  %v7111 = vpop.f32.mrf.mxu0
  %v7112 = vpop.f32.mrf.mxu0
  %v7113 = vadd.f32 %v6555, %v7112
  %v7114 = vpop.f32.mrf.mxu0
  %7115 = vmatprep.mubr.bf16.mxu0 0
  %7116 = vmatmul.mubr.bf16.gmra.mxu0 %v6863
  %v7117 = vpop.f32.mrf.mxu0
  %v7118 = vadd.f32 %v6560, %v7117
  %v7119 = vpop.f32.mrf.mxu0
  %v7120 = vpop.f32.mrf.mxu0
  %v7121 = vadd.f32 %v6565, %v7120
  %v7122 = vpop.f32.mrf.mxu0
  %7123 = vmatprep.mubr.bf16.mxu0 0
  %7124 = vmatmul.mubr.bf16.gmra.mxu0 %v6866
  %v7125 = vpop.f32.mrf.mxu0
  %v7126 = vadd.f32 %v6570, %v7125
  %v7127 = vpop.f32.mrf.mxu0
  %v7128 = vpop.f32.mrf.mxu0
  %v7129 = vadd.f32 %v6575, %v7128
  %v7130 = vpop.f32.mrf.mxu0
  %7131 = vmatprep.mubr.bf16.mxu0 0
  %7132 = vmatmul.mubr.bf16.gmra.mxu0 %v6869
  %v7133 = vpop.f32.mrf.mxu0
  %v7134 = vadd.f32 %v6580, %v7133
  %v7135 = vpop.f32.mrf.mxu0
  %v7136 = vpop.f32.mrf.mxu0
  %v7137 = vadd.f32 %v6585, %v7136
  %v7138 = vpop.f32.mrf.mxu0
  %7139 = vmatprep.mubr.bf16.mxu0 0
  %7140 = vmatmul.mubr.bf16.gmra.mxu0 %v6872
  %v7141 = vpop.f32.mrf.mxu0
  %v7142 = vadd.f32 %v6590, %v7141
  %v7143 = vpop.f32.mrf.mxu0
  %v7144 = vpop.f32.mrf.mxu0
  %v7145 = vadd.f32 %v6595, %v7144
  %v7146 = vpop.f32.mrf.mxu0
  %7147 = vmatprep.mubr.bf16.mxu0 0
  %7148 = vmatmul.mubr.bf16.gmra.mxu0 %v6875
  %v7149 = vpop.f32.mrf.mxu0
  %v7150 = vadd.f32 %v6600, %v7149
  %v7151 = vpop.f32.mrf.mxu0
  %v7152 = vpop.f32.mrf.mxu0
  %v7153 = vadd.f32 %v6605, %v7152
  %v7154 = vpop.f32.mrf.mxu0
  %7155 = vmatprep.mubr.bf16.mxu0 0
  %7156 = vmatmul.mubr.bf16.gmra.mxu0 %v6878
  %v7157 = vpop.f32.mrf.mxu0
  %v7158 = vadd.f32 %v6610, %v7157
  %v7159 = vpop.f32.mrf.mxu0
  %v7160 = vpop.f32.mrf.mxu0
  %v7161 = vadd.f32 %v6615, %v7160
  %v7162 = vpop.f32.mrf.mxu0
  %7163 = vmatprep.mubr.bf16.mxu0 0
  %7164 = vmatmul.mubr.bf16.gmra.mxu0 %v6881
  %v7165 = vpop.f32.mrf.mxu0
  %v7166 = vadd.f32 %v6620, %v7165
  %v7167 = vpop.f32.mrf.mxu0
  %v7168 = vpop.f32.mrf.mxu0
  %v7169 = vadd.f32 %v6625, %v7168
  %v7170 = vpop.f32.mrf.mxu0
  %7171 = vdwg.mxu0
  %vm7172 = vcmp.gt.f32.partialorder %v6918, 0.0
  %vm7173 = vcmp.gt.f32.partialorder %v6921, 0.0
  %vm7174 = vcmp.gt.f32.partialorder %v6926, 0.0
  %vm7175 = vcmp.gt.f32.partialorder %v6929, 0.0
  %vm7176 = vcmp.gt.f32.partialorder %v6934, 0.0
  %vm7177 = vcmp.gt.f32.partialorder %v6937, 0.0
  %vm7178 = vcmp.gt.f32.partialorder %v6942, 0.0
  %vm7179 = vcmp.gt.f32.partialorder %v6945, 0.0
  %vm7180 = vcmp.gt.f32.partialorder %v6950, 0.0
  %vm7181 = vcmp.gt.f32.partialorder %v6953, 0.0
  %vm7182 = vcmp.gt.f32.partialorder %v6958, 0.0
  %vm7183 = vcmp.gt.f32.partialorder %v6961, 0.0
  %vm7184 = vcmp.gt.f32.partialorder %v6966, 0.0
  %vm7185 = vcmp.gt.f32.partialorder %v6969, 0.0
  %vm7186 = vcmp.gt.f32.partialorder %v6974, 0.0
  %vm7187 = vcmp.gt.f32.partialorder %v6977, 0.0
  %vm7188 = vcmp.gt.f32.partialorder %v6982, 0.0
  %vm7189 = vcmp.gt.f32.partialorder %v6985, 0.0
  %vm7190 = vcmp.gt.f32.partialorder %v6990, 0.0
  %vm7191 = vcmp.gt.f32.partialorder %v6993, 0.0
  %vm7192 = vcmp.gt.f32.partialorder %v6998, 0.0
  %vm7193 = vcmp.gt.f32.partialorder %v7001, 0.0
  %vm7194 = vcmp.gt.f32.partialorder %v7006, 0.0
  %vm7195 = vcmp.gt.f32.partialorder %v7009, 0.0
  %vm7196 = vcmp.gt.f32.partialorder %v7014, 0.0
  %vm7197 = vcmp.gt.f32.partialorder %v7017, 0.0
  %vm7198 = vcmp.gt.f32.partialorder %v7022, 0.0
  %vm7199 = vcmp.gt.f32.partialorder %v7025, 0.0
  %vm7200 = vcmp.gt.f32.partialorder %v7030, 0.0
  %vm7201 = vcmp.gt.f32.partialorder %v7033, 0.0
  %vm7202 = vcmp.gt.f32.partialorder %v7038, 0.0
  %vm7203 = vcmp.gt.f32.partialorder %v7041, 0.0
  %vm7204 = vcmp.gt.f32.partialorder %v7046, 0.0
  %vm7205 = vcmp.gt.f32.partialorder %v7049, 0.0
  %vm7206 = vcmp.gt.f32.partialorder %v7054, 0.0
  %vm7207 = vcmp.gt.f32.partialorder %v7057, 0.0
  %vm7208 = vcmp.gt.f32.partialorder %v7062, 0.0
  %vm7209 = vcmp.gt.f32.partialorder %v7065, 0.0
  %vm7210 = vcmp.gt.f32.partialorder %v7070, 0.0
  %vm7211 = vcmp.gt.f32.partialorder %v7073, 0.0
  %vm7212 = vcmp.gt.f32.partialorder %v7078, 0.0
  %vm7213 = vcmp.gt.f32.partialorder %v7081, 0.0
  %vm7214 = vcmp.gt.f32.partialorder %v7086, 0.0
  %vm7215 = vcmp.gt.f32.partialorder %v7089, 0.0
  %vm7216 = vcmp.gt.f32.partialorder %v7094, 0.0
  %vm7217 = vcmp.gt.f32.partialorder %v7097, 0.0
  %vm7218 = vcmp.gt.f32.partialorder %v7102, 0.0
  %vm7219 = vcmp.gt.f32.partialorder %v7105, 0.0
  %vm7220 = vcmp.gt.f32.partialorder %v7110, 0.0
  %vm7221 = vcmp.gt.f32.partialorder %v7113, 0.0
  %vm7222 = vcmp.gt.f32.partialorder %v7118, 0.0
  %vm7223 = vcmp.gt.f32.partialorder %v7121, 0.0
  %vm7224 = vcmp.gt.f32.partialorder %v7126, 0.0
  %vm7225 = vcmp.gt.f32.partialorder %v7129, 0.0
  %vm7226 = vcmp.gt.f32.partialorder %v7134, 0.0
  %vm7227 = vcmp.gt.f32.partialorder %v7137, 0.0
  %vm7228 = vcmp.gt.f32.partialorder %v7142, 0.0
  %vm7229 = vcmp.gt.f32.partialorder %v7145, 0.0
  %vm7230 = vcmp.gt.f32.partialorder %v7150, 0.0
  %vm7231 = vcmp.gt.f32.partialorder %v7153, 0.0
  %vm7232 = vcmp.gt.f32.partialorder %v7158, 0.0
  %vm7233 = vcmp.gt.f32.partialorder %v7161, 0.0
  %vm7234 = vcmp.gt.f32.partialorder %v7166, 0.0
  %vm7235 = vcmp.gt.f32.partialorder %v7169, 0.0
  %v7236 = vld [vmem:[%s5 + $0x600] sm:$0xff]
  %v7237 = vld [vmem:[%s5 + $0x608] sm:$0xff]
  %v7238 = vld [vmem:[%s5 + $0x610] sm:$0xff]
  %v7239 = vld [vmem:[%s5 + $0x618] sm:$0xff]
  %v7240 = vld [vmem:[%s5 + $0x620] sm:$0xff]
  %v7241 = vld [vmem:[%s5 + $0x628] sm:$0xff]
  %v7242 = vld [vmem:[%s5 + $0x630] sm:$0xff]
  %v7243 = vld [vmem:[%s5 + $0x638] sm:$0xff]
  %v7244 = vld [vmem:[%s5 + $0x640] sm:$0xff]
  %v7245 = vld [vmem:[%s5 + $0x648] sm:$0xff]
  %v7246 = vld [vmem:[%s5 + $0x650] sm:$0xff]
  %v7247 = vld [vmem:[%s5 + $0x658] sm:$0xff]
  %v7248 = vld [vmem:[%s5 + $0x660] sm:$0xff]
  %v7249 = vld [vmem:[%s5 + $0x668] sm:$0xff]
  %v7250 = vld [vmem:[%s5 + $0x670] sm:$0xff]
  %v7251 = vld [vmem:[%s5 + $0x678] sm:$0xff]
  %v7252 = vld [vmem:[%s5 + $0x680] sm:$0xff]
  %v7253 = vld [vmem:[%s5 + $0x688] sm:$0xff]
  %v7254 = vld [vmem:[%s5 + $0x690] sm:$0xff]
  %v7255 = vld [vmem:[%s5 + $0x698] sm:$0xff]
  %v7256 = vld [vmem:[%s5 + $0x6a0] sm:$0xff]
  %v7257 = vld [vmem:[%s5 + $0x6a8] sm:$0xff]
  %v7258 = vld [vmem:[%s5 + $0x6b0] sm:$0xff]
  %v7259 = vld [vmem:[%s5 + $0x6b8] sm:$0xff]
  %v7260 = vld [vmem:[%s5 + $0x6c0] sm:$0xff]
  %v7261 = vld [vmem:[%s5 + $0x6c8] sm:$0xff]
  %v7262 = vld [vmem:[%s5 + $0x6d0] sm:$0xff]
  %v7263 = vld [vmem:[%s5 + $0x6d8] sm:$0xff]
  %v7264 = vld [vmem:[%s5 + $0x6e0] sm:$0xff]
  %v7265 = vld [vmem:[%s5 + $0x6e8] sm:$0xff]
  %v7266 = vld [vmem:[%s5 + $0x6f0] sm:$0xff]
  %v7267 = vld [vmem:[%s5 + $0x6f8] sm:$0xff]
  %v7268 = vld [vmem:[%s5 + $0x700] sm:$0xff]
  %v7269 = vld [vmem:[%s5 + $0x708] sm:$0xff]
  %v7270 = vld [vmem:[%s5 + $0x710] sm:$0xff]
  %v7271 = vld [vmem:[%s5 + $0x718] sm:$0xff]
  %v7272 = vld [vmem:[%s5 + $0x720] sm:$0xff]
  %v7273 = vld [vmem:[%s5 + $0x728] sm:$0xff]
  %v7274 = vld [vmem:[%s5 + $0x730] sm:$0xff]
  %v7275 = vld [vmem:[%s5 + $0x738] sm:$0xff]
  %v7276 = vld [vmem:[%s5 + $0x740] sm:$0xff]
  %v7277 = vld [vmem:[%s5 + $0x748] sm:$0xff]
  %v7278 = vld [vmem:[%s5 + $0x750] sm:$0xff]
  %v7279 = vld [vmem:[%s5 + $0x758] sm:$0xff]
  %v7280 = vld [vmem:[%s5 + $0x760] sm:$0xff]
  %v7281 = vld [vmem:[%s5 + $0x768] sm:$0xff]
  %v7282 = vld [vmem:[%s5 + $0x770] sm:$0xff]
  %v7283 = vld [vmem:[%s5 + $0x778] sm:$0xff]
  %v7284 = vld [vmem:[%s5 + $0x780] sm:$0xff]
  %v7285 = vld [vmem:[%s5 + $0x788] sm:$0xff]
  %v7286 = vld [vmem:[%s5 + $0x790] sm:$0xff]
  %v7287 = vld [vmem:[%s5 + $0x798] sm:$0xff]
  %v7288 = vld [vmem:[%s5 + $0x7a0] sm:$0xff]
  %v7289 = vld [vmem:[%s5 + $0x7a8] sm:$0xff]
  %v7290 = vld [vmem:[%s5 + $0x7b0] sm:$0xff]
  %v7291 = vld [vmem:[%s5 + $0x7b8] sm:$0xff]
  %v7292 = vld [vmem:[%s5 + $0x7c0] sm:$0xff]
  %v7293 = vld [vmem:[%s5 + $0x7c8] sm:$0xff]
  %v7294 = vld [vmem:[%s5 + $0x7d0] sm:$0xff]
  %v7295 = vld [vmem:[%s5 + $0x7d8] sm:$0xff]
  %v7296 = vld [vmem:[%s5 + $0x7e0] sm:$0xff]
  %v7297 = vld [vmem:[%s5 + $0x7e8] sm:$0xff]
  %v7298 = vld [vmem:[%s5 + $0x7f0] sm:$0xff]
  %v7299 = vld [vmem:[%s5 + $0x7f8] sm:$0xff]
  %v7300 = vld [vmem:[%s6 + $0x600] sm:$0xff]
  %v7301 = vld [vmem:[%s6 + $0x608] sm:$0xff]
  %v7302 = vld [vmem:[%s6 + $0x610] sm:$0xff]
  %v7303 = vld [vmem:[%s6 + $0x618] sm:$0xff]
  %v7304 = vld [vmem:[%s6 + $0x620] sm:$0xff]
  %v7305 = vld [vmem:[%s6 + $0x628] sm:$0xff]
  %v7306 = vld [vmem:[%s6 + $0x630] sm:$0xff]
  %v7307 = vld [vmem:[%s6 + $0x638] sm:$0xff]
  %v7308 = vld [vmem:[%s6 + $0x640] sm:$0xff]
  %v7309 = vld [vmem:[%s6 + $0x648] sm:$0xff]
  %v7310 = vld [vmem:[%s6 + $0x650] sm:$0xff]
  %v7311 = vld [vmem:[%s6 + $0x658] sm:$0xff]
  %v7312 = vld [vmem:[%s6 + $0x660] sm:$0xff]
  %v7313 = vld [vmem:[%s6 + $0x668] sm:$0xff]
  %v7314 = vld [vmem:[%s6 + $0x670] sm:$0xff]
  %v7315 = vld [vmem:[%s6 + $0x678] sm:$0xff]
  %v7316 = vld [vmem:[%s6 + $0x680] sm:$0xff]
  %v7317 = vld [vmem:[%s6 + $0x688] sm:$0xff]
  %v7318 = vld [vmem:[%s6 + $0x690] sm:$0xff]
  %v7319 = vld [vmem:[%s6 + $0x698] sm:$0xff]
  %v7320 = vld [vmem:[%s6 + $0x6a0] sm:$0xff]
  %v7321 = vld [vmem:[%s6 + $0x6a8] sm:$0xff]
  %v7322 = vld [vmem:[%s6 + $0x6b0] sm:$0xff]
  %v7323 = vld [vmem:[%s6 + $0x6b8] sm:$0xff]
  %v7324 = vld [vmem:[%s6 + $0x6c0] sm:$0xff]
  %v7325 = vld [vmem:[%s6 + $0x6c8] sm:$0xff]
  %v7326 = vld [vmem:[%s6 + $0x6d0] sm:$0xff]
  %v7327 = vld [vmem:[%s6 + $0x6d8] sm:$0xff]
  %v7328 = vld [vmem:[%s6 + $0x6e0] sm:$0xff]
  %v7329 = vld [vmem:[%s6 + $0x6e8] sm:$0xff]
  %v7330 = vld [vmem:[%s6 + $0x6f0] sm:$0xff]
  %v7331 = vld [vmem:[%s6 + $0x6f8] sm:$0xff]
  %v7332 = vld [vmem:[%s6 + $0x700] sm:$0xff]
  %v7333 = vld [vmem:[%s6 + $0x708] sm:$0xff]
  %v7334 = vld [vmem:[%s6 + $0x710] sm:$0xff]
  %v7335 = vld [vmem:[%s6 + $0x718] sm:$0xff]
  %v7336 = vld [vmem:[%s6 + $0x720] sm:$0xff]
  %v7337 = vld [vmem:[%s6 + $0x728] sm:$0xff]
  %v7338 = vld [vmem:[%s6 + $0x730] sm:$0xff]
  %v7339 = vld [vmem:[%s6 + $0x738] sm:$0xff]
  %v7340 = vld [vmem:[%s6 + $0x740] sm:$0xff]
  %v7341 = vld [vmem:[%s6 + $0x748] sm:$0xff]
  %v7342 = vld [vmem:[%s6 + $0x750] sm:$0xff]
  %v7343 = vld [vmem:[%s6 + $0x758] sm:$0xff]
  %v7344 = vld [vmem:[%s6 + $0x760] sm:$0xff]
  %v7345 = vld [vmem:[%s6 + $0x768] sm:$0xff]
  %v7346 = vld [vmem:[%s6 + $0x770] sm:$0xff]
  %v7347 = vld [vmem:[%s6 + $0x778] sm:$0xff]
  %v7348 = vld [vmem:[%s6 + $0x780] sm:$0xff]
  %v7349 = vld [vmem:[%s6 + $0x788] sm:$0xff]
  %v7350 = vld [vmem:[%s6 + $0x790] sm:$0xff]
  %v7351 = vld [vmem:[%s6 + $0x798] sm:$0xff]
  %v7352 = vld [vmem:[%s6 + $0x7a0] sm:$0xff]
  %v7353 = vld [vmem:[%s6 + $0x7a8] sm:$0xff]
  %v7354 = vld [vmem:[%s6 + $0x7b0] sm:$0xff]
  %v7355 = vld [vmem:[%s6 + $0x7b8] sm:$0xff]
  %v7356 = vld [vmem:[%s6 + $0x7c0] sm:$0xff]
  %v7357 = vld [vmem:[%s6 + $0x7c8] sm:$0xff]
  %v7358 = vld [vmem:[%s6 + $0x7d0] sm:$0xff]
  %v7359 = vld [vmem:[%s6 + $0x7d8] sm:$0xff]
  %v7360 = vld [vmem:[%s6 + $0x7e0] sm:$0xff]
  %v7361 = vld [vmem:[%s6 + $0x7e8] sm:$0xff]
  %v7362 = vld [vmem:[%s6 + $0x7f0] sm:$0xff]
  %v7363 = vld [vmem:[%s6 + $0x7f8] sm:$0xff]
  %7365 = vset.pattern.permute.xlu0 0
  %7366 = vperm.xlu0 %7365, %v7236
  %v7367 = vpop.permute.xlu0 %7366
  %7370 = vset.pattern.permute.xlu0 0
  %7371 = vperm.xlu0 %7370, %v7237
  %v7372 = vpop.permute.xlu0 %7371
  %7375 = vset.pattern.permute.xlu0 0
  %7376 = vperm.xlu0 %7375, %v7238
  %v7377 = vpop.permute.xlu0 %7376
  %7380 = vset.pattern.permute.xlu0 0
  %7381 = vperm.xlu0 %7380, %v7239
  %v7382 = vpop.permute.xlu0 %7381
  %7385 = vset.pattern.permute.xlu0 0
  %7386 = vperm.xlu0 %7385, %v7240
  %v7387 = vpop.permute.xlu0 %7386
  %7390 = vset.pattern.permute.xlu0 0
  %7391 = vperm.xlu0 %7390, %v7241
  %v7392 = vpop.permute.xlu0 %7391
  %7395 = vset.pattern.permute.xlu0 0
  %7396 = vperm.xlu0 %7395, %v7242
  %v7397 = vpop.permute.xlu0 %7396
  %7400 = vset.pattern.permute.xlu0 0
  %7401 = vperm.xlu0 %7400, %v7243
  %v7402 = vpop.permute.xlu0 %7401
  %7405 = vset.pattern.permute.xlu0 0
  %7406 = vperm.xlu0 %7405, %v7244
  %v7407 = vpop.permute.xlu0 %7406
  %7410 = vset.pattern.permute.xlu0 0
  %7411 = vperm.xlu0 %7410, %v7245
  %v7412 = vpop.permute.xlu0 %7411
  %7415 = vset.pattern.permute.xlu0 0
  %7416 = vperm.xlu0 %7415, %v7246
  %v7417 = vpop.permute.xlu0 %7416
  %7420 = vset.pattern.permute.xlu0 0
  %7421 = vperm.xlu0 %7420, %v7247
  %v7422 = vpop.permute.xlu0 %7421
  %7425 = vset.pattern.permute.xlu0 0
  %7426 = vperm.xlu0 %7425, %v7248
  %v7427 = vpop.permute.xlu0 %7426
  %7430 = vset.pattern.permute.xlu0 0
  %7431 = vperm.xlu0 %7430, %v7249
  %v7432 = vpop.permute.xlu0 %7431
  %7435 = vset.pattern.permute.xlu0 0
  %7436 = vperm.xlu0 %7435, %v7250
  %v7437 = vpop.permute.xlu0 %7436
  %7440 = vset.pattern.permute.xlu0 0
  %7441 = vperm.xlu0 %7440, %v7251
  %v7442 = vpop.permute.xlu0 %7441
  %7445 = vset.pattern.permute.xlu0 0
  %7446 = vperm.xlu0 %7445, %v7252
  %v7447 = vpop.permute.xlu0 %7446
  %7450 = vset.pattern.permute.xlu0 0
  %7451 = vperm.xlu0 %7450, %v7253
  %v7452 = vpop.permute.xlu0 %7451
  %7455 = vset.pattern.permute.xlu0 0
  %7456 = vperm.xlu0 %7455, %v7254
  %v7457 = vpop.permute.xlu0 %7456
  %7460 = vset.pattern.permute.xlu0 0
  %7461 = vperm.xlu0 %7460, %v7255
  %v7462 = vpop.permute.xlu0 %7461
  %7465 = vset.pattern.permute.xlu0 0
  %7466 = vperm.xlu0 %7465, %v7256
  %v7467 = vpop.permute.xlu0 %7466
  %7470 = vset.pattern.permute.xlu0 0
  %7471 = vperm.xlu0 %7470, %v7257
  %v7472 = vpop.permute.xlu0 %7471
  %7475 = vset.pattern.permute.xlu0 0
  %7476 = vperm.xlu0 %7475, %v7258
  %v7477 = vpop.permute.xlu0 %7476
  %7480 = vset.pattern.permute.xlu0 0
  %7481 = vperm.xlu0 %7480, %v7259
  %v7482 = vpop.permute.xlu0 %7481
  %7485 = vset.pattern.permute.xlu0 0
  %7486 = vperm.xlu0 %7485, %v7260
  %v7487 = vpop.permute.xlu0 %7486
  %7490 = vset.pattern.permute.xlu0 0
  %7491 = vperm.xlu0 %7490, %v7261
  %v7492 = vpop.permute.xlu0 %7491
  %7495 = vset.pattern.permute.xlu0 0
  %7496 = vperm.xlu0 %7495, %v7262
  %v7497 = vpop.permute.xlu0 %7496
  %7500 = vset.pattern.permute.xlu0 0
  %7501 = vperm.xlu0 %7500, %v7263
  %v7502 = vpop.permute.xlu0 %7501
  %7505 = vset.pattern.permute.xlu0 0
  %7506 = vperm.xlu0 %7505, %v7264
  %v7507 = vpop.permute.xlu0 %7506
  %7510 = vset.pattern.permute.xlu0 0
  %7511 = vperm.xlu0 %7510, %v7265
  %v7512 = vpop.permute.xlu0 %7511
  %7515 = vset.pattern.permute.xlu0 0
  %7516 = vperm.xlu0 %7515, %v7266
  %v7517 = vpop.permute.xlu0 %7516
  %7520 = vset.pattern.permute.xlu0 0
  %7521 = vperm.xlu0 %7520, %v7267
  %v7522 = vpop.permute.xlu0 %7521
  %7525 = vset.pattern.permute.xlu0 0
  %7526 = vperm.xlu0 %7525, %v7268
  %v7527 = vpop.permute.xlu0 %7526
  %7530 = vset.pattern.permute.xlu0 0
  %7531 = vperm.xlu0 %7530, %v7269
  %v7532 = vpop.permute.xlu0 %7531
  %7535 = vset.pattern.permute.xlu0 0
  %7536 = vperm.xlu0 %7535, %v7270
  %v7537 = vpop.permute.xlu0 %7536
  %7540 = vset.pattern.permute.xlu0 0
  %7541 = vperm.xlu0 %7540, %v7271
  %v7542 = vpop.permute.xlu0 %7541
  %7545 = vset.pattern.permute.xlu0 0
  %7546 = vperm.xlu0 %7545, %v7272
  %v7547 = vpop.permute.xlu0 %7546
  %7550 = vset.pattern.permute.xlu0 0
  %7551 = vperm.xlu0 %7550, %v7273
  %v7552 = vpop.permute.xlu0 %7551
  %7555 = vset.pattern.permute.xlu0 0
  %7556 = vperm.xlu0 %7555, %v7274
  %v7557 = vpop.permute.xlu0 %7556
  %7560 = vset.pattern.permute.xlu0 0
  %7561 = vperm.xlu0 %7560, %v7275
  %v7562 = vpop.permute.xlu0 %7561
  %7565 = vset.pattern.permute.xlu0 0
  %7566 = vperm.xlu0 %7565, %v7276
  %v7567 = vpop.permute.xlu0 %7566
  %7570 = vset.pattern.permute.xlu0 0
  %7571 = vperm.xlu0 %7570, %v7277
  %v7572 = vpop.permute.xlu0 %7571
  %7575 = vset.pattern.permute.xlu0 0
  %7576 = vperm.xlu0 %7575, %v7278
  %v7577 = vpop.permute.xlu0 %7576
  %7580 = vset.pattern.permute.xlu0 0
  %7581 = vperm.xlu0 %7580, %v7279
  %v7582 = vpop.permute.xlu0 %7581
  %7585 = vset.pattern.permute.xlu0 0
  %7586 = vperm.xlu0 %7585, %v7280
  %v7587 = vpop.permute.xlu0 %7586
  %7590 = vset.pattern.permute.xlu0 0
  %7591 = vperm.xlu0 %7590, %v7281
  %v7592 = vpop.permute.xlu0 %7591
  %7595 = vset.pattern.permute.xlu0 0
  %7596 = vperm.xlu0 %7595, %v7282
  %v7597 = vpop.permute.xlu0 %7596
  %7600 = vset.pattern.permute.xlu0 0
  %7601 = vperm.xlu0 %7600, %v7283
  %v7602 = vpop.permute.xlu0 %7601
  %7605 = vset.pattern.permute.xlu0 0
  %7606 = vperm.xlu0 %7605, %v7284
  %v7607 = vpop.permute.xlu0 %7606
  %7610 = vset.pattern.permute.xlu0 0
  %7611 = vperm.xlu0 %7610, %v7285
  %v7612 = vpop.permute.xlu0 %7611
  %7615 = vset.pattern.permute.xlu0 0
  %7616 = vperm.xlu0 %7615, %v7286
  %v7617 = vpop.permute.xlu0 %7616
  %7620 = vset.pattern.permute.xlu0 0
  %7621 = vperm.xlu0 %7620, %v7287
  %v7622 = vpop.permute.xlu0 %7621
  %7625 = vset.pattern.permute.xlu0 0
  %7626 = vperm.xlu0 %7625, %v7288
  %v7627 = vpop.permute.xlu0 %7626
  %7630 = vset.pattern.permute.xlu0 0
  %7631 = vperm.xlu0 %7630, %v7289
  %v7632 = vpop.permute.xlu0 %7631
  %7635 = vset.pattern.permute.xlu0 0
  %7636 = vperm.xlu0 %7635, %v7290
  %v7637 = vpop.permute.xlu0 %7636
  %7640 = vset.pattern.permute.xlu0 0
  %7641 = vperm.xlu0 %7640, %v7291
  %v7642 = vpop.permute.xlu0 %7641
  %7645 = vset.pattern.permute.xlu0 0
  %7646 = vperm.xlu0 %7645, %v7292
  %v7647 = vpop.permute.xlu0 %7646
  %7650 = vset.pattern.permute.xlu0 0
  %7651 = vperm.xlu0 %7650, %v7293
  %v7652 = vpop.permute.xlu0 %7651
  %7655 = vset.pattern.permute.xlu0 0
  %7656 = vperm.xlu0 %7655, %v7294
  %v7657 = vpop.permute.xlu0 %7656
  %7660 = vset.pattern.permute.xlu0 0
  %7661 = vperm.xlu0 %7660, %v7295
  %v7662 = vpop.permute.xlu0 %7661
  %7665 = vset.pattern.permute.xlu0 0
  %7666 = vperm.xlu0 %7665, %v7296
  %v7667 = vpop.permute.xlu0 %7666
  %7670 = vset.pattern.permute.xlu0 0
  %7671 = vperm.xlu0 %7670, %v7297
  %v7672 = vpop.permute.xlu0 %7671
  %7675 = vset.pattern.permute.xlu0 0
  %7676 = vperm.xlu0 %7675, %v7298
  %v7677 = vpop.permute.xlu0 %7676
  %7680 = vset.pattern.permute.xlu0 0
  %7681 = vperm.xlu0 %7680, %v7299
  %v7682 = vpop.permute.xlu0 %7681
  %7685 = vset.pattern.permute.xlu0 0
  %7686 = vperm.xlu0 %7685, %v7300
  %v7687 = vpop.permute.xlu0 %7686
  %7690 = vset.pattern.permute.xlu0 0
  %7691 = vperm.xlu0 %7690, %v7301
  %v7692 = vpop.permute.xlu0 %7691
  %7695 = vset.pattern.permute.xlu0 0
  %7696 = vperm.xlu0 %7695, %v7302
  %v7697 = vpop.permute.xlu0 %7696
  %7700 = vset.pattern.permute.xlu0 0
  %7701 = vperm.xlu0 %7700, %v7303
  %v7702 = vpop.permute.xlu0 %7701
  %7705 = vset.pattern.permute.xlu0 0
  %7706 = vperm.xlu0 %7705, %v7304
  %v7707 = vpop.permute.xlu0 %7706
  %7710 = vset.pattern.permute.xlu0 0
  %7711 = vperm.xlu0 %7710, %v7305
  %v7712 = vpop.permute.xlu0 %7711
  %7715 = vset.pattern.permute.xlu0 0
  %7716 = vperm.xlu0 %7715, %v7306
  %v7717 = vpop.permute.xlu0 %7716
  %7720 = vset.pattern.permute.xlu0 0
  %7721 = vperm.xlu0 %7720, %v7307
  %v7722 = vpop.permute.xlu0 %7721
  %7725 = vset.pattern.permute.xlu0 0
  %7726 = vperm.xlu0 %7725, %v7308
  %v7727 = vpop.permute.xlu0 %7726
  %7730 = vset.pattern.permute.xlu0 0
  %7731 = vperm.xlu0 %7730, %v7309
  %v7732 = vpop.permute.xlu0 %7731
  %7735 = vset.pattern.permute.xlu0 0
  %7736 = vperm.xlu0 %7735, %v7310
  %v7737 = vpop.permute.xlu0 %7736
  %7740 = vset.pattern.permute.xlu0 0
  %7741 = vperm.xlu0 %7740, %v7311
  %v7742 = vpop.permute.xlu0 %7741
  %7745 = vset.pattern.permute.xlu0 0
  %7746 = vperm.xlu0 %7745, %v7312
  %v7747 = vpop.permute.xlu0 %7746
  %7750 = vset.pattern.permute.xlu0 0
  %7751 = vperm.xlu0 %7750, %v7313
  %v7752 = vpop.permute.xlu0 %7751
  %7755 = vset.pattern.permute.xlu0 0
  %7756 = vperm.xlu0 %7755, %v7314
  %v7757 = vpop.permute.xlu0 %7756
  %7760 = vset.pattern.permute.xlu0 0
  %7761 = vperm.xlu0 %7760, %v7315
  %v7762 = vpop.permute.xlu0 %7761
  %7765 = vset.pattern.permute.xlu0 0
  %7766 = vperm.xlu0 %7765, %v7316
  %v7767 = vpop.permute.xlu0 %7766
  %7770 = vset.pattern.permute.xlu0 0
  %7771 = vperm.xlu0 %7770, %v7317
  %v7772 = vpop.permute.xlu0 %7771
  %7775 = vset.pattern.permute.xlu0 0
  %7776 = vperm.xlu0 %7775, %v7318
  %v7777 = vpop.permute.xlu0 %7776
  %7780 = vset.pattern.permute.xlu0 0
  %7781 = vperm.xlu0 %7780, %v7319
  %v7782 = vpop.permute.xlu0 %7781
  %7785 = vset.pattern.permute.xlu0 0
  %7786 = vperm.xlu0 %7785, %v7320
  %v7787 = vpop.permute.xlu0 %7786
  %7790 = vset.pattern.permute.xlu0 0
  %7791 = vperm.xlu0 %7790, %v7321
  %v7792 = vpop.permute.xlu0 %7791
  %7795 = vset.pattern.permute.xlu0 0
  %7796 = vperm.xlu0 %7795, %v7322
  %v7797 = vpop.permute.xlu0 %7796
  %7800 = vset.pattern.permute.xlu0 0
  %7801 = vperm.xlu0 %7800, %v7323
  %v7802 = vpop.permute.xlu0 %7801
  %7805 = vset.pattern.permute.xlu0 0
  %7806 = vperm.xlu0 %7805, %v7324
  %v7807 = vpop.permute.xlu0 %7806
  %7810 = vset.pattern.permute.xlu0 0
  %7811 = vperm.xlu0 %7810, %v7325
  %v7812 = vpop.permute.xlu0 %7811
  %7815 = vset.pattern.permute.xlu0 0
  %7816 = vperm.xlu0 %7815, %v7326
  %v7817 = vpop.permute.xlu0 %7816
  %7820 = vset.pattern.permute.xlu0 0
  %7821 = vperm.xlu0 %7820, %v7327
  %v7822 = vpop.permute.xlu0 %7821
  %7825 = vset.pattern.permute.xlu0 0
  %7826 = vperm.xlu0 %7825, %v7328
  %v7827 = vpop.permute.xlu0 %7826
  %7830 = vset.pattern.permute.xlu0 0
  %7831 = vperm.xlu0 %7830, %v7329
  %v7832 = vpop.permute.xlu0 %7831
  %7835 = vset.pattern.permute.xlu0 0
  %7836 = vperm.xlu0 %7835, %v7330
  %v7837 = vpop.permute.xlu0 %7836
  %7840 = vset.pattern.permute.xlu0 0
  %7841 = vperm.xlu0 %7840, %v7331
  %v7842 = vpop.permute.xlu0 %7841
  %7845 = vset.pattern.permute.xlu0 0
  %7846 = vperm.xlu0 %7845, %v7332
  %v7847 = vpop.permute.xlu0 %7846
  %7850 = vset.pattern.permute.xlu0 0
  %7851 = vperm.xlu0 %7850, %v7333
  %v7852 = vpop.permute.xlu0 %7851
  %7855 = vset.pattern.permute.xlu0 0
  %7856 = vperm.xlu0 %7855, %v7334
  %v7857 = vpop.permute.xlu0 %7856
  %7860 = vset.pattern.permute.xlu0 0
  %7861 = vperm.xlu0 %7860, %v7335
  %v7862 = vpop.permute.xlu0 %7861
  %7865 = vset.pattern.permute.xlu0 0
  %7866 = vperm.xlu0 %7865, %v7336
  %v7867 = vpop.permute.xlu0 %7866
  %7870 = vset.pattern.permute.xlu0 0
  %7871 = vperm.xlu0 %7870, %v7337
  %v7872 = vpop.permute.xlu0 %7871
  %7875 = vset.pattern.permute.xlu0 0
  %7876 = vperm.xlu0 %7875, %v7338
  %v7877 = vpop.permute.xlu0 %7876
  %7880 = vset.pattern.permute.xlu0 0
  %7881 = vperm.xlu0 %7880, %v7339
  %v7882 = vpop.permute.xlu0 %7881
  %7885 = vset.pattern.permute.xlu0 0
  %7886 = vperm.xlu0 %7885, %v7340
  %v7887 = vpop.permute.xlu0 %7886
  %7890 = vset.pattern.permute.xlu0 0
  %7891 = vperm.xlu0 %7890, %v7341
  %v7892 = vpop.permute.xlu0 %7891
  %7895 = vset.pattern.permute.xlu0 0
  %7896 = vperm.xlu0 %7895, %v7342
  %v7897 = vpop.permute.xlu0 %7896
  %7900 = vset.pattern.permute.xlu0 0
  %7901 = vperm.xlu0 %7900, %v7343
  %v7902 = vpop.permute.xlu0 %7901
  %7905 = vset.pattern.permute.xlu0 0
  %7906 = vperm.xlu0 %7905, %v7344
  %v7907 = vpop.permute.xlu0 %7906
  %7910 = vset.pattern.permute.xlu0 0
  %7911 = vperm.xlu0 %7910, %v7345
  %v7912 = vpop.permute.xlu0 %7911
  %7915 = vset.pattern.permute.xlu0 0
  %7916 = vperm.xlu0 %7915, %v7346
  %v7917 = vpop.permute.xlu0 %7916
  %7920 = vset.pattern.permute.xlu0 0
  %7921 = vperm.xlu0 %7920, %v7347
  %v7922 = vpop.permute.xlu0 %7921
  %7925 = vset.pattern.permute.xlu0 0
  %7926 = vperm.xlu0 %7925, %v7348
  %v7927 = vpop.permute.xlu0 %7926
  %7930 = vset.pattern.permute.xlu0 0
  %7931 = vperm.xlu0 %7930, %v7349
  %v7932 = vpop.permute.xlu0 %7931
  %7935 = vset.pattern.permute.xlu0 0
  %7936 = vperm.xlu0 %7935, %v7350
  %v7937 = vpop.permute.xlu0 %7936
  %7940 = vset.pattern.permute.xlu0 0
  %7941 = vperm.xlu0 %7940, %v7351
  %v7942 = vpop.permute.xlu0 %7941
  %7945 = vset.pattern.permute.xlu0 0
  %7946 = vperm.xlu0 %7945, %v7352
  %v7947 = vpop.permute.xlu0 %7946
  %7950 = vset.pattern.permute.xlu0 0
  %7951 = vperm.xlu0 %7950, %v7353
  %v7952 = vpop.permute.xlu0 %7951
  %7955 = vset.pattern.permute.xlu0 0
  %7956 = vperm.xlu0 %7955, %v7354
  %v7957 = vpop.permute.xlu0 %7956
  %7960 = vset.pattern.permute.xlu0 0
  %7961 = vperm.xlu0 %7960, %v7355
  %v7962 = vpop.permute.xlu0 %7961
  %7965 = vset.pattern.permute.xlu0 0
  %7966 = vperm.xlu0 %7965, %v7356
  %v7967 = vpop.permute.xlu0 %7966
  %7970 = vset.pattern.permute.xlu0 0
  %7971 = vperm.xlu0 %7970, %v7357
  %v7972 = vpop.permute.xlu0 %7971
  %7975 = vset.pattern.permute.xlu0 0
  %7976 = vperm.xlu0 %7975, %v7358
  %v7977 = vpop.permute.xlu0 %7976
  %7980 = vset.pattern.permute.xlu0 0
  %7981 = vperm.xlu0 %7980, %v7359
  %v7982 = vpop.permute.xlu0 %7981
  %7985 = vset.pattern.permute.xlu0 0
  %7986 = vperm.xlu0 %7985, %v7360
  %v7987 = vpop.permute.xlu0 %7986
  %7990 = vset.pattern.permute.xlu0 0
  %7991 = vperm.xlu0 %7990, %v7361
  %v7992 = vpop.permute.xlu0 %7991
  %7995 = vset.pattern.permute.xlu0 0
  %7996 = vperm.xlu0 %7995, %v7362
  %v7997 = vpop.permute.xlu0 %7996
  %8000 = vset.pattern.permute.xlu0 0
  %8001 = vperm.xlu0 %8000, %v7363
  %v8002 = vpop.permute.xlu0 %8001
  %v8004 = vsel %vm7172, %v7367, %v7687
  %v8005 = vsel %vm7173, %v7372, %v7692
  %v8006 = vsel %vm7174, %v7377, %v7697
  %v8007 = vsel %vm7175, %v7382, %v7702
  %v8008 = vsel %vm7176, %v7387, %v7707
  %v8009 = vsel %vm7177, %v7392, %v7712
  %v8010 = vsel %vm7178, %v7397, %v7717
  %v8011 = vsel %vm7179, %v7402, %v7722
  %v8012 = vsel %vm7180, %v7407, %v7727
  %v8013 = vsel %vm7181, %v7412, %v7732
  %v8014 = vsel %vm7182, %v7417, %v7737
  %v8015 = vsel %vm7183, %v7422, %v7742
  %v8016 = vsel %vm7184, %v7427, %v7747
  %v8017 = vsel %vm7185, %v7432, %v7752
  %v8018 = vsel %vm7186, %v7437, %v7757
  %v8019 = vsel %vm7187, %v7442, %v7762
  %v8020 = vsel %vm7188, %v7447, %v7767
  %v8021 = vsel %vm7189, %v7452, %v7772
  %v8022 = vsel %vm7190, %v7457, %v7777
  %v8023 = vsel %vm7191, %v7462, %v7782
  %v8024 = vsel %vm7192, %v7467, %v7787
  %v8025 = vsel %vm7193, %v7472, %v7792
  %v8026 = vsel %vm7194, %v7477, %v7797
  %v8027 = vsel %vm7195, %v7482, %v7802
  %v8028 = vsel %vm7196, %v7487, %v7807
  %v8029 = vsel %vm7197, %v7492, %v7812
  %v8030 = vsel %vm7198, %v7497, %v7817
  %v8031 = vsel %vm7199, %v7502, %v7822
  %v8032 = vsel %vm7200, %v7507, %v7827
  %v8033 = vsel %vm7201, %v7512, %v7832
  %v8034 = vsel %vm7202, %v7517, %v7837
  %v8035 = vsel %vm7203, %v7522, %v7842
  %v8036 = vsel %vm7204, %v7527, %v7847
  %v8037 = vsel %vm7205, %v7532, %v7852
  %v8038 = vsel %vm7206, %v7537, %v7857
  %v8039 = vsel %vm7207, %v7542, %v7862
  %v8040 = vsel %vm7208, %v7547, %v7867
  %v8041 = vsel %vm7209, %v7552, %v7872
  %v8042 = vsel %vm7210, %v7557, %v7877
  %v8043 = vsel %vm7211, %v7562, %v7882
  %v8044 = vsel %vm7212, %v7567, %v7887
  %v8045 = vsel %vm7213, %v7572, %v7892
  %v8046 = vsel %vm7214, %v7577, %v7897
  %v8047 = vsel %vm7215, %v7582, %v7902
  %v8048 = vsel %vm7216, %v7587, %v7907
  %v8049 = vsel %vm7217, %v7592, %v7912
  %v8050 = vsel %vm7218, %v7597, %v7917
  %v8051 = vsel %vm7219, %v7602, %v7922
  %v8052 = vsel %vm7220, %v7607, %v7927
  %v8053 = vsel %vm7221, %v7612, %v7932
  %v8054 = vsel %vm7222, %v7617, %v7937
  %v8055 = vsel %vm7223, %v7622, %v7942
  %v8056 = vsel %vm7224, %v7627, %v7947
  %v8057 = vsel %vm7225, %v7632, %v7952
  %v8058 = vsel %vm7226, %v7637, %v7957
  %v8059 = vsel %vm7227, %v7642, %v7962
  %v8060 = vsel %vm7228, %v7647, %v7967
  %v8061 = vsel %vm7229, %v7652, %v7972
  %v8062 = vsel %vm7230, %v7657, %v7977
  %v8063 = vsel %vm7231, %v7662, %v7982
  %v8064 = vsel %vm7232, %v7667, %v7987
  %v8065 = vsel %vm7233, %v7672, %v7992
  %v8066 = vsel %vm7234, %v7677, %v7997
  %v8067 = vsel %vm7235, %v7682, %v8002
  %v8068 = vmul.f32 %v6918, %v8004
  %v8069 = vmul.f32 %v6921, %v8005
  %v8070 = vmul.f32 %v6926, %v8006
  %v8071 = vmul.f32 %v6929, %v8007
  %v8072 = vmul.f32 %v6934, %v8008
  %v8073 = vmul.f32 %v6937, %v8009
  %v8074 = vmul.f32 %v6942, %v8010
  %v8075 = vmul.f32 %v6945, %v8011
  %v8076 = vmul.f32 %v6950, %v8012
  %v8077 = vmul.f32 %v6953, %v8013
  %v8078 = vmul.f32 %v6958, %v8014
  %v8079 = vmul.f32 %v6961, %v8015
  %v8080 = vmul.f32 %v6966, %v8016
  %v8081 = vmul.f32 %v6969, %v8017
  %v8082 = vmul.f32 %v6974, %v8018
  %v8083 = vmul.f32 %v6977, %v8019
  %v8084 = vmul.f32 %v6982, %v8020
  %v8085 = vmul.f32 %v6985, %v8021
  %v8086 = vmul.f32 %v6990, %v8022
  %v8087 = vmul.f32 %v6993, %v8023
  %v8088 = vmul.f32 %v6998, %v8024
  %v8089 = vmul.f32 %v7001, %v8025
  %v8090 = vmul.f32 %v7006, %v8026
  %v8091 = vmul.f32 %v7009, %v8027
  %v8092 = vmul.f32 %v7014, %v8028
  %v8093 = vmul.f32 %v7017, %v8029
  %v8094 = vmul.f32 %v7022, %v8030
  %v8095 = vmul.f32 %v7025, %v8031
  %v8096 = vmul.f32 %v7030, %v8032
  %v8097 = vmul.f32 %v7033, %v8033
  %v8098 = vmul.f32 %v7038, %v8034
  %v8099 = vmul.f32 %v7041, %v8035
  %v8100 = vmul.f32 %v7046, %v8036
  %v8101 = vmul.f32 %v7049, %v8037
  %v8102 = vmul.f32 %v7054, %v8038
  %v8103 = vmul.f32 %v7057, %v8039
  %v8104 = vmul.f32 %v7062, %v8040
  %v8105 = vmul.f32 %v7065, %v8041
  %v8106 = vmul.f32 %v7070, %v8042
  %v8107 = vmul.f32 %v7073, %v8043
  %v8108 = vmul.f32 %v7078, %v8044
  %v8109 = vmul.f32 %v7081, %v8045
  %v8110 = vmul.f32 %v7086, %v8046
  %v8111 = vmul.f32 %v7089, %v8047
  %v8112 = vmul.f32 %v7094, %v8048
  %v8113 = vmul.f32 %v7097, %v8049
  %v8114 = vmul.f32 %v7102, %v8050
  %v8115 = vmul.f32 %v7105, %v8051
  %v8116 = vmul.f32 %v7110, %v8052
  %v8117 = vmul.f32 %v7113, %v8053
  %v8118 = vmul.f32 %v7118, %v8054
  %v8119 = vmul.f32 %v7121, %v8055
  %v8120 = vmul.f32 %v7126, %v8056
  %v8121 = vmul.f32 %v7129, %v8057
  %v8122 = vmul.f32 %v7134, %v8058
  %v8123 = vmul.f32 %v7137, %v8059
  %v8124 = vmul.f32 %v7142, %v8060
  %v8125 = vmul.f32 %v7145, %v8061
  %v8126 = vmul.f32 %v7150, %v8062
  %v8127 = vmul.f32 %v7153, %v8063
  %v8128 = vmul.f32 %v7158, %v8064
  %v8129 = vmul.f32 %v7161, %v8065
  %v8130 = vmul.f32 %v7166, %v8066
  %v8131 = vmul.f32 %v7169, %v8067
  %v8132 = vadd.f32 %v8068, %v8069
  %v8133 = vadd.f32 %v8132, %v8070
  %v8134 = vadd.f32 %v8133, %v8071
  %v8135 = vadd.f32 %v8134, %v8072
  %v8136 = vadd.f32 %v8135, %v8073
  %v8137 = vadd.f32 %v8136, %v8074
  %v8138 = vadd.f32 %v8137, %v8075
  %v8139 = vadd.f32 %v8138, %v8076
  %v8140 = vadd.f32 %v8139, %v8077
  %v8141 = vadd.f32 %v8140, %v8078
  %v8142 = vadd.f32 %v8141, %v8079
  %v8143 = vadd.f32 %v8142, %v8080
  %v8144 = vadd.f32 %v8143, %v8081
  %v8145 = vadd.f32 %v8144, %v8082
  %v8146 = vadd.f32 %v8145, %v8083
  %v8147 = vadd.f32 %v8146, %v8084
  %v8148 = vadd.f32 %v8147, %v8085
  %v8149 = vadd.f32 %v8148, %v8086
  %v8150 = vadd.f32 %v8149, %v8087
  %v8151 = vadd.f32 %v8150, %v8088
  %v8152 = vadd.f32 %v8151, %v8089
  %v8153 = vadd.f32 %v8152, %v8090
  %v8154 = vadd.f32 %v8153, %v8091
  %v8155 = vadd.f32 %v8154, %v8092
  %v8156 = vadd.f32 %v8155, %v8093
  %v8157 = vadd.f32 %v8156, %v8094
  %v8158 = vadd.f32 %v8157, %v8095
  %v8159 = vadd.f32 %v8158, %v8096
  %v8160 = vadd.f32 %v8159, %v8097
  %v8161 = vadd.f32 %v8160, %v8098
  %v8162 = vadd.f32 %v8161, %v8099
  %v8163 = vadd.f32 %v8162, %v8100
  %v8164 = vadd.f32 %v8163, %v8101
  %v8165 = vadd.f32 %v8164, %v8102
  %v8166 = vadd.f32 %v8165, %v8103
  %v8167 = vadd.f32 %v8166, %v8104
  %v8168 = vadd.f32 %v8167, %v8105
  %v8169 = vadd.f32 %v8168, %v8106
  %v8170 = vadd.f32 %v8169, %v8107
  %v8171 = vadd.f32 %v8170, %v8108
  %v8172 = vadd.f32 %v8171, %v8109
  %v8173 = vadd.f32 %v8172, %v8110
  %v8174 = vadd.f32 %v8173, %v8111
  %v8175 = vadd.f32 %v8174, %v8112
  %v8176 = vadd.f32 %v8175, %v8113
  %v8177 = vadd.f32 %v8176, %v8114
  %v8178 = vadd.f32 %v8177, %v8115
  %v8179 = vadd.f32 %v8178, %v8116
  %v8180 = vadd.f32 %v8179, %v8117
  %v8181 = vadd.f32 %v8180, %v8118
  %v8182 = vadd.f32 %v8181, %v8119
  %v8183 = vadd.f32 %v8182, %v8120
  %v8184 = vadd.f32 %v8183, %v8121
  %v8185 = vadd.f32 %v8184, %v8122
  %v8186 = vadd.f32 %v8185, %v8123
  %v8187 = vadd.f32 %v8186, %v8124
  %v8188 = vadd.f32 %v8187, %v8125
  %v8189 = vadd.f32 %v8188, %v8126
  %v8190 = vadd.f32 %v8189, %v8127
  %v8191 = vadd.f32 %v8190, %v8128
  %v8192 = vadd.f32 %v8191, %v8129
  %v8193 = vadd.f32 %v8192, %v8130
  %v8194 = vadd.f32 %v8193, %v8131
  %v8195 = vrot.slane %v8194, 4
  %v8196 = vadd.f32 %v8194, %v8195
  %v8197 = vrot.slane %v8196, 2
  %v8198 = vadd.f32 %v8196, %v8197
  %v8199 = vrot.slane %v8198, 1
  %v8200 = vadd.f32 %v8198, %v8199
  %v8201 = vadd.f32 %v6178, %v8200
  %v8202 = vld [vmem:[#allocation2] sm:$0x1]
  %8204 = vset.pattern.permute.xlu0 0
  %8205 = vperm.xlu0 %8204, %v8202
  %v8206 = vpop.permute.xlu0 %8205
  %v8208 = vlaneseq
  %v8209 = vshrl.u32 %v8208, 7
  %v8210 = vsub.s32 0, %v8209
  %v8211 = vrot.slane %v8206, %v8210
  %v8212 = vadd.f32 %v8201, %v8211
  %8213 = vst [vmem:[%s8] sm:$0x1] %v8212
  // Predicated region
  $region34: #{discriminator_forward.1} parent=0 // pred_check
    _
  $region35: #{discriminator_forward.1} parent=0 // pred_check_branch
    %8215 = sbr.rel (0) target = $region37
  $region36: #{discriminator_forward.1} parent=0 // pred_region
    _
  $region37: #{discriminator_forward.1} parent=0 // pred_fallthru
    _
  // Predicated region
  $region38: #{discriminator_forward.1} parent=0 // pred_check
    _
  $region39: #{discriminator_forward.1} parent=0 // pred_check_branch
    %8217 = sbr.rel (0) target = $region41
  $region40: #{discriminator_forward.1} parent=0 // pred_region
    _
  $region41: #{discriminator_forward.1} parent=0 // pred_fallthru
    _

</llo_original>
